<compile_context>
chip_gen: v6e
topology: v6e:2x2x1
jax: 0.10.0
libtpu: 0.0.40
codegen_flags: <defaults>
</compile_context>

<pallas_src>
import jax
import jax.numpy as jnp
from jax import lax
from jax.experimental import pallas as pl
from jax.experimental.pallas import tpu as pltpu

EPS = 1e-5          # nn.BatchNorm2d default eps
NEG_SLOPE = 0.2     # LeakyReLU slope
VMEM_LIMIT = 48 * 1024 * 1024   # scoped-VMEM budget (well under all chips' caps)


def _pick_tile(total, candidates):
    """Largest candidate that exactly divides `total`, else the full extent."""
    for c in candidates:
        if total >= c and total % c == 0:
            return c
    return total


# ---------------------------------------------------------------------------
# Pallas kernels
# ---------------------------------------------------------------------------
def _mm_stats_kernel(a_ref, b_ref, o_ref, sum_ref, sq_ref, acc_ref):
    """M/K-tiled matmul for the BN blocks.

    o = a @ b (bf16 store), plus per-M-tile, per-channel partial sums and
    sums-of-squares of the f32 accumulator (consumed by the BN finalize).
    """
    @pl.when(pl.program_id(1) == 0)
    def _():
        acc_ref[...] = jnp.zeros_like(acc_ref)

    acc_ref[...] += jnp.dot(a_ref[...], b_ref[...],
                            preferred_element_type=jnp.float32)

    @pl.when(pl.program_id(1) == pl.num_programs(1) - 1)
    def _():
        acc = acc_ref[...]
        o_ref[...] = acc.astype(o_ref.dtype)
        # Cross-sublane reductions go to the XLU (off the MXU critical path).
        sum_ref[...] = jnp.sum(acc, axis=0).reshape(sum_ref.shape)
        sq_ref[...] = jnp.sum(acc * acc, axis=0).reshape(sq_ref.shape)


def _mm_bias_kernel(a_ref, b_ref, bias_ref, o_ref, acc_ref):
    """M/K-tiled matmul with bias (final conv): o = a @ b + bias."""
    @pl.when(pl.program_id(1) == 0)
    def _():
        acc_ref[...] = jnp.zeros_like(acc_ref)

    acc_ref[...] += jnp.dot(a_ref[...], b_ref[...],
                            preferred_element_type=jnp.float32)

    @pl.when(pl.program_id(1) == pl.num_programs(1) - 1)
    def _():
        o_ref[...] = (acc_ref[...] + bias_ref[...]).astype(o_ref.dtype)


def _bn_apply_leaky_kernel(x_ref, scale_ref, shift_ref, o_ref):
    y = x_ref[...].astype(jnp.float32) * scale_ref[...] + shift_ref[...]
    o_ref[...] = jnp.where(y >= 0, y, NEG_SLOPE * y).astype(o_ref.dtype)


# ---------------------------------------------------------------------------
# pallas_call wrappers
# ---------------------------------------------------------------------------
def conv_bn_matmul(patches, w2d):
    """patches: (M, K), w2d: (K, Cout) -> (conv_bf16 (M, Cout),
    partial_sum (gm, 1, Cout) f32, partial_sq (gm, 1, Cout) f32)."""
    M, K = patches.shape
    K2, Cout = w2d.shape
    assert K == K2
    tm = _pick_tile(M, (256, 128, 64, 32, 16, 8))
    tk = _pick_tile(K, (512, 256, 128))
    gm, gk = M // tm, K // tk

    return pl.pallas_call(
        _mm_stats_kernel,
        out_shape=(jax.ShapeDtypeStruct((M, Cout), jnp.bfloat16),
                   jax.ShapeDtypeStruct((gm, 1, Cout), jnp.float32),
                   jax.ShapeDtypeStruct((gm, 1, Cout), jnp.float32)),
        grid_spec=pltpu.PrefetchScalarGridSpec(
            num_scalar_prefetch=0, grid=(gm, gk),
            in_specs=[pl.BlockSpec((tm, tk), lambda i, k: (i, k)),
                      pl.BlockSpec((tk, Cout), lambda i, k: (k, 0))],
            out_specs=[pl.BlockSpec((tm, Cout), lambda i, k: (i, 0)),
                       pl.BlockSpec((1, 1, Cout), lambda i, k: (i, 0, 0)),
                       pl.BlockSpec((1, 1, Cout), lambda i, k: (i, 0, 0))],
            scratch_shapes=[pltpu.VMEM((tm, Cout), jnp.float32)]),
        compiler_params=pltpu.CompilerParams(
            dimension_semantics=("parallel", "arbitrary"),
            vmem_limit_bytes=VMEM_LIMIT),
    )(patches.astype(jnp.bfloat16), w2d.astype(jnp.bfloat16))


def conv_bias_matmul(patches, w2d, bias, out_dtype=jnp.float32):
    """patches: (M, K), w2d: (K, Cout), bias: (Cout,) -> (M, Cout)."""
    M, K = patches.shape
    K2, Cout = w2d.shape
    assert K == K2
    tm = _pick_tile(M, (256, 128, 64, 32, 16, 8))
    tk = _pick_tile(K, (512, 256, 128))
    grid = (M // tm, K // tk)

    return pl.pallas_call(
        _mm_bias_kernel,
        out_shape=jax.ShapeDtypeStruct((M, Cout), out_dtype),
        grid_spec=pltpu.PrefetchScalarGridSpec(
            num_scalar_prefetch=0, grid=grid,
            in_specs=[pl.BlockSpec((tm, tk), lambda i, k: (i, k)),
                      pl.BlockSpec((tk, Cout), lambda i, k: (k, 0)),
                      pl.BlockSpec((1, Cout), lambda i, k: (0, 0))],
            out_specs=pl.BlockSpec((tm, Cout), lambda i, k: (i, 0)),
            scratch_shapes=[pltpu.VMEM((tm, Cout), jnp.float32)]),
        compiler_params=pltpu.CompilerParams(
            dimension_semantics=("parallel", "arbitrary"),
            vmem_limit_bytes=VMEM_LIMIT),
    )(patches.astype(jnp.bfloat16), w2d.astype(jnp.bfloat16),
      bias.reshape(1, Cout).astype(jnp.float32))


def bn_leaky_apply(x2d, scale, shift):
    """x2d: (M, C) bf16, scale/shift: (1, C) f32 -> bf16 (M, C)."""
    M, C = x2d.shape
    tm = _pick_tile(M, (512, 256, 128, 64, 32, 16, 8))
    return pl.pallas_call(
        _bn_apply_leaky_kernel,
        out_shape=jax.ShapeDtypeStruct((M, C), jnp.bfloat16),
        grid_spec=pltpu.PrefetchScalarGridSpec(
            num_scalar_prefetch=0, grid=(M // tm,),
            in_specs=[pl.BlockSpec((tm, C), lambda i: (i, 0)),
                      pl.BlockSpec((1, C), lambda i: (0, 0)),
                      pl.BlockSpec((1, C), lambda i: (0, 0))],
            out_specs=pl.BlockSpec((tm, C), lambda i: (i, 0))),
        compiler_params=pltpu.CompilerParams(
            dimension_semantics=("parallel",),
            vmem_limit_bytes=VMEM_LIMIT),
    )(x2d, scale, shift)


# ---------------------------------------------------------------------------
# Glue (im2col, weight reshape, BN finalize, parameter init) — plain JAX
# ---------------------------------------------------------------------------
def im2col(x_nhwc, k, stride, pad):
    N, H, W, C = x_nhwc.shape
    x_p = jnp.pad(x_nhwc, ((0, 0), (pad, pad), (pad, pad), (0, 0)))
    Ho = (H + 2 * pad - k) // stride + 1
    Wo = (W + 2 * pad - k) // stride + 1
    cols = []
    for di in range(k):
        for dj in range(k):
            cols.append(x_p[:, di:di + stride * Ho:stride,
                            dj:dj + stride * Wo:stride, :])
    patches = jnp.stack(cols, axis=3)              # (N, Ho, Wo, k*k, C)
    return patches.reshape(N * Ho * Wo, k * k * C), (N, Ho, Wo)


def w_to_2d(w):
    # PyTorch conv weight (Cout, Cin, Kh, Kw) -> (Kh*Kw*Cin, Cout),
    # matching the im2col patch element order (kh, kw, cin).
    cout = w.shape[0]
    return jnp.transpose(w, (2, 3, 1, 0)).reshape(-1, cout)


def bn_finalize(psum, psq, gamma, beta, m_total):
    """Fold per-M-tile partial sums into per-channel (scale, shift).

    Only O(C) scalars; the heavy M-reduction happened inside the conv kernel.
    """
    s = jnp.sum(psum, axis=(0, 1))                     # (C,)
    sq = jnp.sum(psq, axis=(0, 1))                     # (C,)
    mean = s / m_total
    var = jnp.maximum(sq / m_total - mean * mean, 0.0)  # clamp f32 cancellation
    scale = gamma * lax.rsqrt(var + EPS)
    shift = beta - mean * scale
    C = scale.shape[0]
    return scale.reshape(1, C), shift.reshape(1, C)


def init_params(key):
    keys = jax.random.split(key, 14)
    specs = [(6, 64, 2), (64, 128, 2), (128, 256, 2), (256, 512, 1)]
    blocks = []
    ki = 0
    for cin, cout, stride in specs:
        w = 0.05 * jax.random.normal(keys[ki], (cout, cin, 4, 4), jnp.float32)
        ki += 1
        gamma = 1.0 + 0.1 * jax.random.normal(keys[ki], (cout,), jnp.float32)
        ki += 1
        beta = 0.1 * jax.random.normal(keys[ki], (cout,), jnp.float32)
        ki += 1
        blocks.append((w, gamma, beta, stride))
    w_final = 0.05 * jax.random.normal(keys[ki], (1, 512, 4, 4), jnp.float32)
    ki += 1
    b_final = 0.1 * jax.random.normal(keys[ki], (1,), jnp.float32)
    return blocks, (w_final, b_final)


def patchgan_forward(x, y, blocks, final):
    h = jnp.concatenate([x, y], axis=1)            # (N, 6, H, W)  NCHW
    h = jnp.transpose(h, (0, 2, 3, 1)).astype(jnp.bfloat16)   # NHWC, bf16
    for w, gamma, beta, stride in blocks:
        patches, (N, Ho, Wo) = im2col(h, 4, stride, 1)
        cout = w.shape[0]
        conv, psum, psq = conv_bn_matmul(patches, w_to_2d(w))
        scale, shift = bn_finalize(psum, psq, gamma, beta, patches.shape[0])
        act = bn_leaky_apply(conv, scale, shift)
        h = act.reshape(N, Ho, Wo, cout)

    # Final conv (Cout=1): pad output channels to 128 for lane-dense stores.
    w_f, b_f = final
    patches, (N, Ho, Wo) = im2col(h, 4, 1, 1)
    w2d = jnp.pad(w_to_2d(w_f), ((0, 0), (0, 127)))   # (K, 128)
    b_pad = jnp.pad(b_f, (0, 127))                    # (128,)
    out = conv_bias_matmul(patches, w2d, b_pad, out_dtype=jnp.float32)
    out = out[:, :1]
    h = out.reshape(N, Ho, Wo, 1)
    return jnp.transpose(h, (0, 3, 1, 2)).astype(jnp.float32)  # back to NCHW


# ---------------------------------------------------------------------------
# Pure-JAX f32 reference for correctness checking
# ---------------------------------------------------------------------------
def ref_forward(x, y, blocks, final):
    h = jnp.concatenate([x, y], axis=1)
    dn = ('NCHW', 'OIHW', 'NCHW')
    for w, gamma, beta, stride in blocks:
        h = lax.conv_general_dilated(h, w, (stride, stride), ((1, 1), (1, 1)),
                                     dimension_numbers=dn)
        mean = h.mean(axis=(0, 2, 3), keepdims=True)
        var = ((h - mean) ** 2).mean(axis=(0, 2, 3), keepdims=True)
        h = (h - mean) * (gamma.reshape(1, -1, 1, 1) / jnp.sqrt(var + EPS)) \
            + beta.reshape(1, -1, 1, 1)
        h = jnp.where(h >= 0, h, NEG_SLOPE * h)
    w_f, b_f = final
    h = lax.conv_general_dilated(h, w_f, (1, 1), ((1, 1), (1, 1)),
                                 dimension_numbers=dn)
    return h + b_f.reshape(1, -1, 1, 1)


if __name__ == "__main__":
    key = jax.random.PRNGKey(0)
    kx, ky, kp = jax.random.split(key, 3)
    # Small shapes: batch=2, 3 channels each for x and y, spatial=32
    # (32 -> 16 -> 8 -> 4 -> 3 -> 2 under the module's stride/padding scheme).
    x = jax.random.normal(kx, (2, 3, 32, 32), jnp.float32)
    y = jax.random.normal(ky, (2, 3, 32, 32), jnp.float32)
    blocks, final = init_params(kp)

    fwd = jax.jit(lambda xx, yy: patchgan_forward(xx, yy, blocks, final))
    out = jax.block_until_ready(fwd(x, y))
    assert out.shape == (2, 1, 2, 2), out.shape

    ref = jax.block_until_ready(ref_forward(x, y, blocks, final))
    max_err = float(jnp.max(jnp.abs(out - ref)))
    out_scale = float(jnp.max(jnp.abs(ref)))
    # bf16 activations/matmul inputs (f32 accumulation): allow 5% of output scale.
    assert max_err <= 5e-2 * max(1.0, out_scale), (max_err, out_scale)

    print("KERNEL_OK")
</pallas_src>

<mosaic_0001>
module attributes {stable_mosaic.version = 11 : i64} {
  func.func @_mm_stats_kernel(%arg0: i32, %arg1: i32, %arg2: memref<256x96xbf16, #tpu.memory_space<vmem>>, %arg3: memref<96x64xbf16, #tpu.memory_space<vmem>>, %arg4: memref<256x64xbf16, #tpu.memory_space<vmem>>, %arg5: memref<1x1x64xf32, #tpu.memory_space<vmem>>, %arg6: memref<1x1x64xf32, #tpu.memory_space<vmem>>, %arg7: memref<256x64xf32, #tpu.memory_space<vmem>>) attributes {dimension_semantics = [#tpu.dimension_semantics<parallel>, #tpu.dimension_semantics<arbitrary>], iteration_bounds = array<i64: 2, 1>, scalar_prefetch = 0 : i64, scratch_operands = 1 : i64, tpu.core_type = #tpu.core_type<tc>, window_params = [{transform_indices = @transform_0, window_bounds = array<i64: 256, 96>}, {transform_indices = @transform_1, window_bounds = array<i64: 96, 64>}, {transform_indices = @transform_2, window_bounds = array<i64: 256, 64>}, {transform_indices = @transform_3, window_bounds = array<i64: 1, 1, 64>}, {transform_indices = @transform_4, window_bounds = array<i64: 1, 1, 64>}]} {
    %c0_i32 = arith.constant 0 : i32
    %0 = arith.cmpi eq, %arg1, %c0_i32 : i32
    %1 = arith.extui %0 : i1 to i32
    %c0_i32_0 = arith.constant 0 : i32
    %2 = arith.cmpi ne, %1, %c0_i32_0 : i32
    scf.if %2 {
      %cst_10 = arith.constant 0.000000e+00 : f32
      %12 = vector.broadcast %cst_10 : f32 to vector<256x64xf32>
      %c0_11 = arith.constant 0 : index
      %c0_12 = arith.constant 0 : index
      %13 = vector.load %arg7[%c0_11, %c0_12] : memref<256x64xf32, #tpu.memory_space<vmem>>, vector<256x64xf32>
      tpu.vector_store %arg7[%c0_11, %c0_12], %12 {strides = array<i32>} : memref<256x64xf32, #tpu.memory_space<vmem>>, vector<256x64xf32>,
    } else {
    }
    %c0 = arith.constant 0 : index
    %c0_1 = arith.constant 0 : index
    %3 = vector.load %arg7[%c0, %c0_1] : memref<256x64xf32, #tpu.memory_space<vmem>>, vector<256x64xf32>
    %c0_2 = arith.constant 0 : index
    %c0_3 = arith.constant 0 : index
    %4 = vector.load %arg2[%c0_2, %c0_3] : memref<256x96xbf16, #tpu.memory_space<vmem>>, vector<256x96xbf16>
    %c0_4 = arith.constant 0 : index
    %c0_5 = arith.constant 0 : index
    %5 = vector.load %arg3[%c0_4, %c0_5] : memref<96x64xbf16, #tpu.memory_space<vmem>>, vector<96x64xbf16>
    %cst = arith.constant dense<0.000000e+00> : vector<256x64xf32>
    %6 = tpu.matmul %4, %5, %cst {dimension_numbers = #tpu.dot_dimension_numbers<[1], [0], [0], [1], [0, 0, 1, 1], [], []>} : vector<256x96xbf16>, vector<96x64xbf16>, vector<256x64xf32> -> vector<256x64xf32>
    %7 = arith.addf %3, %6 : vector<256x64xf32>
    %c0_6 = arith.constant 0 : index
    %c0_7 = arith.constant 0 : index
    %8 = vector.load %arg7[%c0_6, %c0_7] : memref<256x64xf32, #tpu.memory_space<vmem>>, vector<256x64xf32>
    tpu.vector_store %arg7[%c0_6, %c0_7], %7 {strides = array<i32>} : memref<256x64xf32, #tpu.memory_space<vmem>>, vector<256x64xf32>,
    %c0_i32_8 = arith.constant 0 : i32
    %9 = arith.cmpi eq, %arg1, %c0_i32_8 : i32
    %10 = arith.extui %9 : i1 to i32
    %c0_i32_9 = arith.constant 0 : i32
    %11 = arith.cmpi ne, %10, %c0_i32_9 : i32
    scf.if %11 {
      %c0_10 = arith.constant 0 : index
      %c0_11 = arith.constant 0 : index
      %12 = vector.load %arg7[%c0_10, %c0_11] : memref<256x64xf32, #tpu.memory_space<vmem>>, vector<256x64xf32>
      %13 = arith.truncf %12 : vector<256x64xf32> to vector<256x64xbf16>
      %c0_12 = arith.constant 0 : index
      %c0_13 = arith.constant 0 : index
      %14 = vector.load %arg4[%c0_12, %c0_13] : memref<256x64xbf16, #tpu.memory_space<vmem>>, vector<256x64xbf16>
      tpu.vector_store %arg4[%c0_12, %c0_13], %13 {strides = array<i32>} : memref<256x64xbf16, #tpu.memory_space<vmem>>, vector<256x64xbf16>,
      %cst_14 = arith.constant dense<0.000000e+00> : vector<64xf32>
      %15 = vector.multi_reduction <add>, %12, %cst_14 [0] : vector<256x64xf32> to vector<64xf32>
      %16 = vector.shape_cast %15 : vector<64xf32> to vector<1x1x64xf32>
      %c0_15 = arith.constant 0 : index
      %c0_16 = arith.constant 0 : index
      %c0_17 = arith.constant 0 : index
      %17 = vector.load %arg5[%c0_15, %c0_16, %c0_17] : memref<1x1x64xf32, #tpu.memory_space<vmem>>, vector<1x1x64xf32>
      tpu.vector_store %arg5[%c0_15, %c0_16, %c0_17], %16 {strides = array<i32>} : memref<1x1x64xf32, #tpu.memory_space<vmem>>, vector<1x1x64xf32>,
      %18 = arith.mulf %12, %12 : vector<256x64xf32>
      %cst_18 = arith.constant dense<0.000000e+00> : vector<64xf32>
      %19 = vector.multi_reduction <add>, %18, %cst_18 [0] : vector<256x64xf32> to vector<64xf32>
      %20 = vector.shape_cast %19 : vector<64xf32> to vector<1x1x64xf32>
      %c0_19 = arith.constant 0 : index
      %c0_20 = arith.constant 0 : index
      %c0_21 = arith.constant 0 : index
      %21 = vector.load %arg6[%c0_19, %c0_20, %c0_21] : memref<1x1x64xf32, #tpu.memory_space<vmem>>, vector<1x1x64xf32>
      tpu.vector_store %arg6[%c0_19, %c0_20, %c0_21], %20 {strides = array<i32>} : memref<1x1x64xf32, #tpu.memory_space<vmem>>, vector<1x1x64xf32>,
    } else {
    }
    return
  }
  func.func @transform_0(%arg0: i32, %arg1: i32) -> (i32, i32) {
    %c0_i32 = arith.constant 0 : i32
    return %arg0, %arg1 : i32, i32
  }
  func.func @transform_1(%arg0: i32, %arg1: i32) -> (i32, i32) {
    %c0_i32 = arith.constant 0 : i32
    %c0_i32_0 = arith.constant 0 : i32
    return %arg1, %c0_i32 : i32, i32
  }
  func.func @transform_2(%arg0: i32, %arg1: i32) -> (i32, i32) {
    %c0_i32 = arith.constant 0 : i32
    %c0_i32_0 = arith.constant 0 : i32
    return %arg0, %c0_i32 : i32, i32
  }
  func.func @transform_3(%arg0: i32, %arg1: i32) -> (i32, i32, i32) {
    %c0_i32 = arith.constant 0 : i32
    %c0_i32_0 = arith.constant 0 : i32
    %c0_i32_1 = arith.constant 0 : i32
    return %arg0, %c0_i32, %c0_i32_0 : i32, i32, i32
  }
  func.func @transform_4(%arg0: i32, %arg1: i32) -> (i32, i32, i32) {
    %c0_i32 = arith.constant 0 : i32
    %c0_i32_0 = arith.constant 0 : i32
    %c0_i32_1 = arith.constant 0 : i32
    return %arg0, %c0_i32, %c0_i32_0 : i32, i32, i32
  }
}

module attributes {stable_mosaic.version = 11 : i64} {
  func.func @_bn_apply_leaky_kernel(%arg0: i32, %arg1: memref<512x64xbf16, #tpu.memory_space<vmem>>, %arg2: memref<1x64xf32, #tpu.memory_space<vmem>>, %arg3: memref<1x64xf32, #tpu.memory_space<vmem>>, %arg4: memref<512x64xbf16, #tpu.memory_space<vmem>>) attributes {dimension_semantics = [#tpu.dimension_semantics<parallel>], iteration_bounds = array<i64: 1>, scalar_prefetch = 0 : i64, scratch_operands = 0 : i64, tpu.core_type = #tpu.core_type<tc>, window_params = [{transform_indices = @transform_0, window_bounds = array<i64: 512, 64>}, {pipeline_mode = #tpu.pipeline_mode<synchronous>, transform_indices = @transform_1, window_bounds = array<i64: 1, 64>}, {pipeline_mode = #tpu.pipeline_mode<synchronous>, transform_indices = @transform_2, window_bounds = array<i64: 1, 64>}, {transform_indices = @transform_3, window_bounds = array<i64: 512, 64>}]} {
    %c0 = arith.constant 0 : index
    %c0_0 = arith.constant 0 : index
    %0 = vector.load %arg1[%c0, %c0_0] : memref<512x64xbf16, #tpu.memory_space<vmem>>, vector<512x64xbf16>
    %1 = arith.extf %0 : vector<512x64xbf16> to vector<512x64xf32>
    %c0_1 = arith.constant 0 : index
    %c0_2 = arith.constant 0 : index
    %2 = vector.load %arg2[%c0_1, %c0_2] : memref<1x64xf32, #tpu.memory_space<vmem>>, vector<1x64xf32>
    %3 = vector.broadcast %2 : vector<1x64xf32> to vector<512x64xf32>
    %4 = arith.mulf %1, %3 : vector<512x64xf32>
    %c0_3 = arith.constant 0 : index
    %c0_4 = arith.constant 0 : index
    %5 = vector.load %arg3[%c0_3, %c0_4] : memref<1x64xf32, #tpu.memory_space<vmem>>, vector<1x64xf32>
    %6 = vector.broadcast %5 : vector<1x64xf32> to vector<512x64xf32>
    %7 = arith.addf %4, %6 : vector<512x64xf32>
    %cst = arith.constant 0.000000e+00 : f32
    %8 = vector.broadcast %cst : f32 to vector<512x64xf32>
    %9 = arith.cmpf oge, %7, %8 : vector<512x64xf32>
    %cst_5 = arith.constant 2.000000e-01 : f32
    %10 = vector.broadcast %cst_5 : f32 to vector<512x64xf32>
    %11 = arith.mulf %10, %7 : vector<512x64xf32>
    %12 = arith.select %9, %7, %11 : vector<512x64xi1>, vector<512x64xf32>
    %13 = arith.truncf %12 : vector<512x64xf32> to vector<512x64xbf16>
    %c0_6 = arith.constant 0 : index
    %c0_7 = arith.constant 0 : index
    %14 = vector.load %arg4[%c0_6, %c0_7] : memref<512x64xbf16, #tpu.memory_space<vmem>>, vector<512x64xbf16>
    tpu.vector_store %arg4[%c0_6, %c0_7], %13 {strides = array<i32>} : memref<512x64xbf16, #tpu.memory_space<vmem>>, vector<512x64xbf16>,
    return
  }
  func.func @transform_0(%arg0: i32) -> (i32, i32) {
    %c0_i32 = arith.constant 0 : i32
    %c0_i32_0 = arith.constant 0 : i32
    return %arg0, %c0_i32 : i32, i32
  }
  func.func @transform_1(%arg0: i32) -> (i32, i32) {
    %c0_i32 = arith.constant 0 : i32
    %c0_i32_0 = arith.constant 0 : i32
    %c0_i32_1 = arith.constant 0 : i32
    return %c0_i32, %c0_i32_0 : i32, i32
  }
  func.func @transform_2(%arg0: i32) -> (i32, i32) {
    %c0_i32 = arith.constant 0 : i32
    %c0_i32_0 = arith.constant 0 : i32
    %c0_i32_1 = arith.constant 0 : i32
    return %c0_i32, %c0_i32_0 : i32, i32
  }
  func.func @transform_3(%arg0: i32) -> (i32, i32) {
    %c0_i32 = arith.constant 0 : i32
    %c0_i32_0 = arith.constant 0 : i32
    return %arg0, %c0_i32 : i32, i32
  }
}

module attributes {stable_mosaic.version = 11 : i64} {
  func.func @_mm_stats_kernel(%arg0: i32, %arg1: i32, %arg2: memref<128x512xbf16, #tpu.memory_space<vmem>>, %arg3: memref<512x128xbf16, #tpu.memory_space<vmem>>, %arg4: memref<128x128xbf16, #tpu.memory_space<vmem>>, %arg5: memref<1x1x128xf32, #tpu.memory_space<vmem>>, %arg6: memref<1x1x128xf32, #tpu.memory_space<vmem>>, %arg7: memref<128x128xf32, #tpu.memory_space<vmem>>) attributes {dimension_semantics = [#tpu.dimension_semantics<parallel>, #tpu.dimension_semantics<arbitrary>], iteration_bounds = array<i64: 1, 2>, scalar_prefetch = 0 : i64, scratch_operands = 1 : i64, tpu.core_type = #tpu.core_type<tc>, window_params = [{transform_indices = @transform_0, window_bounds = array<i64: 128, 512>}, {transform_indices = @transform_1, window_bounds = array<i64: 512, 128>}, {transform_indices = @transform_2, window_bounds = array<i64: 128, 128>}, {transform_indices = @transform_3, window_bounds = array<i64: 1, 1, 128>}, {transform_indices = @transform_4, window_bounds = array<i64: 1, 1, 128>}]} {
    %c0_i32 = arith.constant 0 : i32
    %0 = arith.cmpi eq, %arg1, %c0_i32 : i32
    %1 = arith.extui %0 : i1 to i32
    %c0_i32_0 = arith.constant 0 : i32
    %2 = arith.cmpi ne, %1, %c0_i32_0 : i32
    scf.if %2 {
      %cst_9 = arith.constant 0.000000e+00 : f32
      %12 = vector.broadcast %cst_9 : f32 to vector<128x128xf32>
      %c0_10 = arith.constant 0 : index
      %c0_11 = arith.constant 0 : index
      %13 = vector.load %arg7[%c0_10, %c0_11] : memref<128x128xf32, #tpu.memory_space<vmem>>, vector<128x128xf32>
      tpu.vector_store %arg7[%c0_10, %c0_11], %12 {strides = array<i32>} : memref<128x128xf32, #tpu.memory_space<vmem>>, vector<128x128xf32>,
    } else {
    }
    %c0 = arith.constant 0 : index
    %c0_1 = arith.constant 0 : index
    %3 = vector.load %arg7[%c0, %c0_1] : memref<128x128xf32, #tpu.memory_space<vmem>>, vector<128x128xf32>
    %c0_2 = arith.constant 0 : index
    %c0_3 = arith.constant 0 : index
    %4 = vector.load %arg2[%c0_2, %c0_3] : memref<128x512xbf16, #tpu.memory_space<vmem>>, vector<128x512xbf16>
    %c0_4 = arith.constant 0 : index
    %c0_5 = arith.constant 0 : index
    %5 = vector.load %arg3[%c0_4, %c0_5] : memref<512x128xbf16, #tpu.memory_space<vmem>>, vector<512x128xbf16>
    %cst = arith.constant dense<0.000000e+00> : vector<128x128xf32>
    %6 = tpu.matmul %4, %5, %cst {dimension_numbers = #tpu.dot_dimension_numbers<[1], [0], [0], [1], [0, 0, 1, 1], [], []>} : vector<128x512xbf16>, vector<512x128xbf16>, vector<128x128xf32> -> vector<128x128xf32>
    %7 = arith.addf %3, %6 : vector<128x128xf32>
    %c0_6 = arith.constant 0 : index
    %c0_7 = arith.constant 0 : index
    %8 = vector.load %arg7[%c0_6, %c0_7] : memref<128x128xf32, #tpu.memory_space<vmem>>, vector<128x128xf32>
    tpu.vector_store %arg7[%c0_6, %c0_7], %7 {strides = array<i32>} : memref<128x128xf32, #tpu.memory_space<vmem>>, vector<128x128xf32>,
    %c1_i32 = arith.constant 1 : i32
    %9 = arith.cmpi eq, %arg1, %c1_i32 : i32
    %10 = arith.extui %9 : i1 to i32
    %c0_i32_8 = arith.constant 0 : i32
    %11 = arith.cmpi ne, %10, %c0_i32_8 : i32
    scf.if %11 {
      %c0_9 = arith.constant 0 : index
      %c0_10 = arith.constant 0 : index
      %12 = vector.load %arg7[%c0_9, %c0_10] : memref<128x128xf32, #tpu.memory_space<vmem>>, vector<128x128xf32>
      %13 = arith.truncf %12 : vector<128x128xf32> to vector<128x128xbf16>
      %c0_11 = arith.constant 0 : index
      %c0_12 = arith.constant 0 : index
      %14 = vector.load %arg4[%c0_11, %c0_12] : memref<128x128xbf16, #tpu.memory_space<vmem>>, vector<128x128xbf16>
      tpu.vector_store %arg4[%c0_11, %c0_12], %13 {strides = array<i32>} : memref<128x128xbf16, #tpu.memory_space<vmem>>, vector<128x128xbf16>,
      %cst_13 = arith.constant dense<0.000000e+00> : vector<128xf32>
      %15 = vector.multi_reduction <add>, %12, %cst_13 [0] : vector<128x128xf32> to vector<128xf32>
      %16 = vector.shape_cast %15 : vector<128xf32> to vector<1x1x128xf32>
      %c0_14 = arith.constant 0 : index
      %c0_15 = arith.constant 0 : index
      %c0_16 = arith.constant 0 : index
      %17 = vector.load %arg5[%c0_14, %c0_15, %c0_16] : memref<1x1x128xf32, #tpu.memory_space<vmem>>, vector<1x1x128xf32>
      tpu.vector_store %arg5[%c0_14, %c0_15, %c0_16], %16 {strides = array<i32>} : memref<1x1x128xf32, #tpu.memory_space<vmem>>, vector<1x1x128xf32>,
      %18 = arith.mulf %12, %12 : vector<128x128xf32>
      %cst_17 = arith.constant dense<0.000000e+00> : vector<128xf32>
      %19 = vector.multi_reduction <add>, %18, %cst_17 [0] : vector<128x128xf32> to vector<128xf32>
      %20 = vector.shape_cast %19 : vector<128xf32> to vector<1x1x128xf32>
      %c0_18 = arith.constant 0 : index
      %c0_19 = arith.constant 0 : index
      %c0_20 = arith.constant 0 : index
      %21 = vector.load %arg6[%c0_18, %c0_19, %c0_20] : memref<1x1x128xf32, #tpu.memory_space<vmem>>, vector<1x1x128xf32>
      tpu.vector_store %arg6[%c0_18, %c0_19, %c0_20], %20 {strides = array<i32>} : memref<1x1x128xf32, #tpu.memory_space<vmem>>, vector<1x1x128xf32>,
    } else {
    }
    return
  }
  func.func @transform_0(%arg0: i32, %arg1: i32) -> (i32, i32) {
    %c0_i32 = arith.constant 0 : i32
    return %arg0, %arg1 : i32, i32
  }
  func.func @transform_1(%arg0: i32, %arg1: i32) -> (i32, i32) {
    %c0_i32 = arith.constant 0 : i32
    %c0_i32_0 = arith.constant 0 : i32
    return %arg1, %c0_i32 : i32, i32
  }
  func.func @transform_2(%arg0: i32, %arg1: i32) -> (i32, i32) {
    %c0_i32 = arith.constant 0 : i32
    %c0_i32_0 = arith.constant 0 : i32
    return %arg0, %c0_i32 : i32, i32
  }
  func.func @transform_3(%arg0: i32, %arg1: i32) -> (i32, i32, i32) {
    %c0_i32 = arith.constant 0 : i32
    %c0_i32_0 = arith.constant 0 : i32
    %c0_i32_1 = arith.constant 0 : i32
    return %arg0, %c0_i32, %c0_i32_0 : i32, i32, i32
  }
  func.func @transform_4(%arg0: i32, %arg1: i32) -> (i32, i32, i32) {
    %c0_i32 = arith.constant 0 : i32
    %c0_i32_0 = arith.constant 0 : i32
    %c0_i32_1 = arith.constant 0 : i32
    return %arg0, %c0_i32, %c0_i32_0 : i32, i32, i32
  }
}

module attributes {stable_mosaic.version = 11 : i64} {
  func.func @_bn_apply_leaky_kernel(%arg0: i32, %arg1: memref<128x128xbf16, #tpu.memory_space<vmem>>, %arg2: memref<1x128xf32, #tpu.memory_space<vmem>>, %arg3: memref<1x128xf32, #tpu.memory_space<vmem>>, %arg4: memref<128x128xbf16, #tpu.memory_space<vmem>>) attributes {dimension_semantics = [#tpu.dimension_semantics<parallel>], iteration_bounds = array<i64: 1>, scalar_prefetch = 0 : i64, scratch_operands = 0 : i64, tpu.core_type = #tpu.core_type<tc>, window_params = [{transform_indices = @transform_0, window_bounds = array<i64: 128, 128>}, {pipeline_mode = #tpu.pipeline_mode<synchronous>, transform_indices = @transform_1, window_bounds = array<i64: 1, 128>}, {pipeline_mode = #tpu.pipeline_mode<synchronous>, transform_indices = @transform_2, window_bounds = array<i64: 1, 128>}, {transform_indices = @transform_3, window_bounds = array<i64: 128, 128>}]} {
    %c0 = arith.constant 0 : index
    %c0_0 = arith.constant 0 : index
    %0 = vector.load %arg1[%c0, %c0_0] : memref<128x128xbf16, #tpu.memory_space<vmem>>, vector<128x128xbf16>
    %1 = arith.extf %0 : vector<128x128xbf16> to vector<128x128xf32>
    %c0_1 = arith.constant 0 : index
    %c0_2 = arith.constant 0 : index
    %2 = vector.load %arg2[%c0_1, %c0_2] : memref<1x128xf32, #tpu.memory_space<vmem>>, vector<1x128xf32>
    %3 = vector.broadcast %2 : vector<1x128xf32> to vector<128x128xf32>
    %4 = arith.mulf %1, %3 : vector<128x128xf32>
    %c0_3 = arith.constant 0 : index
    %c0_4 = arith.constant 0 : index
    %5 = vector.load %arg3[%c0_3, %c0_4] : memref<1x128xf32, #tpu.memory_space<vmem>>, vector<1x128xf32>
    %6 = vector.broadcast %5 : vector<1x128xf32> to vector<128x128xf32>
    %7 = arith.addf %4, %6 : vector<128x128xf32>
    %cst = arith.constant 0.000000e+00 : f32
    %8 = vector.broadcast %cst : f32 to vector<128x128xf32>
    %9 = arith.cmpf oge, %7, %8 : vector<128x128xf32>
    %cst_5 = arith.constant 2.000000e-01 : f32
    %10 = vector.broadcast %cst_5 : f32 to vector<128x128xf32>
    %11 = arith.mulf %10, %7 : vector<128x128xf32>
    %12 = arith.select %9, %7, %11 : vector<128x128xi1>, vector<128x128xf32>
    %13 = arith.truncf %12 : vector<128x128xf32> to vector<128x128xbf16>
    %c0_6 = arith.constant 0 : index
    %c0_7 = arith.constant 0 : index
    %14 = vector.load %arg4[%c0_6, %c0_7] : memref<128x128xbf16, #tpu.memory_space<vmem>>, vector<128x128xbf16>
    tpu.vector_store %arg4[%c0_6, %c0_7], %13 {strides = array<i32>} : memref<128x128xbf16, #tpu.memory_space<vmem>>, vector<128x128xbf16>,
    return
  }
  func.func @transform_0(%arg0: i32) -> (i32, i32) {
    %c0_i32 = arith.constant 0 : i32
    %c0_i32_0 = arith.constant 0 : i32
    return %arg0, %c0_i32 : i32, i32
  }
  func.func @transform_1(%arg0: i32) -> (i32, i32) {
    %c0_i32 = arith.constant 0 : i32
    %c0_i32_0 = arith.constant 0 : i32
    %c0_i32_1 = arith.constant 0 : i32
    return %c0_i32, %c0_i32_0 : i32, i32
  }
  func.func @transform_2(%arg0: i32) -> (i32, i32) {
    %c0_i32 = arith.constant 0 : i32
    %c0_i32_0 = arith.constant 0 : i32
    %c0_i32_1 = arith.constant 0 : i32
    return %c0_i32, %c0_i32_0 : i32, i32
  }
  func.func @transform_3(%arg0: i32) -> (i32, i32) {
    %c0_i32 = arith.constant 0 : i32
    %c0_i32_0 = arith.constant 0 : i32
    return %arg0, %c0_i32 : i32, i32
  }
}

module attributes {stable_mosaic.version = 11 : i64} {
  func.func @_bn_apply_leaky_kernel(%arg0: i32, %arg1: memref<32x256xbf16, #tpu.memory_space<vmem>>, %arg2: memref<1x256xf32, #tpu.memory_space<vmem>>, %arg3: memref<1x256xf32, #tpu.memory_space<vmem>>, %arg4: memref<32x256xbf16, #tpu.memory_space<vmem>>) attributes {dimension_semantics = [#tpu.dimension_semantics<parallel>], iteration_bounds = array<i64: 1>, scalar_prefetch = 0 : i64, scratch_operands = 0 : i64, tpu.core_type = #tpu.core_type<tc>, window_params = [{transform_indices = @transform_0, window_bounds = array<i64: 32, 256>}, {pipeline_mode = #tpu.pipeline_mode<synchronous>, transform_indices = @transform_1, window_bounds = array<i64: 1, 256>}, {pipeline_mode = #tpu.pipeline_mode<synchronous>, transform_indices = @transform_2, window_bounds = array<i64: 1, 256>}, {transform_indices = @transform_3, window_bounds = array<i64: 32, 256>}]} {
    %c0 = arith.constant 0 : index
    %c0_0 = arith.constant 0 : index
    %0 = vector.load %arg1[%c0, %c0_0] : memref<32x256xbf16, #tpu.memory_space<vmem>>, vector<32x256xbf16>
    %1 = arith.extf %0 : vector<32x256xbf16> to vector<32x256xf32>
    %c0_1 = arith.constant 0 : index
    %c0_2 = arith.constant 0 : index
    %2 = vector.load %arg2[%c0_1, %c0_2] : memref<1x256xf32, #tpu.memory_space<vmem>>, vector<1x256xf32>
    %3 = vector.broadcast %2 : vector<1x256xf32> to vector<32x256xf32>
    %4 = arith.mulf %1, %3 : vector<32x256xf32>
    %c0_3 = arith.constant 0 : index
    %c0_4 = arith.constant 0 : index
    %5 = vector.load %arg3[%c0_3, %c0_4] : memref<1x256xf32, #tpu.memory_space<vmem>>, vector<1x256xf32>
    %6 = vector.broadcast %5 : vector<1x256xf32> to vector<32x256xf32>
    %7 = arith.addf %4, %6 : vector<32x256xf32>
    %cst = arith.constant 0.000000e+00 : f32
    %8 = vector.broadcast %cst : f32 to vector<32x256xf32>
    %9 = arith.cmpf oge, %7, %8 : vector<32x256xf32>
    %cst_5 = arith.constant 2.000000e-01 : f32
    %10 = vector.broadcast %cst_5 : f32 to vector<32x256xf32>
    %11 = arith.mulf %10, %7 : vector<32x256xf32>
    %12 = arith.select %9, %7, %11 : vector<32x256xi1>, vector<32x256xf32>
    %13 = arith.truncf %12 : vector<32x256xf32> to vector<32x256xbf16>
    %c0_6 = arith.constant 0 : index
    %c0_7 = arith.constant 0 : index
    %14 = vector.load %arg4[%c0_6, %c0_7] : memref<32x256xbf16, #tpu.memory_space<vmem>>, vector<32x256xbf16>
    tpu.vector_store %arg4[%c0_6, %c0_7], %13 {strides = array<i32>} : memref<32x256xbf16, #tpu.memory_space<vmem>>, vector<32x256xbf16>,
    return
  }
  func.func @transform_0(%arg0: i32) -> (i32, i32) {
    %c0_i32 = arith.constant 0 : i32
    %c0_i32_0 = arith.constant 0 : i32
    return %arg0, %c0_i32 : i32, i32
  }
  func.func @transform_1(%arg0: i32) -> (i32, i32) {
    %c0_i32 = arith.constant 0 : i32
    %c0_i32_0 = arith.constant 0 : i32
    %c0_i32_1 = arith.constant 0 : i32
    return %c0_i32, %c0_i32_0 : i32, i32
  }
  func.func @transform_2(%arg0: i32) -> (i32, i32) {
    %c0_i32 = arith.constant 0 : i32
    %c0_i32_0 = arith.constant 0 : i32
    %c0_i32_1 = arith.constant 0 : i32
    return %c0_i32, %c0_i32_0 : i32, i32
  }
  func.func @transform_3(%arg0: i32) -> (i32, i32) {
    %c0_i32 = arith.constant 0 : i32
    %c0_i32_0 = arith.constant 0 : i32
    return %arg0, %c0_i32 : i32, i32
  }
}

module attributes {stable_mosaic.version = 11 : i64} {
  func.func @_mm_stats_kernel(%arg0: i32, %arg1: i32, %arg2: memref<32x512xbf16, #tpu.memory_space<vmem>>, %arg3: memref<512x256xbf16, #tpu.memory_space<vmem>>, %arg4: memref<32x256xbf16, #tpu.memory_space<vmem>>, %arg5: memref<1x1x256xf32, #tpu.memory_space<vmem>>, %arg6: memref<1x1x256xf32, #tpu.memory_space<vmem>>, %arg7: memref<32x256xf32, #tpu.memory_space<vmem>>) attributes {dimension_semantics = [#tpu.dimension_semantics<parallel>, #tpu.dimension_semantics<arbitrary>], iteration_bounds = array<i64: 1, 4>, scalar_prefetch = 0 : i64, scratch_operands = 1 : i64, tpu.core_type = #tpu.core_type<tc>, window_params = [{transform_indices = @transform_0, window_bounds = array<i64: 32, 512>}, {transform_indices = @transform_1, window_bounds = array<i64: 512, 256>}, {transform_indices = @transform_2, window_bounds = array<i64: 32, 256>}, {transform_indices = @transform_3, window_bounds = array<i64: 1, 1, 256>}, {transform_indices = @transform_4, window_bounds = array<i64: 1, 1, 256>}]} {
    %c0_i32 = arith.constant 0 : i32
    %0 = arith.cmpi eq, %arg1, %c0_i32 : i32
    %1 = arith.extui %0 : i1 to i32
    %c0_i32_0 = arith.constant 0 : i32
    %2 = arith.cmpi ne, %1, %c0_i32_0 : i32
    scf.if %2 {
      %cst_9 = arith.constant 0.000000e+00 : f32
      %12 = vector.broadcast %cst_9 : f32 to vector<32x256xf32>
      %c0_10 = arith.constant 0 : index
      %c0_11 = arith.constant 0 : index
      %13 = vector.load %arg7[%c0_10, %c0_11] : memref<32x256xf32, #tpu.memory_space<vmem>>, vector<32x256xf32>
      tpu.vector_store %arg7[%c0_10, %c0_11], %12 {strides = array<i32>} : memref<32x256xf32, #tpu.memory_space<vmem>>, vector<32x256xf32>,
    } else {
    }
    %c0 = arith.constant 0 : index
    %c0_1 = arith.constant 0 : index
    %3 = vector.load %arg7[%c0, %c0_1] : memref<32x256xf32, #tpu.memory_space<vmem>>, vector<32x256xf32>
    %c0_2 = arith.constant 0 : index
    %c0_3 = arith.constant 0 : index
    %4 = vector.load %arg2[%c0_2, %c0_3] : memref<32x512xbf16, #tpu.memory_space<vmem>>, vector<32x512xbf16>
    %c0_4 = arith.constant 0 : index
    %c0_5 = arith.constant 0 : index
    %5 = vector.load %arg3[%c0_4, %c0_5] : memref<512x256xbf16, #tpu.memory_space<vmem>>, vector<512x256xbf16>
    %cst = arith.constant dense<0.000000e+00> : vector<32x256xf32>
    %6 = tpu.matmul %4, %5, %cst {dimension_numbers = #tpu.dot_dimension_numbers<[1], [0], [0], [1], [0, 0, 1, 1], [], []>} : vector<32x512xbf16>, vector<512x256xbf16>, vector<32x256xf32> -> vector<32x256xf32>
    %7 = arith.addf %3, %6 : vector<32x256xf32>
    %c0_6 = arith.constant 0 : index
    %c0_7 = arith.constant 0 : index
    %8 = vector.load %arg7[%c0_6, %c0_7] : memref<32x256xf32, #tpu.memory_space<vmem>>, vector<32x256xf32>
    tpu.vector_store %arg7[%c0_6, %c0_7], %7 {strides = array<i32>} : memref<32x256xf32, #tpu.memory_space<vmem>>, vector<32x256xf32>,
    %c3_i32 = arith.constant 3 : i32
    %9 = arith.cmpi eq, %arg1, %c3_i32 : i32
    %10 = arith.extui %9 : i1 to i32
    %c0_i32_8 = arith.constant 0 : i32
    %11 = arith.cmpi ne, %10, %c0_i32_8 : i32
    scf.if %11 {
      %c0_9 = arith.constant 0 : index
      %c0_10 = arith.constant 0 : index
      %12 = vector.load %arg7[%c0_9, %c0_10] : memref<32x256xf32, #tpu.memory_space<vmem>>, vector<32x256xf32>
      %13 = arith.truncf %12 : vector<32x256xf32> to vector<32x256xbf16>
      %c0_11 = arith.constant 0 : index
      %c0_12 = arith.constant 0 : index
      %14 = vector.load %arg4[%c0_11, %c0_12] : memref<32x256xbf16, #tpu.memory_space<vmem>>, vector<32x256xbf16>
      tpu.vector_store %arg4[%c0_11, %c0_12], %13 {strides = array<i32>} : memref<32x256xbf16, #tpu.memory_space<vmem>>, vector<32x256xbf16>,
      %cst_13 = arith.constant dense<0.000000e+00> : vector<256xf32>
      %15 = vector.multi_reduction <add>, %12, %cst_13 [0] : vector<32x256xf32> to vector<256xf32>
      %16 = vector.shape_cast %15 : vector<256xf32> to vector<1x1x256xf32>
      %c0_14 = arith.constant 0 : index
      %c0_15 = arith.constant 0 : index
      %c0_16 = arith.constant 0 : index
      %17 = vector.load %arg5[%c0_14, %c0_15, %c0_16] : memref<1x1x256xf32, #tpu.memory_space<vmem>>, vector<1x1x256xf32>
      tpu.vector_store %arg5[%c0_14, %c0_15, %c0_16], %16 {strides = array<i32>} : memref<1x1x256xf32, #tpu.memory_space<vmem>>, vector<1x1x256xf32>,
      %18 = arith.mulf %12, %12 : vector<32x256xf32>
      %cst_17 = arith.constant dense<0.000000e+00> : vector<256xf32>
      %19 = vector.multi_reduction <add>, %18, %cst_17 [0] : vector<32x256xf32> to vector<256xf32>
      %20 = vector.shape_cast %19 : vector<256xf32> to vector<1x1x256xf32>
      %c0_18 = arith.constant 0 : index
      %c0_19 = arith.constant 0 : index
      %c0_20 = arith.constant 0 : index
      %21 = vector.load %arg6[%c0_18, %c0_19, %c0_20] : memref<1x1x256xf32, #tpu.memory_space<vmem>>, vector<1x1x256xf32>
      tpu.vector_store %arg6[%c0_18, %c0_19, %c0_20], %20 {strides = array<i32>} : memref<1x1x256xf32, #tpu.memory_space<vmem>>, vector<1x1x256xf32>,
    } else {
    }
    return
  }
  func.func @transform_0(%arg0: i32, %arg1: i32) -> (i32, i32) {
    %c0_i32 = arith.constant 0 : i32
    return %arg0, %arg1 : i32, i32
  }
  func.func @transform_1(%arg0: i32, %arg1: i32) -> (i32, i32) {
    %c0_i32 = arith.constant 0 : i32
    %c0_i32_0 = arith.constant 0 : i32
    return %arg1, %c0_i32 : i32, i32
  }
  func.func @transform_2(%arg0: i32, %arg1: i32) -> (i32, i32) {
    %c0_i32 = arith.constant 0 : i32
    %c0_i32_0 = arith.constant 0 : i32
    return %arg0, %c0_i32 : i32, i32
  }
  func.func @transform_3(%arg0: i32, %arg1: i32) -> (i32, i32, i32) {
    %c0_i32 = arith.constant 0 : i32
    %c0_i32_0 = arith.constant 0 : i32
    %c0_i32_1 = arith.constant 0 : i32
    return %arg0, %c0_i32, %c0_i32_0 : i32, i32, i32
  }
  func.func @transform_4(%arg0: i32, %arg1: i32) -> (i32, i32, i32) {
    %c0_i32 = arith.constant 0 : i32
    %c0_i32_0 = arith.constant 0 : i32
    %c0_i32_1 = arith.constant 0 : i32
    return %arg0, %c0_i32, %c0_i32_0 : i32, i32, i32
  }
}

module attributes {stable_mosaic.version = 11 : i64} {
  func.func @_mm_stats_kernel(%arg0: i32, %arg1: i32, %arg2: memref<18x512xbf16, #tpu.memory_space<vmem>>, %arg3: memref<512x512xbf16, #tpu.memory_space<vmem>>, %arg4: memref<18x512xbf16, #tpu.memory_space<vmem>>, %arg5: memref<1x1x512xf32, #tpu.memory_space<vmem>>, %arg6: memref<1x1x512xf32, #tpu.memory_space<vmem>>, %arg7: memref<18x512xf32, #tpu.memory_space<vmem>>) attributes {dimension_semantics = [#tpu.dimension_semantics<parallel>, #tpu.dimension_semantics<arbitrary>], iteration_bounds = array<i64: 1, 8>, scalar_prefetch = 0 : i64, scratch_operands = 1 : i64, tpu.core_type = #tpu.core_type<tc>, window_params = [{transform_indices = @transform_0, window_bounds = array<i64: 18, 512>}, {transform_indices = @transform_1, window_bounds = array<i64: 512, 512>}, {transform_indices = @transform_2, window_bounds = array<i64: 18, 512>}, {transform_indices = @transform_3, window_bounds = array<i64: 1, 1, 512>}, {transform_indices = @transform_4, window_bounds = array<i64: 1, 1, 512>}]} {
    %c0_i32 = arith.constant 0 : i32
    %0 = arith.cmpi eq, %arg1, %c0_i32 : i32
    %1 = arith.extui %0 : i1 to i32
    %c0_i32_0 = arith.constant 0 : i32
    %2 = arith.cmpi ne, %1, %c0_i32_0 : i32
    scf.if %2 {
      %cst_9 = arith.constant 0.000000e+00 : f32
      %12 = vector.broadcast %cst_9 : f32 to vector<18x512xf32>
      %c0_10 = arith.constant 0 : index
      %c0_11 = arith.constant 0 : index
      %13 = vector.load %arg7[%c0_10, %c0_11] : memref<18x512xf32, #tpu.memory_space<vmem>>, vector<18x512xf32>
      tpu.vector_store %arg7[%c0_10, %c0_11], %12 {strides = array<i32>} : memref<18x512xf32, #tpu.memory_space<vmem>>, vector<18x512xf32>,
    } else {
    }
    %c0 = arith.constant 0 : index
    %c0_1 = arith.constant 0 : index
    %3 = vector.load %arg7[%c0, %c0_1] : memref<18x512xf32, #tpu.memory_space<vmem>>, vector<18x512xf32>
    %c0_2 = arith.constant 0 : index
    %c0_3 = arith.constant 0 : index
    %4 = vector.load %arg2[%c0_2, %c0_3] : memref<18x512xbf16, #tpu.memory_space<vmem>>, vector<18x512xbf16>
    %c0_4 = arith.constant 0 : index
    %c0_5 = arith.constant 0 : index
    %5 = vector.load %arg3[%c0_4, %c0_5] : memref<512x512xbf16, #tpu.memory_space<vmem>>, vector<512x512xbf16>
    %cst = arith.constant dense<0.000000e+00> : vector<18x512xf32>
    %6 = tpu.matmul %4, %5, %cst {dimension_numbers = #tpu.dot_dimension_numbers<[1], [0], [0], [1], [0, 0, 1, 1], [], []>} : vector<18x512xbf16>, vector<512x512xbf16>, vector<18x512xf32> -> vector<18x512xf32>
    %7 = arith.addf %3, %6 : vector<18x512xf32>
    %c0_6 = arith.constant 0 : index
    %c0_7 = arith.constant 0 : index
    %8 = vector.load %arg7[%c0_6, %c0_7] : memref<18x512xf32, #tpu.memory_space<vmem>>, vector<18x512xf32>
    tpu.vector_store %arg7[%c0_6, %c0_7], %7 {strides = array<i32>} : memref<18x512xf32, #tpu.memory_space<vmem>>, vector<18x512xf32>,
    %c7_i32 = arith.constant 7 : i32
    %9 = arith.cmpi eq, %arg1, %c7_i32 : i32
    %10 = arith.extui %9 : i1 to i32
    %c0_i32_8 = arith.constant 0 : i32
    %11 = arith.cmpi ne, %10, %c0_i32_8 : i32
    scf.if %11 {
      %c0_9 = arith.constant 0 : index
      %c0_10 = arith.constant 0 : index
      %12 = vector.load %arg7[%c0_9, %c0_10] : memref<18x512xf32, #tpu.memory_space<vmem>>, vector<18x512xf32>
      %13 = arith.truncf %12 : vector<18x512xf32> to vector<18x512xbf16>
      %c0_11 = arith.constant 0 : index
      %c0_12 = arith.constant 0 : index
      %14 = vector.load %arg4[%c0_11, %c0_12] : memref<18x512xbf16, #tpu.memory_space<vmem>>, vector<18x512xbf16>
      tpu.vector_store %arg4[%c0_11, %c0_12], %13 {strides = array<i32>} : memref<18x512xbf16, #tpu.memory_space<vmem>>, vector<18x512xbf16>,
      %cst_13 = arith.constant dense<0.000000e+00> : vector<512xf32>
      %15 = vector.multi_reduction <add>, %12, %cst_13 [0] : vector<18x512xf32> to vector<512xf32>
      %16 = vector.shape_cast %15 : vector<512xf32> to vector<1x1x512xf32>
      %c0_14 = arith.constant 0 : index
      %c0_15 = arith.constant 0 : index
      %c0_16 = arith.constant 0 : index
      %17 = vector.load %arg5[%c0_14, %c0_15, %c0_16] : memref<1x1x512xf32, #tpu.memory_space<vmem>>, vector<1x1x512xf32>
      tpu.vector_store %arg5[%c0_14, %c0_15, %c0_16], %16 {strides = array<i32>} : memref<1x1x512xf32, #tpu.memory_space<vmem>>, vector<1x1x512xf32>,
      %18 = arith.mulf %12, %12 : vector<18x512xf32>
      %cst_17 = arith.constant dense<0.000000e+00> : vector<512xf32>
      %19 = vector.multi_reduction <add>, %18, %cst_17 [0] : vector<18x512xf32> to vector<512xf32>
      %20 = vector.shape_cast %19 : vector<512xf32> to vector<1x1x512xf32>
      %c0_18 = arith.constant 0 : index
      %c0_19 = arith.constant 0 : index
      %c0_20 = arith.constant 0 : index
      %21 = vector.load %arg6[%c0_18, %c0_19, %c0_20] : memref<1x1x512xf32, #tpu.memory_space<vmem>>, vector<1x1x512xf32>
      tpu.vector_store %arg6[%c0_18, %c0_19, %c0_20], %20 {strides = array<i32>} : memref<1x1x512xf32, #tpu.memory_space<vmem>>, vector<1x1x512xf32>,
    } else {
    }
    return
  }
  func.func @transform_0(%arg0: i32, %arg1: i32) -> (i32, i32) {
    %c0_i32 = arith.constant 0 : i32
    return %arg0, %arg1 : i32, i32
  }
  func.func @transform_1(%arg0: i32, %arg1: i32) -> (i32, i32) {
    %c0_i32 = arith.constant 0 : i32
    %c0_i32_0 = arith.constant 0 : i32
    return %arg1, %c0_i32 : i32, i32
  }
  func.func @transform_2(%arg0: i32, %arg1: i32) -> (i32, i32) {
    %c0_i32 = arith.constant 0 : i32
    %c0_i32_0 = arith.constant 0 : i32
    return %arg0, %c0_i32 : i32, i32
  }
  func.func @transform_3(%arg0: i32, %arg1: i32) -> (i32, i32, i32) {
    %c0_i32 = arith.constant 0 : i32
    %c0_i32_0 = arith.constant 0 : i32
    %c0_i32_1 = arith.constant 0 : i32
    return %arg0, %c0_i32, %c0_i32_0 : i32, i32, i32
  }
  func.func @transform_4(%arg0: i32, %arg1: i32) -> (i32, i32, i32) {
    %c0_i32 = arith.constant 0 : i32
    %c0_i32_0 = arith.constant 0 : i32
    %c0_i32_1 = arith.constant 0 : i32
    return %arg0, %c0_i32, %c0_i32_0 : i32, i32, i32
  }
}

module attributes {stable_mosaic.version = 11 : i64} {
  func.func @_bn_apply_leaky_kernel(%arg0: i32, %arg1: memref<18x512xbf16, #tpu.memory_space<vmem>>, %arg2: memref<1x512xf32, #tpu.memory_space<vmem>>, %arg3: memref<1x512xf32, #tpu.memory_space<vmem>>, %arg4: memref<18x512xbf16, #tpu.memory_space<vmem>>) attributes {dimension_semantics = [#tpu.dimension_semantics<parallel>], iteration_bounds = array<i64: 1>, scalar_prefetch = 0 : i64, scratch_operands = 0 : i64, tpu.core_type = #tpu.core_type<tc>, window_params = [{transform_indices = @transform_0, window_bounds = array<i64: 18, 512>}, {pipeline_mode = #tpu.pipeline_mode<synchronous>, transform_indices = @transform_1, window_bounds = array<i64: 1, 512>}, {pipeline_mode = #tpu.pipeline_mode<synchronous>, transform_indices = @transform_2, window_bounds = array<i64: 1, 512>}, {transform_indices = @transform_3, window_bounds = array<i64: 18, 512>}]} {
    %c0 = arith.constant 0 : index
    %c0_0 = arith.constant 0 : index
    %0 = vector.load %arg1[%c0, %c0_0] : memref<18x512xbf16, #tpu.memory_space<vmem>>, vector<18x512xbf16>
    %1 = arith.extf %0 : vector<18x512xbf16> to vector<18x512xf32>
    %c0_1 = arith.constant 0 : index
    %c0_2 = arith.constant 0 : index
    %2 = vector.load %arg2[%c0_1, %c0_2] : memref<1x512xf32, #tpu.memory_space<vmem>>, vector<1x512xf32>
    %3 = vector.broadcast %2 : vector<1x512xf32> to vector<18x512xf32>
    %4 = arith.mulf %1, %3 : vector<18x512xf32>
    %c0_3 = arith.constant 0 : index
    %c0_4 = arith.constant 0 : index
    %5 = vector.load %arg3[%c0_3, %c0_4] : memref<1x512xf32, #tpu.memory_space<vmem>>, vector<1x512xf32>
    %6 = vector.broadcast %5 : vector<1x512xf32> to vector<18x512xf32>
    %7 = arith.addf %4, %6 : vector<18x512xf32>
    %cst = arith.constant 0.000000e+00 : f32
    %8 = vector.broadcast %cst : f32 to vector<18x512xf32>
    %9 = arith.cmpf oge, %7, %8 : vector<18x512xf32>
    %cst_5 = arith.constant 2.000000e-01 : f32
    %10 = vector.broadcast %cst_5 : f32 to vector<18x512xf32>
    %11 = arith.mulf %10, %7 : vector<18x512xf32>
    %12 = arith.select %9, %7, %11 : vector<18x512xi1>, vector<18x512xf32>
    %13 = arith.truncf %12 : vector<18x512xf32> to vector<18x512xbf16>
    %c0_6 = arith.constant 0 : index
    %c0_7 = arith.constant 0 : index
    %14 = vector.load %arg4[%c0_6, %c0_7] : memref<18x512xbf16, #tpu.memory_space<vmem>>, vector<18x512xbf16>
    tpu.vector_store %arg4[%c0_6, %c0_7], %13 {strides = array<i32>} : memref<18x512xbf16, #tpu.memory_space<vmem>>, vector<18x512xbf16>,
    return
  }
  func.func @transform_0(%arg0: i32) -> (i32, i32) {
    %c0_i32 = arith.constant 0 : i32
    %c0_i32_0 = arith.constant 0 : i32
    return %arg0, %c0_i32 : i32, i32
  }
  func.func @transform_1(%arg0: i32) -> (i32, i32) {
    %c0_i32 = arith.constant 0 : i32
    %c0_i32_0 = arith.constant 0 : i32
    %c0_i32_1 = arith.constant 0 : i32
    return %c0_i32, %c0_i32_0 : i32, i32
  }
  func.func @transform_2(%arg0: i32) -> (i32, i32) {
    %c0_i32 = arith.constant 0 : i32
    %c0_i32_0 = arith.constant 0 : i32
    %c0_i32_1 = arith.constant 0 : i32
    return %c0_i32, %c0_i32_0 : i32, i32
  }
  func.func @transform_3(%arg0: i32) -> (i32, i32) {
    %c0_i32 = arith.constant 0 : i32
    %c0_i32_0 = arith.constant 0 : i32
    return %arg0, %c0_i32 : i32, i32
  }
}

module attributes {stable_mosaic.version = 11 : i64} {
  func.func @_mm_bias_kernel(%arg0: i32, %arg1: i32, %arg2: memref<8x512xbf16, #tpu.memory_space<vmem>>, %arg3: memref<512x128xbf16, #tpu.memory_space<vmem>>, %arg4: memref<1x128xf32, #tpu.memory_space<vmem>>, %arg5: memref<8x128xf32, #tpu.memory_space<vmem>>, %arg6: memref<8x128xf32, #tpu.memory_space<vmem>>) attributes {dimension_semantics = [#tpu.dimension_semantics<parallel>, #tpu.dimension_semantics<arbitrary>], iteration_bounds = array<i64: 1, 16>, scalar_prefetch = 0 : i64, scratch_operands = 1 : i64, tpu.core_type = #tpu.core_type<tc>, window_params = [{transform_indices = @transform_0, window_bounds = array<i64: 8, 512>}, {transform_indices = @transform_1, window_bounds = array<i64: 512, 128>}, {pipeline_mode = #tpu.pipeline_mode<synchronous>, transform_indices = @transform_2, window_bounds = array<i64: 1, 128>}, {transform_indices = @transform_3, window_bounds = array<i64: 8, 128>}]} {
    %c0_i32 = arith.constant 0 : i32
    %0 = arith.cmpi eq, %arg1, %c0_i32 : i32
    %1 = arith.extui %0 : i1 to i32
    %c0_i32_0 = arith.constant 0 : i32
    %2 = arith.cmpi ne, %1, %c0_i32_0 : i32
    scf.if %2 {
      %cst_9 = arith.constant 0.000000e+00 : f32
      %12 = vector.broadcast %cst_9 : f32 to vector<8x128xf32>
      %c0_10 = arith.constant 0 : index
      %c0_11 = arith.constant 0 : index
      %13 = vector.load %arg6[%c0_10, %c0_11] : memref<8x128xf32, #tpu.memory_space<vmem>>, vector<8x128xf32>
      tpu.vector_store %arg6[%c0_10, %c0_11], %12 {strides = array<i32>} : memref<8x128xf32, #tpu.memory_space<vmem>>, vector<8x128xf32>,
    } else {
    }
    %c0 = arith.constant 0 : index
    %c0_1 = arith.constant 0 : index
    %3 = vector.load %arg6[%c0, %c0_1] : memref<8x128xf32, #tpu.memory_space<vmem>>, vector<8x128xf32>
    %c0_2 = arith.constant 0 : index
    %c0_3 = arith.constant 0 : index
    %4 = vector.load %arg2[%c0_2, %c0_3] : memref<8x512xbf16, #tpu.memory_space<vmem>>, vector<8x512xbf16>
    %c0_4 = arith.constant 0 : index
    %c0_5 = arith.constant 0 : index
    %5 = vector.load %arg3[%c0_4, %c0_5] : memref<512x128xbf16, #tpu.memory_space<vmem>>, vector<512x128xbf16>
    %cst = arith.constant dense<0.000000e+00> : vector<8x128xf32>
    %6 = tpu.matmul %4, %5, %cst {dimension_numbers = #tpu.dot_dimension_numbers<[1], [0], [0], [1], [0, 0, 1, 1], [], []>} : vector<8x512xbf16>, vector<512x128xbf16>, vector<8x128xf32> -> vector<8x128xf32>
    %7 = arith.addf %3, %6 : vector<8x128xf32>
    %c0_6 = arith.constant 0 : index
    %c0_7 = arith.constant 0 : index
    %8 = vector.load %arg6[%c0_6, %c0_7] : memref<8x128xf32, #tpu.memory_space<vmem>>, vector<8x128xf32>
    tpu.vector_store %arg6[%c0_6, %c0_7], %7 {strides = array<i32>} : memref<8x128xf32, #tpu.memory_space<vmem>>, vector<8x128xf32>,
    %c15_i32 = arith.constant 15 : i32
    %9 = arith.cmpi eq, %arg1, %c15_i32 : i32
    %10 = arith.extui %9 : i1 to i32
    %c0_i32_8 = arith.constant 0 : i32
    %11 = arith.cmpi ne, %10, %c0_i32_8 : i32
    scf.if %11 {
      %c0_9 = arith.constant 0 : index
      %c0_10 = arith.constant 0 : index
      %12 = vector.load %arg6[%c0_9, %c0_10] : memref<8x128xf32, #tpu.memory_space<vmem>>, vector<8x128xf32>
      %c0_11 = arith.constant 0 : index
      %c0_12 = arith.constant 0 : index
      %13 = vector.load %arg4[%c0_11, %c0_12] : memref<1x128xf32, #tpu.memory_space<vmem>>, vector<1x128xf32>
      %14 = vector.broadcast %13 : vector<1x128xf32> to vector<8x128xf32>
      %15 = arith.addf %12, %14 : vector<8x128xf32>
      %c0_13 = arith.constant 0 : index
      %c0_14 = arith.constant 0 : index
      %16 = vector.load %arg5[%c0_13, %c0_14] : memref<8x128xf32, #tpu.memory_space<vmem>>, vector<8x128xf32>
      tpu.vector_store %arg5[%c0_13, %c0_14], %15 {strides = array<i32>} : memref<8x128xf32, #tpu.memory_space<vmem>>, vector<8x128xf32>,
    } else {
    }
    return
  }
  func.func @transform_0(%arg0: i32, %arg1: i32) -> (i32, i32) {
    %c0_i32 = arith.constant 0 : i32
    return %arg0, %arg1 : i32, i32
  }
  func.func @transform_1(%arg0: i32, %arg1: i32) -> (i32, i32) {
    %c0_i32 = arith.constant 0 : i32
    %c0_i32_0 = arith.constant 0 : i32
    return %arg1, %c0_i32 : i32, i32
  }
  func.func @transform_2(%arg0: i32, %arg1: i32) -> (i32, i32) {
    %c0_i32 = arith.constant 0 : i32
    %c0_i32_0 = arith.constant 0 : i32
    %c0_i32_1 = arith.constant 0 : i32
    return %c0_i32, %c0_i32_0 : i32, i32
  }
  func.func @transform_3(%arg0: i32, %arg1: i32) -> (i32, i32) {
    %c0_i32 = arith.constant 0 : i32
    %c0_i32_0 = arith.constant 0 : i32
    return %arg0, %c0_i32 : i32, i32
  }
}

</mosaic_0001>

<llo_original>
// kernel: _lambda_.9
$region0: #{_lambda_.9}
  #allocation0 [shape = 'u32[]', space=smem, size = 0x4, offset = 0x4, fixed_abs, tag = 'smem constant byte address 0x4 - core index']
  #allocation1 [shape = 'u32[144,128]{1,0:T(1,128)}', space=vmem, size = 0x12000, scoped, tag = 'internal scratch']
  #allocation2 [shape = 'f32[256,64]{1,0:T(8,128)}', space=vmem, size = 0x20000, scoped, tag = 'scratch operand']
  %s0 = inlined_call_operand.vmem [shape: bf16[512,96], index: 0, kind: input, shape index: {}]
  %s1 = inlined_call_operand.vmem [shape: bf16[96,64], index: 1, kind: input, shape index: {}]
  %s2 = inlined_call_operand.vmem [shape: bf16[512,64], index: 2, kind: output, shape index: {0}]
  %s3 = inlined_call_operand.vmem [shape: f32[2,1,64], index: 3, kind: output, shape index: {1}]
  %s4 = inlined_call_operand.vmem [shape: f32[2,1,64], index: 4, kind: output, shape index: {2}]
  %5 = xla_tuple %s2, %s3, %s4
  %s6 = sld [smem:[#allocation0]]
  $region65: #{_lambda_.9} parent=0
    _
  %s8 = ssub.s32 1, %s6
  %s9 = scalar_select 0, %s8, %s6
  loop: start=0, step=1, limit=4
  $region2: #{_lambda_.9} parent=0 // loop_pre_header
    _
  $region3: #{_lambda_.9} parent=0 // loop_header
    %s11 = sphi 0, %s15
    %p12 = scmp.ge.s32.totalorder %s11, 4
    %s18 = sphi 0, %s30
    %s19 = sphi 0, %s26
    %s20 = sphi 0, %s18
    %s21 = sphi 0, %s19
    %s22 = sphi 0, %s20
    %s23 = sphi 0, %s21
    %s35 = sphi 0, %s37
    %s38 = sphi 0, %s35
    %s39 = sphi 0, %s38
    %s55 = sphi 0, %s39
    %s61 = sphi 0, %s63
    %s64 = sphi 0, %s61
    %s65 = sphi 0, %s64
    %s81 = sphi 0, %s65
    %s87 = sphi 0, %s89
    %s90 = sphi 0, %s87
    %s91 = sphi 0, %s90
    %s107 = sphi 0, %s91
    %s113 = sphi 0, %s115
    %s116 = sphi 0, %s113
    %s117 = sphi 0, %s116
    %s133 = sphi 0, %s117
    %s139 = sphi 0, %s141
    %s142 = sphi 0, %s139
    %s143 = sphi 0, %s142
    %s159 = sphi 0, %s143
  $region4: #{_lambda_.9} parent=0 // loop_header_branch
    %14 = sbr.rel (%p12) target = $region8
  $region5: #{_lambda_.9} parent=0 // loop_body
    %s16 = ssub.s32 %s11, 1
    %s17 = ssub.s32 %s11, 2
    %s24 = sadd.s32 1, %s19
    %p25 = scmp.ge.s32.totalorder %s24, 1
    %s26 = scalar_select %p25, 0, %s24
    %s27 = sadd.s32 1, %s18
    %s28 = scalar_select %p25, %s27, %s18
    %p29 = scmp.ge.s32.totalorder %s28, 2
    %s30 = scalar_select %p29, 0, %s28
    %s31 = ssub.s32 %s18, %s30
    %s32 = ssub.s32 %s19, %s26
    %s33 = sor.u32 %s31, %s32
    %p34 = scmp.eq.s32.totalorder %s33, 0
    %s36 = sadd.s32 %s35, 1
    %s37 = scalar_select %p34, %s35, %s36
    %p40 = pneg %p34
    %p41 = scmp.eq.s32.totalorder %s11, 1
    %p42 = por %p40, %p41
    %p43 = scmp.ne.s32.totalorder %s35, %s38
    %p44 = scmp.eq.s32.totalorder %s11, 0
    %p45 = por %p43, %p44
    %p46 = scmp.ne.s32.totalorder %s35, %s38
    %p47 = scmp.eq.s32.totalorder %s16, 1
    %p48 = por %p46, %p47
    %p49 = scmp.ne.s32.totalorder %s38, %s39
    %p50 = scmp.eq.s32.totalorder %s16, 0
    %p51 = por %p49, %p50
    %p52 = scmp.ne.s32.totalorder %s38, %s39
    %p53 = scmp.eq.s32.totalorder %s17, 1
    %p54 = por %p52, %p53
    %p56 = scmp.ne.s32.totalorder %s39, %s55
    %p57 = scmp.eq.s32.totalorder %s17, 0
    %p58 = por %p56, %p57
    %s59 = ssub.s32 %s19, %s26
    %p60 = scmp.eq.s32.totalorder %s59, 0
    %s62 = sadd.s32 %s61, 1
    %s63 = scalar_select %p60, %s61, %s62
    %p66 = pneg %p60
    %p67 = scmp.eq.s32.totalorder %s11, 1
    %p68 = por %p66, %p67
    %p69 = scmp.ne.s32.totalorder %s61, %s64
    %p70 = scmp.eq.s32.totalorder %s11, 0
    %p71 = por %p69, %p70
    %p72 = scmp.ne.s32.totalorder %s61, %s64
    %p73 = scmp.eq.s32.totalorder %s16, 1
    %p74 = por %p72, %p73
    %p75 = scmp.ne.s32.totalorder %s64, %s65
    %p76 = scmp.eq.s32.totalorder %s16, 0
    %p77 = por %p75, %p76
    %p78 = scmp.ne.s32.totalorder %s64, %s65
    %p79 = scmp.eq.s32.totalorder %s17, 1
    %p80 = por %p78, %p79
    %p82 = scmp.ne.s32.totalorder %s65, %s81
    %p83 = scmp.eq.s32.totalorder %s17, 0
    %p84 = por %p82, %p83
    %s85 = ssub.s32 %s18, %s30
    %p86 = scmp.eq.s32.totalorder %s85, 0
    %s88 = sadd.s32 %s87, 1
    %s89 = scalar_select %p86, %s87, %s88
    %p92 = pneg %p86
    %p93 = scmp.eq.s32.totalorder %s11, 1
    %p94 = por %p92, %p93
    %p95 = scmp.ne.s32.totalorder %s87, %s90
    %p96 = scmp.eq.s32.totalorder %s11, 0
    %p97 = por %p95, %p96
    %p98 = scmp.ne.s32.totalorder %s87, %s90
    %p99 = scmp.eq.s32.totalorder %s16, 1
    %p100 = por %p98, %p99
    %p101 = scmp.ne.s32.totalorder %s90, %s91
    %p102 = scmp.eq.s32.totalorder %s16, 0
    %p103 = por %p101, %p102
    %p104 = scmp.ne.s32.totalorder %s90, %s91
    %p105 = scmp.eq.s32.totalorder %s17, 1
    %p106 = por %p104, %p105
    %p108 = scmp.ne.s32.totalorder %s91, %s107
    %p109 = scmp.eq.s32.totalorder %s17, 0
    %p110 = por %p108, %p109
    %s111 = ssub.s32 %s18, %s30
    %p112 = scmp.eq.s32.totalorder %s111, 0
    %s114 = sadd.s32 %s113, 1
    %s115 = scalar_select %p112, %s113, %s114
    %p118 = pneg %p112
    %p119 = scmp.eq.s32.totalorder %s11, 1
    %p120 = por %p118, %p119
    %p121 = scmp.ne.s32.totalorder %s113, %s116
    %p122 = scmp.eq.s32.totalorder %s11, 0
    %p123 = por %p121, %p122
    %p124 = scmp.ne.s32.totalorder %s113, %s116
    %p125 = scmp.eq.s32.totalorder %s16, 1
    %p126 = por %p124, %p125
    %p127 = scmp.ne.s32.totalorder %s116, %s117
    %p128 = scmp.eq.s32.totalorder %s16, 0
    %p129 = por %p127, %p128
    %p130 = scmp.ne.s32.totalorder %s116, %s117
    %p131 = scmp.eq.s32.totalorder %s17, 1
    %p132 = por %p130, %p131
    %p134 = scmp.ne.s32.totalorder %s117, %s133
    %p135 = scmp.eq.s32.totalorder %s17, 0
    %p136 = por %p134, %p135
    %s137 = ssub.s32 %s18, %s30
    %p138 = scmp.eq.s32.totalorder %s137, 0
    %s140 = sadd.s32 %s139, 1
    %s141 = scalar_select %p138, %s139, %s140
    %p144 = pneg %p138
    %p145 = scmp.eq.s32.totalorder %s11, 1
    %p146 = por %p144, %p145
    %p147 = scmp.ne.s32.totalorder %s139, %s142
    %p148 = scmp.eq.s32.totalorder %s11, 0
    %p149 = por %p147, %p148
    %p150 = scmp.ne.s32.totalorder %s139, %s142
    %p151 = scmp.eq.s32.totalorder %s16, 1
    %p152 = por %p150, %p151
    %p153 = scmp.ne.s32.totalorder %s142, %s143
    %p154 = scmp.eq.s32.totalorder %s16, 0
    %p155 = por %p153, %p154
    %p156 = scmp.ne.s32.totalorder %s142, %s143
    %p157 = scmp.eq.s32.totalorder %s17, 1
    %p158 = por %p156, %p157
    %p160 = scmp.ne.s32.totalorder %s143, %s159
    %p161 = scmp.eq.s32.totalorder %s17, 0
    %p162 = por %p160, %p161
    %p163 = scmp.le.s32.totalorder 1, %s11
    %p164 = scmp.lt.s32.totalorder %s11, 3
    %p165 = pnand %p163, %p164
    %p166 = pneg %p165
    // Predicated region
    $region9: #{_lambda_.9} parent=5 // pred_check
      _
    $region10: #{_lambda_.9} parent=5 // pred_check_branch
      %168 = sbr.rel (%p165) target = $region12
    $region11: #{_lambda_.9} parent=5 // pred_region
      %s169 = ssub.s32 %s11, 1
      // Predicated region
      $region13: #{_lambda_.9} parent=11 // pred_check
        %p170 = pneg %p77
      $region14: #{_lambda_.9} parent=11 // pred_check_branch
        %172 = sbr.rel (%p170) target = $region16
      $region15: #{_lambda_.9} parent=11 // pred_region
        %s173 = smul.u32 12, %s21
        %p174 = scmp.lt.s32.totalorder %s173, 11
        %s175 = scalar_select %p174, %s173, 11
        %s176 = smul.addr %s175, 4
        %s177 = scalar_lea.vmem %s1, %s176
        %s178 = smul.u32 12, %s21
      $region16: #{_lambda_.9} parent=11 // pred_fallthru
        _
    $region12: #{_lambda_.9} parent=5 // pred_fallthru
      _
    %p179 = scmp.lt.s32.totalorder %s11, 2
    // Predicated region
    $region17: #{_lambda_.9} parent=5 // pred_check
      %p180 = pneg %p179
    $region18: #{_lambda_.9} parent=5 // pred_check_branch
      %182 = sbr.rel (%p180) target = $region20
    $region19: #{_lambda_.9} parent=5 // pred_region
      // Predicated region
      $region21: #{_lambda_.9} parent=19 // pred_check
        %p183 = pneg %p45
      $region22: #{_lambda_.9} parent=19 // pred_check_branch
        %185 = sbr.rel (%p183) target = $region24
      $region23: #{_lambda_.9} parent=19 // pred_region
        %s186 = smul.u32 32, %s18
        %p187 = scmp.lt.s32.totalorder %s186, 63
        %s188 = scalar_select %p187, %s186, 63
        %p189 = scmp.lt.s32.totalorder %s19, 0
        %s190 = scalar_select %p189, %s19, 0
        %s191 = sadd.s32 %s190, %s188
        %s192 = smul.addr %s191, 4
        %s193 = scalar_lea.vmem %s0, %s192
        %s194 = smul.u32 32, %s18
      $region24: #{_lambda_.9} parent=19 // pred_fallthru
        _
    $region20: #{_lambda_.9} parent=5 // pred_fallthru
      _
    %p195 = scmp.le.s32.totalorder 1, %s11
    %p196 = scmp.lt.s32.totalorder %s11, 3
    %p197 = pnand %p195, %p196
    %p198 = pneg %p197
    // Predicated region
    $region25: #{_lambda_.9} parent=5 // pred_check
      _
    $region26: #{_lambda_.9} parent=5 // pred_check_branch
      %200 = sbr.rel (%p197) target = $region28
    $region27: #{_lambda_.9} parent=5 // pred_region
      %s201 = ssub.s32 %s11, 1
      %s202 = smul.u32 32, %s20
      %p203 = scmp.lt.s32.totalorder %s202, 63
      %s204 = scalar_select %p203, %s202, 63
      %p205 = scmp.lt.s32.totalorder %s21, 0
      %s206 = scalar_select %p205, %s21, 0
      %s207 = sadd.s32 %s206, %s204
      %s208 = smul.addr %s207, 4
      %s209 = scalar_lea.vmem %s0, %s208
      %p210 = pneg %p51
      %p211 = pneg %p48
      %s212 = smul.u32 12, %s21
      %p213 = scmp.lt.s32.totalorder %s212, 11
      %s214 = scalar_select %p213, %s212, 11
      %s215 = smul.addr %s214, 4
      %s216 = scalar_lea.vmem %s1, %s215
      %p217 = pneg %p77
      %p218 = pneg %p74
      %p219 = pneg %p103
      %p220 = pneg %p100
      %s221 = smul.u32 32, %s20
      %p222 = scmp.lt.s32.totalorder %s221, 63
      %s223 = scalar_select %p222, %s221, 63
      %s224 = smul.addr %s223, 4
      %s225 = scalar_lea.vmem %s2, %s224
      %p226 = pneg %p129
      %p227 = pneg %p126
      %p228 = scmp.lt.s32.totalorder %s20, 1
      %s229 = scalar_select %p228, %s20, 1
      %s230 = scalar_lea.vmem %s3, %s229
      %p231 = pneg %p155
      %p232 = pneg %p152
      %p233 = scmp.lt.s32.totalorder %s20, 1
      %s234 = scalar_select %p233, %s20, 1
      %s235 = scalar_lea.vmem %s4, %s234
      %s236 = smul.u32 32, %s20
      %p237 = scmp.lt.s32.totalorder %s236, 63
      %s238 = scalar_select %p237, %s236, 63
      %p239 = scmp.lt.s32.totalorder %s21, 0
      %s240 = scalar_select %p239, %s21, 0
      %s241 = sadd.s32 %s240, %s238
      %s242 = smul.addr %s241, 4
      %s243 = scalar_lea.vmem %s0, %s242
      %s244 = smul.u32 32, %s20
      %s245 = smul.u32 12, %s21
      %p246 = scmp.lt.s32.totalorder %s245, 11
      %s247 = scalar_select %p246, %s245, 11
      %s248 = smul.addr %s247, 4
      %s249 = scalar_lea.vmem %s1, %s248
      %s250 = smul.u32 12, %s21
      %s251 = smul.u32 32, %s20
      %p252 = scmp.lt.s32.totalorder %s251, 63
      %s253 = scalar_select %p252, %s251, 63
      %s254 = smul.addr %s253, 4
      %s255 = scalar_lea.vmem %s2, %s254
      %s256 = smul.u32 32, %s20
      %p257 = scmp.lt.s32.totalorder %s20, 1
      %s258 = scalar_select %p257, %s20, 1
      %s259 = scalar_lea.vmem %s3, %s258
      %p260 = scmp.lt.s32.totalorder %s20, 1
      %s261 = scalar_select %p260, %s20, 1
      %s262 = scalar_lea.vmem %s4, %s261
      %p264 = scmp.eq.s32.totalorder %s21, 0
      // Predicated region
      $region29: #{_lambda_.9} parent=27 // pred_check
        %p265 = pneg %p264
      $region30: #{_lambda_.9} parent=27 // pred_check_branch
        %267 = sbr.rel (%p265) target = $region32
      $region31: #{_lambda_.9} parent=27 // pred_region
        %vm268 = vcmask 523264
        %269 = vst.msk [vmem:[#allocation2] sm:$0xff] %vm268, 0.0
        %270 = vst.msk [vmem:[#allocation2 + $0x8] sm:$0xff] %vm268, 0.0
        %271 = vst.msk [vmem:[#allocation2 + $0x10] sm:$0xff] %vm268, 0.0
        %272 = vst.msk [vmem:[#allocation2 + $0x18] sm:$0xff] %vm268, 0.0
        %273 = vst.msk [vmem:[#allocation2 + $0x20] sm:$0xff] %vm268, 0.0
        %274 = vst.msk [vmem:[#allocation2 + $0x28] sm:$0xff] %vm268, 0.0
        %275 = vst.msk [vmem:[#allocation2 + $0x30] sm:$0xff] %vm268, 0.0
        %276 = vst.msk [vmem:[#allocation2 + $0x38] sm:$0xff] %vm268, 0.0
        %277 = vst.msk [vmem:[#allocation2 + $0x40] sm:$0xff] %vm268, 0.0
        %278 = vst.msk [vmem:[#allocation2 + $0x48] sm:$0xff] %vm268, 0.0
        %279 = vst.msk [vmem:[#allocation2 + $0x50] sm:$0xff] %vm268, 0.0
        %280 = vst.msk [vmem:[#allocation2 + $0x58] sm:$0xff] %vm268, 0.0
        %281 = vst.msk [vmem:[#allocation2 + $0x60] sm:$0xff] %vm268, 0.0
        %282 = vst.msk [vmem:[#allocation2 + $0x68] sm:$0xff] %vm268, 0.0
        %283 = vst.msk [vmem:[#allocation2 + $0x70] sm:$0xff] %vm268, 0.0
        %284 = vst.msk [vmem:[#allocation2 + $0x78] sm:$0xff] %vm268, 0.0
        %285 = vst.msk [vmem:[#allocation2 + $0x80] sm:$0xff] %vm268, 0.0
        %286 = vst.msk [vmem:[#allocation2 + $0x88] sm:$0xff] %vm268, 0.0
        %287 = vst.msk [vmem:[#allocation2 + $0x90] sm:$0xff] %vm268, 0.0
        %288 = vst.msk [vmem:[#allocation2 + $0x98] sm:$0xff] %vm268, 0.0
        %289 = vst.msk [vmem:[#allocation2 + $0xa0] sm:$0xff] %vm268, 0.0
        %290 = vst.msk [vmem:[#allocation2 + $0xa8] sm:$0xff] %vm268, 0.0
        %291 = vst.msk [vmem:[#allocation2 + $0xb0] sm:$0xff] %vm268, 0.0
        %292 = vst.msk [vmem:[#allocation2 + $0xb8] sm:$0xff] %vm268, 0.0
        %293 = vst.msk [vmem:[#allocation2 + $0xc0] sm:$0xff] %vm268, 0.0
        %294 = vst.msk [vmem:[#allocation2 + $0xc8] sm:$0xff] %vm268, 0.0
        %295 = vst.msk [vmem:[#allocation2 + $0xd0] sm:$0xff] %vm268, 0.0
        %296 = vst.msk [vmem:[#allocation2 + $0xd8] sm:$0xff] %vm268, 0.0
        %297 = vst.msk [vmem:[#allocation2 + $0xe0] sm:$0xff] %vm268, 0.0
        %298 = vst.msk [vmem:[#allocation2 + $0xe8] sm:$0xff] %vm268, 0.0
        %299 = vst.msk [vmem:[#allocation2 + $0xf0] sm:$0xff] %vm268, 0.0
        %300 = vst.msk [vmem:[#allocation2 + $0xf8] sm:$0xff] %vm268, 0.0
      $region32: #{_lambda_.9} parent=27 // pred_fallthru
        _
      %v301 = vld [vmem:[#allocation2] sm:$0xff]
      %v302 = vld [vmem:[#allocation2 + $0x8] sm:$0xff]
      %v303 = vld [vmem:[#allocation2 + $0x10] sm:$0xff]
      %v304 = vld [vmem:[#allocation2 + $0x18] sm:$0xff]
      %v305 = vld [vmem:[#allocation2 + $0x20] sm:$0xff]
      %v306 = vld [vmem:[#allocation2 + $0x28] sm:$0xff]
      %v307 = vld [vmem:[#allocation2 + $0x30] sm:$0xff]
      %v308 = vld [vmem:[#allocation2 + $0x38] sm:$0xff]
      %v309 = vld [vmem:[#allocation2 + $0x40] sm:$0xff]
      %v310 = vld [vmem:[#allocation2 + $0x48] sm:$0xff]
      %v311 = vld [vmem:[#allocation2 + $0x50] sm:$0xff]
      %v312 = vld [vmem:[#allocation2 + $0x58] sm:$0xff]
      %v313 = vld [vmem:[#allocation2 + $0x60] sm:$0xff]
      %v314 = vld [vmem:[#allocation2 + $0x68] sm:$0xff]
      %v315 = vld [vmem:[#allocation2 + $0x70] sm:$0xff]
      %v316 = vld [vmem:[#allocation2 + $0x78] sm:$0xff]
      %v317 = vld [vmem:[#allocation2 + $0x80] sm:$0xff]
      %v318 = vld [vmem:[#allocation2 + $0x88] sm:$0xff]
      %v319 = vld [vmem:[#allocation2 + $0x90] sm:$0xff]
      %v320 = vld [vmem:[#allocation2 + $0x98] sm:$0xff]
      %v321 = vld [vmem:[#allocation2 + $0xa0] sm:$0xff]
      %v322 = vld [vmem:[#allocation2 + $0xa8] sm:$0xff]
      %v323 = vld [vmem:[#allocation2 + $0xb0] sm:$0xff]
      %v324 = vld [vmem:[#allocation2 + $0xb8] sm:$0xff]
      %v325 = vld [vmem:[#allocation2 + $0xc0] sm:$0xff]
      %v326 = vld [vmem:[#allocation2 + $0xc8] sm:$0xff]
      %v327 = vld [vmem:[#allocation2 + $0xd0] sm:$0xff]
      %v328 = vld [vmem:[#allocation2 + $0xd8] sm:$0xff]
      %v329 = vld [vmem:[#allocation2 + $0xe0] sm:$0xff]
      %v330 = vld [vmem:[#allocation2 + $0xe8] sm:$0xff]
      %v331 = vld [vmem:[#allocation2 + $0xf0] sm:$0xff]
      %v332 = vld [vmem:[#allocation2 + $0xf8] sm:$0xff]
      %v333 = vld [vmem:[%s243] sm:$0xf]
      %v334 = vld [vmem:[%s243 + $0x4] sm:$0xf]
      %v335 = vld [vmem:[%s243 + $0x8] sm:$0xf]
      %v336 = vld [vmem:[%s243 + $0xc] sm:$0xf]
      %v337 = vld [vmem:[%s243 + $0x10] sm:$0xf]
      %v338 = vld [vmem:[%s243 + $0x14] sm:$0xf]
      %v339 = vld [vmem:[%s243 + $0x18] sm:$0xf]
      %v340 = vld [vmem:[%s243 + $0x1c] sm:$0xf]
      %v341 = vld [vmem:[%s243 + $0x20] sm:$0xf]
      %v342 = vld [vmem:[%s243 + $0x24] sm:$0xf]
      %v343 = vld [vmem:[%s243 + $0x28] sm:$0xf]
      %v344 = vld [vmem:[%s243 + $0x2c] sm:$0xf]
      %v345 = vld [vmem:[%s243 + $0x30] sm:$0xf]
      %v346 = vld [vmem:[%s243 + $0x34] sm:$0xf]
      %v347 = vld [vmem:[%s243 + $0x38] sm:$0xf]
      %v348 = vld [vmem:[%s243 + $0x3c] sm:$0xf]
      %v349 = vld [vmem:[%s243 + $0x40] sm:$0xf]
      %v350 = vld [vmem:[%s243 + $0x44] sm:$0xf]
      %v351 = vld [vmem:[%s243 + $0x48] sm:$0xf]
      %v352 = vld [vmem:[%s243 + $0x4c] sm:$0xf]
      %v353 = vld [vmem:[%s243 + $0x50] sm:$0xf]
      %v354 = vld [vmem:[%s243 + $0x54] sm:$0xf]
      %v355 = vld [vmem:[%s243 + $0x58] sm:$0xf]
      %v356 = vld [vmem:[%s243 + $0x5c] sm:$0xf]
      %v357 = vld [vmem:[%s243 + $0x60] sm:$0xf]
      %v358 = vld [vmem:[%s243 + $0x64] sm:$0xf]
      %v359 = vld [vmem:[%s243 + $0x68] sm:$0xf]
      %v360 = vld [vmem:[%s243 + $0x6c] sm:$0xf]
      %v361 = vld [vmem:[%s243 + $0x70] sm:$0xf]
      %v362 = vld [vmem:[%s243 + $0x74] sm:$0xf]
      %v363 = vld [vmem:[%s243 + $0x78] sm:$0xf]
      %v364 = vld [vmem:[%s243 + $0x7c] sm:$0xf]
      %v365 = vld [vmem:[%s249] sm:$0xf]
      %v366 = vld [vmem:[%s249 + $0x4] sm:$0xf]
      %v367 = vld [vmem:[%s249 + $0x8] sm:$0xf]
      %v368 = vld [vmem:[%s249 + $0xc] sm:$0xf]
      %v369 = vld [vmem:[%s249 + $0x10] sm:$0xf]
      %v370 = vld [vmem:[%s249 + $0x14] sm:$0xf]
      %v371 = vld [vmem:[%s249 + $0x18] sm:$0xf]
      %v372 = vld [vmem:[%s249 + $0x1c] sm:$0xf]
      %v373 = vld [vmem:[%s249 + $0x20] sm:$0xf]
      %v374 = vld [vmem:[%s249 + $0x24] sm:$0xf]
      %v375 = vld [vmem:[%s249 + $0x28] sm:$0xf]
      %v376 = vld [vmem:[%s249 + $0x2c] sm:$0xf]
      %v409 = vunpack.c.l.b16 %v333
      %v410 = vunpack.c.l.b16 %v334
      %v411 = vunpack.c.l.b16 %v335
      %v412 = vunpack.c.l.b16 %v336
      %v413 = vunpack.c.l.b16 %v337
      %v414 = vunpack.c.l.b16 %v338
      %v415 = vunpack.c.l.b16 %v339
      %v416 = vunpack.c.l.b16 %v340
      %v417 = vunpack.c.l.b16 %v341
      %v418 = vunpack.c.l.b16 %v342
      %v419 = vunpack.c.l.b16 %v343
      %v420 = vunpack.c.l.b16 %v344
      %v421 = vunpack.c.l.b16 %v345
      %v422 = vunpack.c.l.b16 %v346
      %v423 = vunpack.c.l.b16 %v347
      %v424 = vunpack.c.l.b16 %v348
      %v425 = vunpack.c.l.b16 %v349
      %v426 = vunpack.c.l.b16 %v350
      %v427 = vunpack.c.l.b16 %v351
      %v428 = vunpack.c.l.b16 %v352
      %v429 = vunpack.c.l.b16 %v353
      %v430 = vunpack.c.l.b16 %v354
      %v431 = vunpack.c.l.b16 %v355
      %v432 = vunpack.c.l.b16 %v356
      %v433 = vunpack.c.l.b16 %v357
      %v434 = vunpack.c.l.b16 %v358
      %v435 = vunpack.c.l.b16 %v359
      %v436 = vunpack.c.l.b16 %v360
      %v437 = vunpack.c.l.b16 %v361
      %v438 = vunpack.c.l.b16 %v362
      %v439 = vunpack.c.l.b16 %v363
      %v440 = vunpack.c.l.b16 %v364
      %v441 = vpack.c.b16 %v410, %v409
      %v442 = vpack.c.b16 %v412, %v411
      %v443 = vpack.c.b16 %v414, %v413
      %v444 = vpack.c.b16 %v416, %v415
      %v445 = vpack.c.b16 %v418, %v417
      %v446 = vpack.c.b16 %v420, %v419
      %v447 = vpack.c.b16 %v422, %v421
      %v448 = vpack.c.b16 %v424, %v423
      %v449 = vpack.c.b16 %v426, %v425
      %v450 = vpack.c.b16 %v428, %v427
      %v451 = vpack.c.b16 %v430, %v429
      %v452 = vpack.c.b16 %v432, %v431
      %v453 = vpack.c.b16 %v434, %v433
      %v454 = vpack.c.b16 %v436, %v435
      %v455 = vpack.c.b16 %v438, %v437
      %v456 = vpack.c.b16 %v440, %v439
      %v469 = vunpack.c.l.b16 %v365
      %v470 = vunpack.c.l.b16 %v366
      %v471 = vunpack.c.l.b16 %v367
      %v472 = vunpack.c.l.b16 %v368
      %v473 = vunpack.c.l.b16 %v369
      %v474 = vunpack.c.l.b16 %v370
      %v475 = vunpack.c.l.b16 %v371
      %v476 = vunpack.c.l.b16 %v372
      %v477 = vunpack.c.l.b16 %v373
      %v478 = vunpack.c.l.b16 %v374
      %v479 = vunpack.c.l.b16 %v375
      %v480 = vunpack.c.l.b16 %v376
      %v481 = vpack.c.b16 %v470, %v469
      %v482 = vpack.c.b16 %v472, %v471
      %v483 = vpack.c.b16 %v474, %v473
      %v484 = vpack.c.b16 %v476, %v475
      %v485 = vpack.c.b16 %v478, %v477
      %v486 = vpack.c.b16 %v480, %v479
      %vm493 = vcmask 785408
      %v495 = vsel %vm493, %v441, 0
      %v498 = vsel %vm493, %v442, 0
      %v501 = vsel %vm493, %v443, 0
      %v504 = vsel %vm493, %v444, 0
      %v507 = vsel %vm493, %v445, 0
      %v510 = vsel %vm493, %v446, 0
      %v513 = vsel %vm493, %v447, 0
      %v516 = vsel %vm493, %v448, 0
      %v519 = vsel %vm493, %v449, 0
      %v522 = vsel %vm493, %v450, 0
      %v525 = vsel %vm493, %v451, 0
      %v528 = vsel %vm493, %v452, 0
      %v531 = vsel %vm493, %v453, 0
      %v534 = vsel %vm493, %v454, 0
      %v537 = vsel %vm493, %v455, 0
      %v540 = vsel %vm493, %v456, 0
      %542 = vmatprep.subr.bf16.mxu0 0
      %543 = vmatpush1.bf16.msra.mxu0 0
      %544 = vmatprep.subr.bf16.mxu0 0
      %545 = vmatpush1.bf16.msra.mxu0 0
      %546 = vmatprep.subr.bf16.mxu0 0
      %547 = vmatpush1.bf16.msra.mxu0 %v486
      %548 = vmatprep.subr.bf16.mxu0 0
      %549 = vmatpush1.bf16.msra.mxu0 %v485
      %550 = vmatprep.subr.bf16.mxu0 0
      %551 = vmatpush1.bf16.msra.mxu0 %v484
      %552 = vmatprep.subr.bf16.mxu0 0
      %553 = vmatpush1.bf16.msra.mxu0 %v483
      %554 = vmatprep.subr.bf16.mxu0 0
      %555 = vmatpush1.bf16.msra.mxu0 %v482
      %556 = vmatprep.subr.bf16.mxu0 0
      %557 = vmatpush1.bf16.msra.mxu0 %v481
      %558 = vmatprep.subr.bf16.mxu0 0
      %559 = vmatpush2.bf16.msra.mxu0 0
      %560 = vmatprep.subr.bf16.mxu0 0
      %561 = vmatpush2.bf16.msra.mxu0 0
      %562 = vmatprep.subr.bf16.mxu0 0
      %563 = vmatpush2.bf16.msra.mxu0 0
      %564 = vmatprep.subr.bf16.mxu0 0
      %565 = vmatpush2.bf16.msra.mxu0 0
      %566 = vmatprep.subr.bf16.mxu0 0
      %567 = vmatpush2.bf16.msra.mxu0 0
      %568 = vmatprep.subr.bf16.mxu0 0
      %569 = vmatpush2.bf16.msra.mxu0 0
      %570 = vmatprep.subr.bf16.mxu0 0
      %571 = vmatpush2.bf16.msra.mxu0 0
      %572 = vmatprep.subr.bf16.mxu0 0
      %573 = vmatpush2.bf16.msra.mxu0 0
      %574 = vmatprep.mubr.bf16.mxu0 0
      %575 = vmatmul.mubr.bf16.gmra.mxu0 %v495
      %v576 = vpop.f32.mrf.mxu0
      %v577 = vadd.f32 0.0, %v576
      %v578 = vpop.f32.mrf.mxu0
      %v579 = vpop.f32.mrf.mxu0
      %v580 = vadd.f32 0.0, %v579
      %v581 = vpop.f32.mrf.mxu0
      %582 = vmatprep.mubr.bf16.mxu0 0
      %583 = vmatmul.mubr.bf16.gmra.mxu0 %v498
      %v584 = vpop.f32.mrf.mxu0
      %v585 = vadd.f32 0.0, %v584
      %v586 = vpop.f32.mrf.mxu0
      %v587 = vpop.f32.mrf.mxu0
      %v588 = vadd.f32 0.0, %v587
      %v589 = vpop.f32.mrf.mxu0
      %590 = vmatprep.mubr.bf16.mxu0 0
      %591 = vmatmul.mubr.bf16.gmra.mxu0 %v501
      %v592 = vpop.f32.mrf.mxu0
      %v593 = vadd.f32 0.0, %v592
      %v594 = vpop.f32.mrf.mxu0
      %v595 = vpop.f32.mrf.mxu0
      %v596 = vadd.f32 0.0, %v595
      %v597 = vpop.f32.mrf.mxu0
      %598 = vmatprep.mubr.bf16.mxu0 0
      %599 = vmatmul.mubr.bf16.gmra.mxu0 %v504
      %v600 = vpop.f32.mrf.mxu0
      %v601 = vadd.f32 0.0, %v600
      %v602 = vpop.f32.mrf.mxu0
      %v603 = vpop.f32.mrf.mxu0
      %v604 = vadd.f32 0.0, %v603
      %v605 = vpop.f32.mrf.mxu0
      %606 = vmatprep.mubr.bf16.mxu0 0
      %607 = vmatmul.mubr.bf16.gmra.mxu0 %v507
      %v608 = vpop.f32.mrf.mxu0
      %v609 = vadd.f32 0.0, %v608
      %v610 = vpop.f32.mrf.mxu0
      %v611 = vpop.f32.mrf.mxu0
      %v612 = vadd.f32 0.0, %v611
      %v613 = vpop.f32.mrf.mxu0
      %614 = vmatprep.mubr.bf16.mxu0 0
      %615 = vmatmul.mubr.bf16.gmra.mxu0 %v510
      %v616 = vpop.f32.mrf.mxu0
      %v617 = vadd.f32 0.0, %v616
      %v618 = vpop.f32.mrf.mxu0
      %v619 = vpop.f32.mrf.mxu0
      %v620 = vadd.f32 0.0, %v619
      %v621 = vpop.f32.mrf.mxu0
      %622 = vmatprep.mubr.bf16.mxu0 0
      %623 = vmatmul.mubr.bf16.gmra.mxu0 %v513
      %v624 = vpop.f32.mrf.mxu0
      %v625 = vadd.f32 0.0, %v624
      %v626 = vpop.f32.mrf.mxu0
      %v627 = vpop.f32.mrf.mxu0
      %v628 = vadd.f32 0.0, %v627
      %v629 = vpop.f32.mrf.mxu0
      %630 = vmatprep.mubr.bf16.mxu0 0
      %631 = vmatmul.mubr.bf16.gmra.mxu0 %v516
      %v632 = vpop.f32.mrf.mxu0
      %v633 = vadd.f32 0.0, %v632
      %v634 = vpop.f32.mrf.mxu0
      %v635 = vpop.f32.mrf.mxu0
      %v636 = vadd.f32 0.0, %v635
      %v637 = vpop.f32.mrf.mxu0
      %638 = vmatprep.mubr.bf16.mxu0 0
      %639 = vmatmul.mubr.bf16.gmra.mxu0 %v519
      %v640 = vpop.f32.mrf.mxu0
      %v641 = vadd.f32 0.0, %v640
      %v642 = vpop.f32.mrf.mxu0
      %v643 = vpop.f32.mrf.mxu0
      %v644 = vadd.f32 0.0, %v643
      %v645 = vpop.f32.mrf.mxu0
      %646 = vmatprep.mubr.bf16.mxu0 0
      %647 = vmatmul.mubr.bf16.gmra.mxu0 %v522
      %v648 = vpop.f32.mrf.mxu0
      %v649 = vadd.f32 0.0, %v648
      %v650 = vpop.f32.mrf.mxu0
      %v651 = vpop.f32.mrf.mxu0
      %v652 = vadd.f32 0.0, %v651
      %v653 = vpop.f32.mrf.mxu0
      %654 = vmatprep.mubr.bf16.mxu0 0
      %655 = vmatmul.mubr.bf16.gmra.mxu0 %v525
      %v656 = vpop.f32.mrf.mxu0
      %v657 = vadd.f32 0.0, %v656
      %v658 = vpop.f32.mrf.mxu0
      %v659 = vpop.f32.mrf.mxu0
      %v660 = vadd.f32 0.0, %v659
      %v661 = vpop.f32.mrf.mxu0
      %662 = vmatprep.mubr.bf16.mxu0 0
      %663 = vmatmul.mubr.bf16.gmra.mxu0 %v528
      %v664 = vpop.f32.mrf.mxu0
      %v665 = vadd.f32 0.0, %v664
      %v666 = vpop.f32.mrf.mxu0
      %v667 = vpop.f32.mrf.mxu0
      %v668 = vadd.f32 0.0, %v667
      %v669 = vpop.f32.mrf.mxu0
      %670 = vmatprep.mubr.bf16.mxu0 0
      %671 = vmatmul.mubr.bf16.gmra.mxu0 %v531
      %v672 = vpop.f32.mrf.mxu0
      %v673 = vadd.f32 0.0, %v672
      %v674 = vpop.f32.mrf.mxu0
      %v675 = vpop.f32.mrf.mxu0
      %v676 = vadd.f32 0.0, %v675
      %v677 = vpop.f32.mrf.mxu0
      %678 = vmatprep.mubr.bf16.mxu0 0
      %679 = vmatmul.mubr.bf16.gmra.mxu0 %v534
      %v680 = vpop.f32.mrf.mxu0
      %v681 = vadd.f32 0.0, %v680
      %v682 = vpop.f32.mrf.mxu0
      %v683 = vpop.f32.mrf.mxu0
      %v684 = vadd.f32 0.0, %v683
      %v685 = vpop.f32.mrf.mxu0
      %686 = vmatprep.mubr.bf16.mxu0 0
      %687 = vmatmul.mubr.bf16.gmra.mxu0 %v537
      %v688 = vpop.f32.mrf.mxu0
      %v689 = vadd.f32 0.0, %v688
      %v690 = vpop.f32.mrf.mxu0
      %v691 = vpop.f32.mrf.mxu0
      %v692 = vadd.f32 0.0, %v691
      %v693 = vpop.f32.mrf.mxu0
      %694 = vmatprep.mubr.bf16.mxu0 0
      %695 = vmatmul.mubr.bf16.gmra.mxu0 %v540
      %v696 = vpop.f32.mrf.mxu0
      %v697 = vadd.f32 0.0, %v696
      %v698 = vpop.f32.mrf.mxu0
      %v699 = vpop.f32.mrf.mxu0
      %v700 = vadd.f32 0.0, %v699
      %v701 = vpop.f32.mrf.mxu0
      %702 = vdwg.mxu0
      %v703 = vadd.f32 %v301, %v577
      %v704 = vadd.f32 %v302, %v580
      %v705 = vadd.f32 %v303, %v585
      %v706 = vadd.f32 %v304, %v588
      %v707 = vadd.f32 %v305, %v593
      %v708 = vadd.f32 %v306, %v596
      %v709 = vadd.f32 %v307, %v601
      %v710 = vadd.f32 %v308, %v604
      %v711 = vadd.f32 %v309, %v609
      %v712 = vadd.f32 %v310, %v612
      %v713 = vadd.f32 %v311, %v617
      %v714 = vadd.f32 %v312, %v620
      %v715 = vadd.f32 %v313, %v625
      %v716 = vadd.f32 %v314, %v628
      %v717 = vadd.f32 %v315, %v633
      %v718 = vadd.f32 %v316, %v636
      %v719 = vadd.f32 %v317, %v641
      %v720 = vadd.f32 %v318, %v644
      %v721 = vadd.f32 %v319, %v649
      %v722 = vadd.f32 %v320, %v652
      %v723 = vadd.f32 %v321, %v657
      %v724 = vadd.f32 %v322, %v660
      %v725 = vadd.f32 %v323, %v665
      %v726 = vadd.f32 %v324, %v668
      %v727 = vadd.f32 %v325, %v673
      %v728 = vadd.f32 %v326, %v676
      %v729 = vadd.f32 %v327, %v681
      %v730 = vadd.f32 %v328, %v684
      %v731 = vadd.f32 %v329, %v689
      %v732 = vadd.f32 %v330, %v692
      %v733 = vadd.f32 %v331, %v697
      %v734 = vadd.f32 %v332, %v700
      %vm735 = vcmask 523264
      %736 = vst.msk [vmem:[#allocation2] sm:$0xff] %vm735, %v703
      %737 = vst.msk [vmem:[#allocation2 + $0x8] sm:$0xff] %vm735, %v704
      %738 = vst.msk [vmem:[#allocation2 + $0x10] sm:$0xff] %vm735, %v705
      %739 = vst.msk [vmem:[#allocation2 + $0x18] sm:$0xff] %vm735, %v706
      %740 = vst.msk [vmem:[#allocation2 + $0x20] sm:$0xff] %vm735, %v707
      %741 = vst.msk [vmem:[#allocation2 + $0x28] sm:$0xff] %vm735, %v708
      %742 = vst.msk [vmem:[#allocation2 + $0x30] sm:$0xff] %vm735, %v709
      %743 = vst.msk [vmem:[#allocation2 + $0x38] sm:$0xff] %vm735, %v710
      %744 = vst.msk [vmem:[#allocation2 + $0x40] sm:$0xff] %vm735, %v711
      %745 = vst.msk [vmem:[#allocation2 + $0x48] sm:$0xff] %vm735, %v712
      %746 = vst.msk [vmem:[#allocation2 + $0x50] sm:$0xff] %vm735, %v713
      %747 = vst.msk [vmem:[#allocation2 + $0x58] sm:$0xff] %vm735, %v714
      %748 = vst.msk [vmem:[#allocation2 + $0x60] sm:$0xff] %vm735, %v715
      %749 = vst.msk [vmem:[#allocation2 + $0x68] sm:$0xff] %vm735, %v716
      %750 = vst.msk [vmem:[#allocation2 + $0x70] sm:$0xff] %vm735, %v717
      %751 = vst.msk [vmem:[#allocation2 + $0x78] sm:$0xff] %vm735, %v718
      %752 = vst.msk [vmem:[#allocation2 + $0x80] sm:$0xff] %vm735, %v719
      %753 = vst.msk [vmem:[#allocation2 + $0x88] sm:$0xff] %vm735, %v720
      %754 = vst.msk [vmem:[#allocation2 + $0x90] sm:$0xff] %vm735, %v721
      %755 = vst.msk [vmem:[#allocation2 + $0x98] sm:$0xff] %vm735, %v722
      %756 = vst.msk [vmem:[#allocation2 + $0xa0] sm:$0xff] %vm735, %v723
      %757 = vst.msk [vmem:[#allocation2 + $0xa8] sm:$0xff] %vm735, %v724
      %758 = vst.msk [vmem:[#allocation2 + $0xb0] sm:$0xff] %vm735, %v725
      %759 = vst.msk [vmem:[#allocation2 + $0xb8] sm:$0xff] %vm735, %v726
      %760 = vst.msk [vmem:[#allocation2 + $0xc0] sm:$0xff] %vm735, %v727
      %761 = vst.msk [vmem:[#allocation2 + $0xc8] sm:$0xff] %vm735, %v728
      %762 = vst.msk [vmem:[#allocation2 + $0xd0] sm:$0xff] %vm735, %v729
      %763 = vst.msk [vmem:[#allocation2 + $0xd8] sm:$0xff] %vm735, %v730
      %764 = vst.msk [vmem:[#allocation2 + $0xe0] sm:$0xff] %vm735, %v731
      %765 = vst.msk [vmem:[#allocation2 + $0xe8] sm:$0xff] %vm735, %v732
      %766 = vst.msk [vmem:[#allocation2 + $0xf0] sm:$0xff] %vm735, %v733
      %767 = vst.msk [vmem:[#allocation2 + $0xf8] sm:$0xff] %vm735, %v734
      // Predicated region
      $region33: #{_lambda_.9} parent=27 // pred_check
        %p768 = pneg %p264
      $region34: #{_lambda_.9} parent=27 // pred_check_branch
        %770 = sbr.rel (%p768) target = $region36
      $region35: #{_lambda_.9} parent=27 // pred_region
        %v771 = vld [vmem:[#allocation2] sm:$0xff]
        %v772 = vld [vmem:[#allocation2 + $0x8] sm:$0xff]
        %v773 = vld [vmem:[#allocation2 + $0x10] sm:$0xff]
        %v774 = vld [vmem:[#allocation2 + $0x18] sm:$0xff]
        %v775 = vld [vmem:[#allocation2 + $0x20] sm:$0xff]
        %v776 = vld [vmem:[#allocation2 + $0x28] sm:$0xff]
        %v777 = vld [vmem:[#allocation2 + $0x30] sm:$0xff]
        %v778 = vld [vmem:[#allocation2 + $0x38] sm:$0xff]
        %v779 = vld [vmem:[#allocation2 + $0x40] sm:$0xff]
        %v780 = vld [vmem:[#allocation2 + $0x48] sm:$0xff]
        %v781 = vld [vmem:[#allocation2 + $0x50] sm:$0xff]
        %v782 = vld [vmem:[#allocation2 + $0x58] sm:$0xff]
        %v783 = vld [vmem:[#allocation2 + $0x60] sm:$0xff]
        %v784 = vld [vmem:[#allocation2 + $0x68] sm:$0xff]
        %v785 = vld [vmem:[#allocation2 + $0x70] sm:$0xff]
        %v786 = vld [vmem:[#allocation2 + $0x78] sm:$0xff]
        %v787 = vld [vmem:[#allocation2 + $0x80] sm:$0xff]
        %v788 = vld [vmem:[#allocation2 + $0x88] sm:$0xff]
        %v789 = vld [vmem:[#allocation2 + $0x90] sm:$0xff]
        %v790 = vld [vmem:[#allocation2 + $0x98] sm:$0xff]
        %v791 = vld [vmem:[#allocation2 + $0xa0] sm:$0xff]
        %v792 = vld [vmem:[#allocation2 + $0xa8] sm:$0xff]
        %v793 = vld [vmem:[#allocation2 + $0xb0] sm:$0xff]
        %v794 = vld [vmem:[#allocation2 + $0xb8] sm:$0xff]
        %v795 = vld [vmem:[#allocation2 + $0xc0] sm:$0xff]
        %v796 = vld [vmem:[#allocation2 + $0xc8] sm:$0xff]
        %v797 = vld [vmem:[#allocation2 + $0xd0] sm:$0xff]
        %v798 = vld [vmem:[#allocation2 + $0xd8] sm:$0xff]
        %v799 = vld [vmem:[#allocation2 + $0xe0] sm:$0xff]
        %v800 = vld [vmem:[#allocation2 + $0xe8] sm:$0xff]
        %v801 = vld [vmem:[#allocation2 + $0xf0] sm:$0xff]
        %v802 = vld [vmem:[#allocation2 + $0xf8] sm:$0xff]
        %v803 = vpack.c.bf16 %v772, %v771
        %v804 = vpack.c.bf16 %v774, %v773
        %v805 = vpack.c.bf16 %v776, %v775
        %v806 = vpack.c.bf16 %v778, %v777
        %v807 = vpack.c.bf16 %v780, %v779
        %v808 = vpack.c.bf16 %v782, %v781
        %v809 = vpack.c.bf16 %v784, %v783
        %v810 = vpack.c.bf16 %v786, %v785
        %v811 = vpack.c.bf16 %v788, %v787
        %v812 = vpack.c.bf16 %v790, %v789
        %v813 = vpack.c.bf16 %v792, %v791
        %v814 = vpack.c.bf16 %v794, %v793
        %v815 = vpack.c.bf16 %v796, %v795
        %v816 = vpack.c.bf16 %v798, %v797
        %v817 = vpack.c.bf16 %v800, %v799
        %v818 = vpack.c.bf16 %v802, %v801
        %v835 = vunpack.c.l.b16 %v803
        %v836 = vunpack.c.h.b16 %v803
        %v837 = vunpack.c.l.b16 %v804
        %v838 = vunpack.c.h.b16 %v804
        %v839 = vunpack.c.l.b16 %v805
        %v840 = vunpack.c.h.b16 %v805
        %v841 = vunpack.c.l.b16 %v806
        %v842 = vunpack.c.h.b16 %v806
        %v843 = vunpack.c.l.b16 %v807
        %v844 = vunpack.c.h.b16 %v807
        %v845 = vunpack.c.l.b16 %v808
        %v846 = vunpack.c.h.b16 %v808
        %v847 = vunpack.c.l.b16 %v809
        %v848 = vunpack.c.h.b16 %v809
        %v849 = vunpack.c.l.b16 %v810
        %v850 = vunpack.c.h.b16 %v810
        %v851 = vunpack.c.l.b16 %v811
        %v852 = vunpack.c.h.b16 %v811
        %v853 = vunpack.c.l.b16 %v812
        %v854 = vunpack.c.h.b16 %v812
        %v855 = vunpack.c.l.b16 %v813
        %v856 = vunpack.c.h.b16 %v813
        %v857 = vunpack.c.l.b16 %v814
        %v858 = vunpack.c.h.b16 %v814
        %v859 = vunpack.c.l.b16 %v815
        %v860 = vunpack.c.h.b16 %v815
        %v861 = vunpack.c.l.b16 %v816
        %v862 = vunpack.c.h.b16 %v816
        %v863 = vunpack.c.l.b16 %v817
        %v864 = vunpack.c.h.b16 %v817
        %v865 = vunpack.c.l.b16 %v818
        %v866 = vunpack.c.h.b16 %v818
        %v867 = vpack.c.b16 %v835, %v835
        %v868 = vpack.c.b16 %v836, %v836
        %v869 = vpack.c.b16 %v837, %v837
        %v870 = vpack.c.b16 %v838, %v838
        %v871 = vpack.c.b16 %v839, %v839
        %v872 = vpack.c.b16 %v840, %v840
        %v873 = vpack.c.b16 %v841, %v841
        %v874 = vpack.c.b16 %v842, %v842
        %v875 = vpack.c.b16 %v843, %v843
        %v876 = vpack.c.b16 %v844, %v844
        %v877 = vpack.c.b16 %v845, %v845
        %v878 = vpack.c.b16 %v846, %v846
        %v879 = vpack.c.b16 %v847, %v847
        %v880 = vpack.c.b16 %v848, %v848
        %v881 = vpack.c.b16 %v849, %v849
        %v882 = vpack.c.b16 %v850, %v850
        %v883 = vpack.c.b16 %v851, %v851
        %v884 = vpack.c.b16 %v852, %v852
        %v885 = vpack.c.b16 %v853, %v853
        %v886 = vpack.c.b16 %v854, %v854
        %v887 = vpack.c.b16 %v855, %v855
        %v888 = vpack.c.b16 %v856, %v856
        %v889 = vpack.c.b16 %v857, %v857
        %v890 = vpack.c.b16 %v858, %v858
        %v891 = vpack.c.b16 %v859, %v859
        %v892 = vpack.c.b16 %v860, %v860
        %v893 = vpack.c.b16 %v861, %v861
        %v894 = vpack.c.b16 %v862, %v862
        %v895 = vpack.c.b16 %v863, %v863
        %v896 = vpack.c.b16 %v864, %v864
        %v897 = vpack.c.b16 %v865, %v865
        %v898 = vpack.c.b16 %v866, %v866
        %vm931 = vcmask 519168
        %932 = vst.msk [vmem:[%s255] sm:$0xf] %vm931, %v867
        %933 = vst.msk [vmem:[%s255 + $0x4] sm:$0xf] %vm931, %v868
        %934 = vst.msk [vmem:[%s255 + $0x8] sm:$0xf] %vm931, %v869
        %935 = vst.msk [vmem:[%s255 + $0xc] sm:$0xf] %vm931, %v870
        %936 = vst.msk [vmem:[%s255 + $0x10] sm:$0xf] %vm931, %v871
        %937 = vst.msk [vmem:[%s255 + $0x14] sm:$0xf] %vm931, %v872
        %938 = vst.msk [vmem:[%s255 + $0x18] sm:$0xf] %vm931, %v873
        %939 = vst.msk [vmem:[%s255 + $0x1c] sm:$0xf] %vm931, %v874
        %940 = vst.msk [vmem:[%s255 + $0x20] sm:$0xf] %vm931, %v875
        %941 = vst.msk [vmem:[%s255 + $0x24] sm:$0xf] %vm931, %v876
        %942 = vst.msk [vmem:[%s255 + $0x28] sm:$0xf] %vm931, %v877
        %943 = vst.msk [vmem:[%s255 + $0x2c] sm:$0xf] %vm931, %v878
        %944 = vst.msk [vmem:[%s255 + $0x30] sm:$0xf] %vm931, %v879
        %945 = vst.msk [vmem:[%s255 + $0x34] sm:$0xf] %vm931, %v880
        %946 = vst.msk [vmem:[%s255 + $0x38] sm:$0xf] %vm931, %v881
        %947 = vst.msk [vmem:[%s255 + $0x3c] sm:$0xf] %vm931, %v882
        %948 = vst.msk [vmem:[%s255 + $0x40] sm:$0xf] %vm931, %v883
        %949 = vst.msk [vmem:[%s255 + $0x44] sm:$0xf] %vm931, %v884
        %950 = vst.msk [vmem:[%s255 + $0x48] sm:$0xf] %vm931, %v885
        %951 = vst.msk [vmem:[%s255 + $0x4c] sm:$0xf] %vm931, %v886
        %952 = vst.msk [vmem:[%s255 + $0x50] sm:$0xf] %vm931, %v887
        %953 = vst.msk [vmem:[%s255 + $0x54] sm:$0xf] %vm931, %v888
        %954 = vst.msk [vmem:[%s255 + $0x58] sm:$0xf] %vm931, %v889
        %955 = vst.msk [vmem:[%s255 + $0x5c] sm:$0xf] %vm931, %v890
        %956 = vst.msk [vmem:[%s255 + $0x60] sm:$0xf] %vm931, %v891
        %957 = vst.msk [vmem:[%s255 + $0x64] sm:$0xf] %vm931, %v892
        %958 = vst.msk [vmem:[%s255 + $0x68] sm:$0xf] %vm931, %v893
        %959 = vst.msk [vmem:[%s255 + $0x6c] sm:$0xf] %vm931, %v894
        %960 = vst.msk [vmem:[%s255 + $0x70] sm:$0xf] %vm931, %v895
        %961 = vst.msk [vmem:[%s255 + $0x74] sm:$0xf] %vm931, %v896
        %962 = vst.msk [vmem:[%s255 + $0x78] sm:$0xf] %vm931, %v897
        %963 = vst.msk [vmem:[%s255 + $0x7c] sm:$0xf] %vm931, %v898
        %v964 = vsel %vm735, %v771, 0.0
        %v965 = vsel %vm735, %v772, 0.0
        %v966 = vadd.f32 %v964, %v965
        %v967 = vsel %vm735, %v773, 0.0
        %v968 = vadd.f32 %v966, %v967
        %v969 = vsel %vm735, %v774, 0.0
        %v970 = vadd.f32 %v968, %v969
        %v971 = vsel %vm735, %v775, 0.0
        %v972 = vadd.f32 %v970, %v971
        %v973 = vsel %vm735, %v776, 0.0
        %v974 = vadd.f32 %v972, %v973
        %v975 = vsel %vm735, %v777, 0.0
        %v976 = vadd.f32 %v974, %v975
        %v977 = vsel %vm735, %v778, 0.0
        %v978 = vadd.f32 %v976, %v977
        %v979 = vsel %vm735, %v779, 0.0
        %v980 = vadd.f32 %v978, %v979
        %v981 = vsel %vm735, %v780, 0.0
        %v982 = vadd.f32 %v980, %v981
        %v983 = vsel %vm735, %v781, 0.0
        %v984 = vadd.f32 %v982, %v983
        %v985 = vsel %vm735, %v782, 0.0
        %v986 = vadd.f32 %v984, %v985
        %v987 = vsel %vm735, %v783, 0.0
        %v988 = vadd.f32 %v986, %v987
        %v989 = vsel %vm735, %v784, 0.0
        %v990 = vadd.f32 %v988, %v989
        %v991 = vsel %vm735, %v785, 0.0
        %v992 = vadd.f32 %v990, %v991
        %v993 = vsel %vm735, %v786, 0.0
        %v994 = vadd.f32 %v992, %v993
        %v995 = vsel %vm735, %v787, 0.0
        %v996 = vadd.f32 %v994, %v995
        %v997 = vsel %vm735, %v788, 0.0
        %v998 = vadd.f32 %v996, %v997
        %v999 = vsel %vm735, %v789, 0.0
        %v1000 = vadd.f32 %v998, %v999
        %v1001 = vsel %vm735, %v790, 0.0
        %v1002 = vadd.f32 %v1000, %v1001
        %v1003 = vsel %vm735, %v791, 0.0
        %v1004 = vadd.f32 %v1002, %v1003
        %v1005 = vsel %vm735, %v792, 0.0
        %v1006 = vadd.f32 %v1004, %v1005
        %v1007 = vsel %vm735, %v793, 0.0
        %v1008 = vadd.f32 %v1006, %v1007
        %v1009 = vsel %vm735, %v794, 0.0
        %v1010 = vadd.f32 %v1008, %v1009
        %v1011 = vsel %vm735, %v795, 0.0
        %v1012 = vadd.f32 %v1010, %v1011
        %v1013 = vsel %vm735, %v796, 0.0
        %v1014 = vadd.f32 %v1012, %v1013
        %v1015 = vsel %vm735, %v797, 0.0
        %v1016 = vadd.f32 %v1014, %v1015
        %v1017 = vsel %vm735, %v798, 0.0
        %v1018 = vadd.f32 %v1016, %v1017
        %v1019 = vsel %vm735, %v799, 0.0
        %v1020 = vadd.f32 %v1018, %v1019
        %v1021 = vsel %vm735, %v800, 0.0
        %v1022 = vadd.f32 %v1020, %v1021
        %v1023 = vsel %vm735, %v801, 0.0
        %v1024 = vadd.f32 %v1022, %v1023
        %v1025 = vsel %vm735, %v802, 0.0
        %v1026 = vadd.f32 %v1024, %v1025
        %v1027 = vrot.slane %v1026, 4
        %v1028 = vadd.f32 %v1026, %v1027
        %v1029 = vrot.slane %v1028, 2
        %v1030 = vadd.f32 %v1028, %v1029
        %v1031 = vrot.slane %v1030, 1
        %v1032 = vadd.f32 %v1030, %v1031
        %vm1033 = vcmask 516096
        %1034 = vst.msk [vmem:[%s259] sm:$0x1] %vm1033, %v1032
        %v1035 = vmul.f32 %v771, %v771
        %v1036 = vmul.f32 %v772, %v772
        %v1037 = vmul.f32 %v773, %v773
        %v1038 = vmul.f32 %v774, %v774
        %v1039 = vmul.f32 %v775, %v775
        %v1040 = vmul.f32 %v776, %v776
        %v1041 = vmul.f32 %v777, %v777
        %v1042 = vmul.f32 %v778, %v778
        %v1043 = vmul.f32 %v779, %v779
        %v1044 = vmul.f32 %v780, %v780
        %v1045 = vmul.f32 %v781, %v781
        %v1046 = vmul.f32 %v782, %v782
        %v1047 = vmul.f32 %v783, %v783
        %v1048 = vmul.f32 %v784, %v784
        %v1049 = vmul.f32 %v785, %v785
        %v1050 = vmul.f32 %v786, %v786
        %v1051 = vmul.f32 %v787, %v787
        %v1052 = vmul.f32 %v788, %v788
        %v1053 = vmul.f32 %v789, %v789
        %v1054 = vmul.f32 %v790, %v790
        %v1055 = vmul.f32 %v791, %v791
        %v1056 = vmul.f32 %v792, %v792
        %v1057 = vmul.f32 %v793, %v793
        %v1058 = vmul.f32 %v794, %v794
        %v1059 = vmul.f32 %v795, %v795
        %v1060 = vmul.f32 %v796, %v796
        %v1061 = vmul.f32 %v797, %v797
        %v1062 = vmul.f32 %v798, %v798
        %v1063 = vmul.f32 %v799, %v799
        %v1064 = vmul.f32 %v800, %v800
        %v1065 = vmul.f32 %v801, %v801
        %v1066 = vmul.f32 %v802, %v802
        %v1067 = vsel %vm735, %v1035, 0.0
        %v1068 = vsel %vm735, %v1036, 0.0
        %v1069 = vadd.f32 %v1067, %v1068
        %v1070 = vsel %vm735, %v1037, 0.0
        %v1071 = vadd.f32 %v1069, %v1070
        %v1072 = vsel %vm735, %v1038, 0.0
        %v1073 = vadd.f32 %v1071, %v1072
        %v1074 = vsel %vm735, %v1039, 0.0
        %v1075 = vadd.f32 %v1073, %v1074
        %v1076 = vsel %vm735, %v1040, 0.0
        %v1077 = vadd.f32 %v1075, %v1076
        %v1078 = vsel %vm735, %v1041, 0.0
        %v1079 = vadd.f32 %v1077, %v1078
        %v1080 = vsel %vm735, %v1042, 0.0
        %v1081 = vadd.f32 %v1079, %v1080
        %v1082 = vsel %vm735, %v1043, 0.0
        %v1083 = vadd.f32 %v1081, %v1082
        %v1084 = vsel %vm735, %v1044, 0.0
        %v1085 = vadd.f32 %v1083, %v1084
        %v1086 = vsel %vm735, %v1045, 0.0
        %v1087 = vadd.f32 %v1085, %v1086
        %v1088 = vsel %vm735, %v1046, 0.0
        %v1089 = vadd.f32 %v1087, %v1088
        %v1090 = vsel %vm735, %v1047, 0.0
        %v1091 = vadd.f32 %v1089, %v1090
        %v1092 = vsel %vm735, %v1048, 0.0
        %v1093 = vadd.f32 %v1091, %v1092
        %v1094 = vsel %vm735, %v1049, 0.0
        %v1095 = vadd.f32 %v1093, %v1094
        %v1096 = vsel %vm735, %v1050, 0.0
        %v1097 = vadd.f32 %v1095, %v1096
        %v1098 = vsel %vm735, %v1051, 0.0
        %v1099 = vadd.f32 %v1097, %v1098
        %v1100 = vsel %vm735, %v1052, 0.0
        %v1101 = vadd.f32 %v1099, %v1100
        %v1102 = vsel %vm735, %v1053, 0.0
        %v1103 = vadd.f32 %v1101, %v1102
        %v1104 = vsel %vm735, %v1054, 0.0
        %v1105 = vadd.f32 %v1103, %v1104
        %v1106 = vsel %vm735, %v1055, 0.0
        %v1107 = vadd.f32 %v1105, %v1106
        %v1108 = vsel %vm735, %v1056, 0.0
        %v1109 = vadd.f32 %v1107, %v1108
        %v1110 = vsel %vm735, %v1057, 0.0
        %v1111 = vadd.f32 %v1109, %v1110
        %v1112 = vsel %vm735, %v1058, 0.0
        %v1113 = vadd.f32 %v1111, %v1112
        %v1114 = vsel %vm735, %v1059, 0.0
        %v1115 = vadd.f32 %v1113, %v1114
        %v1116 = vsel %vm735, %v1060, 0.0
        %v1117 = vadd.f32 %v1115, %v1116
        %v1118 = vsel %vm735, %v1061, 0.0
        %v1119 = vadd.f32 %v1117, %v1118
        %v1120 = vsel %vm735, %v1062, 0.0
        %v1121 = vadd.f32 %v1119, %v1120
        %v1122 = vsel %vm735, %v1063, 0.0
        %v1123 = vadd.f32 %v1121, %v1122
        %v1124 = vsel %vm735, %v1064, 0.0
        %v1125 = vadd.f32 %v1123, %v1124
        %v1126 = vsel %vm735, %v1065, 0.0
        %v1127 = vadd.f32 %v1125, %v1126
        %v1128 = vsel %vm735, %v1066, 0.0
        %v1129 = vadd.f32 %v1127, %v1128
        %v1130 = vrot.slane %v1129, 4
        %v1131 = vadd.f32 %v1129, %v1130
        %v1132 = vrot.slane %v1131, 2
        %v1133 = vadd.f32 %v1131, %v1132
        %v1134 = vrot.slane %v1133, 1
        %v1135 = vadd.f32 %v1133, %v1134
        %1136 = vst.msk [vmem:[%s262] sm:$0x1] %vm1033, %v1135
      $region36: #{_lambda_.9} parent=27 // pred_fallthru
        _
      %s1137 = smul.u32 32, %s20
      %p1138 = scmp.lt.s32.totalorder %s1137, 63
      %s1139 = scalar_select %p1138, %s1137, 63
      %s1140 = smul.addr %s1139, 4
      %s1141 = scalar_lea.vmem %s2, %s1140
      %p1142 = scmp.lt.s32.totalorder %s20, 1
      %s1143 = scalar_select %p1142, %s20, 1
      %s1144 = scalar_lea.vmem %s3, %s1143
      %p1145 = scmp.lt.s32.totalorder %s20, 1
      %s1146 = scalar_select %p1145, %s20, 1
      %s1147 = scalar_lea.vmem %s4, %s1146
      // Predicated region
      $region37: #{_lambda_.9} parent=27 // pred_check
        %p1148 = pneg %p100
      $region38: #{_lambda_.9} parent=27 // pred_check_branch
        %1150 = sbr.rel (%p1148) target = $region40
      $region39: #{_lambda_.9} parent=27 // pred_region
        %s1151 = smul.u32 32, %s20
      $region40: #{_lambda_.9} parent=27 // pred_fallthru
        _
      // Predicated region
      $region41: #{_lambda_.9} parent=27 // pred_check
        %p1152 = pneg %p126
      $region42: #{_lambda_.9} parent=27 // pred_check_branch
        %1154 = sbr.rel (%p1152) target = $region44
      $region43: #{_lambda_.9} parent=27 // pred_region
        _
      $region44: #{_lambda_.9} parent=27 // pred_fallthru
        _
      // Predicated region
      $region45: #{_lambda_.9} parent=27 // pred_check
        %p1155 = pneg %p152
      $region46: #{_lambda_.9} parent=27 // pred_check_branch
        %1157 = sbr.rel (%p1155) target = $region48
      $region47: #{_lambda_.9} parent=27 // pred_region
        _
      $region48: #{_lambda_.9} parent=27 // pred_fallthru
        _
    $region28: #{_lambda_.9} parent=5 // pred_fallthru
      _
    %p1158 = scmp.le.s32.totalorder 2, %s11
    // Predicated region
    $region49: #{_lambda_.9} parent=5 // pred_check
      %p1159 = pneg %p1158
    $region50: #{_lambda_.9} parent=5 // pred_check_branch
      %1161 = sbr.rel (%p1159) target = $region52
    $region51: #{_lambda_.9} parent=5 // pred_region
      %s1162 = ssub.s32 %s11, 2
      // Predicated region
      $region53: #{_lambda_.9} parent=51 // pred_check
        %p1163 = pneg %p106
      $region54: #{_lambda_.9} parent=51 // pred_check_branch
        %1165 = sbr.rel (%p1163) target = $region56
      $region55: #{_lambda_.9} parent=51 // pred_region
        %s1166 = smul.u32 32, %s22
        %p1167 = scmp.lt.s32.totalorder %s1166, 63
        %s1168 = scalar_select %p1167, %s1166, 63
        %s1169 = smul.addr %s1168, 4
        %s1170 = scalar_lea.vmem %s2, %s1169
      $region56: #{_lambda_.9} parent=51 // pred_fallthru
        _
      // Predicated region
      $region57: #{_lambda_.9} parent=51 // pred_check
        %p1171 = pneg %p132
      $region58: #{_lambda_.9} parent=51 // pred_check_branch
        %1173 = sbr.rel (%p1171) target = $region60
      $region59: #{_lambda_.9} parent=51 // pred_region
        %p1174 = scmp.lt.s32.totalorder %s22, 1
        %s1175 = scalar_select %p1174, %s22, 1
        %s1176 = scalar_lea.vmem %s3, %s1175
      $region60: #{_lambda_.9} parent=51 // pred_fallthru
        _
      // Predicated region
      $region61: #{_lambda_.9} parent=51 // pred_check
        %p1177 = pneg %p158
      $region62: #{_lambda_.9} parent=51 // pred_check_branch
        %1179 = sbr.rel (%p1177) target = $region64
      $region63: #{_lambda_.9} parent=51 // pred_region
        %p1180 = scmp.lt.s32.totalorder %s22, 1
        %s1181 = scalar_select %p1180, %s22, 1
        %s1182 = scalar_lea.vmem %s4, %s1181
      $region64: #{_lambda_.9} parent=51 // pred_fallthru
        _
    $region52: #{_lambda_.9} parent=5 // pred_fallthru
      _
  $region6: #{_lambda_.9} parent=0 // loop_footer
    %s15 = sadd.s32 1, %s11
  $region7: #{_lambda_.9} parent=0 // loop_footer_branch
    %10 = sbr.rel target = $region3
  $region8: #{_lambda_.9} parent=0 // loop_exit
    _

// kernel: _lambda_.10
$region0: #{_lambda_.10}
  #allocation0 [shape = 'u32[]', space=smem, size = 0x4, offset = 0x4, fixed_abs, tag = 'smem constant byte address 0x4 - core index']
  #allocation1 [shape = 'u32[144,128]{1,0:T(1,128)}', space=vmem, size = 0x12000, scoped, tag = 'internal scratch']
  %s0 = inlined_call_operand.vmem [shape: bf16[512,64], index: 0, kind: input, shape index: {}]
  %s1 = inlined_call_operand.vmem [shape: f32[1,64], index: 1, kind: input, shape index: {}]
  %s2 = inlined_call_operand.vmem [shape: f32[1,64], index: 2, kind: input, shape index: {}]
  %s3 = inlined_call_operand.vmem [shape: bf16[512,64], index: 3, kind: output, shape index: {}]
  %s4 = sld [smem:[#allocation0]]
  $region22: #{_lambda_.10} parent=0
    _
  %s6 = ssub.s32 1, %s4
  %s7 = scalar_select 0, %s6, %s4
  // Predicated region
  $region2: #{_lambda_.10} parent=0 // pred_check
    _
  $region3: #{_lambda_.10} parent=0 // pred_check_branch
    %9 = sbr.rel (0) target = $region5
  $region4: #{_lambda_.10} parent=0 // pred_region
    _
  $region5: #{_lambda_.10} parent=0 // pred_fallthru
    _
  // Predicated region
  $region6: #{_lambda_.10} parent=0 // pred_check
    _
  $region7: #{_lambda_.10} parent=0 // pred_check_branch
    %11 = sbr.rel (0) target = $region9
  $region8: #{_lambda_.10} parent=0 // pred_region
    _
  $region9: #{_lambda_.10} parent=0 // pred_fallthru
    _
  // Predicated region
  $region10: #{_lambda_.10} parent=0 // pred_check
    _
  $region11: #{_lambda_.10} parent=0 // pred_check_branch
    %13 = sbr.rel (0) target = $region13
  $region12: #{_lambda_.10} parent=0 // pred_region
    _
  $region13: #{_lambda_.10} parent=0 // pred_fallthru
    _
  %v14 = vld [vmem:[%s0] sm:$0xf]
  %v15 = vld [vmem:[%s0 + $0x4] sm:$0xf]
  %v16 = vld [vmem:[%s0 + $0x8] sm:$0xf]
  %v17 = vld [vmem:[%s0 + $0xc] sm:$0xf]
  %v18 = vld [vmem:[%s0 + $0x10] sm:$0xf]
  %v19 = vld [vmem:[%s0 + $0x14] sm:$0xf]
  %v20 = vld [vmem:[%s0 + $0x18] sm:$0xf]
  %v21 = vld [vmem:[%s0 + $0x1c] sm:$0xf]
  %v22 = vld [vmem:[%s0 + $0x20] sm:$0xf]
  %v23 = vld [vmem:[%s0 + $0x24] sm:$0xf]
  %v24 = vld [vmem:[%s0 + $0x28] sm:$0xf]
  %v25 = vld [vmem:[%s0 + $0x2c] sm:$0xf]
  %v26 = vld [vmem:[%s0 + $0x30] sm:$0xf]
  %v27 = vld [vmem:[%s0 + $0x34] sm:$0xf]
  %v28 = vld [vmem:[%s0 + $0x38] sm:$0xf]
  %v29 = vld [vmem:[%s0 + $0x3c] sm:$0xf]
  %v30 = vld [vmem:[%s0 + $0x40] sm:$0xf]
  %v31 = vld [vmem:[%s0 + $0x44] sm:$0xf]
  %v32 = vld [vmem:[%s0 + $0x48] sm:$0xf]
  %v33 = vld [vmem:[%s0 + $0x4c] sm:$0xf]
  %v34 = vld [vmem:[%s0 + $0x50] sm:$0xf]
  %v35 = vld [vmem:[%s0 + $0x54] sm:$0xf]
  %v36 = vld [vmem:[%s0 + $0x58] sm:$0xf]
  %v37 = vld [vmem:[%s0 + $0x5c] sm:$0xf]
  %v38 = vld [vmem:[%s0 + $0x60] sm:$0xf]
  %v39 = vld [vmem:[%s0 + $0x64] sm:$0xf]
  %v40 = vld [vmem:[%s0 + $0x68] sm:$0xf]
  %v41 = vld [vmem:[%s0 + $0x6c] sm:$0xf]
  %v42 = vld [vmem:[%s0 + $0x70] sm:$0xf]
  %v43 = vld [vmem:[%s0 + $0x74] sm:$0xf]
  %v44 = vld [vmem:[%s0 + $0x78] sm:$0xf]
  %v45 = vld [vmem:[%s0 + $0x7c] sm:$0xf]
  %v46 = vld [vmem:[%s0 + $0x80] sm:$0xf]
  %v47 = vld [vmem:[%s0 + $0x84] sm:$0xf]
  %v48 = vld [vmem:[%s0 + $0x88] sm:$0xf]
  %v49 = vld [vmem:[%s0 + $0x8c] sm:$0xf]
  %v50 = vld [vmem:[%s0 + $0x90] sm:$0xf]
  %v51 = vld [vmem:[%s0 + $0x94] sm:$0xf]
  %v52 = vld [vmem:[%s0 + $0x98] sm:$0xf]
  %v53 = vld [vmem:[%s0 + $0x9c] sm:$0xf]
  %v54 = vld [vmem:[%s0 + $0xa0] sm:$0xf]
  %v55 = vld [vmem:[%s0 + $0xa4] sm:$0xf]
  %v56 = vld [vmem:[%s0 + $0xa8] sm:$0xf]
  %v57 = vld [vmem:[%s0 + $0xac] sm:$0xf]
  %v58 = vld [vmem:[%s0 + $0xb0] sm:$0xf]
  %v59 = vld [vmem:[%s0 + $0xb4] sm:$0xf]
  %v60 = vld [vmem:[%s0 + $0xb8] sm:$0xf]
  %v61 = vld [vmem:[%s0 + $0xbc] sm:$0xf]
  %v62 = vld [vmem:[%s0 + $0xc0] sm:$0xf]
  %v63 = vld [vmem:[%s0 + $0xc4] sm:$0xf]
  %v64 = vld [vmem:[%s0 + $0xc8] sm:$0xf]
  %v65 = vld [vmem:[%s0 + $0xcc] sm:$0xf]
  %v66 = vld [vmem:[%s0 + $0xd0] sm:$0xf]
  %v67 = vld [vmem:[%s0 + $0xd4] sm:$0xf]
  %v68 = vld [vmem:[%s0 + $0xd8] sm:$0xf]
  %v69 = vld [vmem:[%s0 + $0xdc] sm:$0xf]
  %v70 = vld [vmem:[%s0 + $0xe0] sm:$0xf]
  %v71 = vld [vmem:[%s0 + $0xe4] sm:$0xf]
  %v72 = vld [vmem:[%s0 + $0xe8] sm:$0xf]
  %v73 = vld [vmem:[%s0 + $0xec] sm:$0xf]
  %v74 = vld [vmem:[%s0 + $0xf0] sm:$0xf]
  %v75 = vld [vmem:[%s0 + $0xf4] sm:$0xf]
  %v76 = vld [vmem:[%s0 + $0xf8] sm:$0xf]
  %v77 = vld [vmem:[%s0 + $0xfc] sm:$0xf]
  %v78 = vunpack.c.l.bf16 %v14
  %v79 = vunpack.c.l.bf16 %v15
  %v80 = vunpack.c.l.bf16 %v16
  %v81 = vunpack.c.l.bf16 %v17
  %v82 = vunpack.c.l.bf16 %v18
  %v83 = vunpack.c.l.bf16 %v19
  %v84 = vunpack.c.l.bf16 %v20
  %v85 = vunpack.c.l.bf16 %v21
  %v86 = vunpack.c.l.bf16 %v22
  %v87 = vunpack.c.l.bf16 %v23
  %v88 = vunpack.c.l.bf16 %v24
  %v89 = vunpack.c.l.bf16 %v25
  %v90 = vunpack.c.l.bf16 %v26
  %v91 = vunpack.c.l.bf16 %v27
  %v92 = vunpack.c.l.bf16 %v28
  %v93 = vunpack.c.l.bf16 %v29
  %v94 = vunpack.c.l.bf16 %v30
  %v95 = vunpack.c.l.bf16 %v31
  %v96 = vunpack.c.l.bf16 %v32
  %v97 = vunpack.c.l.bf16 %v33
  %v98 = vunpack.c.l.bf16 %v34
  %v99 = vunpack.c.l.bf16 %v35
  %v100 = vunpack.c.l.bf16 %v36
  %v101 = vunpack.c.l.bf16 %v37
  %v102 = vunpack.c.l.bf16 %v38
  %v103 = vunpack.c.l.bf16 %v39
  %v104 = vunpack.c.l.bf16 %v40
  %v105 = vunpack.c.l.bf16 %v41
  %v106 = vunpack.c.l.bf16 %v42
  %v107 = vunpack.c.l.bf16 %v43
  %v108 = vunpack.c.l.bf16 %v44
  %v109 = vunpack.c.l.bf16 %v45
  %v110 = vunpack.c.l.bf16 %v46
  %v111 = vunpack.c.l.bf16 %v47
  %v112 = vunpack.c.l.bf16 %v48
  %v113 = vunpack.c.l.bf16 %v49
  %v114 = vunpack.c.l.bf16 %v50
  %v115 = vunpack.c.l.bf16 %v51
  %v116 = vunpack.c.l.bf16 %v52
  %v117 = vunpack.c.l.bf16 %v53
  %v118 = vunpack.c.l.bf16 %v54
  %v119 = vunpack.c.l.bf16 %v55
  %v120 = vunpack.c.l.bf16 %v56
  %v121 = vunpack.c.l.bf16 %v57
  %v122 = vunpack.c.l.bf16 %v58
  %v123 = vunpack.c.l.bf16 %v59
  %v124 = vunpack.c.l.bf16 %v60
  %v125 = vunpack.c.l.bf16 %v61
  %v126 = vunpack.c.l.bf16 %v62
  %v127 = vunpack.c.l.bf16 %v63
  %v128 = vunpack.c.l.bf16 %v64
  %v129 = vunpack.c.l.bf16 %v65
  %v130 = vunpack.c.l.bf16 %v66
  %v131 = vunpack.c.l.bf16 %v67
  %v132 = vunpack.c.l.bf16 %v68
  %v133 = vunpack.c.l.bf16 %v69
  %v134 = vunpack.c.l.bf16 %v70
  %v135 = vunpack.c.l.bf16 %v71
  %v136 = vunpack.c.l.bf16 %v72
  %v137 = vunpack.c.l.bf16 %v73
  %v138 = vunpack.c.l.bf16 %v74
  %v139 = vunpack.c.l.bf16 %v75
  %v140 = vunpack.c.l.bf16 %v76
  %v141 = vunpack.c.l.bf16 %v77
  %v142 = vld [vmem:[%s1] sm:$0x1]
  %v144 = vlaneseq
  %v145 = vshrl.u32 %v144, 7
  %v146 = vsub.s32 0, %v145
  %v147 = vrot.slane %v142, %v146
  %v149 = vmul.f32 %v78, %v147
  %v150 = vmul.f32 %v79, %v147
  %v151 = vmul.f32 %v80, %v147
  %v152 = vmul.f32 %v81, %v147
  %v153 = vmul.f32 %v82, %v147
  %v154 = vmul.f32 %v83, %v147
  %v155 = vmul.f32 %v84, %v147
  %v156 = vmul.f32 %v85, %v147
  %v157 = vmul.f32 %v86, %v147
  %v158 = vmul.f32 %v87, %v147
  %v159 = vmul.f32 %v88, %v147
  %v160 = vmul.f32 %v89, %v147
  %v161 = vmul.f32 %v90, %v147
  %v162 = vmul.f32 %v91, %v147
  %v163 = vmul.f32 %v92, %v147
  %v164 = vmul.f32 %v93, %v147
  %v165 = vmul.f32 %v94, %v147
  %v166 = vmul.f32 %v95, %v147
  %v167 = vmul.f32 %v96, %v147
  %v168 = vmul.f32 %v97, %v147
  %v169 = vmul.f32 %v98, %v147
  %v170 = vmul.f32 %v99, %v147
  %v171 = vmul.f32 %v100, %v147
  %v172 = vmul.f32 %v101, %v147
  %v173 = vmul.f32 %v102, %v147
  %v174 = vmul.f32 %v103, %v147
  %v175 = vmul.f32 %v104, %v147
  %v176 = vmul.f32 %v105, %v147
  %v177 = vmul.f32 %v106, %v147
  %v178 = vmul.f32 %v107, %v147
  %v179 = vmul.f32 %v108, %v147
  %v180 = vmul.f32 %v109, %v147
  %v181 = vmul.f32 %v110, %v147
  %v182 = vmul.f32 %v111, %v147
  %v183 = vmul.f32 %v112, %v147
  %v184 = vmul.f32 %v113, %v147
  %v185 = vmul.f32 %v114, %v147
  %v186 = vmul.f32 %v115, %v147
  %v187 = vmul.f32 %v116, %v147
  %v188 = vmul.f32 %v117, %v147
  %v189 = vmul.f32 %v118, %v147
  %v190 = vmul.f32 %v119, %v147
  %v191 = vmul.f32 %v120, %v147
  %v192 = vmul.f32 %v121, %v147
  %v193 = vmul.f32 %v122, %v147
  %v194 = vmul.f32 %v123, %v147
  %v195 = vmul.f32 %v124, %v147
  %v196 = vmul.f32 %v125, %v147
  %v197 = vmul.f32 %v126, %v147
  %v198 = vmul.f32 %v127, %v147
  %v199 = vmul.f32 %v128, %v147
  %v200 = vmul.f32 %v129, %v147
  %v201 = vmul.f32 %v130, %v147
  %v202 = vmul.f32 %v131, %v147
  %v203 = vmul.f32 %v132, %v147
  %v204 = vmul.f32 %v133, %v147
  %v205 = vmul.f32 %v134, %v147
  %v206 = vmul.f32 %v135, %v147
  %v207 = vmul.f32 %v136, %v147
  %v208 = vmul.f32 %v137, %v147
  %v209 = vmul.f32 %v138, %v147
  %v210 = vmul.f32 %v139, %v147
  %v211 = vmul.f32 %v140, %v147
  %v212 = vmul.f32 %v141, %v147
  %v213 = vld [vmem:[%s2] sm:$0x1]
  %v215 = vlaneseq
  %v216 = vshrl.u32 %v215, 7
  %v217 = vsub.s32 0, %v216
  %v218 = vrot.slane %v213, %v217
  %v220 = vadd.f32 %v149, %v218
  %v221 = vadd.f32 %v150, %v218
  %v222 = vadd.f32 %v151, %v218
  %v223 = vadd.f32 %v152, %v218
  %v224 = vadd.f32 %v153, %v218
  %v225 = vadd.f32 %v154, %v218
  %v226 = vadd.f32 %v155, %v218
  %v227 = vadd.f32 %v156, %v218
  %v228 = vadd.f32 %v157, %v218
  %v229 = vadd.f32 %v158, %v218
  %v230 = vadd.f32 %v159, %v218
  %v231 = vadd.f32 %v160, %v218
  %v232 = vadd.f32 %v161, %v218
  %v233 = vadd.f32 %v162, %v218
  %v234 = vadd.f32 %v163, %v218
  %v235 = vadd.f32 %v164, %v218
  %v236 = vadd.f32 %v165, %v218
  %v237 = vadd.f32 %v166, %v218
  %v238 = vadd.f32 %v167, %v218
  %v239 = vadd.f32 %v168, %v218
  %v240 = vadd.f32 %v169, %v218
  %v241 = vadd.f32 %v170, %v218
  %v242 = vadd.f32 %v171, %v218
  %v243 = vadd.f32 %v172, %v218
  %v244 = vadd.f32 %v173, %v218
  %v245 = vadd.f32 %v174, %v218
  %v246 = vadd.f32 %v175, %v218
  %v247 = vadd.f32 %v176, %v218
  %v248 = vadd.f32 %v177, %v218
  %v249 = vadd.f32 %v178, %v218
  %v250 = vadd.f32 %v179, %v218
  %v251 = vadd.f32 %v180, %v218
  %v252 = vadd.f32 %v181, %v218
  %v253 = vadd.f32 %v182, %v218
  %v254 = vadd.f32 %v183, %v218
  %v255 = vadd.f32 %v184, %v218
  %v256 = vadd.f32 %v185, %v218
  %v257 = vadd.f32 %v186, %v218
  %v258 = vadd.f32 %v187, %v218
  %v259 = vadd.f32 %v188, %v218
  %v260 = vadd.f32 %v189, %v218
  %v261 = vadd.f32 %v190, %v218
  %v262 = vadd.f32 %v191, %v218
  %v263 = vadd.f32 %v192, %v218
  %v264 = vadd.f32 %v193, %v218
  %v265 = vadd.f32 %v194, %v218
  %v266 = vadd.f32 %v195, %v218
  %v267 = vadd.f32 %v196, %v218
  %v268 = vadd.f32 %v197, %v218
  %v269 = vadd.f32 %v198, %v218
  %v270 = vadd.f32 %v199, %v218
  %v271 = vadd.f32 %v200, %v218
  %v272 = vadd.f32 %v201, %v218
  %v273 = vadd.f32 %v202, %v218
  %v274 = vadd.f32 %v203, %v218
  %v275 = vadd.f32 %v204, %v218
  %v276 = vadd.f32 %v205, %v218
  %v277 = vadd.f32 %v206, %v218
  %v278 = vadd.f32 %v207, %v218
  %v279 = vadd.f32 %v208, %v218
  %v280 = vadd.f32 %v209, %v218
  %v281 = vadd.f32 %v210, %v218
  %v282 = vadd.f32 %v211, %v218
  %v283 = vadd.f32 %v212, %v218
  %vm284 = vcmp.ge.f32.partialorder %v220, 0.0
  %vm285 = vcmp.ge.f32.partialorder %v221, 0.0
  %vm286 = vcmp.ge.f32.partialorder %v222, 0.0
  %vm287 = vcmp.ge.f32.partialorder %v223, 0.0
  %vm288 = vcmp.ge.f32.partialorder %v224, 0.0
  %vm289 = vcmp.ge.f32.partialorder %v225, 0.0
  %vm290 = vcmp.ge.f32.partialorder %v226, 0.0
  %vm291 = vcmp.ge.f32.partialorder %v227, 0.0
  %vm292 = vcmp.ge.f32.partialorder %v228, 0.0
  %vm293 = vcmp.ge.f32.partialorder %v229, 0.0
  %vm294 = vcmp.ge.f32.partialorder %v230, 0.0
  %vm295 = vcmp.ge.f32.partialorder %v231, 0.0
  %vm296 = vcmp.ge.f32.partialorder %v232, 0.0
  %vm297 = vcmp.ge.f32.partialorder %v233, 0.0
  %vm298 = vcmp.ge.f32.partialorder %v234, 0.0
  %vm299 = vcmp.ge.f32.partialorder %v235, 0.0
  %vm300 = vcmp.ge.f32.partialorder %v236, 0.0
  %vm301 = vcmp.ge.f32.partialorder %v237, 0.0
  %vm302 = vcmp.ge.f32.partialorder %v238, 0.0
  %vm303 = vcmp.ge.f32.partialorder %v239, 0.0
  %vm304 = vcmp.ge.f32.partialorder %v240, 0.0
  %vm305 = vcmp.ge.f32.partialorder %v241, 0.0
  %vm306 = vcmp.ge.f32.partialorder %v242, 0.0
  %vm307 = vcmp.ge.f32.partialorder %v243, 0.0
  %vm308 = vcmp.ge.f32.partialorder %v244, 0.0
  %vm309 = vcmp.ge.f32.partialorder %v245, 0.0
  %vm310 = vcmp.ge.f32.partialorder %v246, 0.0
  %vm311 = vcmp.ge.f32.partialorder %v247, 0.0
  %vm312 = vcmp.ge.f32.partialorder %v248, 0.0
  %vm313 = vcmp.ge.f32.partialorder %v249, 0.0
  %vm314 = vcmp.ge.f32.partialorder %v250, 0.0
  %vm315 = vcmp.ge.f32.partialorder %v251, 0.0
  %vm316 = vcmp.ge.f32.partialorder %v252, 0.0
  %vm317 = vcmp.ge.f32.partialorder %v253, 0.0
  %vm318 = vcmp.ge.f32.partialorder %v254, 0.0
  %vm319 = vcmp.ge.f32.partialorder %v255, 0.0
  %vm320 = vcmp.ge.f32.partialorder %v256, 0.0
  %vm321 = vcmp.ge.f32.partialorder %v257, 0.0
  %vm322 = vcmp.ge.f32.partialorder %v258, 0.0
  %vm323 = vcmp.ge.f32.partialorder %v259, 0.0
  %vm324 = vcmp.ge.f32.partialorder %v260, 0.0
  %vm325 = vcmp.ge.f32.partialorder %v261, 0.0
  %vm326 = vcmp.ge.f32.partialorder %v262, 0.0
  %vm327 = vcmp.ge.f32.partialorder %v263, 0.0
  %vm328 = vcmp.ge.f32.partialorder %v264, 0.0
  %vm329 = vcmp.ge.f32.partialorder %v265, 0.0
  %vm330 = vcmp.ge.f32.partialorder %v266, 0.0
  %vm331 = vcmp.ge.f32.partialorder %v267, 0.0
  %vm332 = vcmp.ge.f32.partialorder %v268, 0.0
  %vm333 = vcmp.ge.f32.partialorder %v269, 0.0
  %vm334 = vcmp.ge.f32.partialorder %v270, 0.0
  %vm335 = vcmp.ge.f32.partialorder %v271, 0.0
  %vm336 = vcmp.ge.f32.partialorder %v272, 0.0
  %vm337 = vcmp.ge.f32.partialorder %v273, 0.0
  %vm338 = vcmp.ge.f32.partialorder %v274, 0.0
  %vm339 = vcmp.ge.f32.partialorder %v275, 0.0
  %vm340 = vcmp.ge.f32.partialorder %v276, 0.0
  %vm341 = vcmp.ge.f32.partialorder %v277, 0.0
  %vm342 = vcmp.ge.f32.partialorder %v278, 0.0
  %vm343 = vcmp.ge.f32.partialorder %v279, 0.0
  %vm344 = vcmp.ge.f32.partialorder %v280, 0.0
  %vm345 = vcmp.ge.f32.partialorder %v281, 0.0
  %vm346 = vcmp.ge.f32.partialorder %v282, 0.0
  %vm347 = vcmp.ge.f32.partialorder %v283, 0.0
  %v348 = vmul.f32 %v220, 0.2
  %v349 = vmul.f32 %v221, 0.2
  %v350 = vmul.f32 %v222, 0.2
  %v351 = vmul.f32 %v223, 0.2
  %v352 = vmul.f32 %v224, 0.2
  %v353 = vmul.f32 %v225, 0.2
  %v354 = vmul.f32 %v226, 0.2
  %v355 = vmul.f32 %v227, 0.2
  %v356 = vmul.f32 %v228, 0.2
  %v357 = vmul.f32 %v229, 0.2
  %v358 = vmul.f32 %v230, 0.2
  %v359 = vmul.f32 %v231, 0.2
  %v360 = vmul.f32 %v232, 0.2
  %v361 = vmul.f32 %v233, 0.2
  %v362 = vmul.f32 %v234, 0.2
  %v363 = vmul.f32 %v235, 0.2
  %v364 = vmul.f32 %v236, 0.2
  %v365 = vmul.f32 %v237, 0.2
  %v366 = vmul.f32 %v238, 0.2
  %v367 = vmul.f32 %v239, 0.2
  %v368 = vmul.f32 %v240, 0.2
  %v369 = vmul.f32 %v241, 0.2
  %v370 = vmul.f32 %v242, 0.2
  %v371 = vmul.f32 %v243, 0.2
  %v372 = vmul.f32 %v244, 0.2
  %v373 = vmul.f32 %v245, 0.2
  %v374 = vmul.f32 %v246, 0.2
  %v375 = vmul.f32 %v247, 0.2
  %v376 = vmul.f32 %v248, 0.2
  %v377 = vmul.f32 %v249, 0.2
  %v378 = vmul.f32 %v250, 0.2
  %v379 = vmul.f32 %v251, 0.2
  %v380 = vmul.f32 %v252, 0.2
  %v381 = vmul.f32 %v253, 0.2
  %v382 = vmul.f32 %v254, 0.2
  %v383 = vmul.f32 %v255, 0.2
  %v384 = vmul.f32 %v256, 0.2
  %v385 = vmul.f32 %v257, 0.2
  %v386 = vmul.f32 %v258, 0.2
  %v387 = vmul.f32 %v259, 0.2
  %v388 = vmul.f32 %v260, 0.2
  %v389 = vmul.f32 %v261, 0.2
  %v390 = vmul.f32 %v262, 0.2
  %v391 = vmul.f32 %v263, 0.2
  %v392 = vmul.f32 %v264, 0.2
  %v393 = vmul.f32 %v265, 0.2
  %v394 = vmul.f32 %v266, 0.2
  %v395 = vmul.f32 %v267, 0.2
  %v396 = vmul.f32 %v268, 0.2
  %v397 = vmul.f32 %v269, 0.2
  %v398 = vmul.f32 %v270, 0.2
  %v399 = vmul.f32 %v271, 0.2
  %v400 = vmul.f32 %v272, 0.2
  %v401 = vmul.f32 %v273, 0.2
  %v402 = vmul.f32 %v274, 0.2
  %v403 = vmul.f32 %v275, 0.2
  %v404 = vmul.f32 %v276, 0.2
  %v405 = vmul.f32 %v277, 0.2
  %v406 = vmul.f32 %v278, 0.2
  %v407 = vmul.f32 %v279, 0.2
  %v408 = vmul.f32 %v280, 0.2
  %v409 = vmul.f32 %v281, 0.2
  %v410 = vmul.f32 %v282, 0.2
  %v411 = vmul.f32 %v283, 0.2
  %v412 = vsel %vm284, %v220, %v348
  %v413 = vsel %vm285, %v221, %v349
  %v414 = vsel %vm286, %v222, %v350
  %v415 = vsel %vm287, %v223, %v351
  %v416 = vsel %vm288, %v224, %v352
  %v417 = vsel %vm289, %v225, %v353
  %v418 = vsel %vm290, %v226, %v354
  %v419 = vsel %vm291, %v227, %v355
  %v420 = vsel %vm292, %v228, %v356
  %v421 = vsel %vm293, %v229, %v357
  %v422 = vsel %vm294, %v230, %v358
  %v423 = vsel %vm295, %v231, %v359
  %v424 = vsel %vm296, %v232, %v360
  %v425 = vsel %vm297, %v233, %v361
  %v426 = vsel %vm298, %v234, %v362
  %v427 = vsel %vm299, %v235, %v363
  %v428 = vsel %vm300, %v236, %v364
  %v429 = vsel %vm301, %v237, %v365
  %v430 = vsel %vm302, %v238, %v366
  %v431 = vsel %vm303, %v239, %v367
  %v432 = vsel %vm304, %v240, %v368
  %v433 = vsel %vm305, %v241, %v369
  %v434 = vsel %vm306, %v242, %v370
  %v435 = vsel %vm307, %v243, %v371
  %v436 = vsel %vm308, %v244, %v372
  %v437 = vsel %vm309, %v245, %v373
  %v438 = vsel %vm310, %v246, %v374
  %v439 = vsel %vm311, %v247, %v375
  %v440 = vsel %vm312, %v248, %v376
  %v441 = vsel %vm313, %v249, %v377
  %v442 = vsel %vm314, %v250, %v378
  %v443 = vsel %vm315, %v251, %v379
  %v444 = vsel %vm316, %v252, %v380
  %v445 = vsel %vm317, %v253, %v381
  %v446 = vsel %vm318, %v254, %v382
  %v447 = vsel %vm319, %v255, %v383
  %v448 = vsel %vm320, %v256, %v384
  %v449 = vsel %vm321, %v257, %v385
  %v450 = vsel %vm322, %v258, %v386
  %v451 = vsel %vm323, %v259, %v387
  %v452 = vsel %vm324, %v260, %v388
  %v453 = vsel %vm325, %v261, %v389
  %v454 = vsel %vm326, %v262, %v390
  %v455 = vsel %vm327, %v263, %v391
  %v456 = vsel %vm328, %v264, %v392
  %v457 = vsel %vm329, %v265, %v393
  %v458 = vsel %vm330, %v266, %v394
  %v459 = vsel %vm331, %v267, %v395
  %v460 = vsel %vm332, %v268, %v396
  %v461 = vsel %vm333, %v269, %v397
  %v462 = vsel %vm334, %v270, %v398
  %v463 = vsel %vm335, %v271, %v399
  %v464 = vsel %vm336, %v272, %v400
  %v465 = vsel %vm337, %v273, %v401
  %v466 = vsel %vm338, %v274, %v402
  %v467 = vsel %vm339, %v275, %v403
  %v468 = vsel %vm340, %v276, %v404
  %v469 = vsel %vm341, %v277, %v405
  %v470 = vsel %vm342, %v278, %v406
  %v471 = vsel %vm343, %v279, %v407
  %v472 = vsel %vm344, %v280, %v408
  %v473 = vsel %vm345, %v281, %v409
  %v474 = vsel %vm346, %v282, %v410
  %v475 = vsel %vm347, %v283, %v411
  %v476 = vpack.c.bf16 %v413, %v412
  %v477 = vpack.c.bf16 %v415, %v414
  %v478 = vpack.c.bf16 %v417, %v416
  %v479 = vpack.c.bf16 %v419, %v418
  %v480 = vpack.c.bf16 %v421, %v420
  %v481 = vpack.c.bf16 %v423, %v422
  %v482 = vpack.c.bf16 %v425, %v424
  %v483 = vpack.c.bf16 %v427, %v426
  %v484 = vpack.c.bf16 %v429, %v428
  %v485 = vpack.c.bf16 %v431, %v430
  %v486 = vpack.c.bf16 %v433, %v432
  %v487 = vpack.c.bf16 %v435, %v434
  %v488 = vpack.c.bf16 %v437, %v436
  %v489 = vpack.c.bf16 %v439, %v438
  %v490 = vpack.c.bf16 %v441, %v440
  %v491 = vpack.c.bf16 %v443, %v442
  %v492 = vpack.c.bf16 %v445, %v444
  %v493 = vpack.c.bf16 %v447, %v446
  %v494 = vpack.c.bf16 %v449, %v448
  %v495 = vpack.c.bf16 %v451, %v450
  %v496 = vpack.c.bf16 %v453, %v452
  %v497 = vpack.c.bf16 %v455, %v454
  %v498 = vpack.c.bf16 %v457, %v456
  %v499 = vpack.c.bf16 %v459, %v458
  %v500 = vpack.c.bf16 %v461, %v460
  %v501 = vpack.c.bf16 %v463, %v462
  %v502 = vpack.c.bf16 %v465, %v464
  %v503 = vpack.c.bf16 %v467, %v466
  %v504 = vpack.c.bf16 %v469, %v468
  %v505 = vpack.c.bf16 %v471, %v470
  %v506 = vpack.c.bf16 %v473, %v472
  %v507 = vpack.c.bf16 %v475, %v474
  %v540 = vunpack.c.l.b16 %v476
  %v541 = vunpack.c.h.b16 %v476
  %v542 = vunpack.c.l.b16 %v477
  %v543 = vunpack.c.h.b16 %v477
  %v544 = vunpack.c.l.b16 %v478
  %v545 = vunpack.c.h.b16 %v478
  %v546 = vunpack.c.l.b16 %v479
  %v547 = vunpack.c.h.b16 %v479
  %v548 = vunpack.c.l.b16 %v480
  %v549 = vunpack.c.h.b16 %v480
  %v550 = vunpack.c.l.b16 %v481
  %v551 = vunpack.c.h.b16 %v481
  %v552 = vunpack.c.l.b16 %v482
  %v553 = vunpack.c.h.b16 %v482
  %v554 = vunpack.c.l.b16 %v483
  %v555 = vunpack.c.h.b16 %v483
  %v556 = vunpack.c.l.b16 %v484
  %v557 = vunpack.c.h.b16 %v484
  %v558 = vunpack.c.l.b16 %v485
  %v559 = vunpack.c.h.b16 %v485
  %v560 = vunpack.c.l.b16 %v486
  %v561 = vunpack.c.h.b16 %v486
  %v562 = vunpack.c.l.b16 %v487
  %v563 = vunpack.c.h.b16 %v487
  %v564 = vunpack.c.l.b16 %v488
  %v565 = vunpack.c.h.b16 %v488
  %v566 = vunpack.c.l.b16 %v489
  %v567 = vunpack.c.h.b16 %v489
  %v568 = vunpack.c.l.b16 %v490
  %v569 = vunpack.c.h.b16 %v490
  %v570 = vunpack.c.l.b16 %v491
  %v571 = vunpack.c.h.b16 %v491
  %v572 = vunpack.c.l.b16 %v492
  %v573 = vunpack.c.h.b16 %v492
  %v574 = vunpack.c.l.b16 %v493
  %v575 = vunpack.c.h.b16 %v493
  %v576 = vunpack.c.l.b16 %v494
  %v577 = vunpack.c.h.b16 %v494
  %v578 = vunpack.c.l.b16 %v495
  %v579 = vunpack.c.h.b16 %v495
  %v580 = vunpack.c.l.b16 %v496
  %v581 = vunpack.c.h.b16 %v496
  %v582 = vunpack.c.l.b16 %v497
  %v583 = vunpack.c.h.b16 %v497
  %v584 = vunpack.c.l.b16 %v498
  %v585 = vunpack.c.h.b16 %v498
  %v586 = vunpack.c.l.b16 %v499
  %v587 = vunpack.c.h.b16 %v499
  %v588 = vunpack.c.l.b16 %v500
  %v589 = vunpack.c.h.b16 %v500
  %v590 = vunpack.c.l.b16 %v501
  %v591 = vunpack.c.h.b16 %v501
  %v592 = vunpack.c.l.b16 %v502
  %v593 = vunpack.c.h.b16 %v502
  %v594 = vunpack.c.l.b16 %v503
  %v595 = vunpack.c.h.b16 %v503
  %v596 = vunpack.c.l.b16 %v504
  %v597 = vunpack.c.h.b16 %v504
  %v598 = vunpack.c.l.b16 %v505
  %v599 = vunpack.c.h.b16 %v505
  %v600 = vunpack.c.l.b16 %v506
  %v601 = vunpack.c.h.b16 %v506
  %v602 = vunpack.c.l.b16 %v507
  %v603 = vunpack.c.h.b16 %v507
  %v604 = vpack.c.b16 %v540, %v540
  %v605 = vpack.c.b16 %v541, %v541
  %v606 = vpack.c.b16 %v542, %v542
  %v607 = vpack.c.b16 %v543, %v543
  %v608 = vpack.c.b16 %v544, %v544
  %v609 = vpack.c.b16 %v545, %v545
  %v610 = vpack.c.b16 %v546, %v546
  %v611 = vpack.c.b16 %v547, %v547
  %v612 = vpack.c.b16 %v548, %v548
  %v613 = vpack.c.b16 %v549, %v549
  %v614 = vpack.c.b16 %v550, %v550
  %v615 = vpack.c.b16 %v551, %v551
  %v616 = vpack.c.b16 %v552, %v552
  %v617 = vpack.c.b16 %v553, %v553
  %v618 = vpack.c.b16 %v554, %v554
  %v619 = vpack.c.b16 %v555, %v555
  %v620 = vpack.c.b16 %v556, %v556
  %v621 = vpack.c.b16 %v557, %v557
  %v622 = vpack.c.b16 %v558, %v558
  %v623 = vpack.c.b16 %v559, %v559
  %v624 = vpack.c.b16 %v560, %v560
  %v625 = vpack.c.b16 %v561, %v561
  %v626 = vpack.c.b16 %v562, %v562
  %v627 = vpack.c.b16 %v563, %v563
  %v628 = vpack.c.b16 %v564, %v564
  %v629 = vpack.c.b16 %v565, %v565
  %v630 = vpack.c.b16 %v566, %v566
  %v631 = vpack.c.b16 %v567, %v567
  %v632 = vpack.c.b16 %v568, %v568
  %v633 = vpack.c.b16 %v569, %v569
  %v634 = vpack.c.b16 %v570, %v570
  %v635 = vpack.c.b16 %v571, %v571
  %v636 = vpack.c.b16 %v572, %v572
  %v637 = vpack.c.b16 %v573, %v573
  %v638 = vpack.c.b16 %v574, %v574
  %v639 = vpack.c.b16 %v575, %v575
  %v640 = vpack.c.b16 %v576, %v576
  %v641 = vpack.c.b16 %v577, %v577
  %v642 = vpack.c.b16 %v578, %v578
  %v643 = vpack.c.b16 %v579, %v579
  %v644 = vpack.c.b16 %v580, %v580
  %v645 = vpack.c.b16 %v581, %v581
  %v646 = vpack.c.b16 %v582, %v582
  %v647 = vpack.c.b16 %v583, %v583
  %v648 = vpack.c.b16 %v584, %v584
  %v649 = vpack.c.b16 %v585, %v585
  %v650 = vpack.c.b16 %v586, %v586
  %v651 = vpack.c.b16 %v587, %v587
  %v652 = vpack.c.b16 %v588, %v588
  %v653 = vpack.c.b16 %v589, %v589
  %v654 = vpack.c.b16 %v590, %v590
  %v655 = vpack.c.b16 %v591, %v591
  %v656 = vpack.c.b16 %v592, %v592
  %v657 = vpack.c.b16 %v593, %v593
  %v658 = vpack.c.b16 %v594, %v594
  %v659 = vpack.c.b16 %v595, %v595
  %v660 = vpack.c.b16 %v596, %v596
  %v661 = vpack.c.b16 %v597, %v597
  %v662 = vpack.c.b16 %v598, %v598
  %v663 = vpack.c.b16 %v599, %v599
  %v664 = vpack.c.b16 %v600, %v600
  %v665 = vpack.c.b16 %v601, %v601
  %v666 = vpack.c.b16 %v602, %v602
  %v667 = vpack.c.b16 %v603, %v603
  %vm732 = vcmask 519168
  %733 = vst.msk [vmem:[%s3] sm:$0xf] %vm732, %v604
  %734 = vst.msk [vmem:[%s3 + $0x4] sm:$0xf] %vm732, %v605
  %735 = vst.msk [vmem:[%s3 + $0x8] sm:$0xf] %vm732, %v606
  %736 = vst.msk [vmem:[%s3 + $0xc] sm:$0xf] %vm732, %v607
  %737 = vst.msk [vmem:[%s3 + $0x10] sm:$0xf] %vm732, %v608
  %738 = vst.msk [vmem:[%s3 + $0x14] sm:$0xf] %vm732, %v609
  %739 = vst.msk [vmem:[%s3 + $0x18] sm:$0xf] %vm732, %v610
  %740 = vst.msk [vmem:[%s3 + $0x1c] sm:$0xf] %vm732, %v611
  %741 = vst.msk [vmem:[%s3 + $0x20] sm:$0xf] %vm732, %v612
  %742 = vst.msk [vmem:[%s3 + $0x24] sm:$0xf] %vm732, %v613
  %743 = vst.msk [vmem:[%s3 + $0x28] sm:$0xf] %vm732, %v614
  %744 = vst.msk [vmem:[%s3 + $0x2c] sm:$0xf] %vm732, %v615
  %745 = vst.msk [vmem:[%s3 + $0x30] sm:$0xf] %vm732, %v616
  %746 = vst.msk [vmem:[%s3 + $0x34] sm:$0xf] %vm732, %v617
  %747 = vst.msk [vmem:[%s3 + $0x38] sm:$0xf] %vm732, %v618
  %748 = vst.msk [vmem:[%s3 + $0x3c] sm:$0xf] %vm732, %v619
  %749 = vst.msk [vmem:[%s3 + $0x40] sm:$0xf] %vm732, %v620
  %750 = vst.msk [vmem:[%s3 + $0x44] sm:$0xf] %vm732, %v621
  %751 = vst.msk [vmem:[%s3 + $0x48] sm:$0xf] %vm732, %v622
  %752 = vst.msk [vmem:[%s3 + $0x4c] sm:$0xf] %vm732, %v623
  %753 = vst.msk [vmem:[%s3 + $0x50] sm:$0xf] %vm732, %v624
  %754 = vst.msk [vmem:[%s3 + $0x54] sm:$0xf] %vm732, %v625
  %755 = vst.msk [vmem:[%s3 + $0x58] sm:$0xf] %vm732, %v626
  %756 = vst.msk [vmem:[%s3 + $0x5c] sm:$0xf] %vm732, %v627
  %757 = vst.msk [vmem:[%s3 + $0x60] sm:$0xf] %vm732, %v628
  %758 = vst.msk [vmem:[%s3 + $0x64] sm:$0xf] %vm732, %v629
  %759 = vst.msk [vmem:[%s3 + $0x68] sm:$0xf] %vm732, %v630
  %760 = vst.msk [vmem:[%s3 + $0x6c] sm:$0xf] %vm732, %v631
  %761 = vst.msk [vmem:[%s3 + $0x70] sm:$0xf] %vm732, %v632
  %762 = vst.msk [vmem:[%s3 + $0x74] sm:$0xf] %vm732, %v633
  %763 = vst.msk [vmem:[%s3 + $0x78] sm:$0xf] %vm732, %v634
  %764 = vst.msk [vmem:[%s3 + $0x7c] sm:$0xf] %vm732, %v635
  %765 = vst.msk [vmem:[%s3 + $0x80] sm:$0xf] %vm732, %v636
  %766 = vst.msk [vmem:[%s3 + $0x84] sm:$0xf] %vm732, %v637
  %767 = vst.msk [vmem:[%s3 + $0x88] sm:$0xf] %vm732, %v638
  %768 = vst.msk [vmem:[%s3 + $0x8c] sm:$0xf] %vm732, %v639
  %769 = vst.msk [vmem:[%s3 + $0x90] sm:$0xf] %vm732, %v640
  %770 = vst.msk [vmem:[%s3 + $0x94] sm:$0xf] %vm732, %v641
  %771 = vst.msk [vmem:[%s3 + $0x98] sm:$0xf] %vm732, %v642
  %772 = vst.msk [vmem:[%s3 + $0x9c] sm:$0xf] %vm732, %v643
  %773 = vst.msk [vmem:[%s3 + $0xa0] sm:$0xf] %vm732, %v644
  %774 = vst.msk [vmem:[%s3 + $0xa4] sm:$0xf] %vm732, %v645
  %775 = vst.msk [vmem:[%s3 + $0xa8] sm:$0xf] %vm732, %v646
  %776 = vst.msk [vmem:[%s3 + $0xac] sm:$0xf] %vm732, %v647
  %777 = vst.msk [vmem:[%s3 + $0xb0] sm:$0xf] %vm732, %v648
  %778 = vst.msk [vmem:[%s3 + $0xb4] sm:$0xf] %vm732, %v649
  %779 = vst.msk [vmem:[%s3 + $0xb8] sm:$0xf] %vm732, %v650
  %780 = vst.msk [vmem:[%s3 + $0xbc] sm:$0xf] %vm732, %v651
  %781 = vst.msk [vmem:[%s3 + $0xc0] sm:$0xf] %vm732, %v652
  %782 = vst.msk [vmem:[%s3 + $0xc4] sm:$0xf] %vm732, %v653
  %783 = vst.msk [vmem:[%s3 + $0xc8] sm:$0xf] %vm732, %v654
  %784 = vst.msk [vmem:[%s3 + $0xcc] sm:$0xf] %vm732, %v655
  %785 = vst.msk [vmem:[%s3 + $0xd0] sm:$0xf] %vm732, %v656
  %786 = vst.msk [vmem:[%s3 + $0xd4] sm:$0xf] %vm732, %v657
  %787 = vst.msk [vmem:[%s3 + $0xd8] sm:$0xf] %vm732, %v658
  %788 = vst.msk [vmem:[%s3 + $0xdc] sm:$0xf] %vm732, %v659
  %789 = vst.msk [vmem:[%s3 + $0xe0] sm:$0xf] %vm732, %v660
  %790 = vst.msk [vmem:[%s3 + $0xe4] sm:$0xf] %vm732, %v661
  %791 = vst.msk [vmem:[%s3 + $0xe8] sm:$0xf] %vm732, %v662
  %792 = vst.msk [vmem:[%s3 + $0xec] sm:$0xf] %vm732, %v663
  %793 = vst.msk [vmem:[%s3 + $0xf0] sm:$0xf] %vm732, %v664
  %794 = vst.msk [vmem:[%s3 + $0xf4] sm:$0xf] %vm732, %v665
  %795 = vst.msk [vmem:[%s3 + $0xf8] sm:$0xf] %vm732, %v666
  %796 = vst.msk [vmem:[%s3 + $0xfc] sm:$0xf] %vm732, %v667
  // Predicated region
  $region14: #{_lambda_.10} parent=0 // pred_check
    _
  $region15: #{_lambda_.10} parent=0 // pred_check_branch
    %798 = sbr.rel (0) target = $region17
  $region16: #{_lambda_.10} parent=0 // pred_region
    _
  $region17: #{_lambda_.10} parent=0 // pred_fallthru
    _
  // Predicated region
  $region18: #{_lambda_.10} parent=0 // pred_check
    _
  $region19: #{_lambda_.10} parent=0 // pred_check_branch
    %800 = sbr.rel (0) target = $region21
  $region20: #{_lambda_.10} parent=0 // pred_region
    _
  $region21: #{_lambda_.10} parent=0 // pred_fallthru
    _

// kernel: _lambda_.11
$region0: #{_lambda_.11}
  #allocation0 [shape = 'u32[]', space=smem, size = 0x4, offset = 0x4, fixed_abs, tag = 'smem constant byte address 0x4 - core index']
  #allocation1 [shape = 'u32[144,128]{1,0:T(1,128)}', space=vmem, size = 0x12000, scoped, tag = 'internal scratch']
  #allocation2 [shape = 'f32[128,128]{1,0:T(8,128)}', space=vmem, size = 0x10000, scoped, tag = 'scratch operand']
  %s0 = inlined_call_operand.vmem [shape: bf16[128,1024], index: 0, kind: input, shape index: {}]
  %s1 = inlined_call_operand.vmem [shape: bf16[1024,128], index: 1, kind: input, shape index: {}]
  %s2 = inlined_call_operand.vmem [shape: bf16[128,128], index: 2, kind: output, shape index: {0}]
  %s3 = inlined_call_operand.vmem [shape: f32[1,1,128], index: 3, kind: output, shape index: {1}]
  %s4 = inlined_call_operand.vmem [shape: f32[1,1,128], index: 4, kind: output, shape index: {2}]
  %5 = xla_tuple %s2, %s3, %s4
  %s6 = sld [smem:[#allocation0]]
  $region88: #{_lambda_.11} parent=0
    _
  %s8 = ssub.s32 1, %s6
  %s9 = scalar_select 0, %s8, %s6
  $region1: #{_lambda_.11} parent=0
    #allocation3 [shape = 'u8[262144]{0}', space=vmem, size = 0x40000, scoped, tag = 'input window, operand 0']
    loop: start=0, step=1, limit=4
    $region2: #{_lambda_.11} parent=1 // loop_pre_header
      _
    $region3: #{_lambda_.11} parent=1 // loop_header
      %s11 = sphi 0, %s15
      %p12 = scmp.ge.s32.totalorder %s11, 4
      %s18 = sphi 0, %s30
      %s19 = sphi 0, %s26
      %s20 = sphi 0, %s18
      %s21 = sphi 0, %s19
      %s22 = sphi 0, %s20
      %s23 = sphi 0, %s21
      %s35 = sphi 0, %s37
      %s38 = sphi 0, %s35
      %s39 = sphi 0, %s38
      %s55 = sphi 0, %s39
      %s61 = sphi 0, %s63
      %s64 = sphi 0, %s61
      %s65 = sphi 0, %s64
      %s81 = sphi 0, %s65
      %s87 = sphi 0, %s89
      %s90 = sphi 0, %s87
      %s91 = sphi 0, %s90
      %s107 = sphi 0, %s91
      %s113 = sphi 0, %s115
      %s116 = sphi 0, %s113
      %s117 = sphi 0, %s116
      %s133 = sphi 0, %s117
      %s139 = sphi 0, %s141
      %s142 = sphi 0, %s139
      %s143 = sphi 0, %s142
      %s159 = sphi 0, %s143
    $region4: #{_lambda_.11} parent=1 // loop_header_branch
      %14 = sbr.rel (%p12) target = $region8
    $region5: #{_lambda_.11} parent=1 // loop_body
      %s16 = ssub.s32 %s11, 1
      %s17 = ssub.s32 %s11, 2
      %s24 = sadd.s32 1, %s19
      %p25 = scmp.ge.s32.totalorder %s24, 2
      %s26 = scalar_select %p25, 0, %s24
      %s27 = sadd.s32 1, %s18
      %s28 = scalar_select %p25, %s27, %s18
      %p29 = scmp.ge.s32.totalorder %s28, 1
      %s30 = scalar_select %p29, 0, %s28
      %s31 = ssub.s32 %s18, %s30
      %s32 = ssub.s32 %s19, %s26
      %s33 = sor.u32 %s31, %s32
      %p34 = scmp.eq.s32.totalorder %s33, 0
      %s36 = sadd.s32 %s35, 1
      %s37 = scalar_select %p34, %s35, %s36
      %p40 = pneg %p34
      %p41 = scmp.eq.s32.totalorder %s11, 1
      %p42 = por %p40, %p41
      %p43 = scmp.ne.s32.totalorder %s35, %s38
      %p44 = scmp.eq.s32.totalorder %s11, 0
      %p45 = por %p43, %p44
      %p46 = scmp.ne.s32.totalorder %s35, %s38
      %p47 = scmp.eq.s32.totalorder %s16, 1
      %p48 = por %p46, %p47
      %p49 = scmp.ne.s32.totalorder %s38, %s39
      %p50 = scmp.eq.s32.totalorder %s16, 0
      %p51 = por %p49, %p50
      %p52 = scmp.ne.s32.totalorder %s38, %s39
      %p53 = scmp.eq.s32.totalorder %s17, 1
      %p54 = por %p52, %p53
      %p56 = scmp.ne.s32.totalorder %s39, %s55
      %p57 = scmp.eq.s32.totalorder %s17, 0
      %p58 = por %p56, %p57
      %s59 = ssub.s32 %s19, %s26
      %p60 = scmp.eq.s32.totalorder %s59, 0
      %s62 = sadd.s32 %s61, 1
      %s63 = scalar_select %p60, %s61, %s62
      %p66 = pneg %p60
      %p67 = scmp.eq.s32.totalorder %s11, 1
      %p68 = por %p66, %p67
      %p69 = scmp.ne.s32.totalorder %s61, %s64
      %p70 = scmp.eq.s32.totalorder %s11, 0
      %p71 = por %p69, %p70
      %p72 = scmp.ne.s32.totalorder %s61, %s64
      %p73 = scmp.eq.s32.totalorder %s16, 1
      %p74 = por %p72, %p73
      %p75 = scmp.ne.s32.totalorder %s64, %s65
      %p76 = scmp.eq.s32.totalorder %s16, 0
      %p77 = por %p75, %p76
      %p78 = scmp.ne.s32.totalorder %s64, %s65
      %p79 = scmp.eq.s32.totalorder %s17, 1
      %p80 = por %p78, %p79
      %p82 = scmp.ne.s32.totalorder %s65, %s81
      %p83 = scmp.eq.s32.totalorder %s17, 0
      %p84 = por %p82, %p83
      %s85 = ssub.s32 %s18, %s30
      %p86 = scmp.eq.s32.totalorder %s85, 0
      %s88 = sadd.s32 %s87, 1
      %s89 = scalar_select %p86, %s87, %s88
      %p92 = pneg %p86
      %p93 = scmp.eq.s32.totalorder %s11, 1
      %p94 = por %p92, %p93
      %p95 = scmp.ne.s32.totalorder %s87, %s90
      %p96 = scmp.eq.s32.totalorder %s11, 0
      %p97 = por %p95, %p96
      %p98 = scmp.ne.s32.totalorder %s87, %s90
      %p99 = scmp.eq.s32.totalorder %s16, 1
      %p100 = por %p98, %p99
      %p101 = scmp.ne.s32.totalorder %s90, %s91
      %p102 = scmp.eq.s32.totalorder %s16, 0
      %p103 = por %p101, %p102
      %p104 = scmp.ne.s32.totalorder %s90, %s91
      %p105 = scmp.eq.s32.totalorder %s17, 1
      %p106 = por %p104, %p105
      %p108 = scmp.ne.s32.totalorder %s91, %s107
      %p109 = scmp.eq.s32.totalorder %s17, 0
      %p110 = por %p108, %p109
      %s111 = ssub.s32 %s18, %s30
      %p112 = scmp.eq.s32.totalorder %s111, 0
      %s114 = sadd.s32 %s113, 1
      %s115 = scalar_select %p112, %s113, %s114
      %p118 = pneg %p112
      %p119 = scmp.eq.s32.totalorder %s11, 1
      %p120 = por %p118, %p119
      %p121 = scmp.ne.s32.totalorder %s113, %s116
      %p122 = scmp.eq.s32.totalorder %s11, 0
      %p123 = por %p121, %p122
      %p124 = scmp.ne.s32.totalorder %s113, %s116
      %p125 = scmp.eq.s32.totalorder %s16, 1
      %p126 = por %p124, %p125
      %p127 = scmp.ne.s32.totalorder %s116, %s117
      %p128 = scmp.eq.s32.totalorder %s16, 0
      %p129 = por %p127, %p128
      %p130 = scmp.ne.s32.totalorder %s116, %s117
      %p131 = scmp.eq.s32.totalorder %s17, 1
      %p132 = por %p130, %p131
      %p134 = scmp.ne.s32.totalorder %s117, %s133
      %p135 = scmp.eq.s32.totalorder %s17, 0
      %p136 = por %p134, %p135
      %s137 = ssub.s32 %s18, %s30
      %p138 = scmp.eq.s32.totalorder %s137, 0
      %s140 = sadd.s32 %s139, 1
      %s141 = scalar_select %p138, %s139, %s140
      %p144 = pneg %p138
      %p145 = scmp.eq.s32.totalorder %s11, 1
      %p146 = por %p144, %p145
      %p147 = scmp.ne.s32.totalorder %s139, %s142
      %p148 = scmp.eq.s32.totalorder %s11, 0
      %p149 = por %p147, %p148
      %p150 = scmp.ne.s32.totalorder %s139, %s142
      %p151 = scmp.eq.s32.totalorder %s16, 1
      %p152 = por %p150, %p151
      %p153 = scmp.ne.s32.totalorder %s142, %s143
      %p154 = scmp.eq.s32.totalorder %s16, 0
      %p155 = por %p153, %p154
      %p156 = scmp.ne.s32.totalorder %s142, %s143
      %p157 = scmp.eq.s32.totalorder %s17, 1
      %p158 = por %p156, %p157
      %p160 = scmp.ne.s32.totalorder %s143, %s159
      %p161 = scmp.eq.s32.totalorder %s17, 0
      %p162 = por %p160, %p161
      %p163 = scmp.le.s32.totalorder 1, %s11
      %p164 = scmp.lt.s32.totalorder %s11, 3
      %p165 = pnand %p163, %p164
      %p166 = pneg %p165
      // Predicated region
      $region9: #{_lambda_.11} parent=5 // pred_check
        _
      $region10: #{_lambda_.11} parent=5 // pred_check_branch
        %168 = sbr.rel (%p165) target = $region12
      $region11: #{_lambda_.11} parent=5 // pred_region
        %s169 = ssub.s32 %s11, 1
      $region12: #{_lambda_.11} parent=5 // pred_fallthru
        _
      %p170 = scmp.lt.s32.totalorder %s11, 2
      // Predicated region
      $region13: #{_lambda_.11} parent=5 // pred_check
        %p171 = pneg %p170
      $region14: #{_lambda_.11} parent=5 // pred_check_branch
        %173 = sbr.rel (%p171) target = $region16
      $region15: #{_lambda_.11} parent=5 // pred_region
        // Predicated region
        $region17: #{_lambda_.11} parent=15 // pred_check
          %p174 = pneg %p45
        $region18: #{_lambda_.11} parent=15 // pred_check_branch
          %176 = sbr.rel (%p174) target = $region20
        $region19: #{_lambda_.11} parent=15 // pred_region
          %s177 = sand.u32 %s35, 1
          %s178 = sand.u32 %s35, 1
          %s179 = smul.addr %s178, 256
          %s180 = scalar_lea.vmem [#allocation3], %s179
          %s181 = smul.u32 16, %s18
          %s182 = smul.u32 4, %s19
          %s183 = smul.addr %s181, 8
          %s184 = sadd.s32 %s182, %s183
          %s185 = smul.addr %s184, 4
          %s186 = scalar_lea.vmem %s0, %s185
          // Predicated region
          $region21: #{_lambda_.11} parent=19 // pred_check
            _
          $region22: #{_lambda_.11} parent=19 // pred_check_branch
            %188 = sbr.rel (0) target = $region24
          $region23: #{_lambda_.11} parent=19 // pred_region
            // Predicated region
            $region25: #{_lambda_.11} parent=23 // pred_check
              _
            $region26: #{_lambda_.11} parent=23 // pred_check_branch
              %190 = sbr.rel (0) target = $region28
            $region27: #{_lambda_.11} parent=23 // pred_region
              loop: start=0, step=1, limit=1
              $region29: #{_lambda_.11} parent=27 // loop_pre_header
                _
              $region30: #{_lambda_.11} parent=27 // loop_header
                %s192 = sphi 0, %s196
                %p193 = scmp.ge.s32.totalorder %s192, 1
                %s197 = sphi %s186, %s186
                %s198 = sphi %s180, %s180
              $region31: #{_lambda_.11} parent=27 // loop_header_branch
                %195 = sbr.rel (%p193) target = $region35
              $region32: #{_lambda_.11} parent=27 // loop_body
                %v199 = vld [vmem:[%s197] sm:$0xff]
                %200 = vst [vmem:[%s198] sm:$0xff] %v199
                %v201 = vld [vmem:[%s197 + $0x8] sm:$0xff]
                %202 = vst [vmem:[%s198 + $0x8] sm:$0xff] %v201
                %v203 = vld [vmem:[%s197 + $0x20] sm:$0xff]
                %204 = vst [vmem:[%s198 + $0x10] sm:$0xff] %v203
                %v205 = vld [vmem:[%s197 + $0x28] sm:$0xff]
                %206 = vst [vmem:[%s198 + $0x18] sm:$0xff] %v205
                %v207 = vld [vmem:[%s197 + $0x40] sm:$0xff]
                %208 = vst [vmem:[%s198 + $0x20] sm:$0xff] %v207
                %v209 = vld [vmem:[%s197 + $0x48] sm:$0xff]
                %210 = vst [vmem:[%s198 + $0x28] sm:$0xff] %v209
                %v211 = vld [vmem:[%s197 + $0x60] sm:$0xff]
                %212 = vst [vmem:[%s198 + $0x30] sm:$0xff] %v211
                %v213 = vld [vmem:[%s197 + $0x68] sm:$0xff]
                %214 = vst [vmem:[%s198 + $0x38] sm:$0xff] %v213
                %v215 = vld [vmem:[%s197 + $0x80] sm:$0xff]
                %216 = vst [vmem:[%s198 + $0x40] sm:$0xff] %v215
                %v217 = vld [vmem:[%s197 + $0x88] sm:$0xff]
                %218 = vst [vmem:[%s198 + $0x48] sm:$0xff] %v217
                %v219 = vld [vmem:[%s197 + $0xa0] sm:$0xff]
                %220 = vst [vmem:[%s198 + $0x50] sm:$0xff] %v219
                %v221 = vld [vmem:[%s197 + $0xa8] sm:$0xff]
                %222 = vst [vmem:[%s198 + $0x58] sm:$0xff] %v221
                %v223 = vld [vmem:[%s197 + $0xc0] sm:$0xff]
                %224 = vst [vmem:[%s198 + $0x60] sm:$0xff] %v223
                %v225 = vld [vmem:[%s197 + $0xc8] sm:$0xff]
                %226 = vst [vmem:[%s198 + $0x68] sm:$0xff] %v225
                %v227 = vld [vmem:[%s197 + $0xe0] sm:$0xff]
                %228 = vst [vmem:[%s198 + $0x70] sm:$0xff] %v227
                %v229 = vld [vmem:[%s197 + $0xe8] sm:$0xff]
                %230 = vst [vmem:[%s198 + $0x78] sm:$0xff] %v229
                %v231 = vld [vmem:[%s197 + $0x100] sm:$0xff]
                %232 = vst [vmem:[%s198 + $0x80] sm:$0xff] %v231
                %v233 = vld [vmem:[%s197 + $0x108] sm:$0xff]
                %234 = vst [vmem:[%s198 + $0x88] sm:$0xff] %v233
                %v235 = vld [vmem:[%s197 + $0x120] sm:$0xff]
                %236 = vst [vmem:[%s198 + $0x90] sm:$0xff] %v235
                %v237 = vld [vmem:[%s197 + $0x128] sm:$0xff]
                %238 = vst [vmem:[%s198 + $0x98] sm:$0xff] %v237
                %v239 = vld [vmem:[%s197 + $0x140] sm:$0xff]
                %240 = vst [vmem:[%s198 + $0xa0] sm:$0xff] %v239
                %v241 = vld [vmem:[%s197 + $0x148] sm:$0xff]
                %242 = vst [vmem:[%s198 + $0xa8] sm:$0xff] %v241
                %v243 = vld [vmem:[%s197 + $0x160] sm:$0xff]
                %244 = vst [vmem:[%s198 + $0xb0] sm:$0xff] %v243
                %v245 = vld [vmem:[%s197 + $0x168] sm:$0xff]
                %246 = vst [vmem:[%s198 + $0xb8] sm:$0xff] %v245
                %v247 = vld [vmem:[%s197 + $0x180] sm:$0xff]
                %248 = vst [vmem:[%s198 + $0xc0] sm:$0xff] %v247
                %v249 = vld [vmem:[%s197 + $0x188] sm:$0xff]
                %250 = vst [vmem:[%s198 + $0xc8] sm:$0xff] %v249
                %v251 = vld [vmem:[%s197 + $0x1a0] sm:$0xff]
                %252 = vst [vmem:[%s198 + $0xd0] sm:$0xff] %v251
                %v253 = vld [vmem:[%s197 + $0x1a8] sm:$0xff]
                %254 = vst [vmem:[%s198 + $0xd8] sm:$0xff] %v253
                %v255 = vld [vmem:[%s197 + $0x1c0] sm:$0xff]
                %256 = vst [vmem:[%s198 + $0xe0] sm:$0xff] %v255
                %v257 = vld [vmem:[%s197 + $0x1c8] sm:$0xff]
                %258 = vst [vmem:[%s198 + $0xe8] sm:$0xff] %v257
                %v259 = vld [vmem:[%s197 + $0x1e0] sm:$0xff]
                %260 = vst [vmem:[%s198 + $0xf0] sm:$0xff] %v259
                %v261 = vld [vmem:[%s197 + $0x1e8] sm:$0xff]
                %262 = vst [vmem:[%s198 + $0xf8] sm:$0xff] %v261
              $region33: #{_lambda_.11} parent=27 // loop_footer
                %s196 = sadd.s32 1, %s192
              $region34: #{_lambda_.11} parent=27 // loop_footer_branch
                %191 = sbr.rel target = $region30
              $region35: #{_lambda_.11} parent=27 // loop_exit
                _
            $region28: #{_lambda_.11} parent=23 // pred_fallthru
              _
            // Predicated region
            $region36: #{_lambda_.11} parent=23 // pred_check
              _
            $region37: #{_lambda_.11} parent=23 // pred_check_branch
              %264 = sbr.rel target = $region39
            $region38: #{_lambda_.11} parent=23 // pred_region
              _
            $region39: #{_lambda_.11} parent=23 // pred_fallthru
              _
          $region24: #{_lambda_.11} parent=19 // pred_fallthru
            _
          %265 = vnop
        $region20: #{_lambda_.11} parent=15 // pred_fallthru
          _
        // Predicated region
        $region40: #{_lambda_.11} parent=15 // pred_check
          %p266 = pneg %p71
        $region41: #{_lambda_.11} parent=15 // pred_check_branch
          %268 = sbr.rel (%p266) target = $region43
        $region42: #{_lambda_.11} parent=15 // pred_region
          %s269 = smul.u32 64, %s19
          %p270 = scmp.lt.s32.totalorder %s269, 127
          %s271 = scalar_select %p270, %s269, 127
          %s272 = smul.addr %s271, 4
          %s273 = scalar_lea.vmem %s1, %s272
          %s274 = smul.u32 64, %s19
        $region43: #{_lambda_.11} parent=15 // pred_fallthru
          _
      $region16: #{_lambda_.11} parent=5 // pred_fallthru
        _
      %p275 = scmp.le.s32.totalorder 1, %s11
      %p276 = scmp.lt.s32.totalorder %s11, 3
      %p277 = pnand %p275, %p276
      %p278 = pneg %p277
      // Predicated region
      $region44: #{_lambda_.11} parent=5 // pred_check
        _
      $region45: #{_lambda_.11} parent=5 // pred_check_branch
        %280 = sbr.rel (%p277) target = $region47
      $region46: #{_lambda_.11} parent=5 // pred_region
        %s281 = ssub.s32 %s11, 1
        %s282 = sand.u32 %s38, 1
        %s283 = sand.u32 %s38, 1
        %s284 = smul.addr %s283, 256
        %s285 = scalar_lea.vmem [#allocation3], %s284
        // Predicated region
        $region48: #{_lambda_.11} parent=46 // pred_check
          %p286 = pneg %p51
        $region49: #{_lambda_.11} parent=46 // pred_check_branch
          %288 = sbr.rel (%p286) target = $region51
        $region50: #{_lambda_.11} parent=46 // pred_region
          _
        $region51: #{_lambda_.11} parent=46 // pred_fallthru
          _
        %s289 = sand.u32 %s38, 1
        %s290 = sand.u32 %s38, 1
        %s291 = smul.addr %s290, 256
        %s292 = scalar_lea.vmem [#allocation3], %s291
        %p293 = pneg %p51
        %p294 = pneg %p48
        %s295 = smul.u32 64, %s21
        %p296 = scmp.lt.s32.totalorder %s295, 127
        %s297 = scalar_select %p296, %s295, 127
        %s298 = smul.addr %s297, 4
        %s299 = scalar_lea.vmem %s1, %s298
        %p300 = pneg %p77
        %p301 = pneg %p74
        %p302 = pneg %p103
        %p303 = pneg %p100
        %s304 = smul.u32 16, %s20
        %p305 = scmp.lt.s32.totalorder %s304, 15
        %s306 = scalar_select %p305, %s304, 15
        %s307 = smul.addr %s306, 4
        %s308 = scalar_lea.vmem %s2, %s307
        %p309 = pneg %p129
        %p310 = pneg %p126
        %p311 = scmp.lt.s32.totalorder %s20, 0
        %s312 = scalar_select %p311, %s20, 0
        %s313 = scalar_lea.vmem %s3, %s312
        %p314 = pneg %p155
        %p315 = pneg %p152
        %p316 = scmp.lt.s32.totalorder %s20, 0
        %s317 = scalar_select %p316, %s20, 0
        %s318 = scalar_lea.vmem %s4, %s317
        %s319 = smul.u32 16, %s20
        %s320 = smul.u32 4, %s21
        %s321 = smul.u32 64, %s21
        %p322 = scmp.lt.s32.totalorder %s321, 127
        %s323 = scalar_select %p322, %s321, 127
        %s324 = smul.addr %s323, 4
        %s325 = scalar_lea.vmem %s1, %s324
        %s326 = smul.u32 64, %s21
        %s327 = smul.u32 16, %s20
        %p328 = scmp.lt.s32.totalorder %s327, 15
        %s329 = scalar_select %p328, %s327, 15
        %s330 = smul.addr %s329, 4
        %s331 = scalar_lea.vmem %s2, %s330
        %s332 = smul.u32 16, %s20
        %p333 = scmp.lt.s32.totalorder %s20, 0
        %s334 = scalar_select %p333, %s20, 0
        %s335 = scalar_lea.vmem %s3, %s334
        %p336 = scmp.lt.s32.totalorder %s20, 0
        %s337 = scalar_select %p336, %s20, 0
        %s338 = scalar_lea.vmem %s4, %s337
        %p340 = scmp.eq.s32.totalorder %s21, 0
        // Predicated region
        $region52: #{_lambda_.11} parent=46 // pred_check
          %p341 = pneg %p340
        $region53: #{_lambda_.11} parent=46 // pred_check_branch
          %343 = sbr.rel (%p341) target = $region55
        $region54: #{_lambda_.11} parent=46 // pred_region
          %344 = vst [vmem:[#allocation2] sm:$0xff] 0.0
          %345 = vst [vmem:[#allocation2 + $0x8] sm:$0xff] 0.0
          %346 = vst [vmem:[#allocation2 + $0x10] sm:$0xff] 0.0
          %347 = vst [vmem:[#allocation2 + $0x18] sm:$0xff] 0.0
          %348 = vst [vmem:[#allocation2 + $0x20] sm:$0xff] 0.0
          %349 = vst [vmem:[#allocation2 + $0x28] sm:$0xff] 0.0
          %350 = vst [vmem:[#allocation2 + $0x30] sm:$0xff] 0.0
          %351 = vst [vmem:[#allocation2 + $0x38] sm:$0xff] 0.0
          %352 = vst [vmem:[#allocation2 + $0x40] sm:$0xff] 0.0
          %353 = vst [vmem:[#allocation2 + $0x48] sm:$0xff] 0.0
          %354 = vst [vmem:[#allocation2 + $0x50] sm:$0xff] 0.0
          %355 = vst [vmem:[#allocation2 + $0x58] sm:$0xff] 0.0
          %356 = vst [vmem:[#allocation2 + $0x60] sm:$0xff] 0.0
          %357 = vst [vmem:[#allocation2 + $0x68] sm:$0xff] 0.0
          %358 = vst [vmem:[#allocation2 + $0x70] sm:$0xff] 0.0
          %359 = vst [vmem:[#allocation2 + $0x78] sm:$0xff] 0.0
        $region55: #{_lambda_.11} parent=46 // pred_fallthru
          _
        %v360 = vld [vmem:[#allocation2] sm:$0xff]
        %v361 = vld [vmem:[#allocation2 + $0x8] sm:$0xff]
        %v362 = vld [vmem:[#allocation2 + $0x10] sm:$0xff]
        %v363 = vld [vmem:[#allocation2 + $0x18] sm:$0xff]
        %v364 = vld [vmem:[#allocation2 + $0x20] sm:$0xff]
        %v365 = vld [vmem:[#allocation2 + $0x28] sm:$0xff]
        %v366 = vld [vmem:[#allocation2 + $0x30] sm:$0xff]
        %v367 = vld [vmem:[#allocation2 + $0x38] sm:$0xff]
        %v368 = vld [vmem:[#allocation2 + $0x40] sm:$0xff]
        %v369 = vld [vmem:[#allocation2 + $0x48] sm:$0xff]
        %v370 = vld [vmem:[#allocation2 + $0x50] sm:$0xff]
        %v371 = vld [vmem:[#allocation2 + $0x58] sm:$0xff]
        %v372 = vld [vmem:[#allocation2 + $0x60] sm:$0xff]
        %v373 = vld [vmem:[#allocation2 + $0x68] sm:$0xff]
        %v374 = vld [vmem:[#allocation2 + $0x70] sm:$0xff]
        %v375 = vld [vmem:[#allocation2 + $0x78] sm:$0xff]
        %v376 = vld [vmem:[%s285] sm:$0xff]
        %v377 = vld [vmem:[%s285 + $0x8] sm:$0xff]
        %v378 = vld [vmem:[%s285 + $0x10] sm:$0xff]
        %v379 = vld [vmem:[%s285 + $0x18] sm:$0xff]
        %v380 = vld [vmem:[%s285 + $0x20] sm:$0xff]
        %v381 = vld [vmem:[%s285 + $0x28] sm:$0xff]
        %v382 = vld [vmem:[%s285 + $0x30] sm:$0xff]
        %v383 = vld [vmem:[%s285 + $0x38] sm:$0xff]
        %v384 = vld [vmem:[%s285 + $0x40] sm:$0xff]
        %v385 = vld [vmem:[%s285 + $0x48] sm:$0xff]
        %v386 = vld [vmem:[%s285 + $0x50] sm:$0xff]
        %v387 = vld [vmem:[%s285 + $0x58] sm:$0xff]
        %v388 = vld [vmem:[%s285 + $0x60] sm:$0xff]
        %v389 = vld [vmem:[%s285 + $0x68] sm:$0xff]
        %v390 = vld [vmem:[%s285 + $0x70] sm:$0xff]
        %v391 = vld [vmem:[%s285 + $0x78] sm:$0xff]
        %v392 = vld [vmem:[%s285 + $0x80] sm:$0xff]
        %v393 = vld [vmem:[%s285 + $0x88] sm:$0xff]
        %v394 = vld [vmem:[%s285 + $0x90] sm:$0xff]
        %v395 = vld [vmem:[%s285 + $0x98] sm:$0xff]
        %v396 = vld [vmem:[%s285 + $0xa0] sm:$0xff]
        %v397 = vld [vmem:[%s285 + $0xa8] sm:$0xff]
        %v398 = vld [vmem:[%s285 + $0xb0] sm:$0xff]
        %v399 = vld [vmem:[%s285 + $0xb8] sm:$0xff]
        %v400 = vld [vmem:[%s285 + $0xc0] sm:$0xff]
        %v401 = vld [vmem:[%s285 + $0xc8] sm:$0xff]
        %v402 = vld [vmem:[%s285 + $0xd0] sm:$0xff]
        %v403 = vld [vmem:[%s285 + $0xd8] sm:$0xff]
        %v404 = vld [vmem:[%s285 + $0xe0] sm:$0xff]
        %v405 = vld [vmem:[%s285 + $0xe8] sm:$0xff]
        %v406 = vld [vmem:[%s285 + $0xf0] sm:$0xff]
        %v407 = vld [vmem:[%s285 + $0xf8] sm:$0xff]
        %v408 = vld [vmem:[%s325] sm:$0xf]
        %v409 = vld [vmem:[%s325 + $0x4] sm:$0xf]
        %v410 = vld [vmem:[%s325 + $0x8] sm:$0xf]
        %v411 = vld [vmem:[%s325 + $0xc] sm:$0xf]
        %v412 = vld [vmem:[%s325 + $0x10] sm:$0xf]
        %v413 = vld [vmem:[%s325 + $0x14] sm:$0xf]
        %v414 = vld [vmem:[%s325 + $0x18] sm:$0xf]
        %v415 = vld [vmem:[%s325 + $0x1c] sm:$0xf]
        %v416 = vld [vmem:[%s325 + $0x20] sm:$0xf]
        %v417 = vld [vmem:[%s325 + $0x24] sm:$0xf]
        %v418 = vld [vmem:[%s325 + $0x28] sm:$0xf]
        %v419 = vld [vmem:[%s325 + $0x2c] sm:$0xf]
        %v420 = vld [vmem:[%s325 + $0x30] sm:$0xf]
        %v421 = vld [vmem:[%s325 + $0x34] sm:$0xf]
        %v422 = vld [vmem:[%s325 + $0x38] sm:$0xf]
        %v423 = vld [vmem:[%s325 + $0x3c] sm:$0xf]
        %v424 = vld [vmem:[%s325 + $0x40] sm:$0xf]
        %v425 = vld [vmem:[%s325 + $0x44] sm:$0xf]
        %v426 = vld [vmem:[%s325 + $0x48] sm:$0xf]
        %v427 = vld [vmem:[%s325 + $0x4c] sm:$0xf]
        %v428 = vld [vmem:[%s325 + $0x50] sm:$0xf]
        %v429 = vld [vmem:[%s325 + $0x54] sm:$0xf]
        %v430 = vld [vmem:[%s325 + $0x58] sm:$0xf]
        %v431 = vld [vmem:[%s325 + $0x5c] sm:$0xf]
        %v432 = vld [vmem:[%s325 + $0x60] sm:$0xf]
        %v433 = vld [vmem:[%s325 + $0x64] sm:$0xf]
        %v434 = vld [vmem:[%s325 + $0x68] sm:$0xf]
        %v435 = vld [vmem:[%s325 + $0x6c] sm:$0xf]
        %v436 = vld [vmem:[%s325 + $0x70] sm:$0xf]
        %v437 = vld [vmem:[%s325 + $0x74] sm:$0xf]
        %v438 = vld [vmem:[%s325 + $0x78] sm:$0xf]
        %v439 = vld [vmem:[%s325 + $0x7c] sm:$0xf]
        %v440 = vld [vmem:[%s325 + $0x80] sm:$0xf]
        %v441 = vld [vmem:[%s325 + $0x84] sm:$0xf]
        %v442 = vld [vmem:[%s325 + $0x88] sm:$0xf]
        %v443 = vld [vmem:[%s325 + $0x8c] sm:$0xf]
        %v444 = vld [vmem:[%s325 + $0x90] sm:$0xf]
        %v445 = vld [vmem:[%s325 + $0x94] sm:$0xf]
        %v446 = vld [vmem:[%s325 + $0x98] sm:$0xf]
        %v447 = vld [vmem:[%s325 + $0x9c] sm:$0xf]
        %v448 = vld [vmem:[%s325 + $0xa0] sm:$0xf]
        %v449 = vld [vmem:[%s325 + $0xa4] sm:$0xf]
        %v450 = vld [vmem:[%s325 + $0xa8] sm:$0xf]
        %v451 = vld [vmem:[%s325 + $0xac] sm:$0xf]
        %v452 = vld [vmem:[%s325 + $0xb0] sm:$0xf]
        %v453 = vld [vmem:[%s325 + $0xb4] sm:$0xf]
        %v454 = vld [vmem:[%s325 + $0xb8] sm:$0xf]
        %v455 = vld [vmem:[%s325 + $0xbc] sm:$0xf]
        %v456 = vld [vmem:[%s325 + $0xc0] sm:$0xf]
        %v457 = vld [vmem:[%s325 + $0xc4] sm:$0xf]
        %v458 = vld [vmem:[%s325 + $0xc8] sm:$0xf]
        %v459 = vld [vmem:[%s325 + $0xcc] sm:$0xf]
        %v460 = vld [vmem:[%s325 + $0xd0] sm:$0xf]
        %v461 = vld [vmem:[%s325 + $0xd4] sm:$0xf]
        %v462 = vld [vmem:[%s325 + $0xd8] sm:$0xf]
        %v463 = vld [vmem:[%s325 + $0xdc] sm:$0xf]
        %v464 = vld [vmem:[%s325 + $0xe0] sm:$0xf]
        %v465 = vld [vmem:[%s325 + $0xe4] sm:$0xf]
        %v466 = vld [vmem:[%s325 + $0xe8] sm:$0xf]
        %v467 = vld [vmem:[%s325 + $0xec] sm:$0xf]
        %v468 = vld [vmem:[%s325 + $0xf0] sm:$0xf]
        %v469 = vld [vmem:[%s325 + $0xf4] sm:$0xf]
        %v470 = vld [vmem:[%s325 + $0xf8] sm:$0xf]
        %v471 = vld [vmem:[%s325 + $0xfc] sm:$0xf]
        %v504 = vunpack.c.l.b16 %v376
        %v505 = vunpack.c.h.b16 %v376
        %v506 = vunpack.c.l.b16 %v377
        %v507 = vunpack.c.h.b16 %v377
        %v508 = vunpack.c.l.b16 %v378
        %v509 = vunpack.c.h.b16 %v378
        %v510 = vunpack.c.l.b16 %v379
        %v511 = vunpack.c.h.b16 %v379
        %v512 = vunpack.c.l.b16 %v380
        %v513 = vunpack.c.h.b16 %v380
        %v514 = vunpack.c.l.b16 %v381
        %v515 = vunpack.c.h.b16 %v381
        %v516 = vunpack.c.l.b16 %v382
        %v517 = vunpack.c.h.b16 %v382
        %v518 = vunpack.c.l.b16 %v383
        %v519 = vunpack.c.h.b16 %v383
        %v520 = vunpack.c.l.b16 %v384
        %v521 = vunpack.c.h.b16 %v384
        %v522 = vunpack.c.l.b16 %v385
        %v523 = vunpack.c.h.b16 %v385
        %v524 = vunpack.c.l.b16 %v386
        %v525 = vunpack.c.h.b16 %v386
        %v526 = vunpack.c.l.b16 %v387
        %v527 = vunpack.c.h.b16 %v387
        %v528 = vunpack.c.l.b16 %v388
        %v529 = vunpack.c.h.b16 %v388
        %v530 = vunpack.c.l.b16 %v389
        %v531 = vunpack.c.h.b16 %v389
        %v532 = vunpack.c.l.b16 %v390
        %v533 = vunpack.c.h.b16 %v390
        %v534 = vunpack.c.l.b16 %v391
        %v535 = vunpack.c.h.b16 %v391
        %v536 = vunpack.c.l.b16 %v392
        %v537 = vunpack.c.h.b16 %v392
        %v538 = vunpack.c.l.b16 %v393
        %v539 = vunpack.c.h.b16 %v393
        %v540 = vunpack.c.l.b16 %v394
        %v541 = vunpack.c.h.b16 %v394
        %v542 = vunpack.c.l.b16 %v395
        %v543 = vunpack.c.h.b16 %v395
        %v544 = vunpack.c.l.b16 %v396
        %v545 = vunpack.c.h.b16 %v396
        %v546 = vunpack.c.l.b16 %v397
        %v547 = vunpack.c.h.b16 %v397
        %v548 = vunpack.c.l.b16 %v398
        %v549 = vunpack.c.h.b16 %v398
        %v550 = vunpack.c.l.b16 %v399
        %v551 = vunpack.c.h.b16 %v399
        %v552 = vunpack.c.l.b16 %v400
        %v553 = vunpack.c.h.b16 %v400
        %v554 = vunpack.c.l.b16 %v401
        %v555 = vunpack.c.h.b16 %v401
        %v556 = vunpack.c.l.b16 %v402
        %v557 = vunpack.c.h.b16 %v402
        %v558 = vunpack.c.l.b16 %v403
        %v559 = vunpack.c.h.b16 %v403
        %v560 = vunpack.c.l.b16 %v404
        %v561 = vunpack.c.h.b16 %v404
        %v562 = vunpack.c.l.b16 %v405
        %v563 = vunpack.c.h.b16 %v405
        %v564 = vunpack.c.l.b16 %v406
        %v565 = vunpack.c.h.b16 %v406
        %v566 = vunpack.c.l.b16 %v407
        %v567 = vunpack.c.h.b16 %v407
        %v568 = vpack.c.b16 %v508, %v504
        %v569 = vpack.c.b16 %v509, %v505
        %v570 = vpack.c.b16 %v510, %v506
        %v571 = vpack.c.b16 %v511, %v507
        %v572 = vpack.c.b16 %v516, %v512
        %v573 = vpack.c.b16 %v517, %v513
        %v574 = vpack.c.b16 %v518, %v514
        %v575 = vpack.c.b16 %v519, %v515
        %v576 = vpack.c.b16 %v524, %v520
        %v577 = vpack.c.b16 %v525, %v521
        %v578 = vpack.c.b16 %v526, %v522
        %v579 = vpack.c.b16 %v527, %v523
        %v580 = vpack.c.b16 %v532, %v528
        %v581 = vpack.c.b16 %v533, %v529
        %v582 = vpack.c.b16 %v534, %v530
        %v583 = vpack.c.b16 %v535, %v531
        %v584 = vpack.c.b16 %v540, %v536
        %v585 = vpack.c.b16 %v541, %v537
        %v586 = vpack.c.b16 %v542, %v538
        %v587 = vpack.c.b16 %v543, %v539
        %v588 = vpack.c.b16 %v548, %v544
        %v589 = vpack.c.b16 %v549, %v545
        %v590 = vpack.c.b16 %v550, %v546
        %v591 = vpack.c.b16 %v551, %v547
        %v592 = vpack.c.b16 %v556, %v552
        %v593 = vpack.c.b16 %v557, %v553
        %v594 = vpack.c.b16 %v558, %v554
        %v595 = vpack.c.b16 %v559, %v555
        %v596 = vpack.c.b16 %v564, %v560
        %v597 = vpack.c.b16 %v565, %v561
        %v598 = vpack.c.b16 %v566, %v562
        %v599 = vpack.c.b16 %v567, %v563
        %v696 = vunpack.c.l.b16 %v408
        %v697 = vunpack.c.l.b16 %v409
        %v698 = vunpack.c.l.b16 %v410
        %v699 = vunpack.c.l.b16 %v411
        %v700 = vunpack.c.l.b16 %v412
        %v701 = vunpack.c.l.b16 %v413
        %v702 = vunpack.c.l.b16 %v414
        %v703 = vunpack.c.l.b16 %v415
        %v704 = vunpack.c.l.b16 %v416
        %v705 = vunpack.c.l.b16 %v417
        %v706 = vunpack.c.l.b16 %v418
        %v707 = vunpack.c.l.b16 %v419
        %v708 = vunpack.c.l.b16 %v420
        %v709 = vunpack.c.l.b16 %v421
        %v710 = vunpack.c.l.b16 %v422
        %v711 = vunpack.c.l.b16 %v423
        %v712 = vunpack.c.l.b16 %v424
        %v713 = vunpack.c.l.b16 %v425
        %v714 = vunpack.c.l.b16 %v426
        %v715 = vunpack.c.l.b16 %v427
        %v716 = vunpack.c.l.b16 %v428
        %v717 = vunpack.c.l.b16 %v429
        %v718 = vunpack.c.l.b16 %v430
        %v719 = vunpack.c.l.b16 %v431
        %v720 = vunpack.c.l.b16 %v432
        %v721 = vunpack.c.l.b16 %v433
        %v722 = vunpack.c.l.b16 %v434
        %v723 = vunpack.c.l.b16 %v435
        %v724 = vunpack.c.l.b16 %v436
        %v725 = vunpack.c.l.b16 %v437
        %v726 = vunpack.c.l.b16 %v438
        %v727 = vunpack.c.l.b16 %v439
        %v728 = vunpack.c.l.b16 %v440
        %v729 = vunpack.c.l.b16 %v441
        %v730 = vunpack.c.l.b16 %v442
        %v731 = vunpack.c.l.b16 %v443
        %v732 = vunpack.c.l.b16 %v444
        %v733 = vunpack.c.l.b16 %v445
        %v734 = vunpack.c.l.b16 %v446
        %v735 = vunpack.c.l.b16 %v447
        %v736 = vunpack.c.l.b16 %v448
        %v737 = vunpack.c.l.b16 %v449
        %v738 = vunpack.c.l.b16 %v450
        %v739 = vunpack.c.l.b16 %v451
        %v740 = vunpack.c.l.b16 %v452
        %v741 = vunpack.c.l.b16 %v453
        %v742 = vunpack.c.l.b16 %v454
        %v743 = vunpack.c.l.b16 %v455
        %v744 = vunpack.c.l.b16 %v456
        %v745 = vunpack.c.l.b16 %v457
        %v746 = vunpack.c.l.b16 %v458
        %v747 = vunpack.c.l.b16 %v459
        %v748 = vunpack.c.l.b16 %v460
        %v749 = vunpack.c.l.b16 %v461
        %v750 = vunpack.c.l.b16 %v462
        %v751 = vunpack.c.l.b16 %v463
        %v752 = vunpack.c.l.b16 %v464
        %v753 = vunpack.c.l.b16 %v465
        %v754 = vunpack.c.l.b16 %v466
        %v755 = vunpack.c.l.b16 %v467
        %v756 = vunpack.c.l.b16 %v468
        %v757 = vunpack.c.l.b16 %v469
        %v758 = vunpack.c.l.b16 %v470
        %v759 = vunpack.c.l.b16 %v471
        %v760 = vpack.c.b16 %v697, %v696
        %v761 = vpack.c.b16 %v699, %v698
        %v762 = vpack.c.b16 %v701, %v700
        %v763 = vpack.c.b16 %v703, %v702
        %v764 = vpack.c.b16 %v705, %v704
        %v765 = vpack.c.b16 %v707, %v706
        %v766 = vpack.c.b16 %v709, %v708
        %v767 = vpack.c.b16 %v711, %v710
        %v768 = vpack.c.b16 %v713, %v712
        %v769 = vpack.c.b16 %v715, %v714
        %v770 = vpack.c.b16 %v717, %v716
        %v771 = vpack.c.b16 %v719, %v718
        %v772 = vpack.c.b16 %v721, %v720
        %v773 = vpack.c.b16 %v723, %v722
        %v774 = vpack.c.b16 %v725, %v724
        %v775 = vpack.c.b16 %v727, %v726
        %v776 = vpack.c.b16 %v729, %v728
        %v777 = vpack.c.b16 %v731, %v730
        %v778 = vpack.c.b16 %v733, %v732
        %v779 = vpack.c.b16 %v735, %v734
        %v780 = vpack.c.b16 %v737, %v736
        %v781 = vpack.c.b16 %v739, %v738
        %v782 = vpack.c.b16 %v741, %v740
        %v783 = vpack.c.b16 %v743, %v742
        %v784 = vpack.c.b16 %v745, %v744
        %v785 = vpack.c.b16 %v747, %v746
        %v786 = vpack.c.b16 %v749, %v748
        %v787 = vpack.c.b16 %v751, %v750
        %v788 = vpack.c.b16 %v753, %v752
        %v789 = vpack.c.b16 %v755, %v754
        %v790 = vpack.c.b16 %v757, %v756
        %v791 = vpack.c.b16 %v759, %v758
        %824 = vmatprep.subr.bf16.mxu0 0
        %825 = vmatpush1.bf16.msra.mxu0 %v767
        %826 = vmatprep.subr.bf16.mxu0 0
        %827 = vmatpush1.bf16.msra.mxu0 %v766
        %828 = vmatprep.subr.bf16.mxu0 0
        %829 = vmatpush1.bf16.msra.mxu0 %v765
        %830 = vmatprep.subr.bf16.mxu0 0
        %831 = vmatpush1.bf16.msra.mxu0 %v764
        %832 = vmatprep.subr.bf16.mxu0 0
        %833 = vmatpush1.bf16.msra.mxu0 %v763
        %834 = vmatprep.subr.bf16.mxu0 0
        %835 = vmatpush1.bf16.msra.mxu0 %v762
        %836 = vmatprep.subr.bf16.mxu0 0
        %837 = vmatpush1.bf16.msra.mxu0 %v761
        %838 = vmatprep.subr.bf16.mxu0 0
        %839 = vmatpush1.bf16.msra.mxu0 %v760
        %840 = vmatprep.subr.bf16.mxu0 0
        %841 = vmatpush2.bf16.msra.mxu0 %v775
        %842 = vmatprep.subr.bf16.mxu0 0
        %843 = vmatpush2.bf16.msra.mxu0 %v774
        %844 = vmatprep.subr.bf16.mxu0 0
        %845 = vmatpush2.bf16.msra.mxu0 %v773
        %846 = vmatprep.subr.bf16.mxu0 0
        %847 = vmatpush2.bf16.msra.mxu0 %v772
        %848 = vmatprep.subr.bf16.mxu0 0
        %849 = vmatpush2.bf16.msra.mxu0 %v771
        %850 = vmatprep.subr.bf16.mxu0 0
        %851 = vmatpush2.bf16.msra.mxu0 %v770
        %852 = vmatprep.subr.bf16.mxu0 0
        %853 = vmatpush2.bf16.msra.mxu0 %v769
        %854 = vmatprep.subr.bf16.mxu0 0
        %855 = vmatpush2.bf16.msra.mxu0 %v768
        %856 = vmatprep.mubr.bf16.mxu0 %v569
        %857 = vmatmul.mubr.bf16.gmra.mxu0 %v568
        %v858 = vpop.f32.mrf.mxu0
        %v859 = vadd.f32 0.0, %v858
        %v860 = vpop.f32.mrf.mxu0
        %v861 = vpop.f32.mrf.mxu0
        %v862 = vadd.f32 0.0, %v861
        %v863 = vpop.f32.mrf.mxu0
        %864 = vmatprep.mubr.bf16.mxu0 %v573
        %865 = vmatmul.mubr.bf16.gmra.mxu0 %v572
        %v866 = vpop.f32.mrf.mxu0
        %v867 = vadd.f32 0.0, %v866
        %v868 = vpop.f32.mrf.mxu0
        %v869 = vpop.f32.mrf.mxu0
        %v870 = vadd.f32 0.0, %v869
        %v871 = vpop.f32.mrf.mxu0
        %872 = vmatprep.mubr.bf16.mxu0 %v577
        %873 = vmatmul.mubr.bf16.gmra.mxu0 %v576
        %v874 = vpop.f32.mrf.mxu0
        %v875 = vadd.f32 0.0, %v874
        %v876 = vpop.f32.mrf.mxu0
        %v877 = vpop.f32.mrf.mxu0
        %v878 = vadd.f32 0.0, %v877
        %v879 = vpop.f32.mrf.mxu0
        %880 = vmatprep.mubr.bf16.mxu0 %v581
        %881 = vmatmul.mubr.bf16.gmra.mxu0 %v580
        %v882 = vpop.f32.mrf.mxu0
        %v883 = vadd.f32 0.0, %v882
        %v884 = vpop.f32.mrf.mxu0
        %v885 = vpop.f32.mrf.mxu0
        %v886 = vadd.f32 0.0, %v885
        %v887 = vpop.f32.mrf.mxu0
        %888 = vmatprep.mubr.bf16.mxu0 %v585
        %889 = vmatmul.mubr.bf16.gmra.mxu0 %v584
        %v890 = vpop.f32.mrf.mxu0
        %v891 = vadd.f32 0.0, %v890
        %v892 = vpop.f32.mrf.mxu0
        %v893 = vpop.f32.mrf.mxu0
        %v894 = vadd.f32 0.0, %v893
        %v895 = vpop.f32.mrf.mxu0
        %896 = vmatprep.mubr.bf16.mxu0 %v589
        %897 = vmatmul.mubr.bf16.gmra.mxu0 %v588
        %v898 = vpop.f32.mrf.mxu0
        %v899 = vadd.f32 0.0, %v898
        %v900 = vpop.f32.mrf.mxu0
        %v901 = vpop.f32.mrf.mxu0
        %v902 = vadd.f32 0.0, %v901
        %v903 = vpop.f32.mrf.mxu0
        %904 = vmatprep.mubr.bf16.mxu0 %v593
        %905 = vmatmul.mubr.bf16.gmra.mxu0 %v592
        %v906 = vpop.f32.mrf.mxu0
        %v907 = vadd.f32 0.0, %v906
        %v908 = vpop.f32.mrf.mxu0
        %v909 = vpop.f32.mrf.mxu0
        %v910 = vadd.f32 0.0, %v909
        %v911 = vpop.f32.mrf.mxu0
        %912 = vmatprep.mubr.bf16.mxu0 %v597
        %913 = vmatmul.mubr.bf16.gmra.mxu0 %v596
        %v914 = vpop.f32.mrf.mxu0
        %v915 = vadd.f32 0.0, %v914
        %v916 = vpop.f32.mrf.mxu0
        %v917 = vpop.f32.mrf.mxu0
        %v918 = vadd.f32 0.0, %v917
        %v919 = vpop.f32.mrf.mxu0
        %920 = vdwg.mxu0
        %921 = vmatprep.subr.bf16.mxu0 0
        %922 = vmatpush1.bf16.msra.mxu0 %v783
        %923 = vmatprep.subr.bf16.mxu0 0
        %924 = vmatpush1.bf16.msra.mxu0 %v782
        %925 = vmatprep.subr.bf16.mxu0 0
        %926 = vmatpush1.bf16.msra.mxu0 %v781
        %927 = vmatprep.subr.bf16.mxu0 0
        %928 = vmatpush1.bf16.msra.mxu0 %v780
        %929 = vmatprep.subr.bf16.mxu0 0
        %930 = vmatpush1.bf16.msra.mxu0 %v779
        %931 = vmatprep.subr.bf16.mxu0 0
        %932 = vmatpush1.bf16.msra.mxu0 %v778
        %933 = vmatprep.subr.bf16.mxu0 0
        %934 = vmatpush1.bf16.msra.mxu0 %v777
        %935 = vmatprep.subr.bf16.mxu0 0
        %936 = vmatpush1.bf16.msra.mxu0 %v776
        %937 = vmatprep.subr.bf16.mxu0 0
        %938 = vmatpush2.bf16.msra.mxu0 %v791
        %939 = vmatprep.subr.bf16.mxu0 0
        %940 = vmatpush2.bf16.msra.mxu0 %v790
        %941 = vmatprep.subr.bf16.mxu0 0
        %942 = vmatpush2.bf16.msra.mxu0 %v789
        %943 = vmatprep.subr.bf16.mxu0 0
        %944 = vmatpush2.bf16.msra.mxu0 %v788
        %945 = vmatprep.subr.bf16.mxu0 0
        %946 = vmatpush2.bf16.msra.mxu0 %v787
        %947 = vmatprep.subr.bf16.mxu0 0
        %948 = vmatpush2.bf16.msra.mxu0 %v786
        %949 = vmatprep.subr.bf16.mxu0 0
        %950 = vmatpush2.bf16.msra.mxu0 %v785
        %951 = vmatprep.subr.bf16.mxu0 0
        %952 = vmatpush2.bf16.msra.mxu0 %v784
        %953 = vmatprep.mubr.bf16.mxu0 %v571
        %954 = vmatmul.mubr.bf16.gmra.mxu0 %v570
        %v955 = vpop.f32.mrf.mxu0
        %v956 = vadd.f32 %v859, %v955
        %v957 = vpop.f32.mrf.mxu0
        %v958 = vpop.f32.mrf.mxu0
        %v959 = vadd.f32 %v862, %v958
        %v960 = vpop.f32.mrf.mxu0
        %961 = vmatprep.mubr.bf16.mxu0 %v575
        %962 = vmatmul.mubr.bf16.gmra.mxu0 %v574
        %v963 = vpop.f32.mrf.mxu0
        %v964 = vadd.f32 %v867, %v963
        %v965 = vpop.f32.mrf.mxu0
        %v966 = vpop.f32.mrf.mxu0
        %v967 = vadd.f32 %v870, %v966
        %v968 = vpop.f32.mrf.mxu0
        %969 = vmatprep.mubr.bf16.mxu0 %v579
        %970 = vmatmul.mubr.bf16.gmra.mxu0 %v578
        %v971 = vpop.f32.mrf.mxu0
        %v972 = vadd.f32 %v875, %v971
        %v973 = vpop.f32.mrf.mxu0
        %v974 = vpop.f32.mrf.mxu0
        %v975 = vadd.f32 %v878, %v974
        %v976 = vpop.f32.mrf.mxu0
        %977 = vmatprep.mubr.bf16.mxu0 %v583
        %978 = vmatmul.mubr.bf16.gmra.mxu0 %v582
        %v979 = vpop.f32.mrf.mxu0
        %v980 = vadd.f32 %v883, %v979
        %v981 = vpop.f32.mrf.mxu0
        %v982 = vpop.f32.mrf.mxu0
        %v983 = vadd.f32 %v886, %v982
        %v984 = vpop.f32.mrf.mxu0
        %985 = vmatprep.mubr.bf16.mxu0 %v587
        %986 = vmatmul.mubr.bf16.gmra.mxu0 %v586
        %v987 = vpop.f32.mrf.mxu0
        %v988 = vadd.f32 %v891, %v987
        %v989 = vpop.f32.mrf.mxu0
        %v990 = vpop.f32.mrf.mxu0
        %v991 = vadd.f32 %v894, %v990
        %v992 = vpop.f32.mrf.mxu0
        %993 = vmatprep.mubr.bf16.mxu0 %v591
        %994 = vmatmul.mubr.bf16.gmra.mxu0 %v590
        %v995 = vpop.f32.mrf.mxu0
        %v996 = vadd.f32 %v899, %v995
        %v997 = vpop.f32.mrf.mxu0
        %v998 = vpop.f32.mrf.mxu0
        %v999 = vadd.f32 %v902, %v998
        %v1000 = vpop.f32.mrf.mxu0
        %1001 = vmatprep.mubr.bf16.mxu0 %v595
        %1002 = vmatmul.mubr.bf16.gmra.mxu0 %v594
        %v1003 = vpop.f32.mrf.mxu0
        %v1004 = vadd.f32 %v907, %v1003
        %v1005 = vpop.f32.mrf.mxu0
        %v1006 = vpop.f32.mrf.mxu0
        %v1007 = vadd.f32 %v910, %v1006
        %v1008 = vpop.f32.mrf.mxu0
        %1009 = vmatprep.mubr.bf16.mxu0 %v599
        %1010 = vmatmul.mubr.bf16.gmra.mxu0 %v598
        %v1011 = vpop.f32.mrf.mxu0
        %v1012 = vadd.f32 %v915, %v1011
        %v1013 = vpop.f32.mrf.mxu0
        %v1014 = vpop.f32.mrf.mxu0
        %v1015 = vadd.f32 %v918, %v1014
        %v1016 = vpop.f32.mrf.mxu0
        %1017 = vdwg.mxu0
        %v1018 = vadd.f32 %v360, %v956
        %v1019 = vadd.f32 %v361, %v959
        %v1020 = vadd.f32 %v362, %v964
        %v1021 = vadd.f32 %v363, %v967
        %v1022 = vadd.f32 %v364, %v972
        %v1023 = vadd.f32 %v365, %v975
        %v1024 = vadd.f32 %v366, %v980
        %v1025 = vadd.f32 %v367, %v983
        %v1026 = vadd.f32 %v368, %v988
        %v1027 = vadd.f32 %v369, %v991
        %v1028 = vadd.f32 %v370, %v996
        %v1029 = vadd.f32 %v371, %v999
        %v1030 = vadd.f32 %v372, %v1004
        %v1031 = vadd.f32 %v373, %v1007
        %v1032 = vadd.f32 %v374, %v1012
        %v1033 = vadd.f32 %v375, %v1015
        %1034 = vst [vmem:[#allocation2] sm:$0xff] %v1018
        %1035 = vst [vmem:[#allocation2 + $0x8] sm:$0xff] %v1019
        %1036 = vst [vmem:[#allocation2 + $0x10] sm:$0xff] %v1020
        %1037 = vst [vmem:[#allocation2 + $0x18] sm:$0xff] %v1021
        %1038 = vst [vmem:[#allocation2 + $0x20] sm:$0xff] %v1022
        %1039 = vst [vmem:[#allocation2 + $0x28] sm:$0xff] %v1023
        %1040 = vst [vmem:[#allocation2 + $0x30] sm:$0xff] %v1024
        %1041 = vst [vmem:[#allocation2 + $0x38] sm:$0xff] %v1025
        %1042 = vst [vmem:[#allocation2 + $0x40] sm:$0xff] %v1026
        %1043 = vst [vmem:[#allocation2 + $0x48] sm:$0xff] %v1027
        %1044 = vst [vmem:[#allocation2 + $0x50] sm:$0xff] %v1028
        %1045 = vst [vmem:[#allocation2 + $0x58] sm:$0xff] %v1029
        %1046 = vst [vmem:[#allocation2 + $0x60] sm:$0xff] %v1030
        %1047 = vst [vmem:[#allocation2 + $0x68] sm:$0xff] %v1031
        %1048 = vst [vmem:[#allocation2 + $0x70] sm:$0xff] %v1032
        %1049 = vst [vmem:[#allocation2 + $0x78] sm:$0xff] %v1033
        %p1050 = scmp.eq.s32.totalorder %s21, 1
        // Predicated region
        $region56: #{_lambda_.11} parent=46 // pred_check
          %p1051 = pneg %p1050
        $region57: #{_lambda_.11} parent=46 // pred_check_branch
          %1053 = sbr.rel (%p1051) target = $region59
        $region58: #{_lambda_.11} parent=46 // pred_region
          %v1054 = vld [vmem:[#allocation2] sm:$0xff]
          %v1055 = vld [vmem:[#allocation2 + $0x8] sm:$0xff]
          %v1056 = vld [vmem:[#allocation2 + $0x10] sm:$0xff]
          %v1057 = vld [vmem:[#allocation2 + $0x18] sm:$0xff]
          %v1058 = vld [vmem:[#allocation2 + $0x20] sm:$0xff]
          %v1059 = vld [vmem:[#allocation2 + $0x28] sm:$0xff]
          %v1060 = vld [vmem:[#allocation2 + $0x30] sm:$0xff]
          %v1061 = vld [vmem:[#allocation2 + $0x38] sm:$0xff]
          %v1062 = vld [vmem:[#allocation2 + $0x40] sm:$0xff]
          %v1063 = vld [vmem:[#allocation2 + $0x48] sm:$0xff]
          %v1064 = vld [vmem:[#allocation2 + $0x50] sm:$0xff]
          %v1065 = vld [vmem:[#allocation2 + $0x58] sm:$0xff]
          %v1066 = vld [vmem:[#allocation2 + $0x60] sm:$0xff]
          %v1067 = vld [vmem:[#allocation2 + $0x68] sm:$0xff]
          %v1068 = vld [vmem:[#allocation2 + $0x70] sm:$0xff]
          %v1069 = vld [vmem:[#allocation2 + $0x78] sm:$0xff]
          %v1070 = vpack.c.bf16 %v1055, %v1054
          %v1071 = vpack.c.bf16 %v1057, %v1056
          %v1072 = vpack.c.bf16 %v1059, %v1058
          %v1073 = vpack.c.bf16 %v1061, %v1060
          %v1074 = vpack.c.bf16 %v1063, %v1062
          %v1075 = vpack.c.bf16 %v1065, %v1064
          %v1076 = vpack.c.bf16 %v1067, %v1066
          %v1077 = vpack.c.bf16 %v1069, %v1068
          %v1086 = vunpack.c.l.b16 %v1070
          %v1087 = vunpack.c.h.b16 %v1070
          %v1088 = vunpack.c.l.b16 %v1071
          %v1089 = vunpack.c.h.b16 %v1071
          %v1090 = vunpack.c.l.b16 %v1072
          %v1091 = vunpack.c.h.b16 %v1072
          %v1092 = vunpack.c.l.b16 %v1073
          %v1093 = vunpack.c.h.b16 %v1073
          %v1094 = vunpack.c.l.b16 %v1074
          %v1095 = vunpack.c.h.b16 %v1074
          %v1096 = vunpack.c.l.b16 %v1075
          %v1097 = vunpack.c.h.b16 %v1075
          %v1098 = vunpack.c.l.b16 %v1076
          %v1099 = vunpack.c.h.b16 %v1076
          %v1100 = vunpack.c.l.b16 %v1077
          %v1101 = vunpack.c.h.b16 %v1077
          %v1102 = vpack.c.b16 %v1086, %v1086
          %v1103 = vpack.c.b16 %v1087, %v1087
          %v1104 = vpack.c.b16 %v1088, %v1088
          %v1105 = vpack.c.b16 %v1089, %v1089
          %v1106 = vpack.c.b16 %v1090, %v1090
          %v1107 = vpack.c.b16 %v1091, %v1091
          %v1108 = vpack.c.b16 %v1092, %v1092
          %v1109 = vpack.c.b16 %v1093, %v1093
          %v1110 = vpack.c.b16 %v1094, %v1094
          %v1111 = vpack.c.b16 %v1095, %v1095
          %v1112 = vpack.c.b16 %v1096, %v1096
          %v1113 = vpack.c.b16 %v1097, %v1097
          %v1114 = vpack.c.b16 %v1098, %v1098
          %v1115 = vpack.c.b16 %v1099, %v1099
          %v1116 = vpack.c.b16 %v1100, %v1100
          %v1117 = vpack.c.b16 %v1101, %v1101
          %1134 = vst [vmem:[%s331] sm:$0xf] %v1102
          %1135 = vst [vmem:[%s331 + $0x4] sm:$0xf] %v1103
          %1136 = vst [vmem:[%s331 + $0x8] sm:$0xf] %v1104
          %1137 = vst [vmem:[%s331 + $0xc] sm:$0xf] %v1105
          %1138 = vst [vmem:[%s331 + $0x10] sm:$0xf] %v1106
          %1139 = vst [vmem:[%s331 + $0x14] sm:$0xf] %v1107
          %1140 = vst [vmem:[%s331 + $0x18] sm:$0xf] %v1108
          %1141 = vst [vmem:[%s331 + $0x1c] sm:$0xf] %v1109
          %1142 = vst [vmem:[%s331 + $0x20] sm:$0xf] %v1110
          %1143 = vst [vmem:[%s331 + $0x24] sm:$0xf] %v1111
          %1144 = vst [vmem:[%s331 + $0x28] sm:$0xf] %v1112
          %1145 = vst [vmem:[%s331 + $0x2c] sm:$0xf] %v1113
          %1146 = vst [vmem:[%s331 + $0x30] sm:$0xf] %v1114
          %1147 = vst [vmem:[%s331 + $0x34] sm:$0xf] %v1115
          %1148 = vst [vmem:[%s331 + $0x38] sm:$0xf] %v1116
          %1149 = vst [vmem:[%s331 + $0x3c] sm:$0xf] %v1117
          %v1150 = vadd.f32 %v1054, %v1055
          %v1151 = vadd.f32 %v1150, %v1056
          %v1152 = vadd.f32 %v1151, %v1057
          %v1153 = vadd.f32 %v1152, %v1058
          %v1154 = vadd.f32 %v1153, %v1059
          %v1155 = vadd.f32 %v1154, %v1060
          %v1156 = vadd.f32 %v1155, %v1061
          %v1157 = vadd.f32 %v1156, %v1062
          %v1158 = vadd.f32 %v1157, %v1063
          %v1159 = vadd.f32 %v1158, %v1064
          %v1160 = vadd.f32 %v1159, %v1065
          %v1161 = vadd.f32 %v1160, %v1066
          %v1162 = vadd.f32 %v1161, %v1067
          %v1163 = vadd.f32 %v1162, %v1068
          %v1164 = vadd.f32 %v1163, %v1069
          %v1165 = vrot.slane %v1164, 4
          %v1166 = vadd.f32 %v1164, %v1165
          %v1167 = vrot.slane %v1166, 2
          %v1168 = vadd.f32 %v1166, %v1167
          %v1169 = vrot.slane %v1168, 1
          %v1170 = vadd.f32 %v1168, %v1169
          %1171 = vst [vmem:[%s335] sm:$0x1] %v1170
          %v1172 = vmul.f32 %v1054, %v1054
          %v1173 = vmul.f32 %v1055, %v1055
          %v1174 = vmul.f32 %v1056, %v1056
          %v1175 = vmul.f32 %v1057, %v1057
          %v1176 = vmul.f32 %v1058, %v1058
          %v1177 = vmul.f32 %v1059, %v1059
          %v1178 = vmul.f32 %v1060, %v1060
          %v1179 = vmul.f32 %v1061, %v1061
          %v1180 = vmul.f32 %v1062, %v1062
          %v1181 = vmul.f32 %v1063, %v1063
          %v1182 = vmul.f32 %v1064, %v1064
          %v1183 = vmul.f32 %v1065, %v1065
          %v1184 = vmul.f32 %v1066, %v1066
          %v1185 = vmul.f32 %v1067, %v1067
          %v1186 = vmul.f32 %v1068, %v1068
          %v1187 = vmul.f32 %v1069, %v1069
          %v1188 = vadd.f32 %v1172, %v1173
          %v1189 = vadd.f32 %v1188, %v1174
          %v1190 = vadd.f32 %v1189, %v1175
          %v1191 = vadd.f32 %v1190, %v1176
          %v1192 = vadd.f32 %v1191, %v1177
          %v1193 = vadd.f32 %v1192, %v1178
          %v1194 = vadd.f32 %v1193, %v1179
          %v1195 = vadd.f32 %v1194, %v1180
          %v1196 = vadd.f32 %v1195, %v1181
          %v1197 = vadd.f32 %v1196, %v1182
          %v1198 = vadd.f32 %v1197, %v1183
          %v1199 = vadd.f32 %v1198, %v1184
          %v1200 = vadd.f32 %v1199, %v1185
          %v1201 = vadd.f32 %v1200, %v1186
          %v1202 = vadd.f32 %v1201, %v1187
          %v1203 = vrot.slane %v1202, 4
          %v1204 = vadd.f32 %v1202, %v1203
          %v1205 = vrot.slane %v1204, 2
          %v1206 = vadd.f32 %v1204, %v1205
          %v1207 = vrot.slane %v1206, 1
          %v1208 = vadd.f32 %v1206, %v1207
          %1209 = vst [vmem:[%s338] sm:$0x1] %v1208
        $region59: #{_lambda_.11} parent=46 // pred_fallthru
          _
        %s1210 = smul.u32 16, %s20
        %p1211 = scmp.lt.s32.totalorder %s1210, 15
        %s1212 = scalar_select %p1211, %s1210, 15
        %s1213 = smul.addr %s1212, 4
        %s1214 = scalar_lea.vmem %s2, %s1213
        %p1215 = scmp.lt.s32.totalorder %s20, 0
        %s1216 = scalar_select %p1215, %s20, 0
        %s1217 = scalar_lea.vmem %s3, %s1216
        %p1218 = scmp.lt.s32.totalorder %s20, 0
        %s1219 = scalar_select %p1218, %s20, 0
        %s1220 = scalar_lea.vmem %s4, %s1219
        // Predicated region
        $region60: #{_lambda_.11} parent=46 // pred_check
          %p1221 = pneg %p100
        $region61: #{_lambda_.11} parent=46 // pred_check_branch
          %1223 = sbr.rel (%p1221) target = $region63
        $region62: #{_lambda_.11} parent=46 // pred_region
          %s1224 = smul.u32 16, %s20
        $region63: #{_lambda_.11} parent=46 // pred_fallthru
          _
        // Predicated region
        $region64: #{_lambda_.11} parent=46 // pred_check
          %p1225 = pneg %p126
        $region65: #{_lambda_.11} parent=46 // pred_check_branch
          %1227 = sbr.rel (%p1225) target = $region67
        $region66: #{_lambda_.11} parent=46 // pred_region
          _
        $region67: #{_lambda_.11} parent=46 // pred_fallthru
          _
        // Predicated region
        $region68: #{_lambda_.11} parent=46 // pred_check
          %p1228 = pneg %p152
        $region69: #{_lambda_.11} parent=46 // pred_check_branch
          %1230 = sbr.rel (%p1228) target = $region71
        $region70: #{_lambda_.11} parent=46 // pred_region
          _
        $region71: #{_lambda_.11} parent=46 // pred_fallthru
          _
        // Predicated region
        $region72: #{_lambda_.11} parent=46 // pred_check
          %p1231 = pneg %p100
        $region73: #{_lambda_.11} parent=46 // pred_check_branch
          %1233 = sbr.rel (%p1231) target = $region75
        $region74: #{_lambda_.11} parent=46 // pred_region
          %s1234 = smul.u32 16, %s20
          %p1235 = scmp.lt.s32.totalorder %s1234, 15
          %s1236 = scalar_select %p1235, %s1234, 15
          %s1237 = smul.addr %s1236, 4
          %s1238 = scalar_lea.vmem %s2, %s1237
        $region75: #{_lambda_.11} parent=46 // pred_fallthru
          _
        // Predicated region
        $region76: #{_lambda_.11} parent=46 // pred_check
          %p1239 = pneg %p126
        $region77: #{_lambda_.11} parent=46 // pred_check_branch
          %1241 = sbr.rel (%p1239) target = $region79
        $region78: #{_lambda_.11} parent=46 // pred_region
          %p1242 = scmp.lt.s32.totalorder %s20, 0
          %s1243 = scalar_select %p1242, %s20, 0
          %s1244 = scalar_lea.vmem %s3, %s1243
        $region79: #{_lambda_.11} parent=46 // pred_fallthru
          _
        // Predicated region
        $region80: #{_lambda_.11} parent=46 // pred_check
          %p1245 = pneg %p152
        $region81: #{_lambda_.11} parent=46 // pred_check_branch
          %1247 = sbr.rel (%p1245) target = $region83
        $region82: #{_lambda_.11} parent=46 // pred_region
          %p1248 = scmp.lt.s32.totalorder %s20, 0
          %s1249 = scalar_select %p1248, %s20, 0
          %s1250 = scalar_lea.vmem %s4, %s1249
        $region83: #{_lambda_.11} parent=46 // pred_fallthru
          _
      $region47: #{_lambda_.11} parent=5 // pred_fallthru
        _
      %p1251 = scmp.le.s32.totalorder 2, %s11
      // Predicated region
      $region84: #{_lambda_.11} parent=5 // pred_check
        %p1252 = pneg %p1251
      $region85: #{_lambda_.11} parent=5 // pred_check_branch
        %1254 = sbr.rel (%p1252) target = $region87
      $region86: #{_lambda_.11} parent=5 // pred_region
        %s1255 = ssub.s32 %s11, 2
      $region87: #{_lambda_.11} parent=5 // pred_fallthru
        _
    $region6: #{_lambda_.11} parent=1 // loop_footer
      %s15 = sadd.s32 1, %s11
    $region7: #{_lambda_.11} parent=1 // loop_footer_branch
      %10 = sbr.rel target = $region3
    $region8: #{_lambda_.11} parent=1 // loop_exit
      _

// kernel: _lambda_.12
$region0: #{_lambda_.12}
  #allocation0 [shape = 'u32[]', space=smem, size = 0x4, offset = 0x4, fixed_abs, tag = 'smem constant byte address 0x4 - core index']
  #allocation1 [shape = 'u32[144,128]{1,0:T(1,128)}', space=vmem, size = 0x12000, scoped, tag = 'internal scratch']
  %s0 = inlined_call_operand.vmem [shape: bf16[128,128], index: 0, kind: input, shape index: {}]
  %s1 = inlined_call_operand.vmem [shape: f32[1,128], index: 1, kind: input, shape index: {}]
  %s2 = inlined_call_operand.vmem [shape: f32[1,128], index: 2, kind: input, shape index: {}]
  %s3 = inlined_call_operand.vmem [shape: bf16[128,128], index: 3, kind: output, shape index: {}]
  %s4 = sld [smem:[#allocation0]]
  $region22: #{_lambda_.12} parent=0
    _
  %s6 = ssub.s32 1, %s4
  %s7 = scalar_select 0, %s6, %s4
  // Predicated region
  $region2: #{_lambda_.12} parent=0 // pred_check
    _
  $region3: #{_lambda_.12} parent=0 // pred_check_branch
    %9 = sbr.rel (0) target = $region5
  $region4: #{_lambda_.12} parent=0 // pred_region
    _
  $region5: #{_lambda_.12} parent=0 // pred_fallthru
    _
  // Predicated region
  $region6: #{_lambda_.12} parent=0 // pred_check
    _
  $region7: #{_lambda_.12} parent=0 // pred_check_branch
    %11 = sbr.rel (0) target = $region9
  $region8: #{_lambda_.12} parent=0 // pred_region
    _
  $region9: #{_lambda_.12} parent=0 // pred_fallthru
    _
  // Predicated region
  $region10: #{_lambda_.12} parent=0 // pred_check
    _
  $region11: #{_lambda_.12} parent=0 // pred_check_branch
    %13 = sbr.rel (0) target = $region13
  $region12: #{_lambda_.12} parent=0 // pred_region
    _
  $region13: #{_lambda_.12} parent=0 // pred_fallthru
    _
  %v14 = vld [vmem:[%s0] sm:$0xf]
  %v15 = vld [vmem:[%s0 + $0x4] sm:$0xf]
  %v16 = vld [vmem:[%s0 + $0x8] sm:$0xf]
  %v17 = vld [vmem:[%s0 + $0xc] sm:$0xf]
  %v18 = vld [vmem:[%s0 + $0x10] sm:$0xf]
  %v19 = vld [vmem:[%s0 + $0x14] sm:$0xf]
  %v20 = vld [vmem:[%s0 + $0x18] sm:$0xf]
  %v21 = vld [vmem:[%s0 + $0x1c] sm:$0xf]
  %v22 = vld [vmem:[%s0 + $0x20] sm:$0xf]
  %v23 = vld [vmem:[%s0 + $0x24] sm:$0xf]
  %v24 = vld [vmem:[%s0 + $0x28] sm:$0xf]
  %v25 = vld [vmem:[%s0 + $0x2c] sm:$0xf]
  %v26 = vld [vmem:[%s0 + $0x30] sm:$0xf]
  %v27 = vld [vmem:[%s0 + $0x34] sm:$0xf]
  %v28 = vld [vmem:[%s0 + $0x38] sm:$0xf]
  %v29 = vld [vmem:[%s0 + $0x3c] sm:$0xf]
  %v30 = vunpack.c.l.bf16 %v14
  %v31 = vunpack.c.l.bf16 %v15
  %v32 = vunpack.c.l.bf16 %v16
  %v33 = vunpack.c.l.bf16 %v17
  %v34 = vunpack.c.l.bf16 %v18
  %v35 = vunpack.c.l.bf16 %v19
  %v36 = vunpack.c.l.bf16 %v20
  %v37 = vunpack.c.l.bf16 %v21
  %v38 = vunpack.c.l.bf16 %v22
  %v39 = vunpack.c.l.bf16 %v23
  %v40 = vunpack.c.l.bf16 %v24
  %v41 = vunpack.c.l.bf16 %v25
  %v42 = vunpack.c.l.bf16 %v26
  %v43 = vunpack.c.l.bf16 %v27
  %v44 = vunpack.c.l.bf16 %v28
  %v45 = vunpack.c.l.bf16 %v29
  %v46 = vld [vmem:[%s1] sm:$0x1]
  %v48 = vlaneseq
  %v49 = vshrl.u32 %v48, 7
  %v50 = vsub.s32 0, %v49
  %v51 = vrot.slane %v46, %v50
  %v53 = vmul.f32 %v30, %v51
  %v54 = vmul.f32 %v31, %v51
  %v55 = vmul.f32 %v32, %v51
  %v56 = vmul.f32 %v33, %v51
  %v57 = vmul.f32 %v34, %v51
  %v58 = vmul.f32 %v35, %v51
  %v59 = vmul.f32 %v36, %v51
  %v60 = vmul.f32 %v37, %v51
  %v61 = vmul.f32 %v38, %v51
  %v62 = vmul.f32 %v39, %v51
  %v63 = vmul.f32 %v40, %v51
  %v64 = vmul.f32 %v41, %v51
  %v65 = vmul.f32 %v42, %v51
  %v66 = vmul.f32 %v43, %v51
  %v67 = vmul.f32 %v44, %v51
  %v68 = vmul.f32 %v45, %v51
  %v69 = vld [vmem:[%s2] sm:$0x1]
  %v71 = vlaneseq
  %v72 = vshrl.u32 %v71, 7
  %v73 = vsub.s32 0, %v72
  %v74 = vrot.slane %v69, %v73
  %v76 = vadd.f32 %v53, %v74
  %v77 = vadd.f32 %v54, %v74
  %v78 = vadd.f32 %v55, %v74
  %v79 = vadd.f32 %v56, %v74
  %v80 = vadd.f32 %v57, %v74
  %v81 = vadd.f32 %v58, %v74
  %v82 = vadd.f32 %v59, %v74
  %v83 = vadd.f32 %v60, %v74
  %v84 = vadd.f32 %v61, %v74
  %v85 = vadd.f32 %v62, %v74
  %v86 = vadd.f32 %v63, %v74
  %v87 = vadd.f32 %v64, %v74
  %v88 = vadd.f32 %v65, %v74
  %v89 = vadd.f32 %v66, %v74
  %v90 = vadd.f32 %v67, %v74
  %v91 = vadd.f32 %v68, %v74
  %vm92 = vcmp.ge.f32.partialorder %v76, 0.0
  %vm93 = vcmp.ge.f32.partialorder %v77, 0.0
  %vm94 = vcmp.ge.f32.partialorder %v78, 0.0
  %vm95 = vcmp.ge.f32.partialorder %v79, 0.0
  %vm96 = vcmp.ge.f32.partialorder %v80, 0.0
  %vm97 = vcmp.ge.f32.partialorder %v81, 0.0
  %vm98 = vcmp.ge.f32.partialorder %v82, 0.0
  %vm99 = vcmp.ge.f32.partialorder %v83, 0.0
  %vm100 = vcmp.ge.f32.partialorder %v84, 0.0
  %vm101 = vcmp.ge.f32.partialorder %v85, 0.0
  %vm102 = vcmp.ge.f32.partialorder %v86, 0.0
  %vm103 = vcmp.ge.f32.partialorder %v87, 0.0
  %vm104 = vcmp.ge.f32.partialorder %v88, 0.0
  %vm105 = vcmp.ge.f32.partialorder %v89, 0.0
  %vm106 = vcmp.ge.f32.partialorder %v90, 0.0
  %vm107 = vcmp.ge.f32.partialorder %v91, 0.0
  %v108 = vmul.f32 %v76, 0.2
  %v109 = vmul.f32 %v77, 0.2
  %v110 = vmul.f32 %v78, 0.2
  %v111 = vmul.f32 %v79, 0.2
  %v112 = vmul.f32 %v80, 0.2
  %v113 = vmul.f32 %v81, 0.2
  %v114 = vmul.f32 %v82, 0.2
  %v115 = vmul.f32 %v83, 0.2
  %v116 = vmul.f32 %v84, 0.2
  %v117 = vmul.f32 %v85, 0.2
  %v118 = vmul.f32 %v86, 0.2
  %v119 = vmul.f32 %v87, 0.2
  %v120 = vmul.f32 %v88, 0.2
  %v121 = vmul.f32 %v89, 0.2
  %v122 = vmul.f32 %v90, 0.2
  %v123 = vmul.f32 %v91, 0.2
  %v124 = vsel %vm92, %v76, %v108
  %v125 = vsel %vm93, %v77, %v109
  %v126 = vsel %vm94, %v78, %v110
  %v127 = vsel %vm95, %v79, %v111
  %v128 = vsel %vm96, %v80, %v112
  %v129 = vsel %vm97, %v81, %v113
  %v130 = vsel %vm98, %v82, %v114
  %v131 = vsel %vm99, %v83, %v115
  %v132 = vsel %vm100, %v84, %v116
  %v133 = vsel %vm101, %v85, %v117
  %v134 = vsel %vm102, %v86, %v118
  %v135 = vsel %vm103, %v87, %v119
  %v136 = vsel %vm104, %v88, %v120
  %v137 = vsel %vm105, %v89, %v121
  %v138 = vsel %vm106, %v90, %v122
  %v139 = vsel %vm107, %v91, %v123
  %v140 = vpack.c.bf16 %v125, %v124
  %v141 = vpack.c.bf16 %v127, %v126
  %v142 = vpack.c.bf16 %v129, %v128
  %v143 = vpack.c.bf16 %v131, %v130
  %v144 = vpack.c.bf16 %v133, %v132
  %v145 = vpack.c.bf16 %v135, %v134
  %v146 = vpack.c.bf16 %v137, %v136
  %v147 = vpack.c.bf16 %v139, %v138
  %v156 = vunpack.c.l.b16 %v140
  %v157 = vunpack.c.h.b16 %v140
  %v158 = vunpack.c.l.b16 %v141
  %v159 = vunpack.c.h.b16 %v141
  %v160 = vunpack.c.l.b16 %v142
  %v161 = vunpack.c.h.b16 %v142
  %v162 = vunpack.c.l.b16 %v143
  %v163 = vunpack.c.h.b16 %v143
  %v164 = vunpack.c.l.b16 %v144
  %v165 = vunpack.c.h.b16 %v144
  %v166 = vunpack.c.l.b16 %v145
  %v167 = vunpack.c.h.b16 %v145
  %v168 = vunpack.c.l.b16 %v146
  %v169 = vunpack.c.h.b16 %v146
  %v170 = vunpack.c.l.b16 %v147
  %v171 = vunpack.c.h.b16 %v147
  %v172 = vpack.c.b16 %v156, %v156
  %v173 = vpack.c.b16 %v157, %v157
  %v174 = vpack.c.b16 %v158, %v158
  %v175 = vpack.c.b16 %v159, %v159
  %v176 = vpack.c.b16 %v160, %v160
  %v177 = vpack.c.b16 %v161, %v161
  %v178 = vpack.c.b16 %v162, %v162
  %v179 = vpack.c.b16 %v163, %v163
  %v180 = vpack.c.b16 %v164, %v164
  %v181 = vpack.c.b16 %v165, %v165
  %v182 = vpack.c.b16 %v166, %v166
  %v183 = vpack.c.b16 %v167, %v167
  %v184 = vpack.c.b16 %v168, %v168
  %v185 = vpack.c.b16 %v169, %v169
  %v186 = vpack.c.b16 %v170, %v170
  %v187 = vpack.c.b16 %v171, %v171
  %204 = vst [vmem:[%s3] sm:$0xf] %v172
  %205 = vst [vmem:[%s3 + $0x4] sm:$0xf] %v173
  %206 = vst [vmem:[%s3 + $0x8] sm:$0xf] %v174
  %207 = vst [vmem:[%s3 + $0xc] sm:$0xf] %v175
  %208 = vst [vmem:[%s3 + $0x10] sm:$0xf] %v176
  %209 = vst [vmem:[%s3 + $0x14] sm:$0xf] %v177
  %210 = vst [vmem:[%s3 + $0x18] sm:$0xf] %v178
  %211 = vst [vmem:[%s3 + $0x1c] sm:$0xf] %v179
  %212 = vst [vmem:[%s3 + $0x20] sm:$0xf] %v180
  %213 = vst [vmem:[%s3 + $0x24] sm:$0xf] %v181
  %214 = vst [vmem:[%s3 + $0x28] sm:$0xf] %v182
  %215 = vst [vmem:[%s3 + $0x2c] sm:$0xf] %v183
  %216 = vst [vmem:[%s3 + $0x30] sm:$0xf] %v184
  %217 = vst [vmem:[%s3 + $0x34] sm:$0xf] %v185
  %218 = vst [vmem:[%s3 + $0x38] sm:$0xf] %v186
  %219 = vst [vmem:[%s3 + $0x3c] sm:$0xf] %v187
  // Predicated region
  $region14: #{_lambda_.12} parent=0 // pred_check
    _
  $region15: #{_lambda_.12} parent=0 // pred_check_branch
    %221 = sbr.rel (0) target = $region17
  $region16: #{_lambda_.12} parent=0 // pred_region
    _
  $region17: #{_lambda_.12} parent=0 // pred_fallthru
    _
  // Predicated region
  $region18: #{_lambda_.12} parent=0 // pred_check
    _
  $region19: #{_lambda_.12} parent=0 // pred_check_branch
    %223 = sbr.rel (0) target = $region21
  $region20: #{_lambda_.12} parent=0 // pred_region
    _
  $region21: #{_lambda_.12} parent=0 // pred_fallthru
    _

// kernel: _lambda_.14
$region0: #{_lambda_.14}
  #allocation0 [shape = 'u32[]', space=smem, size = 0x4, offset = 0x4, fixed_abs, tag = 'smem constant byte address 0x4 - core index']
  #allocation1 [shape = 'u32[144,128]{1,0:T(1,128)}', space=vmem, size = 0x12000, scoped, tag = 'internal scratch']
  %s0 = inlined_call_operand.vmem [shape: bf16[32,256], index: 0, kind: input, shape index: {}]
  %s1 = inlined_call_operand.vmem [shape: f32[1,256], index: 1, kind: input, shape index: {}]
  %s2 = inlined_call_operand.vmem [shape: f32[1,256], index: 2, kind: input, shape index: {}]
  %s3 = inlined_call_operand.vmem [shape: bf16[32,256], index: 3, kind: output, shape index: {}]
  %s4 = sld [smem:[#allocation0]]
  $region22: #{_lambda_.14} parent=0
    _
  %s6 = ssub.s32 1, %s4
  %s7 = scalar_select 0, %s6, %s4
  // Predicated region
  $region2: #{_lambda_.14} parent=0 // pred_check
    _
  $region3: #{_lambda_.14} parent=0 // pred_check_branch
    %9 = sbr.rel (0) target = $region5
  $region4: #{_lambda_.14} parent=0 // pred_region
    _
  $region5: #{_lambda_.14} parent=0 // pred_fallthru
    _
  // Predicated region
  $region6: #{_lambda_.14} parent=0 // pred_check
    _
  $region7: #{_lambda_.14} parent=0 // pred_check_branch
    %11 = sbr.rel (0) target = $region9
  $region8: #{_lambda_.14} parent=0 // pred_region
    _
  $region9: #{_lambda_.14} parent=0 // pred_fallthru
    _
  // Predicated region
  $region10: #{_lambda_.14} parent=0 // pred_check
    _
  $region11: #{_lambda_.14} parent=0 // pred_check_branch
    %13 = sbr.rel (0) target = $region13
  $region12: #{_lambda_.14} parent=0 // pred_region
    _
  $region13: #{_lambda_.14} parent=0 // pred_fallthru
    _
  %v14 = vld [vmem:[%s0] sm:$0xff]
  %v15 = vld [vmem:[%s0 + $0x8] sm:$0xff]
  %v16 = vld [vmem:[%s0 + $0x10] sm:$0xff]
  %v17 = vld [vmem:[%s0 + $0x18] sm:$0xff]
  %v18 = vunpack.c.l.bf16 %v14
  %v19 = vunpack.c.h.bf16 %v14
  %v20 = vunpack.c.l.bf16 %v15
  %v21 = vunpack.c.h.bf16 %v15
  %v22 = vunpack.c.l.bf16 %v16
  %v23 = vunpack.c.h.bf16 %v16
  %v24 = vunpack.c.l.bf16 %v17
  %v25 = vunpack.c.h.bf16 %v17
  %v26 = vld [vmem:[%s1] sm:$0x3]
  %v28 = vlaneseq
  %v29 = vshrl.u32 %v28, 7
  %v30 = vsub.s32 0, %v29
  %v31 = vrot.slane %v26, %v30
  %v32 = vlaneseq
  %v33 = vshrl.u32 %v32, 7
  %v34 = vsub.s32 1, %v33
  %v35 = vrot.slane %v26, %v34
  %v38 = vmul.f32 %v18, %v31
  %v39 = vmul.f32 %v19, %v35
  %v40 = vmul.f32 %v20, %v31
  %v41 = vmul.f32 %v21, %v35
  %v42 = vmul.f32 %v22, %v31
  %v43 = vmul.f32 %v23, %v35
  %v44 = vmul.f32 %v24, %v31
  %v45 = vmul.f32 %v25, %v35
  %v46 = vld [vmem:[%s2] sm:$0x3]
  %v48 = vlaneseq
  %v49 = vshrl.u32 %v48, 7
  %v50 = vsub.s32 0, %v49
  %v51 = vrot.slane %v46, %v50
  %v52 = vlaneseq
  %v53 = vshrl.u32 %v52, 7
  %v54 = vsub.s32 1, %v53
  %v55 = vrot.slane %v46, %v54
  %v58 = vadd.f32 %v38, %v51
  %v59 = vadd.f32 %v39, %v55
  %v60 = vadd.f32 %v40, %v51
  %v61 = vadd.f32 %v41, %v55
  %v62 = vadd.f32 %v42, %v51
  %v63 = vadd.f32 %v43, %v55
  %v64 = vadd.f32 %v44, %v51
  %v65 = vadd.f32 %v45, %v55
  %vm66 = vcmp.ge.f32.partialorder %v58, 0.0
  %vm67 = vcmp.ge.f32.partialorder %v59, 0.0
  %vm68 = vcmp.ge.f32.partialorder %v60, 0.0
  %vm69 = vcmp.ge.f32.partialorder %v61, 0.0
  %vm70 = vcmp.ge.f32.partialorder %v62, 0.0
  %vm71 = vcmp.ge.f32.partialorder %v63, 0.0
  %vm72 = vcmp.ge.f32.partialorder %v64, 0.0
  %vm73 = vcmp.ge.f32.partialorder %v65, 0.0
  %v74 = vmul.f32 %v58, 0.2
  %v75 = vmul.f32 %v59, 0.2
  %v76 = vmul.f32 %v60, 0.2
  %v77 = vmul.f32 %v61, 0.2
  %v78 = vmul.f32 %v62, 0.2
  %v79 = vmul.f32 %v63, 0.2
  %v80 = vmul.f32 %v64, 0.2
  %v81 = vmul.f32 %v65, 0.2
  %v82 = vsel %vm66, %v58, %v74
  %v83 = vsel %vm67, %v59, %v75
  %v84 = vsel %vm68, %v60, %v76
  %v85 = vsel %vm69, %v61, %v77
  %v86 = vsel %vm70, %v62, %v78
  %v87 = vsel %vm71, %v63, %v79
  %v88 = vsel %vm72, %v64, %v80
  %v89 = vsel %vm73, %v65, %v81
  %v90 = vpack.c.bf16 %v84, %v82
  %v91 = vpack.c.bf16 %v85, %v83
  %v92 = vpack.c.bf16 %v88, %v86
  %v93 = vpack.c.bf16 %v89, %v87
  %v98 = vunpack.c.l.b16 %v90
  %v99 = vunpack.c.l.b16 %v91
  %v100 = vunpack.c.h.b16 %v90
  %v101 = vunpack.c.h.b16 %v91
  %v102 = vunpack.c.l.b16 %v92
  %v103 = vunpack.c.l.b16 %v93
  %v104 = vunpack.c.h.b16 %v92
  %v105 = vunpack.c.h.b16 %v93
  %v106 = vpack.c.b16 %v99, %v98
  %v107 = vpack.c.b16 %v101, %v100
  %v108 = vpack.c.b16 %v103, %v102
  %v109 = vpack.c.b16 %v105, %v104
  %114 = vst [vmem:[%s3] sm:$0xff] %v106
  %115 = vst [vmem:[%s3 + $0x8] sm:$0xff] %v107
  %116 = vst [vmem:[%s3 + $0x10] sm:$0xff] %v108
  %117 = vst [vmem:[%s3 + $0x18] sm:$0xff] %v109
  // Predicated region
  $region14: #{_lambda_.14} parent=0 // pred_check
    _
  $region15: #{_lambda_.14} parent=0 // pred_check_branch
    %119 = sbr.rel (0) target = $region17
  $region16: #{_lambda_.14} parent=0 // pred_region
    _
  $region17: #{_lambda_.14} parent=0 // pred_fallthru
    _
  // Predicated region
  $region18: #{_lambda_.14} parent=0 // pred_check
    _
  $region19: #{_lambda_.14} parent=0 // pred_check_branch
    %121 = sbr.rel (0) target = $region21
  $region20: #{_lambda_.14} parent=0 // pred_region
    _
  $region21: #{_lambda_.14} parent=0 // pred_fallthru
    _

// kernel: _lambda_.13
$region0: #{_lambda_.13}
  #allocation0 [shape = 'u32[]', space=smem, size = 0x4, offset = 0x4, fixed_abs, tag = 'smem constant byte address 0x4 - core index']
  #allocation1 [shape = 'u32[144,128]{1,0:T(1,128)}', space=vmem, size = 0x12000, scoped, tag = 'internal scratch']
  #allocation2 [shape = 'f32[32,256]{1,0:T(8,128)}', space=vmem, size = 0x8000, scoped, tag = 'scratch operand']
  %s0 = inlined_call_operand.vmem [shape: bf16[32,2048], index: 0, kind: input, shape index: {}]
  %s1 = inlined_call_operand.vmem [shape: bf16[2048,256], index: 1, kind: input, shape index: {}]
  %s2 = inlined_call_operand.vmem [shape: bf16[32,256], index: 2, kind: output, shape index: {0}]
  %s3 = inlined_call_operand.vmem [shape: f32[1,1,256], index: 3, kind: output, shape index: {1}]
  %s4 = inlined_call_operand.vmem [shape: f32[1,1,256], index: 4, kind: output, shape index: {2}]
  %5 = xla_tuple %s2, %s3, %s4
  %s6 = sld [smem:[#allocation0]]
  $region88: #{_lambda_.13} parent=0
    _
  %s8 = ssub.s32 1, %s6
  %s9 = scalar_select 0, %s8, %s6
  $region1: #{_lambda_.13} parent=0
    #allocation3 [shape = 'u8[65536]{0}', space=vmem, size = 0x10000, scoped, tag = 'input window, operand 0']
    loop: start=0, step=1, limit=6
    $region2: #{_lambda_.13} parent=1 // loop_pre_header
      _
    $region3: #{_lambda_.13} parent=1 // loop_header
      %s11 = sphi 0, %s15
      %p12 = scmp.ge.s32.totalorder %s11, 6
      %s18 = sphi 0, %s30
      %s19 = sphi 0, %s26
      %s20 = sphi 0, %s18
      %s21 = sphi 0, %s19
      %s22 = sphi 0, %s20
      %s23 = sphi 0, %s21
      %s35 = sphi 0, %s37
      %s38 = sphi 0, %s35
      %s39 = sphi 0, %s38
      %s55 = sphi 0, %s39
      %s61 = sphi 0, %s63
      %s64 = sphi 0, %s61
      %s65 = sphi 0, %s64
      %s81 = sphi 0, %s65
      %s87 = sphi 0, %s89
      %s90 = sphi 0, %s87
      %s91 = sphi 0, %s90
      %s107 = sphi 0, %s91
      %s113 = sphi 0, %s115
      %s116 = sphi 0, %s113
      %s117 = sphi 0, %s116
      %s133 = sphi 0, %s117
      %s139 = sphi 0, %s141
      %s142 = sphi 0, %s139
      %s143 = sphi 0, %s142
      %s159 = sphi 0, %s143
    $region4: #{_lambda_.13} parent=1 // loop_header_branch
      %14 = sbr.rel (%p12) target = $region8
    $region5: #{_lambda_.13} parent=1 // loop_body
      %s16 = ssub.s32 %s11, 1
      %s17 = ssub.s32 %s11, 2
      %s24 = sadd.s32 1, %s19
      %p25 = scmp.ge.s32.totalorder %s24, 4
      %s26 = scalar_select %p25, 0, %s24
      %s27 = sadd.s32 1, %s18
      %s28 = scalar_select %p25, %s27, %s18
      %p29 = scmp.ge.s32.totalorder %s28, 1
      %s30 = scalar_select %p29, 0, %s28
      %s31 = ssub.s32 %s18, %s30
      %s32 = ssub.s32 %s19, %s26
      %s33 = sor.u32 %s31, %s32
      %p34 = scmp.eq.s32.totalorder %s33, 0
      %s36 = sadd.s32 %s35, 1
      %s37 = scalar_select %p34, %s35, %s36
      %p40 = pneg %p34
      %p41 = scmp.eq.s32.totalorder %s11, 3
      %p42 = por %p40, %p41
      %p43 = scmp.ne.s32.totalorder %s35, %s38
      %p44 = scmp.eq.s32.totalorder %s11, 0
      %p45 = por %p43, %p44
      %p46 = scmp.ne.s32.totalorder %s35, %s38
      %p47 = scmp.eq.s32.totalorder %s16, 3
      %p48 = por %p46, %p47
      %p49 = scmp.ne.s32.totalorder %s38, %s39
      %p50 = scmp.eq.s32.totalorder %s16, 0
      %p51 = por %p49, %p50
      %p52 = scmp.ne.s32.totalorder %s38, %s39
      %p53 = scmp.eq.s32.totalorder %s17, 3
      %p54 = por %p52, %p53
      %p56 = scmp.ne.s32.totalorder %s39, %s55
      %p57 = scmp.eq.s32.totalorder %s17, 0
      %p58 = por %p56, %p57
      %s59 = ssub.s32 %s19, %s26
      %p60 = scmp.eq.s32.totalorder %s59, 0
      %s62 = sadd.s32 %s61, 1
      %s63 = scalar_select %p60, %s61, %s62
      %p66 = pneg %p60
      %p67 = scmp.eq.s32.totalorder %s11, 3
      %p68 = por %p66, %p67
      %p69 = scmp.ne.s32.totalorder %s61, %s64
      %p70 = scmp.eq.s32.totalorder %s11, 0
      %p71 = por %p69, %p70
      %p72 = scmp.ne.s32.totalorder %s61, %s64
      %p73 = scmp.eq.s32.totalorder %s16, 3
      %p74 = por %p72, %p73
      %p75 = scmp.ne.s32.totalorder %s64, %s65
      %p76 = scmp.eq.s32.totalorder %s16, 0
      %p77 = por %p75, %p76
      %p78 = scmp.ne.s32.totalorder %s64, %s65
      %p79 = scmp.eq.s32.totalorder %s17, 3
      %p80 = por %p78, %p79
      %p82 = scmp.ne.s32.totalorder %s65, %s81
      %p83 = scmp.eq.s32.totalorder %s17, 0
      %p84 = por %p82, %p83
      %s85 = ssub.s32 %s18, %s30
      %p86 = scmp.eq.s32.totalorder %s85, 0
      %s88 = sadd.s32 %s87, 1
      %s89 = scalar_select %p86, %s87, %s88
      %p92 = pneg %p86
      %p93 = scmp.eq.s32.totalorder %s11, 3
      %p94 = por %p92, %p93
      %p95 = scmp.ne.s32.totalorder %s87, %s90
      %p96 = scmp.eq.s32.totalorder %s11, 0
      %p97 = por %p95, %p96
      %p98 = scmp.ne.s32.totalorder %s87, %s90
      %p99 = scmp.eq.s32.totalorder %s16, 3
      %p100 = por %p98, %p99
      %p101 = scmp.ne.s32.totalorder %s90, %s91
      %p102 = scmp.eq.s32.totalorder %s16, 0
      %p103 = por %p101, %p102
      %p104 = scmp.ne.s32.totalorder %s90, %s91
      %p105 = scmp.eq.s32.totalorder %s17, 3
      %p106 = por %p104, %p105
      %p108 = scmp.ne.s32.totalorder %s91, %s107
      %p109 = scmp.eq.s32.totalorder %s17, 0
      %p110 = por %p108, %p109
      %s111 = ssub.s32 %s18, %s30
      %p112 = scmp.eq.s32.totalorder %s111, 0
      %s114 = sadd.s32 %s113, 1
      %s115 = scalar_select %p112, %s113, %s114
      %p118 = pneg %p112
      %p119 = scmp.eq.s32.totalorder %s11, 3
      %p120 = por %p118, %p119
      %p121 = scmp.ne.s32.totalorder %s113, %s116
      %p122 = scmp.eq.s32.totalorder %s11, 0
      %p123 = por %p121, %p122
      %p124 = scmp.ne.s32.totalorder %s113, %s116
      %p125 = scmp.eq.s32.totalorder %s16, 3
      %p126 = por %p124, %p125
      %p127 = scmp.ne.s32.totalorder %s116, %s117
      %p128 = scmp.eq.s32.totalorder %s16, 0
      %p129 = por %p127, %p128
      %p130 = scmp.ne.s32.totalorder %s116, %s117
      %p131 = scmp.eq.s32.totalorder %s17, 3
      %p132 = por %p130, %p131
      %p134 = scmp.ne.s32.totalorder %s117, %s133
      %p135 = scmp.eq.s32.totalorder %s17, 0
      %p136 = por %p134, %p135
      %s137 = ssub.s32 %s18, %s30
      %p138 = scmp.eq.s32.totalorder %s137, 0
      %s140 = sadd.s32 %s139, 1
      %s141 = scalar_select %p138, %s139, %s140
      %p144 = pneg %p138
      %p145 = scmp.eq.s32.totalorder %s11, 3
      %p146 = por %p144, %p145
      %p147 = scmp.ne.s32.totalorder %s139, %s142
      %p148 = scmp.eq.s32.totalorder %s11, 0
      %p149 = por %p147, %p148
      %p150 = scmp.ne.s32.totalorder %s139, %s142
      %p151 = scmp.eq.s32.totalorder %s16, 3
      %p152 = por %p150, %p151
      %p153 = scmp.ne.s32.totalorder %s142, %s143
      %p154 = scmp.eq.s32.totalorder %s16, 0
      %p155 = por %p153, %p154
      %p156 = scmp.ne.s32.totalorder %s142, %s143
      %p157 = scmp.eq.s32.totalorder %s17, 3
      %p158 = por %p156, %p157
      %p160 = scmp.ne.s32.totalorder %s143, %s159
      %p161 = scmp.eq.s32.totalorder %s17, 0
      %p162 = por %p160, %p161
      %p163 = scmp.le.s32.totalorder 1, %s11
      %p164 = scmp.lt.s32.totalorder %s11, 5
      %p165 = pnand %p163, %p164
      %p166 = pneg %p165
      // Predicated region
      $region9: #{_lambda_.13} parent=5 // pred_check
        _
      $region10: #{_lambda_.13} parent=5 // pred_check_branch
        %168 = sbr.rel (%p165) target = $region12
      $region11: #{_lambda_.13} parent=5 // pred_region
        %s169 = ssub.s32 %s11, 1
      $region12: #{_lambda_.13} parent=5 // pred_fallthru
        _
      %p170 = scmp.lt.s32.totalorder %s11, 4
      // Predicated region
      $region13: #{_lambda_.13} parent=5 // pred_check
        %p171 = pneg %p170
      $region14: #{_lambda_.13} parent=5 // pred_check_branch
        %173 = sbr.rel (%p171) target = $region16
      $region15: #{_lambda_.13} parent=5 // pred_region
        // Predicated region
        $region17: #{_lambda_.13} parent=15 // pred_check
          %p174 = pneg %p45
        $region18: #{_lambda_.13} parent=15 // pred_check_branch
          %176 = sbr.rel (%p174) target = $region20
        $region19: #{_lambda_.13} parent=15 // pred_region
          %s177 = sand.u32 %s35, 1
          %s178 = sand.u32 %s35, 1
          %s179 = smul.addr %s178, 64
          %s180 = scalar_lea.vmem [#allocation3], %s179
          %s181 = smul.u32 4, %s18
          %s182 = smul.u32 4, %s19
          %s183 = smul.addr %s181, 16
          %s184 = sadd.s32 %s182, %s183
          %s185 = smul.addr %s184, 4
          %s186 = scalar_lea.vmem %s0, %s185
          // Predicated region
          $region21: #{_lambda_.13} parent=19 // pred_check
            _
          $region22: #{_lambda_.13} parent=19 // pred_check_branch
            %188 = sbr.rel (0) target = $region24
          $region23: #{_lambda_.13} parent=19 // pred_region
            // Predicated region
            $region25: #{_lambda_.13} parent=23 // pred_check
              _
            $region26: #{_lambda_.13} parent=23 // pred_check_branch
              %190 = sbr.rel (0) target = $region28
            $region27: #{_lambda_.13} parent=23 // pred_region
              loop: start=0, step=1, limit=1
              $region29: #{_lambda_.13} parent=27 // loop_pre_header
                _
              $region30: #{_lambda_.13} parent=27 // loop_header
                %s192 = sphi 0, %s196
                %p193 = scmp.ge.s32.totalorder %s192, 1
                %s197 = sphi %s186, %s186
                %s198 = sphi %s180, %s180
              $region31: #{_lambda_.13} parent=27 // loop_header_branch
                %195 = sbr.rel (%p193) target = $region35
              $region32: #{_lambda_.13} parent=27 // loop_body
                %v199 = vld [vmem:[%s197] sm:$0xff]
                %200 = vst [vmem:[%s198] sm:$0xff] %v199
                %v201 = vld [vmem:[%s197 + $0x8] sm:$0xff]
                %202 = vst [vmem:[%s198 + $0x8] sm:$0xff] %v201
                %v203 = vld [vmem:[%s197 + $0x40] sm:$0xff]
                %204 = vst [vmem:[%s198 + $0x10] sm:$0xff] %v203
                %v205 = vld [vmem:[%s197 + $0x48] sm:$0xff]
                %206 = vst [vmem:[%s198 + $0x18] sm:$0xff] %v205
                %v207 = vld [vmem:[%s197 + $0x80] sm:$0xff]
                %208 = vst [vmem:[%s198 + $0x20] sm:$0xff] %v207
                %v209 = vld [vmem:[%s197 + $0x88] sm:$0xff]
                %210 = vst [vmem:[%s198 + $0x28] sm:$0xff] %v209
                %v211 = vld [vmem:[%s197 + $0xc0] sm:$0xff]
                %212 = vst [vmem:[%s198 + $0x30] sm:$0xff] %v211
                %v213 = vld [vmem:[%s197 + $0xc8] sm:$0xff]
                %214 = vst [vmem:[%s198 + $0x38] sm:$0xff] %v213
              $region33: #{_lambda_.13} parent=27 // loop_footer
                %s196 = sadd.s32 1, %s192
              $region34: #{_lambda_.13} parent=27 // loop_footer_branch
                %191 = sbr.rel target = $region30
              $region35: #{_lambda_.13} parent=27 // loop_exit
                _
            $region28: #{_lambda_.13} parent=23 // pred_fallthru
              _
            // Predicated region
            $region36: #{_lambda_.13} parent=23 // pred_check
              _
            $region37: #{_lambda_.13} parent=23 // pred_check_branch
              %216 = sbr.rel target = $region39
            $region38: #{_lambda_.13} parent=23 // pred_region
              _
            $region39: #{_lambda_.13} parent=23 // pred_fallthru
              _
          $region24: #{_lambda_.13} parent=19 // pred_fallthru
            _
          %217 = vnop
        $region20: #{_lambda_.13} parent=15 // pred_fallthru
          _
        // Predicated region
        $region40: #{_lambda_.13} parent=15 // pred_check
          %p218 = pneg %p71
        $region41: #{_lambda_.13} parent=15 // pred_check_branch
          %220 = sbr.rel (%p218) target = $region43
        $region42: #{_lambda_.13} parent=15 // pred_region
          %s221 = smul.u32 64, %s19
          %p222 = scmp.lt.s32.totalorder %s221, 255
          %s223 = scalar_select %p222, %s221, 255
          %s224 = smul.addr %s223, 2
          %s225 = smul.addr %s224, 4
          %s226 = scalar_lea.vmem %s1, %s225
          %s227 = smul.u32 64, %s19
        $region43: #{_lambda_.13} parent=15 // pred_fallthru
          _
      $region16: #{_lambda_.13} parent=5 // pred_fallthru
        _
      %p228 = scmp.le.s32.totalorder 1, %s11
      %p229 = scmp.lt.s32.totalorder %s11, 5
      %p230 = pnand %p228, %p229
      %p231 = pneg %p230
      // Predicated region
      $region44: #{_lambda_.13} parent=5 // pred_check
        _
      $region45: #{_lambda_.13} parent=5 // pred_check_branch
        %233 = sbr.rel (%p230) target = $region47
      $region46: #{_lambda_.13} parent=5 // pred_region
        %s234 = ssub.s32 %s11, 1
        %s235 = sand.u32 %s38, 1
        %s236 = sand.u32 %s38, 1
        %s237 = smul.addr %s236, 64
        %s238 = scalar_lea.vmem [#allocation3], %s237
        // Predicated region
        $region48: #{_lambda_.13} parent=46 // pred_check
          %p239 = pneg %p51
        $region49: #{_lambda_.13} parent=46 // pred_check_branch
          %241 = sbr.rel (%p239) target = $region51
        $region50: #{_lambda_.13} parent=46 // pred_region
          _
        $region51: #{_lambda_.13} parent=46 // pred_fallthru
          _
        %s242 = sand.u32 %s38, 1
        %s243 = sand.u32 %s38, 1
        %s244 = smul.addr %s243, 64
        %s245 = scalar_lea.vmem [#allocation3], %s244
        %p246 = pneg %p51
        %p247 = pneg %p48
        %s248 = smul.u32 64, %s21
        %p249 = scmp.lt.s32.totalorder %s248, 255
        %s250 = scalar_select %p249, %s248, 255
        %s251 = smul.addr %s250, 2
        %s252 = smul.addr %s251, 4
        %s253 = scalar_lea.vmem %s1, %s252
        %p254 = pneg %p77
        %p255 = pneg %p74
        %p256 = pneg %p103
        %p257 = pneg %p100
        %s258 = smul.u32 4, %s20
        %p259 = scmp.lt.s32.totalorder %s258, 3
        %s260 = scalar_select %p259, %s258, 3
        %s261 = smul.addr %s260, 2
        %s262 = smul.addr %s261, 4
        %s263 = scalar_lea.vmem %s2, %s262
        %p264 = pneg %p129
        %p265 = pneg %p126
        %p266 = scmp.lt.s32.totalorder %s20, 0
        %s267 = scalar_select %p266, %s20, 0
        %s268 = smul.addr %s267, 2
        %s269 = scalar_lea.vmem %s3, %s268
        %p270 = pneg %p155
        %p271 = pneg %p152
        %p272 = scmp.lt.s32.totalorder %s20, 0
        %s273 = scalar_select %p272, %s20, 0
        %s274 = smul.addr %s273, 2
        %s275 = scalar_lea.vmem %s4, %s274
        %s276 = smul.u32 4, %s20
        %s277 = smul.u32 4, %s21
        %s278 = smul.u32 64, %s21
        %p279 = scmp.lt.s32.totalorder %s278, 255
        %s280 = scalar_select %p279, %s278, 255
        %s281 = smul.addr %s280, 2
        %s282 = smul.addr %s281, 4
        %s283 = scalar_lea.vmem %s1, %s282
        %s284 = smul.u32 64, %s21
        %s285 = smul.u32 4, %s20
        %p286 = scmp.lt.s32.totalorder %s285, 3
        %s287 = scalar_select %p286, %s285, 3
        %s288 = smul.addr %s287, 2
        %s289 = smul.addr %s288, 4
        %s290 = scalar_lea.vmem %s2, %s289
        %s291 = smul.u32 4, %s20
        %p292 = scmp.lt.s32.totalorder %s20, 0
        %s293 = scalar_select %p292, %s20, 0
        %s294 = smul.addr %s293, 2
        %s295 = scalar_lea.vmem %s3, %s294
        %p296 = scmp.lt.s32.totalorder %s20, 0
        %s297 = scalar_select %p296, %s20, 0
        %s298 = smul.addr %s297, 2
        %s299 = scalar_lea.vmem %s4, %s298
        %p300 = scmp.eq.s32.totalorder %s21, 0
        // Predicated region
        $region52: #{_lambda_.13} parent=46 // pred_check
          %p301 = pneg %p300
        $region53: #{_lambda_.13} parent=46 // pred_check_branch
          %303 = sbr.rel (%p301) target = $region55
        $region54: #{_lambda_.13} parent=46 // pred_region
          %304 = vst [vmem:[#allocation2] sm:$0xff] 0.0
          %305 = vst [vmem:[#allocation2 + $0x8] sm:$0xff] 0.0
          %306 = vst [vmem:[#allocation2 + $0x10] sm:$0xff] 0.0
          %307 = vst [vmem:[#allocation2 + $0x18] sm:$0xff] 0.0
          %308 = vst [vmem:[#allocation2 + $0x20] sm:$0xff] 0.0
          %309 = vst [vmem:[#allocation2 + $0x28] sm:$0xff] 0.0
          %310 = vst [vmem:[#allocation2 + $0x30] sm:$0xff] 0.0
          %311 = vst [vmem:[#allocation2 + $0x38] sm:$0xff] 0.0
        $region55: #{_lambda_.13} parent=46 // pred_fallthru
          _
        %v312 = vld [vmem:[#allocation2] sm:$0xff]
        %v313 = vld [vmem:[#allocation2 + $0x8] sm:$0xff]
        %v314 = vld [vmem:[#allocation2 + $0x10] sm:$0xff]
        %v315 = vld [vmem:[#allocation2 + $0x18] sm:$0xff]
        %v316 = vld [vmem:[#allocation2 + $0x20] sm:$0xff]
        %v317 = vld [vmem:[#allocation2 + $0x28] sm:$0xff]
        %v318 = vld [vmem:[#allocation2 + $0x30] sm:$0xff]
        %v319 = vld [vmem:[#allocation2 + $0x38] sm:$0xff]
        %v320 = vld [vmem:[%s238] sm:$0xff]
        %v321 = vld [vmem:[%s238 + $0x8] sm:$0xff]
        %v322 = vld [vmem:[%s238 + $0x10] sm:$0xff]
        %v323 = vld [vmem:[%s238 + $0x18] sm:$0xff]
        %v324 = vld [vmem:[%s238 + $0x20] sm:$0xff]
        %v325 = vld [vmem:[%s238 + $0x28] sm:$0xff]
        %v326 = vld [vmem:[%s238 + $0x30] sm:$0xff]
        %v327 = vld [vmem:[%s238 + $0x38] sm:$0xff]
        %v328 = vld [vmem:[%s283] sm:$0xff]
        %v329 = vld [vmem:[%s283 + $0x8] sm:$0xff]
        %v330 = vld [vmem:[%s283 + $0x10] sm:$0xff]
        %v331 = vld [vmem:[%s283 + $0x18] sm:$0xff]
        %v332 = vld [vmem:[%s283 + $0x20] sm:$0xff]
        %v333 = vld [vmem:[%s283 + $0x28] sm:$0xff]
        %v334 = vld [vmem:[%s283 + $0x30] sm:$0xff]
        %v335 = vld [vmem:[%s283 + $0x38] sm:$0xff]
        %v336 = vld [vmem:[%s283 + $0x40] sm:$0xff]
        %v337 = vld [vmem:[%s283 + $0x48] sm:$0xff]
        %v338 = vld [vmem:[%s283 + $0x50] sm:$0xff]
        %v339 = vld [vmem:[%s283 + $0x58] sm:$0xff]
        %v340 = vld [vmem:[%s283 + $0x60] sm:$0xff]
        %v341 = vld [vmem:[%s283 + $0x68] sm:$0xff]
        %v342 = vld [vmem:[%s283 + $0x70] sm:$0xff]
        %v343 = vld [vmem:[%s283 + $0x78] sm:$0xff]
        %v344 = vld [vmem:[%s283 + $0x80] sm:$0xff]
        %v345 = vld [vmem:[%s283 + $0x88] sm:$0xff]
        %v346 = vld [vmem:[%s283 + $0x90] sm:$0xff]
        %v347 = vld [vmem:[%s283 + $0x98] sm:$0xff]
        %v348 = vld [vmem:[%s283 + $0xa0] sm:$0xff]
        %v349 = vld [vmem:[%s283 + $0xa8] sm:$0xff]
        %v350 = vld [vmem:[%s283 + $0xb0] sm:$0xff]
        %v351 = vld [vmem:[%s283 + $0xb8] sm:$0xff]
        %v352 = vld [vmem:[%s283 + $0xc0] sm:$0xff]
        %v353 = vld [vmem:[%s283 + $0xc8] sm:$0xff]
        %v354 = vld [vmem:[%s283 + $0xd0] sm:$0xff]
        %v355 = vld [vmem:[%s283 + $0xd8] sm:$0xff]
        %v356 = vld [vmem:[%s283 + $0xe0] sm:$0xff]
        %v357 = vld [vmem:[%s283 + $0xe8] sm:$0xff]
        %v358 = vld [vmem:[%s283 + $0xf0] sm:$0xff]
        %v359 = vld [vmem:[%s283 + $0xf8] sm:$0xff]
        %v360 = vld [vmem:[%s283 + $0x100] sm:$0xff]
        %v361 = vld [vmem:[%s283 + $0x108] sm:$0xff]
        %v362 = vld [vmem:[%s283 + $0x110] sm:$0xff]
        %v363 = vld [vmem:[%s283 + $0x118] sm:$0xff]
        %v364 = vld [vmem:[%s283 + $0x120] sm:$0xff]
        %v365 = vld [vmem:[%s283 + $0x128] sm:$0xff]
        %v366 = vld [vmem:[%s283 + $0x130] sm:$0xff]
        %v367 = vld [vmem:[%s283 + $0x138] sm:$0xff]
        %v368 = vld [vmem:[%s283 + $0x140] sm:$0xff]
        %v369 = vld [vmem:[%s283 + $0x148] sm:$0xff]
        %v370 = vld [vmem:[%s283 + $0x150] sm:$0xff]
        %v371 = vld [vmem:[%s283 + $0x158] sm:$0xff]
        %v372 = vld [vmem:[%s283 + $0x160] sm:$0xff]
        %v373 = vld [vmem:[%s283 + $0x168] sm:$0xff]
        %v374 = vld [vmem:[%s283 + $0x170] sm:$0xff]
        %v375 = vld [vmem:[%s283 + $0x178] sm:$0xff]
        %v376 = vld [vmem:[%s283 + $0x180] sm:$0xff]
        %v377 = vld [vmem:[%s283 + $0x188] sm:$0xff]
        %v378 = vld [vmem:[%s283 + $0x190] sm:$0xff]
        %v379 = vld [vmem:[%s283 + $0x198] sm:$0xff]
        %v380 = vld [vmem:[%s283 + $0x1a0] sm:$0xff]
        %v381 = vld [vmem:[%s283 + $0x1a8] sm:$0xff]
        %v382 = vld [vmem:[%s283 + $0x1b0] sm:$0xff]
        %v383 = vld [vmem:[%s283 + $0x1b8] sm:$0xff]
        %v384 = vld [vmem:[%s283 + $0x1c0] sm:$0xff]
        %v385 = vld [vmem:[%s283 + $0x1c8] sm:$0xff]
        %v386 = vld [vmem:[%s283 + $0x1d0] sm:$0xff]
        %v387 = vld [vmem:[%s283 + $0x1d8] sm:$0xff]
        %v388 = vld [vmem:[%s283 + $0x1e0] sm:$0xff]
        %v389 = vld [vmem:[%s283 + $0x1e8] sm:$0xff]
        %v390 = vld [vmem:[%s283 + $0x1f0] sm:$0xff]
        %v391 = vld [vmem:[%s283 + $0x1f8] sm:$0xff]
        %v400 = vunpack.c.l.b16 %v320
        %v401 = vunpack.c.h.b16 %v320
        %v402 = vunpack.c.l.b16 %v321
        %v403 = vunpack.c.h.b16 %v321
        %v404 = vunpack.c.l.b16 %v322
        %v405 = vunpack.c.h.b16 %v322
        %v406 = vunpack.c.l.b16 %v323
        %v407 = vunpack.c.h.b16 %v323
        %v408 = vunpack.c.l.b16 %v324
        %v409 = vunpack.c.h.b16 %v324
        %v410 = vunpack.c.l.b16 %v325
        %v411 = vunpack.c.h.b16 %v325
        %v412 = vunpack.c.l.b16 %v326
        %v413 = vunpack.c.h.b16 %v326
        %v414 = vunpack.c.l.b16 %v327
        %v415 = vunpack.c.h.b16 %v327
        %v416 = vpack.c.b16 %v404, %v400
        %v417 = vpack.c.b16 %v405, %v401
        %v418 = vpack.c.b16 %v406, %v402
        %v419 = vpack.c.b16 %v407, %v403
        %v420 = vpack.c.b16 %v412, %v408
        %v421 = vpack.c.b16 %v413, %v409
        %v422 = vpack.c.b16 %v414, %v410
        %v423 = vpack.c.b16 %v415, %v411
        %v496 = vunpack.c.l.b16 %v328
        %v497 = vunpack.c.h.b16 %v328
        %v498 = vunpack.c.l.b16 %v329
        %v499 = vunpack.c.h.b16 %v329
        %v500 = vunpack.c.l.b16 %v330
        %v501 = vunpack.c.h.b16 %v330
        %v502 = vunpack.c.l.b16 %v331
        %v503 = vunpack.c.h.b16 %v331
        %v504 = vunpack.c.l.b16 %v332
        %v505 = vunpack.c.h.b16 %v332
        %v506 = vunpack.c.l.b16 %v333
        %v507 = vunpack.c.h.b16 %v333
        %v508 = vunpack.c.l.b16 %v334
        %v509 = vunpack.c.h.b16 %v334
        %v510 = vunpack.c.l.b16 %v335
        %v511 = vunpack.c.h.b16 %v335
        %v512 = vunpack.c.l.b16 %v336
        %v513 = vunpack.c.h.b16 %v336
        %v514 = vunpack.c.l.b16 %v337
        %v515 = vunpack.c.h.b16 %v337
        %v516 = vunpack.c.l.b16 %v338
        %v517 = vunpack.c.h.b16 %v338
        %v518 = vunpack.c.l.b16 %v339
        %v519 = vunpack.c.h.b16 %v339
        %v520 = vunpack.c.l.b16 %v340
        %v521 = vunpack.c.h.b16 %v340
        %v522 = vunpack.c.l.b16 %v341
        %v523 = vunpack.c.h.b16 %v341
        %v524 = vunpack.c.l.b16 %v342
        %v525 = vunpack.c.h.b16 %v342
        %v526 = vunpack.c.l.b16 %v343
        %v527 = vunpack.c.h.b16 %v343
        %v528 = vunpack.c.l.b16 %v344
        %v529 = vunpack.c.h.b16 %v344
        %v530 = vunpack.c.l.b16 %v345
        %v531 = vunpack.c.h.b16 %v345
        %v532 = vunpack.c.l.b16 %v346
        %v533 = vunpack.c.h.b16 %v346
        %v534 = vunpack.c.l.b16 %v347
        %v535 = vunpack.c.h.b16 %v347
        %v536 = vunpack.c.l.b16 %v348
        %v537 = vunpack.c.h.b16 %v348
        %v538 = vunpack.c.l.b16 %v349
        %v539 = vunpack.c.h.b16 %v349
        %v540 = vunpack.c.l.b16 %v350
        %v541 = vunpack.c.h.b16 %v350
        %v542 = vunpack.c.l.b16 %v351
        %v543 = vunpack.c.h.b16 %v351
        %v544 = vunpack.c.l.b16 %v352
        %v545 = vunpack.c.h.b16 %v352
        %v546 = vunpack.c.l.b16 %v353
        %v547 = vunpack.c.h.b16 %v353
        %v548 = vunpack.c.l.b16 %v354
        %v549 = vunpack.c.h.b16 %v354
        %v550 = vunpack.c.l.b16 %v355
        %v551 = vunpack.c.h.b16 %v355
        %v552 = vunpack.c.l.b16 %v356
        %v553 = vunpack.c.h.b16 %v356
        %v554 = vunpack.c.l.b16 %v357
        %v555 = vunpack.c.h.b16 %v357
        %v556 = vunpack.c.l.b16 %v358
        %v557 = vunpack.c.h.b16 %v358
        %v558 = vunpack.c.l.b16 %v359
        %v559 = vunpack.c.h.b16 %v359
        %v560 = vunpack.c.l.b16 %v360
        %v561 = vunpack.c.h.b16 %v360
        %v562 = vunpack.c.l.b16 %v361
        %v563 = vunpack.c.h.b16 %v361
        %v564 = vunpack.c.l.b16 %v362
        %v565 = vunpack.c.h.b16 %v362
        %v566 = vunpack.c.l.b16 %v363
        %v567 = vunpack.c.h.b16 %v363
        %v568 = vunpack.c.l.b16 %v364
        %v569 = vunpack.c.h.b16 %v364
        %v570 = vunpack.c.l.b16 %v365
        %v571 = vunpack.c.h.b16 %v365
        %v572 = vunpack.c.l.b16 %v366
        %v573 = vunpack.c.h.b16 %v366
        %v574 = vunpack.c.l.b16 %v367
        %v575 = vunpack.c.h.b16 %v367
        %v576 = vunpack.c.l.b16 %v368
        %v577 = vunpack.c.h.b16 %v368
        %v578 = vunpack.c.l.b16 %v369
        %v579 = vunpack.c.h.b16 %v369
        %v580 = vunpack.c.l.b16 %v370
        %v581 = vunpack.c.h.b16 %v370
        %v582 = vunpack.c.l.b16 %v371
        %v583 = vunpack.c.h.b16 %v371
        %v584 = vunpack.c.l.b16 %v372
        %v585 = vunpack.c.h.b16 %v372
        %v586 = vunpack.c.l.b16 %v373
        %v587 = vunpack.c.h.b16 %v373
        %v588 = vunpack.c.l.b16 %v374
        %v589 = vunpack.c.h.b16 %v374
        %v590 = vunpack.c.l.b16 %v375
        %v591 = vunpack.c.h.b16 %v375
        %v592 = vunpack.c.l.b16 %v376
        %v593 = vunpack.c.h.b16 %v376
        %v594 = vunpack.c.l.b16 %v377
        %v595 = vunpack.c.h.b16 %v377
        %v596 = vunpack.c.l.b16 %v378
        %v597 = vunpack.c.h.b16 %v378
        %v598 = vunpack.c.l.b16 %v379
        %v599 = vunpack.c.h.b16 %v379
        %v600 = vunpack.c.l.b16 %v380
        %v601 = vunpack.c.h.b16 %v380
        %v602 = vunpack.c.l.b16 %v381
        %v603 = vunpack.c.h.b16 %v381
        %v604 = vunpack.c.l.b16 %v382
        %v605 = vunpack.c.h.b16 %v382
        %v606 = vunpack.c.l.b16 %v383
        %v607 = vunpack.c.h.b16 %v383
        %v608 = vunpack.c.l.b16 %v384
        %v609 = vunpack.c.h.b16 %v384
        %v610 = vunpack.c.l.b16 %v385
        %v611 = vunpack.c.h.b16 %v385
        %v612 = vunpack.c.l.b16 %v386
        %v613 = vunpack.c.h.b16 %v386
        %v614 = vunpack.c.l.b16 %v387
        %v615 = vunpack.c.h.b16 %v387
        %v616 = vunpack.c.l.b16 %v388
        %v617 = vunpack.c.h.b16 %v388
        %v618 = vunpack.c.l.b16 %v389
        %v619 = vunpack.c.h.b16 %v389
        %v620 = vunpack.c.l.b16 %v390
        %v621 = vunpack.c.h.b16 %v390
        %v622 = vunpack.c.l.b16 %v391
        %v623 = vunpack.c.h.b16 %v391
        %v624 = vpack.c.b16 %v498, %v496
        %v625 = vpack.c.b16 %v499, %v497
        %v626 = vpack.c.b16 %v502, %v500
        %v627 = vpack.c.b16 %v503, %v501
        %v628 = vpack.c.b16 %v506, %v504
        %v629 = vpack.c.b16 %v507, %v505
        %v630 = vpack.c.b16 %v510, %v508
        %v631 = vpack.c.b16 %v511, %v509
        %v632 = vpack.c.b16 %v514, %v512
        %v633 = vpack.c.b16 %v515, %v513
        %v634 = vpack.c.b16 %v518, %v516
        %v635 = vpack.c.b16 %v519, %v517
        %v636 = vpack.c.b16 %v522, %v520
        %v637 = vpack.c.b16 %v523, %v521
        %v638 = vpack.c.b16 %v526, %v524
        %v639 = vpack.c.b16 %v527, %v525
        %v640 = vpack.c.b16 %v530, %v528
        %v641 = vpack.c.b16 %v531, %v529
        %v642 = vpack.c.b16 %v534, %v532
        %v643 = vpack.c.b16 %v535, %v533
        %v644 = vpack.c.b16 %v538, %v536
        %v645 = vpack.c.b16 %v539, %v537
        %v646 = vpack.c.b16 %v542, %v540
        %v647 = vpack.c.b16 %v543, %v541
        %v648 = vpack.c.b16 %v546, %v544
        %v649 = vpack.c.b16 %v547, %v545
        %v650 = vpack.c.b16 %v550, %v548
        %v651 = vpack.c.b16 %v551, %v549
        %v652 = vpack.c.b16 %v554, %v552
        %v653 = vpack.c.b16 %v555, %v553
        %v654 = vpack.c.b16 %v558, %v556
        %v655 = vpack.c.b16 %v559, %v557
        %v656 = vpack.c.b16 %v562, %v560
        %v657 = vpack.c.b16 %v563, %v561
        %v658 = vpack.c.b16 %v566, %v564
        %v659 = vpack.c.b16 %v567, %v565
        %v660 = vpack.c.b16 %v570, %v568
        %v661 = vpack.c.b16 %v571, %v569
        %v662 = vpack.c.b16 %v574, %v572
        %v663 = vpack.c.b16 %v575, %v573
        %v664 = vpack.c.b16 %v578, %v576
        %v665 = vpack.c.b16 %v579, %v577
        %v666 = vpack.c.b16 %v582, %v580
        %v667 = vpack.c.b16 %v583, %v581
        %v668 = vpack.c.b16 %v586, %v584
        %v669 = vpack.c.b16 %v587, %v585
        %v670 = vpack.c.b16 %v590, %v588
        %v671 = vpack.c.b16 %v591, %v589
        %v672 = vpack.c.b16 %v594, %v592
        %v673 = vpack.c.b16 %v595, %v593
        %v674 = vpack.c.b16 %v598, %v596
        %v675 = vpack.c.b16 %v599, %v597
        %v676 = vpack.c.b16 %v602, %v600
        %v677 = vpack.c.b16 %v603, %v601
        %v678 = vpack.c.b16 %v606, %v604
        %v679 = vpack.c.b16 %v607, %v605
        %v680 = vpack.c.b16 %v610, %v608
        %v681 = vpack.c.b16 %v611, %v609
        %v682 = vpack.c.b16 %v614, %v612
        %v683 = vpack.c.b16 %v615, %v613
        %v684 = vpack.c.b16 %v618, %v616
        %v685 = vpack.c.b16 %v619, %v617
        %v686 = vpack.c.b16 %v622, %v620
        %v687 = vpack.c.b16 %v623, %v621
        %752 = vmatprep.subr.bf16.mxu0 %v639
        %753 = vmatpush1.bf16.msra.mxu0 %v638
        %754 = vmatprep.subr.bf16.mxu0 %v637
        %755 = vmatpush1.bf16.msra.mxu0 %v636
        %756 = vmatprep.subr.bf16.mxu0 %v635
        %757 = vmatpush1.bf16.msra.mxu0 %v634
        %758 = vmatprep.subr.bf16.mxu0 %v633
        %759 = vmatpush1.bf16.msra.mxu0 %v632
        %760 = vmatprep.subr.bf16.mxu0 %v631
        %761 = vmatpush1.bf16.msra.mxu0 %v630
        %762 = vmatprep.subr.bf16.mxu0 %v629
        %763 = vmatpush1.bf16.msra.mxu0 %v628
        %764 = vmatprep.subr.bf16.mxu0 %v627
        %765 = vmatpush1.bf16.msra.mxu0 %v626
        %766 = vmatprep.subr.bf16.mxu0 %v625
        %767 = vmatpush1.bf16.msra.mxu0 %v624
        %768 = vmatprep.subr.bf16.mxu0 %v655
        %769 = vmatpush2.bf16.msra.mxu0 %v654
        %770 = vmatprep.subr.bf16.mxu0 %v653
        %771 = vmatpush2.bf16.msra.mxu0 %v652
        %772 = vmatprep.subr.bf16.mxu0 %v651
        %773 = vmatpush2.bf16.msra.mxu0 %v650
        %774 = vmatprep.subr.bf16.mxu0 %v649
        %775 = vmatpush2.bf16.msra.mxu0 %v648
        %776 = vmatprep.subr.bf16.mxu0 %v647
        %777 = vmatpush2.bf16.msra.mxu0 %v646
        %778 = vmatprep.subr.bf16.mxu0 %v645
        %779 = vmatpush2.bf16.msra.mxu0 %v644
        %780 = vmatprep.subr.bf16.mxu0 %v643
        %781 = vmatpush2.bf16.msra.mxu0 %v642
        %782 = vmatprep.subr.bf16.mxu0 %v641
        %783 = vmatpush2.bf16.msra.mxu0 %v640
        %784 = vmatprep.mubr.bf16.mxu0 %v417
        %785 = vmatmul.mubr.bf16.gmra.mxu0 %v416
        %v786 = vpop.f32.mrf.mxu0
        %v787 = vadd.f32 0.0, %v786
        %v788 = vpop.f32.mrf.mxu0
        %v789 = vadd.f32 0.0, %v788
        %v790 = vpop.f32.mrf.mxu0
        %v791 = vadd.f32 0.0, %v790
        %v792 = vpop.f32.mrf.mxu0
        %v793 = vadd.f32 0.0, %v792
        %794 = vmatprep.mubr.bf16.mxu0 %v421
        %795 = vmatmul.mubr.bf16.gmra.mxu0 %v420
        %v796 = vpop.f32.mrf.mxu0
        %v797 = vadd.f32 0.0, %v796
        %v798 = vpop.f32.mrf.mxu0
        %v799 = vadd.f32 0.0, %v798
        %v800 = vpop.f32.mrf.mxu0
        %v801 = vadd.f32 0.0, %v800
        %v802 = vpop.f32.mrf.mxu0
        %v803 = vadd.f32 0.0, %v802
        %804 = vdwg.mxu0
        %805 = vmatprep.subr.bf16.mxu0 %v671
        %806 = vmatpush1.bf16.msra.mxu0 %v670
        %807 = vmatprep.subr.bf16.mxu0 %v669
        %808 = vmatpush1.bf16.msra.mxu0 %v668
        %809 = vmatprep.subr.bf16.mxu0 %v667
        %810 = vmatpush1.bf16.msra.mxu0 %v666
        %811 = vmatprep.subr.bf16.mxu0 %v665
        %812 = vmatpush1.bf16.msra.mxu0 %v664
        %813 = vmatprep.subr.bf16.mxu0 %v663
        %814 = vmatpush1.bf16.msra.mxu0 %v662
        %815 = vmatprep.subr.bf16.mxu0 %v661
        %816 = vmatpush1.bf16.msra.mxu0 %v660
        %817 = vmatprep.subr.bf16.mxu0 %v659
        %818 = vmatpush1.bf16.msra.mxu0 %v658
        %819 = vmatprep.subr.bf16.mxu0 %v657
        %820 = vmatpush1.bf16.msra.mxu0 %v656
        %821 = vmatprep.subr.bf16.mxu0 %v687
        %822 = vmatpush2.bf16.msra.mxu0 %v686
        %823 = vmatprep.subr.bf16.mxu0 %v685
        %824 = vmatpush2.bf16.msra.mxu0 %v684
        %825 = vmatprep.subr.bf16.mxu0 %v683
        %826 = vmatpush2.bf16.msra.mxu0 %v682
        %827 = vmatprep.subr.bf16.mxu0 %v681
        %828 = vmatpush2.bf16.msra.mxu0 %v680
        %829 = vmatprep.subr.bf16.mxu0 %v679
        %830 = vmatpush2.bf16.msra.mxu0 %v678
        %831 = vmatprep.subr.bf16.mxu0 %v677
        %832 = vmatpush2.bf16.msra.mxu0 %v676
        %833 = vmatprep.subr.bf16.mxu0 %v675
        %834 = vmatpush2.bf16.msra.mxu0 %v674
        %835 = vmatprep.subr.bf16.mxu0 %v673
        %836 = vmatpush2.bf16.msra.mxu0 %v672
        %837 = vmatprep.mubr.bf16.mxu0 %v419
        %838 = vmatmul.mubr.bf16.gmra.mxu0 %v418
        %v839 = vpop.f32.mrf.mxu0
        %v840 = vadd.f32 %v787, %v839
        %v841 = vpop.f32.mrf.mxu0
        %v842 = vadd.f32 %v789, %v841
        %v843 = vpop.f32.mrf.mxu0
        %v844 = vadd.f32 %v791, %v843
        %v845 = vpop.f32.mrf.mxu0
        %v846 = vadd.f32 %v793, %v845
        %847 = vmatprep.mubr.bf16.mxu0 %v423
        %848 = vmatmul.mubr.bf16.gmra.mxu0 %v422
        %v849 = vpop.f32.mrf.mxu0
        %v850 = vadd.f32 %v797, %v849
        %v851 = vpop.f32.mrf.mxu0
        %v852 = vadd.f32 %v799, %v851
        %v853 = vpop.f32.mrf.mxu0
        %v854 = vadd.f32 %v801, %v853
        %v855 = vpop.f32.mrf.mxu0
        %v856 = vadd.f32 %v803, %v855
        %857 = vdwg.mxu0
        %v858 = vadd.f32 %v312, %v840
        %v859 = vadd.f32 %v313, %v842
        %v860 = vadd.f32 %v314, %v844
        %v861 = vadd.f32 %v315, %v846
        %v862 = vadd.f32 %v316, %v850
        %v863 = vadd.f32 %v317, %v852
        %v864 = vadd.f32 %v318, %v854
        %v865 = vadd.f32 %v319, %v856
        %866 = vst [vmem:[#allocation2] sm:$0xff] %v858
        %867 = vst [vmem:[#allocation2 + $0x8] sm:$0xff] %v859
        %868 = vst [vmem:[#allocation2 + $0x10] sm:$0xff] %v860
        %869 = vst [vmem:[#allocation2 + $0x18] sm:$0xff] %v861
        %870 = vst [vmem:[#allocation2 + $0x20] sm:$0xff] %v862
        %871 = vst [vmem:[#allocation2 + $0x28] sm:$0xff] %v863
        %872 = vst [vmem:[#allocation2 + $0x30] sm:$0xff] %v864
        %873 = vst [vmem:[#allocation2 + $0x38] sm:$0xff] %v865
        %p874 = scmp.eq.s32.totalorder %s21, 3
        // Predicated region
        $region56: #{_lambda_.13} parent=46 // pred_check
          %p875 = pneg %p874
        $region57: #{_lambda_.13} parent=46 // pred_check_branch
          %877 = sbr.rel (%p875) target = $region59
        $region58: #{_lambda_.13} parent=46 // pred_region
          %v878 = vld [vmem:[#allocation2] sm:$0xff]
          %v879 = vld [vmem:[#allocation2 + $0x8] sm:$0xff]
          %v880 = vld [vmem:[#allocation2 + $0x10] sm:$0xff]
          %v881 = vld [vmem:[#allocation2 + $0x18] sm:$0xff]
          %v882 = vld [vmem:[#allocation2 + $0x20] sm:$0xff]
          %v883 = vld [vmem:[#allocation2 + $0x28] sm:$0xff]
          %v884 = vld [vmem:[#allocation2 + $0x30] sm:$0xff]
          %v885 = vld [vmem:[#allocation2 + $0x38] sm:$0xff]
          %v886 = vpack.c.bf16 %v880, %v878
          %v887 = vpack.c.bf16 %v881, %v879
          %v888 = vpack.c.bf16 %v884, %v882
          %v889 = vpack.c.bf16 %v885, %v883
          %v894 = vunpack.c.l.b16 %v886
          %v895 = vunpack.c.l.b16 %v887
          %v896 = vunpack.c.h.b16 %v886
          %v897 = vunpack.c.h.b16 %v887
          %v898 = vunpack.c.l.b16 %v888
          %v899 = vunpack.c.l.b16 %v889
          %v900 = vunpack.c.h.b16 %v888
          %v901 = vunpack.c.h.b16 %v889
          %v902 = vpack.c.b16 %v895, %v894
          %v903 = vpack.c.b16 %v897, %v896
          %v904 = vpack.c.b16 %v899, %v898
          %v905 = vpack.c.b16 %v901, %v900
          %910 = vst [vmem:[%s290] sm:$0xff] %v902
          %911 = vst [vmem:[%s290 + $0x8] sm:$0xff] %v903
          %912 = vst [vmem:[%s290 + $0x10] sm:$0xff] %v904
          %913 = vst [vmem:[%s290 + $0x18] sm:$0xff] %v905
          %v914 = vadd.f32 %v878, %v880
          %v915 = vadd.f32 %v914, %v882
          %v916 = vadd.f32 %v915, %v884
          %v917 = vrot.slane %v916, 4
          %v918 = vadd.f32 %v916, %v917
          %v919 = vrot.slane %v918, 2
          %v920 = vadd.f32 %v918, %v919
          %v921 = vrot.slane %v920, 1
          %v922 = vadd.f32 %v920, %v921
          %v923 = vadd.f32 %v879, %v881
          %v924 = vadd.f32 %v923, %v883
          %v925 = vadd.f32 %v924, %v885
          %v926 = vrot.slane %v925, 4
          %v927 = vadd.f32 %v925, %v926
          %v928 = vrot.slane %v927, 2
          %v929 = vadd.f32 %v927, %v928
          %v930 = vrot.slane %v929, 1
          %v931 = vadd.f32 %v929, %v930
          %v934 = vcombine.low %v922, %v931
          %v936 = vunpack.c.l.s4 1966171168
          %v937 = vunpack.c.0.s8 %v936
          %v938 = vlaneseq
          %v939 = vshrl.u32 %v938, 7
          %v940 = vsub.s32 %v937, %v939
          %v941 = vrot.slane %v934, %v940
          %v943 = vunpack.c.l.s4 1966171168
          %v944 = vunpack.c.0.s8 %v943
          %v945 = vlaneseq
          %v946 = vshrl.u32 %v945, 7
          %v947 = vsub.s32 %v944, %v946
          %v948 = vrot.slane %v941, %v947
          %v950 = vlaneseq
          %vm951 = vcmp.ge.s32.totalorder %v950, 0
          %vm952 = vcmp.lt.s32.totalorder %v950, 256
          %vm953 = vmand %vm951, %vm952
          %954 = vst.msk [vmem:[%s295] sm:$0x3] %vm953, %v948
          %v955 = vmul.f32 %v878, %v878
          %v956 = vmul.f32 %v879, %v879
          %v957 = vmul.f32 %v880, %v880
          %v958 = vmul.f32 %v881, %v881
          %v959 = vmul.f32 %v882, %v882
          %v960 = vmul.f32 %v883, %v883
          %v961 = vmul.f32 %v884, %v884
          %v962 = vmul.f32 %v885, %v885
          %v963 = vadd.f32 %v955, %v957
          %v964 = vadd.f32 %v963, %v959
          %v965 = vadd.f32 %v964, %v961
          %v966 = vrot.slane %v965, 4
          %v967 = vadd.f32 %v965, %v966
          %v968 = vrot.slane %v967, 2
          %v969 = vadd.f32 %v967, %v968
          %v970 = vrot.slane %v969, 1
          %v971 = vadd.f32 %v969, %v970
          %v972 = vadd.f32 %v956, %v958
          %v973 = vadd.f32 %v972, %v960
          %v974 = vadd.f32 %v973, %v962
          %v975 = vrot.slane %v974, 4
          %v976 = vadd.f32 %v974, %v975
          %v977 = vrot.slane %v976, 2
          %v978 = vadd.f32 %v976, %v977
          %v979 = vrot.slane %v978, 1
          %v980 = vadd.f32 %v978, %v979
          %v983 = vcombine.low %v971, %v980
          %v985 = vunpack.c.l.s4 1966171168
          %v986 = vunpack.c.0.s8 %v985
          %v987 = vlaneseq
          %v988 = vshrl.u32 %v987, 7
          %v989 = vsub.s32 %v986, %v988
          %v990 = vrot.slane %v983, %v989
          %v992 = vunpack.c.l.s4 1966171168
          %v993 = vunpack.c.0.s8 %v992
          %v994 = vlaneseq
          %v995 = vshrl.u32 %v994, 7
          %v996 = vsub.s32 %v993, %v995
          %v997 = vrot.slane %v990, %v996
          %999 = vst.msk [vmem:[%s299] sm:$0x3] %vm953, %v997
        $region59: #{_lambda_.13} parent=46 // pred_fallthru
          _
        %s1000 = smul.u32 4, %s20
        %p1001 = scmp.lt.s32.totalorder %s1000, 3
        %s1002 = scalar_select %p1001, %s1000, 3
        %s1003 = smul.addr %s1002, 2
        %s1004 = smul.addr %s1003, 4
        %s1005 = scalar_lea.vmem %s2, %s1004
        %p1006 = scmp.lt.s32.totalorder %s20, 0
        %s1007 = scalar_select %p1006, %s20, 0
        %s1008 = smul.addr %s1007, 2
        %s1009 = scalar_lea.vmem %s3, %s1008
        %p1010 = scmp.lt.s32.totalorder %s20, 0
        %s1011 = scalar_select %p1010, %s20, 0
        %s1012 = smul.addr %s1011, 2
        %s1013 = scalar_lea.vmem %s4, %s1012
        // Predicated region
        $region60: #{_lambda_.13} parent=46 // pred_check
          %p1014 = pneg %p100
        $region61: #{_lambda_.13} parent=46 // pred_check_branch
          %1016 = sbr.rel (%p1014) target = $region63
        $region62: #{_lambda_.13} parent=46 // pred_region
          %s1017 = smul.u32 4, %s20
        $region63: #{_lambda_.13} parent=46 // pred_fallthru
          _
        // Predicated region
        $region64: #{_lambda_.13} parent=46 // pred_check
          %p1018 = pneg %p126
        $region65: #{_lambda_.13} parent=46 // pred_check_branch
          %1020 = sbr.rel (%p1018) target = $region67
        $region66: #{_lambda_.13} parent=46 // pred_region
          _
        $region67: #{_lambda_.13} parent=46 // pred_fallthru
          _
        // Predicated region
        $region68: #{_lambda_.13} parent=46 // pred_check
          %p1021 = pneg %p152
        $region69: #{_lambda_.13} parent=46 // pred_check_branch
          %1023 = sbr.rel (%p1021) target = $region71
        $region70: #{_lambda_.13} parent=46 // pred_region
          _
        $region71: #{_lambda_.13} parent=46 // pred_fallthru
          _
        // Predicated region
        $region72: #{_lambda_.13} parent=46 // pred_check
          %p1024 = pneg %p100
        $region73: #{_lambda_.13} parent=46 // pred_check_branch
          %1026 = sbr.rel (%p1024) target = $region75
        $region74: #{_lambda_.13} parent=46 // pred_region
          %s1027 = smul.u32 4, %s20
          %p1028 = scmp.lt.s32.totalorder %s1027, 3
          %s1029 = scalar_select %p1028, %s1027, 3
          %s1030 = smul.addr %s1029, 2
          %s1031 = smul.addr %s1030, 4
          %s1032 = scalar_lea.vmem %s2, %s1031
        $region75: #{_lambda_.13} parent=46 // pred_fallthru
          _
        // Predicated region
        $region76: #{_lambda_.13} parent=46 // pred_check
          %p1033 = pneg %p126
        $region77: #{_lambda_.13} parent=46 // pred_check_branch
          %1035 = sbr.rel (%p1033) target = $region79
        $region78: #{_lambda_.13} parent=46 // pred_region
          %p1036 = scmp.lt.s32.totalorder %s20, 0
          %s1037 = scalar_select %p1036, %s20, 0
          %s1038 = smul.addr %s1037, 2
          %s1039 = scalar_lea.vmem %s3, %s1038
        $region79: #{_lambda_.13} parent=46 // pred_fallthru
          _
        // Predicated region
        $region80: #{_lambda_.13} parent=46 // pred_check
          %p1040 = pneg %p152
        $region81: #{_lambda_.13} parent=46 // pred_check_branch
          %1042 = sbr.rel (%p1040) target = $region83
        $region82: #{_lambda_.13} parent=46 // pred_region
          %p1043 = scmp.lt.s32.totalorder %s20, 0
          %s1044 = scalar_select %p1043, %s20, 0
          %s1045 = smul.addr %s1044, 2
          %s1046 = scalar_lea.vmem %s4, %s1045
        $region83: #{_lambda_.13} parent=46 // pred_fallthru
          _
      $region47: #{_lambda_.13} parent=5 // pred_fallthru
        _
      %p1047 = scmp.le.s32.totalorder 2, %s11
      // Predicated region
      $region84: #{_lambda_.13} parent=5 // pred_check
        %p1048 = pneg %p1047
      $region85: #{_lambda_.13} parent=5 // pred_check_branch
        %1050 = sbr.rel (%p1048) target = $region87
      $region86: #{_lambda_.13} parent=5 // pred_region
        %s1051 = ssub.s32 %s11, 2
      $region87: #{_lambda_.13} parent=5 // pred_fallthru
        _
    $region6: #{_lambda_.13} parent=1 // loop_footer
      %s15 = sadd.s32 1, %s11
    $region7: #{_lambda_.13} parent=1 // loop_footer_branch
      %10 = sbr.rel target = $region3
    $region8: #{_lambda_.13} parent=1 // loop_exit
      _

// kernel: _lambda_.16
$region0: #{_lambda_.16}
  #allocation0 [shape = 'u32[]', space=smem, size = 0x4, offset = 0x4, fixed_abs, tag = 'smem constant byte address 0x4 - core index']
  #allocation1 [shape = 'u32[144,128]{1,0:T(1,128)}', space=vmem, size = 0x12000, scoped, tag = 'internal scratch']
  %s0 = inlined_call_operand.vmem [shape: bf16[18,512], index: 0, kind: input, shape index: {}]
  %s1 = inlined_call_operand.vmem [shape: f32[1,512], index: 1, kind: input, shape index: {}]
  %s2 = inlined_call_operand.vmem [shape: f32[1,512], index: 2, kind: input, shape index: {}]
  %s3 = inlined_call_operand.vmem [shape: bf16[18,512], index: 3, kind: output, shape index: {}]
  %s4 = sld [smem:[#allocation0]]
  $region22: #{_lambda_.16} parent=0
    _
  %s6 = ssub.s32 1, %s4
  %s7 = scalar_select 0, %s6, %s4
  // Predicated region
  $region2: #{_lambda_.16} parent=0 // pred_check
    _
  $region3: #{_lambda_.16} parent=0 // pred_check_branch
    %9 = sbr.rel (0) target = $region5
  $region4: #{_lambda_.16} parent=0 // pred_region
    _
  $region5: #{_lambda_.16} parent=0 // pred_fallthru
    _
  // Predicated region
  $region6: #{_lambda_.16} parent=0 // pred_check
    _
  $region7: #{_lambda_.16} parent=0 // pred_check_branch
    %11 = sbr.rel (0) target = $region9
  $region8: #{_lambda_.16} parent=0 // pred_region
    _
  $region9: #{_lambda_.16} parent=0 // pred_fallthru
    _
  // Predicated region
  $region10: #{_lambda_.16} parent=0 // pred_check
    _
  $region11: #{_lambda_.16} parent=0 // pred_check_branch
    %13 = sbr.rel (0) target = $region13
  $region12: #{_lambda_.16} parent=0 // pred_region
    _
  $region13: #{_lambda_.16} parent=0 // pred_fallthru
    _
  %v14 = vld [vmem:[%s0] sm:$0xff]
  %v15 = vld [vmem:[%s0 + $0x8] sm:$0xff]
  %v16 = vld [vmem:[%s0 + $0x10] sm:$0xff]
  %v17 = vld [vmem:[%s0 + $0x18] sm:$0xff]
  %v18 = vld [vmem:[%s0 + $0x20] sm:$0x11]
  %v19 = vld [vmem:[%s0 + $0x28] sm:$0x11]
  %v20 = vunpack.c.l.bf16 %v14
  %v21 = vunpack.c.h.bf16 %v14
  %v22 = vunpack.c.l.bf16 %v15
  %v23 = vunpack.c.h.bf16 %v15
  %v24 = vunpack.c.l.bf16 %v16
  %v25 = vunpack.c.h.bf16 %v16
  %v26 = vunpack.c.l.bf16 %v17
  %v27 = vunpack.c.h.bf16 %v17
  %v28 = vunpack.c.l.bf16 %v18
  %v29 = vunpack.c.h.bf16 %v18
  %v30 = vunpack.c.l.bf16 %v19
  %v31 = vunpack.c.h.bf16 %v19
  %v32 = vld [vmem:[%s1] sm:$0xf]
  %v34 = vlaneseq
  %v35 = vshrl.u32 %v34, 7
  %v36 = vsub.s32 0, %v35
  %v37 = vrot.slane %v32, %v36
  %v38 = vlaneseq
  %v39 = vshrl.u32 %v38, 7
  %v40 = vsub.s32 1, %v39
  %v41 = vrot.slane %v32, %v40
  %v42 = vlaneseq
  %v43 = vshrl.u32 %v42, 7
  %v44 = vsub.s32 2, %v43
  %v45 = vrot.slane %v32, %v44
  %v46 = vlaneseq
  %v47 = vshrl.u32 %v46, 7
  %v48 = vsub.s32 3, %v47
  %v49 = vrot.slane %v32, %v48
  %v54 = vmul.f32 %v20, %v37
  %v55 = vmul.f32 %v21, %v41
  %v56 = vmul.f32 %v22, %v45
  %v57 = vmul.f32 %v23, %v49
  %v58 = vmul.f32 %v24, %v37
  %v59 = vmul.f32 %v25, %v41
  %v60 = vmul.f32 %v26, %v45
  %v61 = vmul.f32 %v27, %v49
  %v62 = vmul.f32 %v28, %v37
  %v63 = vmul.f32 %v29, %v41
  %v64 = vmul.f32 %v30, %v45
  %v65 = vmul.f32 %v31, %v49
  %v66 = vld [vmem:[%s2] sm:$0xf]
  %v68 = vlaneseq
  %v69 = vshrl.u32 %v68, 7
  %v70 = vsub.s32 0, %v69
  %v71 = vrot.slane %v66, %v70
  %v72 = vlaneseq
  %v73 = vshrl.u32 %v72, 7
  %v74 = vsub.s32 1, %v73
  %v75 = vrot.slane %v66, %v74
  %v76 = vlaneseq
  %v77 = vshrl.u32 %v76, 7
  %v78 = vsub.s32 2, %v77
  %v79 = vrot.slane %v66, %v78
  %v80 = vlaneseq
  %v81 = vshrl.u32 %v80, 7
  %v82 = vsub.s32 3, %v81
  %v83 = vrot.slane %v66, %v82
  %v88 = vadd.f32 %v54, %v71
  %v89 = vadd.f32 %v55, %v75
  %v90 = vadd.f32 %v56, %v79
  %v91 = vadd.f32 %v57, %v83
  %v92 = vadd.f32 %v58, %v71
  %v93 = vadd.f32 %v59, %v75
  %v94 = vadd.f32 %v60, %v79
  %v95 = vadd.f32 %v61, %v83
  %v96 = vadd.f32 %v62, %v71
  %v97 = vadd.f32 %v63, %v75
  %v98 = vadd.f32 %v64, %v79
  %v99 = vadd.f32 %v65, %v83
  %vm100 = vcmp.ge.f32.partialorder %v88, 0.0
  %vm101 = vcmp.ge.f32.partialorder %v89, 0.0
  %vm102 = vcmp.ge.f32.partialorder %v90, 0.0
  %vm103 = vcmp.ge.f32.partialorder %v91, 0.0
  %vm104 = vcmp.ge.f32.partialorder %v92, 0.0
  %vm105 = vcmp.ge.f32.partialorder %v93, 0.0
  %vm106 = vcmp.ge.f32.partialorder %v94, 0.0
  %vm107 = vcmp.ge.f32.partialorder %v95, 0.0
  %vm108 = vcmp.ge.f32.partialorder %v96, 0.0
  %vm109 = vcmp.ge.f32.partialorder %v97, 0.0
  %vm110 = vcmp.ge.f32.partialorder %v98, 0.0
  %vm111 = vcmp.ge.f32.partialorder %v99, 0.0
  %v112 = vmul.f32 %v88, 0.2
  %v113 = vmul.f32 %v89, 0.2
  %v114 = vmul.f32 %v90, 0.2
  %v115 = vmul.f32 %v91, 0.2
  %v116 = vmul.f32 %v92, 0.2
  %v117 = vmul.f32 %v93, 0.2
  %v118 = vmul.f32 %v94, 0.2
  %v119 = vmul.f32 %v95, 0.2
  %v120 = vmul.f32 %v96, 0.2
  %v121 = vmul.f32 %v97, 0.2
  %v122 = vmul.f32 %v98, 0.2
  %v123 = vmul.f32 %v99, 0.2
  %v124 = vsel %vm100, %v88, %v112
  %v125 = vsel %vm101, %v89, %v113
  %v126 = vsel %vm102, %v90, %v114
  %v127 = vsel %vm103, %v91, %v115
  %v128 = vsel %vm104, %v92, %v116
  %v129 = vsel %vm105, %v93, %v117
  %v130 = vsel %vm106, %v94, %v118
  %v131 = vsel %vm107, %v95, %v119
  %v132 = vsel %vm108, %v96, %v120
  %v133 = vsel %vm109, %v97, %v121
  %v134 = vsel %vm110, %v98, %v122
  %v135 = vsel %vm111, %v99, %v123
  %v136 = vpack.c.bf16 %v128, %v124
  %v137 = vpack.c.bf16 %v129, %v125
  %v138 = vpack.c.bf16 %v130, %v126
  %v139 = vpack.c.bf16 %v131, %v127
  %v140 = vpack.c.bf16 %v132, %v132
  %v141 = vpack.c.bf16 %v133, %v133
  %v142 = vpack.c.bf16 %v134, %v134
  %v143 = vpack.c.bf16 %v135, %v135
  %v152 = vunpack.c.l.b16 %v136
  %v153 = vunpack.c.l.b16 %v137
  %v154 = vunpack.c.l.b16 %v138
  %v155 = vunpack.c.l.b16 %v139
  %v156 = vunpack.c.h.b16 %v136
  %v157 = vunpack.c.h.b16 %v137
  %v158 = vunpack.c.h.b16 %v138
  %v159 = vunpack.c.h.b16 %v139
  %v160 = vunpack.c.l.b16 %v140
  %v161 = vunpack.c.l.b16 %v141
  %v162 = vunpack.c.l.b16 %v142
  %v163 = vunpack.c.l.b16 %v143
  %v164 = vpack.c.b16 %v153, %v152
  %v165 = vpack.c.b16 %v155, %v154
  %v166 = vpack.c.b16 %v157, %v156
  %v167 = vpack.c.b16 %v159, %v158
  %v168 = vpack.c.b16 %v161, %v160
  %v169 = vpack.c.b16 %v163, %v162
  %176 = vst [vmem:[%s3] sm:$0xff] %v164
  %177 = vst [vmem:[%s3 + $0x8] sm:$0xff] %v165
  %178 = vst [vmem:[%s3 + $0x10] sm:$0xff] %v166
  %179 = vst [vmem:[%s3 + $0x18] sm:$0xff] %v167
  %180 = vst [vmem:[%s3 + $0x20] sm:$0x11] %v168
  %181 = vst [vmem:[%s3 + $0x28] sm:$0x11] %v169
  // Predicated region
  $region14: #{_lambda_.16} parent=0 // pred_check
    _
  $region15: #{_lambda_.16} parent=0 // pred_check_branch
    %183 = sbr.rel (0) target = $region17
  $region16: #{_lambda_.16} parent=0 // pred_region
    _
  $region17: #{_lambda_.16} parent=0 // pred_fallthru
    _
  // Predicated region
  $region18: #{_lambda_.16} parent=0 // pred_check
    _
  $region19: #{_lambda_.16} parent=0 // pred_check_branch
    %185 = sbr.rel (0) target = $region21
  $region20: #{_lambda_.16} parent=0 // pred_region
    _
  $region21: #{_lambda_.16} parent=0 // pred_fallthru
    _

// kernel: _lambda_.15
$region0: #{_lambda_.15}
  #allocation0 [shape = 'u32[]', space=smem, size = 0x4, offset = 0x4, fixed_abs, tag = 'smem constant byte address 0x4 - core index']
  #allocation1 [shape = 'u32[144,128]{1,0:T(1,128)}', space=vmem, size = 0x12000, scoped, tag = 'internal scratch']
  #allocation2 [shape = 'f32[18,512]{1,0:T(8,128)}', space=vmem, size = 0xc000, scoped, tag = 'scratch operand']
  %s0 = inlined_call_operand.vmem [shape: bf16[18,4096], index: 0, kind: input, shape index: {}]
  %s1 = inlined_call_operand.vmem [shape: bf16[4096,512], index: 1, kind: input, shape index: {}]
  %s2 = inlined_call_operand.vmem [shape: bf16[18,512], index: 2, kind: output, shape index: {0}]
  %s3 = inlined_call_operand.vmem [shape: f32[1,1,512], index: 3, kind: output, shape index: {1}]
  %s4 = inlined_call_operand.vmem [shape: f32[1,1,512], index: 4, kind: output, shape index: {2}]
  %5 = xla_tuple %s2, %s3, %s4
  %s6 = sld [smem:[#allocation0]]
  $region88: #{_lambda_.15} parent=0
    _
  %s8 = ssub.s32 1, %s6
  %s9 = scalar_select 0, %s8, %s6
  $region1: #{_lambda_.15} parent=0
    #allocation3 [shape = 'u8[49152]{0}', space=vmem, size = 0xc000, scoped, tag = 'input window, operand 0']
    loop: start=0, step=1, limit=10
    $region2: #{_lambda_.15} parent=1 // loop_pre_header
      _
    $region3: #{_lambda_.15} parent=1 // loop_header
      %s11 = sphi 0, %s15
      %p12 = scmp.ge.s32.totalorder %s11, 10
      %s18 = sphi 0, %s30
      %s19 = sphi 0, %s26
      %s20 = sphi 0, %s18
      %s21 = sphi 0, %s19
      %s22 = sphi 0, %s20
      %s23 = sphi 0, %s21
      %s35 = sphi 0, %s37
      %s38 = sphi 0, %s35
      %s39 = sphi 0, %s38
      %s55 = sphi 0, %s39
      %s61 = sphi 0, %s63
      %s64 = sphi 0, %s61
      %s65 = sphi 0, %s64
      %s81 = sphi 0, %s65
      %s87 = sphi 0, %s89
      %s90 = sphi 0, %s87
      %s91 = sphi 0, %s90
      %s107 = sphi 0, %s91
      %s113 = sphi 0, %s115
      %s116 = sphi 0, %s113
      %s117 = sphi 0, %s116
      %s133 = sphi 0, %s117
      %s139 = sphi 0, %s141
      %s142 = sphi 0, %s139
      %s143 = sphi 0, %s142
      %s159 = sphi 0, %s143
    $region4: #{_lambda_.15} parent=1 // loop_header_branch
      %14 = sbr.rel (%p12) target = $region8
    $region5: #{_lambda_.15} parent=1 // loop_body
      %s16 = ssub.s32 %s11, 1
      %s17 = ssub.s32 %s11, 2
      %s24 = sadd.s32 1, %s19
      %p25 = scmp.ge.s32.totalorder %s24, 8
      %s26 = scalar_select %p25, 0, %s24
      %s27 = sadd.s32 1, %s18
      %s28 = scalar_select %p25, %s27, %s18
      %p29 = scmp.ge.s32.totalorder %s28, 1
      %s30 = scalar_select %p29, 0, %s28
      %s31 = ssub.s32 %s18, %s30
      %s32 = ssub.s32 %s19, %s26
      %s33 = sor.u32 %s31, %s32
      %p34 = scmp.eq.s32.totalorder %s33, 0
      %s36 = sadd.s32 %s35, 1
      %s37 = scalar_select %p34, %s35, %s36
      %p40 = pneg %p34
      %p41 = scmp.eq.s32.totalorder %s11, 7
      %p42 = por %p40, %p41
      %p43 = scmp.ne.s32.totalorder %s35, %s38
      %p44 = scmp.eq.s32.totalorder %s11, 0
      %p45 = por %p43, %p44
      %p46 = scmp.ne.s32.totalorder %s35, %s38
      %p47 = scmp.eq.s32.totalorder %s16, 7
      %p48 = por %p46, %p47
      %p49 = scmp.ne.s32.totalorder %s38, %s39
      %p50 = scmp.eq.s32.totalorder %s16, 0
      %p51 = por %p49, %p50
      %p52 = scmp.ne.s32.totalorder %s38, %s39
      %p53 = scmp.eq.s32.totalorder %s17, 7
      %p54 = por %p52, %p53
      %p56 = scmp.ne.s32.totalorder %s39, %s55
      %p57 = scmp.eq.s32.totalorder %s17, 0
      %p58 = por %p56, %p57
      %s59 = ssub.s32 %s19, %s26
      %p60 = scmp.eq.s32.totalorder %s59, 0
      %s62 = sadd.s32 %s61, 1
      %s63 = scalar_select %p60, %s61, %s62
      %p66 = pneg %p60
      %p67 = scmp.eq.s32.totalorder %s11, 7
      %p68 = por %p66, %p67
      %p69 = scmp.ne.s32.totalorder %s61, %s64
      %p70 = scmp.eq.s32.totalorder %s11, 0
      %p71 = por %p69, %p70
      %p72 = scmp.ne.s32.totalorder %s61, %s64
      %p73 = scmp.eq.s32.totalorder %s16, 7
      %p74 = por %p72, %p73
      %p75 = scmp.ne.s32.totalorder %s64, %s65
      %p76 = scmp.eq.s32.totalorder %s16, 0
      %p77 = por %p75, %p76
      %p78 = scmp.ne.s32.totalorder %s64, %s65
      %p79 = scmp.eq.s32.totalorder %s17, 7
      %p80 = por %p78, %p79
      %p82 = scmp.ne.s32.totalorder %s65, %s81
      %p83 = scmp.eq.s32.totalorder %s17, 0
      %p84 = por %p82, %p83
      %s85 = ssub.s32 %s18, %s30
      %p86 = scmp.eq.s32.totalorder %s85, 0
      %s88 = sadd.s32 %s87, 1
      %s89 = scalar_select %p86, %s87, %s88
      %p92 = pneg %p86
      %p93 = scmp.eq.s32.totalorder %s11, 7
      %p94 = por %p92, %p93
      %p95 = scmp.ne.s32.totalorder %s87, %s90
      %p96 = scmp.eq.s32.totalorder %s11, 0
      %p97 = por %p95, %p96
      %p98 = scmp.ne.s32.totalorder %s87, %s90
      %p99 = scmp.eq.s32.totalorder %s16, 7
      %p100 = por %p98, %p99
      %p101 = scmp.ne.s32.totalorder %s90, %s91
      %p102 = scmp.eq.s32.totalorder %s16, 0
      %p103 = por %p101, %p102
      %p104 = scmp.ne.s32.totalorder %s90, %s91
      %p105 = scmp.eq.s32.totalorder %s17, 7
      %p106 = por %p104, %p105
      %p108 = scmp.ne.s32.totalorder %s91, %s107
      %p109 = scmp.eq.s32.totalorder %s17, 0
      %p110 = por %p108, %p109
      %s111 = ssub.s32 %s18, %s30
      %p112 = scmp.eq.s32.totalorder %s111, 0
      %s114 = sadd.s32 %s113, 1
      %s115 = scalar_select %p112, %s113, %s114
      %p118 = pneg %p112
      %p119 = scmp.eq.s32.totalorder %s11, 7
      %p120 = por %p118, %p119
      %p121 = scmp.ne.s32.totalorder %s113, %s116
      %p122 = scmp.eq.s32.totalorder %s11, 0
      %p123 = por %p121, %p122
      %p124 = scmp.ne.s32.totalorder %s113, %s116
      %p125 = scmp.eq.s32.totalorder %s16, 7
      %p126 = por %p124, %p125
      %p127 = scmp.ne.s32.totalorder %s116, %s117
      %p128 = scmp.eq.s32.totalorder %s16, 0
      %p129 = por %p127, %p128
      %p130 = scmp.ne.s32.totalorder %s116, %s117
      %p131 = scmp.eq.s32.totalorder %s17, 7
      %p132 = por %p130, %p131
      %p134 = scmp.ne.s32.totalorder %s117, %s133
      %p135 = scmp.eq.s32.totalorder %s17, 0
      %p136 = por %p134, %p135
      %s137 = ssub.s32 %s18, %s30
      %p138 = scmp.eq.s32.totalorder %s137, 0
      %s140 = sadd.s32 %s139, 1
      %s141 = scalar_select %p138, %s139, %s140
      %p144 = pneg %p138
      %p145 = scmp.eq.s32.totalorder %s11, 7
      %p146 = por %p144, %p145
      %p147 = scmp.ne.s32.totalorder %s139, %s142
      %p148 = scmp.eq.s32.totalorder %s11, 0
      %p149 = por %p147, %p148
      %p150 = scmp.ne.s32.totalorder %s139, %s142
      %p151 = scmp.eq.s32.totalorder %s16, 7
      %p152 = por %p150, %p151
      %p153 = scmp.ne.s32.totalorder %s142, %s143
      %p154 = scmp.eq.s32.totalorder %s16, 0
      %p155 = por %p153, %p154
      %p156 = scmp.ne.s32.totalorder %s142, %s143
      %p157 = scmp.eq.s32.totalorder %s17, 7
      %p158 = por %p156, %p157
      %p160 = scmp.ne.s32.totalorder %s143, %s159
      %p161 = scmp.eq.s32.totalorder %s17, 0
      %p162 = por %p160, %p161
      %p163 = scmp.le.s32.totalorder 1, %s11
      %p164 = scmp.lt.s32.totalorder %s11, 9
      %p165 = pnand %p163, %p164
      %p166 = pneg %p165
      // Predicated region
      $region9: #{_lambda_.15} parent=5 // pred_check
        _
      $region10: #{_lambda_.15} parent=5 // pred_check_branch
        %168 = sbr.rel (%p165) target = $region12
      $region11: #{_lambda_.15} parent=5 // pred_region
        %s169 = ssub.s32 %s11, 1
      $region12: #{_lambda_.15} parent=5 // pred_fallthru
        _
      %p170 = scmp.lt.s32.totalorder %s11, 8
      // Predicated region
      $region13: #{_lambda_.15} parent=5 // pred_check
        %p171 = pneg %p170
      $region14: #{_lambda_.15} parent=5 // pred_check_branch
        %173 = sbr.rel (%p171) target = $region16
      $region15: #{_lambda_.15} parent=5 // pred_region
        // Predicated region
        $region17: #{_lambda_.15} parent=15 // pred_check
          %p174 = pneg %p45
        $region18: #{_lambda_.15} parent=15 // pred_check_branch
          %176 = sbr.rel (%p174) target = $region20
        $region19: #{_lambda_.15} parent=15 // pred_region
          %s177 = sand.u32 %s35, 1
          %s178 = sand.u32 %s35, 1
          %s179 = smul.addr %s178, 48
          %s180 = scalar_lea.vmem [#allocation3], %s179
          %s181 = smul.u32 3, %s18
          %s182 = smul.u32 4, %s19
          %s183 = smul.addr %s181, 32
          %s184 = sadd.s32 %s182, %s183
          %s185 = smul.addr %s184, 4
          %s186 = scalar_lea.vmem %s0, %s185
          // Predicated region
          $region21: #{_lambda_.15} parent=19 // pred_check
            _
          $region22: #{_lambda_.15} parent=19 // pred_check_branch
            %188 = sbr.rel (0) target = $region24
          $region23: #{_lambda_.15} parent=19 // pred_region
            // Predicated region
            $region25: #{_lambda_.15} parent=23 // pred_check
              _
            $region26: #{_lambda_.15} parent=23 // pred_check_branch
              %190 = sbr.rel (0) target = $region28
            $region27: #{_lambda_.15} parent=23 // pred_region
              loop: start=0, step=1, limit=1
              $region29: #{_lambda_.15} parent=27 // loop_pre_header
                _
              $region30: #{_lambda_.15} parent=27 // loop_header
                %s192 = sphi 0, %s196
                %p193 = scmp.ge.s32.totalorder %s192, 1
                %s197 = sphi %s186, %s186
                %s198 = sphi %s180, %s180
              $region31: #{_lambda_.15} parent=27 // loop_header_branch
                %195 = sbr.rel (%p193) target = $region35
              $region32: #{_lambda_.15} parent=27 // loop_body
                %v199 = vld [vmem:[%s197] sm:$0xff]
                %200 = vst [vmem:[%s198] sm:$0xff] %v199
                %v201 = vld [vmem:[%s197 + $0x8] sm:$0xff]
                %202 = vst [vmem:[%s198 + $0x8] sm:$0xff] %v201
                %v203 = vld [vmem:[%s197 + $0x80] sm:$0xff]
                %204 = vst [vmem:[%s198 + $0x10] sm:$0xff] %v203
                %v205 = vld [vmem:[%s197 + $0x88] sm:$0xff]
                %206 = vst [vmem:[%s198 + $0x18] sm:$0xff] %v205
                %v207 = vld [vmem:[%s197 + $0x100] sm:$0xff]
                %208 = vst [vmem:[%s198 + $0x20] sm:$0xff] %v207
                %v209 = vld [vmem:[%s197 + $0x108] sm:$0xff]
                %210 = vst [vmem:[%s198 + $0x28] sm:$0xff] %v209
              $region33: #{_lambda_.15} parent=27 // loop_footer
                %s196 = sadd.s32 1, %s192
              $region34: #{_lambda_.15} parent=27 // loop_footer_branch
                %191 = sbr.rel target = $region30
              $region35: #{_lambda_.15} parent=27 // loop_exit
                _
            $region28: #{_lambda_.15} parent=23 // pred_fallthru
              _
            // Predicated region
            $region36: #{_lambda_.15} parent=23 // pred_check
              _
            $region37: #{_lambda_.15} parent=23 // pred_check_branch
              %212 = sbr.rel target = $region39
            $region38: #{_lambda_.15} parent=23 // pred_region
              _
            $region39: #{_lambda_.15} parent=23 // pred_fallthru
              _
          $region24: #{_lambda_.15} parent=19 // pred_fallthru
            _
          %213 = vnop
        $region20: #{_lambda_.15} parent=15 // pred_fallthru
          _
        // Predicated region
        $region40: #{_lambda_.15} parent=15 // pred_check
          %p214 = pneg %p71
        $region41: #{_lambda_.15} parent=15 // pred_check_branch
          %216 = sbr.rel (%p214) target = $region43
        $region42: #{_lambda_.15} parent=15 // pred_region
          %s217 = smul.u32 64, %s19
          %p218 = scmp.lt.s32.totalorder %s217, 511
          %s219 = scalar_select %p218, %s217, 511
          %s220 = smul.addr %s219, 4
          %s221 = smul.addr %s220, 4
          %s222 = scalar_lea.vmem %s1, %s221
          %s223 = smul.u32 64, %s19
        $region43: #{_lambda_.15} parent=15 // pred_fallthru
          _
      $region16: #{_lambda_.15} parent=5 // pred_fallthru
        _
      %p224 = scmp.le.s32.totalorder 1, %s11
      %p225 = scmp.lt.s32.totalorder %s11, 9
      %p226 = pnand %p224, %p225
      %p227 = pneg %p226
      // Predicated region
      $region44: #{_lambda_.15} parent=5 // pred_check
        _
      $region45: #{_lambda_.15} parent=5 // pred_check_branch
        %229 = sbr.rel (%p226) target = $region47
      $region46: #{_lambda_.15} parent=5 // pred_region
        %s230 = ssub.s32 %s11, 1
        %s231 = sand.u32 %s38, 1
        %s232 = sand.u32 %s38, 1
        %s233 = smul.addr %s232, 48
        %s234 = scalar_lea.vmem [#allocation3], %s233
        // Predicated region
        $region48: #{_lambda_.15} parent=46 // pred_check
          %p235 = pneg %p51
        $region49: #{_lambda_.15} parent=46 // pred_check_branch
          %237 = sbr.rel (%p235) target = $region51
        $region50: #{_lambda_.15} parent=46 // pred_region
          _
        $region51: #{_lambda_.15} parent=46 // pred_fallthru
          _
        %s238 = sand.u32 %s38, 1
        %s239 = sand.u32 %s38, 1
        %s240 = smul.addr %s239, 48
        %s241 = scalar_lea.vmem [#allocation3], %s240
        %p242 = pneg %p51
        %p243 = pneg %p48
        %s244 = smul.u32 64, %s21
        %p245 = scmp.lt.s32.totalorder %s244, 511
        %s246 = scalar_select %p245, %s244, 511
        %s247 = smul.addr %s246, 4
        %s248 = smul.addr %s247, 4
        %s249 = scalar_lea.vmem %s1, %s248
        %p250 = pneg %p77
        %p251 = pneg %p74
        %p252 = pneg %p103
        %p253 = pneg %p100
        %s254 = smul.u32 3, %s20
        %p255 = scmp.lt.s32.totalorder %s254, 2
        %s256 = scalar_select %p255, %s254, 2
        %s257 = smul.addr %s256, 4
        %s258 = smul.addr %s257, 4
        %s259 = scalar_lea.vmem %s2, %s258
        %p260 = pneg %p129
        %p261 = pneg %p126
        %p262 = scmp.lt.s32.totalorder %s20, 0
        %s263 = scalar_select %p262, %s20, 0
        %s264 = smul.addr %s263, 4
        %s265 = scalar_lea.vmem %s3, %s264
        %p266 = pneg %p155
        %p267 = pneg %p152
        %p268 = scmp.lt.s32.totalorder %s20, 0
        %s269 = scalar_select %p268, %s20, 0
        %s270 = smul.addr %s269, 4
        %s271 = scalar_lea.vmem %s4, %s270
        %s272 = smul.u32 3, %s20
        %s273 = smul.u32 4, %s21
        %s274 = smul.u32 64, %s21
        %p275 = scmp.lt.s32.totalorder %s274, 511
        %s276 = scalar_select %p275, %s274, 511
        %s277 = smul.addr %s276, 4
        %s278 = smul.addr %s277, 4
        %s279 = scalar_lea.vmem %s1, %s278
        %s280 = smul.u32 64, %s21
        %s281 = smul.u32 3, %s20
        %p282 = scmp.lt.s32.totalorder %s281, 2
        %s283 = scalar_select %p282, %s281, 2
        %s284 = smul.addr %s283, 4
        %s285 = smul.addr %s284, 4
        %s286 = scalar_lea.vmem %s2, %s285
        %s287 = smul.u32 3, %s20
        %p288 = scmp.lt.s32.totalorder %s20, 0
        %s289 = scalar_select %p288, %s20, 0
        %s290 = smul.addr %s289, 4
        %s291 = scalar_lea.vmem %s3, %s290
        %p292 = scmp.lt.s32.totalorder %s20, 0
        %s293 = scalar_select %p292, %s20, 0
        %s294 = smul.addr %s293, 4
        %s295 = scalar_lea.vmem %s4, %s294
        %p296 = scmp.eq.s32.totalorder %s21, 0
        // Predicated region
        $region52: #{_lambda_.15} parent=46 // pred_check
          %p297 = pneg %p296
        $region53: #{_lambda_.15} parent=46 // pred_check_branch
          %299 = sbr.rel (%p297) target = $region55
        $region54: #{_lambda_.15} parent=46 // pred_region
          %300 = vst [vmem:[#allocation2] sm:$0xff] 0.0
          %301 = vst [vmem:[#allocation2 + $0x8] sm:$0xff] 0.0
          %302 = vst [vmem:[#allocation2 + $0x10] sm:$0xff] 0.0
          %303 = vst [vmem:[#allocation2 + $0x18] sm:$0xff] 0.0
          %304 = vst [vmem:[#allocation2 + $0x20] sm:$0xff] 0.0
          %305 = vst [vmem:[#allocation2 + $0x28] sm:$0xff] 0.0
          %306 = vst [vmem:[#allocation2 + $0x30] sm:$0xff] 0.0
          %307 = vst [vmem:[#allocation2 + $0x38] sm:$0xff] 0.0
          %308 = vst [vmem:[#allocation2 + $0x40] sm:$0x3] 0.0
          %309 = vst [vmem:[#allocation2 + $0x48] sm:$0x3] 0.0
          %310 = vst [vmem:[#allocation2 + $0x50] sm:$0x3] 0.0
          %311 = vst [vmem:[#allocation2 + $0x58] sm:$0x3] 0.0
        $region55: #{_lambda_.15} parent=46 // pred_fallthru
          _
        %v312 = vld [vmem:[#allocation2] sm:$0xff]
        %v313 = vld [vmem:[#allocation2 + $0x8] sm:$0xff]
        %v314 = vld [vmem:[#allocation2 + $0x10] sm:$0xff]
        %v315 = vld [vmem:[#allocation2 + $0x18] sm:$0xff]
        %v316 = vld [vmem:[#allocation2 + $0x20] sm:$0xff]
        %v317 = vld [vmem:[#allocation2 + $0x28] sm:$0xff]
        %v318 = vld [vmem:[#allocation2 + $0x30] sm:$0xff]
        %v319 = vld [vmem:[#allocation2 + $0x38] sm:$0xff]
        %v320 = vld [vmem:[#allocation2 + $0x40] sm:$0x3]
        %v321 = vld [vmem:[#allocation2 + $0x48] sm:$0x3]
        %v322 = vld [vmem:[#allocation2 + $0x50] sm:$0x3]
        %v323 = vld [vmem:[#allocation2 + $0x58] sm:$0x3]
        %v324 = vld [vmem:[%s234] sm:$0xff]
        %v325 = vld [vmem:[%s234 + $0x8] sm:$0xff]
        %v326 = vld [vmem:[%s234 + $0x10] sm:$0xff]
        %v327 = vld [vmem:[%s234 + $0x18] sm:$0xff]
        %v328 = vld [vmem:[%s234 + $0x20] sm:$0x11]
        %v329 = vld [vmem:[%s234 + $0x28] sm:$0x11]
        %v330 = vld [vmem:[%s279] sm:$0xff]
        %v331 = vld [vmem:[%s279 + $0x8] sm:$0xff]
        %v332 = vld [vmem:[%s279 + $0x10] sm:$0xff]
        %v333 = vld [vmem:[%s279 + $0x18] sm:$0xff]
        %v334 = vld [vmem:[%s279 + $0x20] sm:$0xff]
        %v335 = vld [vmem:[%s279 + $0x28] sm:$0xff]
        %v336 = vld [vmem:[%s279 + $0x30] sm:$0xff]
        %v337 = vld [vmem:[%s279 + $0x38] sm:$0xff]
        %v338 = vld [vmem:[%s279 + $0x40] sm:$0xff]
        %v339 = vld [vmem:[%s279 + $0x48] sm:$0xff]
        %v340 = vld [vmem:[%s279 + $0x50] sm:$0xff]
        %v341 = vld [vmem:[%s279 + $0x58] sm:$0xff]
        %v342 = vld [vmem:[%s279 + $0x60] sm:$0xff]
        %v343 = vld [vmem:[%s279 + $0x68] sm:$0xff]
        %v344 = vld [vmem:[%s279 + $0x70] sm:$0xff]
        %v345 = vld [vmem:[%s279 + $0x78] sm:$0xff]
        %v346 = vld [vmem:[%s279 + $0x80] sm:$0xff]
        %v347 = vld [vmem:[%s279 + $0x88] sm:$0xff]
        %v348 = vld [vmem:[%s279 + $0x90] sm:$0xff]
        %v349 = vld [vmem:[%s279 + $0x98] sm:$0xff]
        %v350 = vld [vmem:[%s279 + $0xa0] sm:$0xff]
        %v351 = vld [vmem:[%s279 + $0xa8] sm:$0xff]
        %v352 = vld [vmem:[%s279 + $0xb0] sm:$0xff]
        %v353 = vld [vmem:[%s279 + $0xb8] sm:$0xff]
        %v354 = vld [vmem:[%s279 + $0xc0] sm:$0xff]
        %v355 = vld [vmem:[%s279 + $0xc8] sm:$0xff]
        %v356 = vld [vmem:[%s279 + $0xd0] sm:$0xff]
        %v357 = vld [vmem:[%s279 + $0xd8] sm:$0xff]
        %v358 = vld [vmem:[%s279 + $0xe0] sm:$0xff]
        %v359 = vld [vmem:[%s279 + $0xe8] sm:$0xff]
        %v360 = vld [vmem:[%s279 + $0xf0] sm:$0xff]
        %v361 = vld [vmem:[%s279 + $0xf8] sm:$0xff]
        %v362 = vld [vmem:[%s279 + $0x100] sm:$0xff]
        %v363 = vld [vmem:[%s279 + $0x108] sm:$0xff]
        %v364 = vld [vmem:[%s279 + $0x110] sm:$0xff]
        %v365 = vld [vmem:[%s279 + $0x118] sm:$0xff]
        %v366 = vld [vmem:[%s279 + $0x120] sm:$0xff]
        %v367 = vld [vmem:[%s279 + $0x128] sm:$0xff]
        %v368 = vld [vmem:[%s279 + $0x130] sm:$0xff]
        %v369 = vld [vmem:[%s279 + $0x138] sm:$0xff]
        %v370 = vld [vmem:[%s279 + $0x140] sm:$0xff]
        %v371 = vld [vmem:[%s279 + $0x148] sm:$0xff]
        %v372 = vld [vmem:[%s279 + $0x150] sm:$0xff]
        %v373 = vld [vmem:[%s279 + $0x158] sm:$0xff]
        %v374 = vld [vmem:[%s279 + $0x160] sm:$0xff]
        %v375 = vld [vmem:[%s279 + $0x168] sm:$0xff]
        %v376 = vld [vmem:[%s279 + $0x170] sm:$0xff]
        %v377 = vld [vmem:[%s279 + $0x178] sm:$0xff]
        %v378 = vld [vmem:[%s279 + $0x180] sm:$0xff]
        %v379 = vld [vmem:[%s279 + $0x188] sm:$0xff]
        %v380 = vld [vmem:[%s279 + $0x190] sm:$0xff]
        %v381 = vld [vmem:[%s279 + $0x198] sm:$0xff]
        %v382 = vld [vmem:[%s279 + $0x1a0] sm:$0xff]
        %v383 = vld [vmem:[%s279 + $0x1a8] sm:$0xff]
        %v384 = vld [vmem:[%s279 + $0x1b0] sm:$0xff]
        %v385 = vld [vmem:[%s279 + $0x1b8] sm:$0xff]
        %v386 = vld [vmem:[%s279 + $0x1c0] sm:$0xff]
        %v387 = vld [vmem:[%s279 + $0x1c8] sm:$0xff]
        %v388 = vld [vmem:[%s279 + $0x1d0] sm:$0xff]
        %v389 = vld [vmem:[%s279 + $0x1d8] sm:$0xff]
        %v390 = vld [vmem:[%s279 + $0x1e0] sm:$0xff]
        %v391 = vld [vmem:[%s279 + $0x1e8] sm:$0xff]
        %v392 = vld [vmem:[%s279 + $0x1f0] sm:$0xff]
        %v393 = vld [vmem:[%s279 + $0x1f8] sm:$0xff]
        %v394 = vld [vmem:[%s279 + $0x200] sm:$0xff]
        %v395 = vld [vmem:[%s279 + $0x208] sm:$0xff]
        %v396 = vld [vmem:[%s279 + $0x210] sm:$0xff]
        %v397 = vld [vmem:[%s279 + $0x218] sm:$0xff]
        %v398 = vld [vmem:[%s279 + $0x220] sm:$0xff]
        %v399 = vld [vmem:[%s279 + $0x228] sm:$0xff]
        %v400 = vld [vmem:[%s279 + $0x230] sm:$0xff]
        %v401 = vld [vmem:[%s279 + $0x238] sm:$0xff]
        %v402 = vld [vmem:[%s279 + $0x240] sm:$0xff]
        %v403 = vld [vmem:[%s279 + $0x248] sm:$0xff]
        %v404 = vld [vmem:[%s279 + $0x250] sm:$0xff]
        %v405 = vld [vmem:[%s279 + $0x258] sm:$0xff]
        %v406 = vld [vmem:[%s279 + $0x260] sm:$0xff]
        %v407 = vld [vmem:[%s279 + $0x268] sm:$0xff]
        %v408 = vld [vmem:[%s279 + $0x270] sm:$0xff]
        %v409 = vld [vmem:[%s279 + $0x278] sm:$0xff]
        %v410 = vld [vmem:[%s279 + $0x280] sm:$0xff]
        %v411 = vld [vmem:[%s279 + $0x288] sm:$0xff]
        %v412 = vld [vmem:[%s279 + $0x290] sm:$0xff]
        %v413 = vld [vmem:[%s279 + $0x298] sm:$0xff]
        %v414 = vld [vmem:[%s279 + $0x2a0] sm:$0xff]
        %v415 = vld [vmem:[%s279 + $0x2a8] sm:$0xff]
        %v416 = vld [vmem:[%s279 + $0x2b0] sm:$0xff]
        %v417 = vld [vmem:[%s279 + $0x2b8] sm:$0xff]
        %v418 = vld [vmem:[%s279 + $0x2c0] sm:$0xff]
        %v419 = vld [vmem:[%s279 + $0x2c8] sm:$0xff]
        %v420 = vld [vmem:[%s279 + $0x2d0] sm:$0xff]
        %v421 = vld [vmem:[%s279 + $0x2d8] sm:$0xff]
        %v422 = vld [vmem:[%s279 + $0x2e0] sm:$0xff]
        %v423 = vld [vmem:[%s279 + $0x2e8] sm:$0xff]
        %v424 = vld [vmem:[%s279 + $0x2f0] sm:$0xff]
        %v425 = vld [vmem:[%s279 + $0x2f8] sm:$0xff]
        %v426 = vld [vmem:[%s279 + $0x300] sm:$0xff]
        %v427 = vld [vmem:[%s279 + $0x308] sm:$0xff]
        %v428 = vld [vmem:[%s279 + $0x310] sm:$0xff]
        %v429 = vld [vmem:[%s279 + $0x318] sm:$0xff]
        %v430 = vld [vmem:[%s279 + $0x320] sm:$0xff]
        %v431 = vld [vmem:[%s279 + $0x328] sm:$0xff]
        %v432 = vld [vmem:[%s279 + $0x330] sm:$0xff]
        %v433 = vld [vmem:[%s279 + $0x338] sm:$0xff]
        %v434 = vld [vmem:[%s279 + $0x340] sm:$0xff]
        %v435 = vld [vmem:[%s279 + $0x348] sm:$0xff]
        %v436 = vld [vmem:[%s279 + $0x350] sm:$0xff]
        %v437 = vld [vmem:[%s279 + $0x358] sm:$0xff]
        %v438 = vld [vmem:[%s279 + $0x360] sm:$0xff]
        %v439 = vld [vmem:[%s279 + $0x368] sm:$0xff]
        %v440 = vld [vmem:[%s279 + $0x370] sm:$0xff]
        %v441 = vld [vmem:[%s279 + $0x378] sm:$0xff]
        %v442 = vld [vmem:[%s279 + $0x380] sm:$0xff]
        %v443 = vld [vmem:[%s279 + $0x388] sm:$0xff]
        %v444 = vld [vmem:[%s279 + $0x390] sm:$0xff]
        %v445 = vld [vmem:[%s279 + $0x398] sm:$0xff]
        %v446 = vld [vmem:[%s279 + $0x3a0] sm:$0xff]
        %v447 = vld [vmem:[%s279 + $0x3a8] sm:$0xff]
        %v448 = vld [vmem:[%s279 + $0x3b0] sm:$0xff]
        %v449 = vld [vmem:[%s279 + $0x3b8] sm:$0xff]
        %v450 = vld [vmem:[%s279 + $0x3c0] sm:$0xff]
        %v451 = vld [vmem:[%s279 + $0x3c8] sm:$0xff]
        %v452 = vld [vmem:[%s279 + $0x3d0] sm:$0xff]
        %v453 = vld [vmem:[%s279 + $0x3d8] sm:$0xff]
        %v454 = vld [vmem:[%s279 + $0x3e0] sm:$0xff]
        %v455 = vld [vmem:[%s279 + $0x3e8] sm:$0xff]
        %v456 = vld [vmem:[%s279 + $0x3f0] sm:$0xff]
        %v457 = vld [vmem:[%s279 + $0x3f8] sm:$0xff]
        %v464 = vunpack.c.l.b16 %v324
        %v465 = vunpack.c.h.b16 %v324
        %v466 = vunpack.c.l.b16 %v325
        %v467 = vunpack.c.h.b16 %v325
        %v468 = vunpack.c.l.b16 %v326
        %v469 = vunpack.c.h.b16 %v326
        %v470 = vunpack.c.l.b16 %v327
        %v471 = vunpack.c.h.b16 %v327
        %v472 = vunpack.c.l.b16 %v328
        %v473 = vunpack.c.h.b16 %v328
        %v474 = vunpack.c.l.b16 %v329
        %v475 = vunpack.c.h.b16 %v329
        %v476 = vpack.c.b16 %v468, %v464
        %v477 = vpack.c.b16 %v469, %v465
        %v478 = vpack.c.b16 %v470, %v466
        %v479 = vpack.c.b16 %v471, %v467
        %v480 = vpack.c.b16 %v472, %v472
        %v481 = vpack.c.b16 %v473, %v473
        %v482 = vpack.c.b16 %v474, %v474
        %v483 = vpack.c.b16 %v475, %v475
        %v620 = vunpack.c.l.b16 %v330
        %v621 = vunpack.c.h.b16 %v330
        %v622 = vunpack.c.l.b16 %v331
        %v623 = vunpack.c.h.b16 %v331
        %v624 = vunpack.c.l.b16 %v332
        %v625 = vunpack.c.h.b16 %v332
        %v626 = vunpack.c.l.b16 %v333
        %v627 = vunpack.c.h.b16 %v333
        %v628 = vunpack.c.l.b16 %v334
        %v629 = vunpack.c.h.b16 %v334
        %v630 = vunpack.c.l.b16 %v335
        %v631 = vunpack.c.h.b16 %v335
        %v632 = vunpack.c.l.b16 %v336
        %v633 = vunpack.c.h.b16 %v336
        %v634 = vunpack.c.l.b16 %v337
        %v635 = vunpack.c.h.b16 %v337
        %v636 = vunpack.c.l.b16 %v338
        %v637 = vunpack.c.h.b16 %v338
        %v638 = vunpack.c.l.b16 %v339
        %v639 = vunpack.c.h.b16 %v339
        %v640 = vunpack.c.l.b16 %v340
        %v641 = vunpack.c.h.b16 %v340
        %v642 = vunpack.c.l.b16 %v341
        %v643 = vunpack.c.h.b16 %v341
        %v644 = vunpack.c.l.b16 %v342
        %v645 = vunpack.c.h.b16 %v342
        %v646 = vunpack.c.l.b16 %v343
        %v647 = vunpack.c.h.b16 %v343
        %v648 = vunpack.c.l.b16 %v344
        %v649 = vunpack.c.h.b16 %v344
        %v650 = vunpack.c.l.b16 %v345
        %v651 = vunpack.c.h.b16 %v345
        %v652 = vunpack.c.l.b16 %v346
        %v653 = vunpack.c.h.b16 %v346
        %v654 = vunpack.c.l.b16 %v347
        %v655 = vunpack.c.h.b16 %v347
        %v656 = vunpack.c.l.b16 %v348
        %v657 = vunpack.c.h.b16 %v348
        %v658 = vunpack.c.l.b16 %v349
        %v659 = vunpack.c.h.b16 %v349
        %v660 = vunpack.c.l.b16 %v350
        %v661 = vunpack.c.h.b16 %v350
        %v662 = vunpack.c.l.b16 %v351
        %v663 = vunpack.c.h.b16 %v351
        %v664 = vunpack.c.l.b16 %v352
        %v665 = vunpack.c.h.b16 %v352
        %v666 = vunpack.c.l.b16 %v353
        %v667 = vunpack.c.h.b16 %v353
        %v668 = vunpack.c.l.b16 %v354
        %v669 = vunpack.c.h.b16 %v354
        %v670 = vunpack.c.l.b16 %v355
        %v671 = vunpack.c.h.b16 %v355
        %v672 = vunpack.c.l.b16 %v356
        %v673 = vunpack.c.h.b16 %v356
        %v674 = vunpack.c.l.b16 %v357
        %v675 = vunpack.c.h.b16 %v357
        %v676 = vunpack.c.l.b16 %v358
        %v677 = vunpack.c.h.b16 %v358
        %v678 = vunpack.c.l.b16 %v359
        %v679 = vunpack.c.h.b16 %v359
        %v680 = vunpack.c.l.b16 %v360
        %v681 = vunpack.c.h.b16 %v360
        %v682 = vunpack.c.l.b16 %v361
        %v683 = vunpack.c.h.b16 %v361
        %v684 = vunpack.c.l.b16 %v362
        %v685 = vunpack.c.h.b16 %v362
        %v686 = vunpack.c.l.b16 %v363
        %v687 = vunpack.c.h.b16 %v363
        %v688 = vunpack.c.l.b16 %v364
        %v689 = vunpack.c.h.b16 %v364
        %v690 = vunpack.c.l.b16 %v365
        %v691 = vunpack.c.h.b16 %v365
        %v692 = vunpack.c.l.b16 %v366
        %v693 = vunpack.c.h.b16 %v366
        %v694 = vunpack.c.l.b16 %v367
        %v695 = vunpack.c.h.b16 %v367
        %v696 = vunpack.c.l.b16 %v368
        %v697 = vunpack.c.h.b16 %v368
        %v698 = vunpack.c.l.b16 %v369
        %v699 = vunpack.c.h.b16 %v369
        %v700 = vunpack.c.l.b16 %v370
        %v701 = vunpack.c.h.b16 %v370
        %v702 = vunpack.c.l.b16 %v371
        %v703 = vunpack.c.h.b16 %v371
        %v704 = vunpack.c.l.b16 %v372
        %v705 = vunpack.c.h.b16 %v372
        %v706 = vunpack.c.l.b16 %v373
        %v707 = vunpack.c.h.b16 %v373
        %v708 = vunpack.c.l.b16 %v374
        %v709 = vunpack.c.h.b16 %v374
        %v710 = vunpack.c.l.b16 %v375
        %v711 = vunpack.c.h.b16 %v375
        %v712 = vunpack.c.l.b16 %v376
        %v713 = vunpack.c.h.b16 %v376
        %v714 = vunpack.c.l.b16 %v377
        %v715 = vunpack.c.h.b16 %v377
        %v716 = vunpack.c.l.b16 %v378
        %v717 = vunpack.c.h.b16 %v378
        %v718 = vunpack.c.l.b16 %v379
        %v719 = vunpack.c.h.b16 %v379
        %v720 = vunpack.c.l.b16 %v380
        %v721 = vunpack.c.h.b16 %v380
        %v722 = vunpack.c.l.b16 %v381
        %v723 = vunpack.c.h.b16 %v381
        %v724 = vunpack.c.l.b16 %v382
        %v725 = vunpack.c.h.b16 %v382
        %v726 = vunpack.c.l.b16 %v383
        %v727 = vunpack.c.h.b16 %v383
        %v728 = vunpack.c.l.b16 %v384
        %v729 = vunpack.c.h.b16 %v384
        %v730 = vunpack.c.l.b16 %v385
        %v731 = vunpack.c.h.b16 %v385
        %v732 = vunpack.c.l.b16 %v386
        %v733 = vunpack.c.h.b16 %v386
        %v734 = vunpack.c.l.b16 %v387
        %v735 = vunpack.c.h.b16 %v387
        %v736 = vunpack.c.l.b16 %v388
        %v737 = vunpack.c.h.b16 %v388
        %v738 = vunpack.c.l.b16 %v389
        %v739 = vunpack.c.h.b16 %v389
        %v740 = vunpack.c.l.b16 %v390
        %v741 = vunpack.c.h.b16 %v390
        %v742 = vunpack.c.l.b16 %v391
        %v743 = vunpack.c.h.b16 %v391
        %v744 = vunpack.c.l.b16 %v392
        %v745 = vunpack.c.h.b16 %v392
        %v746 = vunpack.c.l.b16 %v393
        %v747 = vunpack.c.h.b16 %v393
        %v748 = vunpack.c.l.b16 %v394
        %v749 = vunpack.c.h.b16 %v394
        %v750 = vunpack.c.l.b16 %v395
        %v751 = vunpack.c.h.b16 %v395
        %v752 = vunpack.c.l.b16 %v396
        %v753 = vunpack.c.h.b16 %v396
        %v754 = vunpack.c.l.b16 %v397
        %v755 = vunpack.c.h.b16 %v397
        %v756 = vunpack.c.l.b16 %v398
        %v757 = vunpack.c.h.b16 %v398
        %v758 = vunpack.c.l.b16 %v399
        %v759 = vunpack.c.h.b16 %v399
        %v760 = vunpack.c.l.b16 %v400
        %v761 = vunpack.c.h.b16 %v400
        %v762 = vunpack.c.l.b16 %v401
        %v763 = vunpack.c.h.b16 %v401
        %v764 = vunpack.c.l.b16 %v402
        %v765 = vunpack.c.h.b16 %v402
        %v766 = vunpack.c.l.b16 %v403
        %v767 = vunpack.c.h.b16 %v403
        %v768 = vunpack.c.l.b16 %v404
        %v769 = vunpack.c.h.b16 %v404
        %v770 = vunpack.c.l.b16 %v405
        %v771 = vunpack.c.h.b16 %v405
        %v772 = vunpack.c.l.b16 %v406
        %v773 = vunpack.c.h.b16 %v406
        %v774 = vunpack.c.l.b16 %v407
        %v775 = vunpack.c.h.b16 %v407
        %v776 = vunpack.c.l.b16 %v408
        %v777 = vunpack.c.h.b16 %v408
        %v778 = vunpack.c.l.b16 %v409
        %v779 = vunpack.c.h.b16 %v409
        %v780 = vunpack.c.l.b16 %v410
        %v781 = vunpack.c.h.b16 %v410
        %v782 = vunpack.c.l.b16 %v411
        %v783 = vunpack.c.h.b16 %v411
        %v784 = vunpack.c.l.b16 %v412
        %v785 = vunpack.c.h.b16 %v412
        %v786 = vunpack.c.l.b16 %v413
        %v787 = vunpack.c.h.b16 %v413
        %v788 = vunpack.c.l.b16 %v414
        %v789 = vunpack.c.h.b16 %v414
        %v790 = vunpack.c.l.b16 %v415
        %v791 = vunpack.c.h.b16 %v415
        %v792 = vunpack.c.l.b16 %v416
        %v793 = vunpack.c.h.b16 %v416
        %v794 = vunpack.c.l.b16 %v417
        %v795 = vunpack.c.h.b16 %v417
        %v796 = vunpack.c.l.b16 %v418
        %v797 = vunpack.c.h.b16 %v418
        %v798 = vunpack.c.l.b16 %v419
        %v799 = vunpack.c.h.b16 %v419
        %v800 = vunpack.c.l.b16 %v420
        %v801 = vunpack.c.h.b16 %v420
        %v802 = vunpack.c.l.b16 %v421
        %v803 = vunpack.c.h.b16 %v421
        %v804 = vunpack.c.l.b16 %v422
        %v805 = vunpack.c.h.b16 %v422
        %v806 = vunpack.c.l.b16 %v423
        %v807 = vunpack.c.h.b16 %v423
        %v808 = vunpack.c.l.b16 %v424
        %v809 = vunpack.c.h.b16 %v424
        %v810 = vunpack.c.l.b16 %v425
        %v811 = vunpack.c.h.b16 %v425
        %v812 = vunpack.c.l.b16 %v426
        %v813 = vunpack.c.h.b16 %v426
        %v814 = vunpack.c.l.b16 %v427
        %v815 = vunpack.c.h.b16 %v427
        %v816 = vunpack.c.l.b16 %v428
        %v817 = vunpack.c.h.b16 %v428
        %v818 = vunpack.c.l.b16 %v429
        %v819 = vunpack.c.h.b16 %v429
        %v820 = vunpack.c.l.b16 %v430
        %v821 = vunpack.c.h.b16 %v430
        %v822 = vunpack.c.l.b16 %v431
        %v823 = vunpack.c.h.b16 %v431
        %v824 = vunpack.c.l.b16 %v432
        %v825 = vunpack.c.h.b16 %v432
        %v826 = vunpack.c.l.b16 %v433
        %v827 = vunpack.c.h.b16 %v433
        %v828 = vunpack.c.l.b16 %v434
        %v829 = vunpack.c.h.b16 %v434
        %v830 = vunpack.c.l.b16 %v435
        %v831 = vunpack.c.h.b16 %v435
        %v832 = vunpack.c.l.b16 %v436
        %v833 = vunpack.c.h.b16 %v436
        %v834 = vunpack.c.l.b16 %v437
        %v835 = vunpack.c.h.b16 %v437
        %v836 = vunpack.c.l.b16 %v438
        %v837 = vunpack.c.h.b16 %v438
        %v838 = vunpack.c.l.b16 %v439
        %v839 = vunpack.c.h.b16 %v439
        %v840 = vunpack.c.l.b16 %v440
        %v841 = vunpack.c.h.b16 %v440
        %v842 = vunpack.c.l.b16 %v441
        %v843 = vunpack.c.h.b16 %v441
        %v844 = vunpack.c.l.b16 %v442
        %v845 = vunpack.c.h.b16 %v442
        %v846 = vunpack.c.l.b16 %v443
        %v847 = vunpack.c.h.b16 %v443
        %v848 = vunpack.c.l.b16 %v444
        %v849 = vunpack.c.h.b16 %v444
        %v850 = vunpack.c.l.b16 %v445
        %v851 = vunpack.c.h.b16 %v445
        %v852 = vunpack.c.l.b16 %v446
        %v853 = vunpack.c.h.b16 %v446
        %v854 = vunpack.c.l.b16 %v447
        %v855 = vunpack.c.h.b16 %v447
        %v856 = vunpack.c.l.b16 %v448
        %v857 = vunpack.c.h.b16 %v448
        %v858 = vunpack.c.l.b16 %v449
        %v859 = vunpack.c.h.b16 %v449
        %v860 = vunpack.c.l.b16 %v450
        %v861 = vunpack.c.h.b16 %v450
        %v862 = vunpack.c.l.b16 %v451
        %v863 = vunpack.c.h.b16 %v451
        %v864 = vunpack.c.l.b16 %v452
        %v865 = vunpack.c.h.b16 %v452
        %v866 = vunpack.c.l.b16 %v453
        %v867 = vunpack.c.h.b16 %v453
        %v868 = vunpack.c.l.b16 %v454
        %v869 = vunpack.c.h.b16 %v454
        %v870 = vunpack.c.l.b16 %v455
        %v871 = vunpack.c.h.b16 %v455
        %v872 = vunpack.c.l.b16 %v456
        %v873 = vunpack.c.h.b16 %v456
        %v874 = vunpack.c.l.b16 %v457
        %v875 = vunpack.c.h.b16 %v457
        %v876 = vpack.c.b16 %v624, %v620
        %v877 = vpack.c.b16 %v625, %v621
        %v878 = vpack.c.b16 %v626, %v622
        %v879 = vpack.c.b16 %v627, %v623
        %v880 = vpack.c.b16 %v632, %v628
        %v881 = vpack.c.b16 %v633, %v629
        %v882 = vpack.c.b16 %v634, %v630
        %v883 = vpack.c.b16 %v635, %v631
        %v884 = vpack.c.b16 %v640, %v636
        %v885 = vpack.c.b16 %v641, %v637
        %v886 = vpack.c.b16 %v642, %v638
        %v887 = vpack.c.b16 %v643, %v639
        %v888 = vpack.c.b16 %v648, %v644
        %v889 = vpack.c.b16 %v649, %v645
        %v890 = vpack.c.b16 %v650, %v646
        %v891 = vpack.c.b16 %v651, %v647
        %v892 = vpack.c.b16 %v656, %v652
        %v893 = vpack.c.b16 %v657, %v653
        %v894 = vpack.c.b16 %v658, %v654
        %v895 = vpack.c.b16 %v659, %v655
        %v896 = vpack.c.b16 %v664, %v660
        %v897 = vpack.c.b16 %v665, %v661
        %v898 = vpack.c.b16 %v666, %v662
        %v899 = vpack.c.b16 %v667, %v663
        %v900 = vpack.c.b16 %v672, %v668
        %v901 = vpack.c.b16 %v673, %v669
        %v902 = vpack.c.b16 %v674, %v670
        %v903 = vpack.c.b16 %v675, %v671
        %v904 = vpack.c.b16 %v680, %v676
        %v905 = vpack.c.b16 %v681, %v677
        %v906 = vpack.c.b16 %v682, %v678
        %v907 = vpack.c.b16 %v683, %v679
        %v908 = vpack.c.b16 %v688, %v684
        %v909 = vpack.c.b16 %v689, %v685
        %v910 = vpack.c.b16 %v690, %v686
        %v911 = vpack.c.b16 %v691, %v687
        %v912 = vpack.c.b16 %v696, %v692
        %v913 = vpack.c.b16 %v697, %v693
        %v914 = vpack.c.b16 %v698, %v694
        %v915 = vpack.c.b16 %v699, %v695
        %v916 = vpack.c.b16 %v704, %v700
        %v917 = vpack.c.b16 %v705, %v701
        %v918 = vpack.c.b16 %v706, %v702
        %v919 = vpack.c.b16 %v707, %v703
        %v920 = vpack.c.b16 %v712, %v708
        %v921 = vpack.c.b16 %v713, %v709
        %v922 = vpack.c.b16 %v714, %v710
        %v923 = vpack.c.b16 %v715, %v711
        %v924 = vpack.c.b16 %v720, %v716
        %v925 = vpack.c.b16 %v721, %v717
        %v926 = vpack.c.b16 %v722, %v718
        %v927 = vpack.c.b16 %v723, %v719
        %v928 = vpack.c.b16 %v728, %v724
        %v929 = vpack.c.b16 %v729, %v725
        %v930 = vpack.c.b16 %v730, %v726
        %v931 = vpack.c.b16 %v731, %v727
        %v932 = vpack.c.b16 %v736, %v732
        %v933 = vpack.c.b16 %v737, %v733
        %v934 = vpack.c.b16 %v738, %v734
        %v935 = vpack.c.b16 %v739, %v735
        %v936 = vpack.c.b16 %v744, %v740
        %v937 = vpack.c.b16 %v745, %v741
        %v938 = vpack.c.b16 %v746, %v742
        %v939 = vpack.c.b16 %v747, %v743
        %v940 = vpack.c.b16 %v752, %v748
        %v941 = vpack.c.b16 %v753, %v749
        %v942 = vpack.c.b16 %v754, %v750
        %v943 = vpack.c.b16 %v755, %v751
        %v944 = vpack.c.b16 %v760, %v756
        %v945 = vpack.c.b16 %v761, %v757
        %v946 = vpack.c.b16 %v762, %v758
        %v947 = vpack.c.b16 %v763, %v759
        %v948 = vpack.c.b16 %v768, %v764
        %v949 = vpack.c.b16 %v769, %v765
        %v950 = vpack.c.b16 %v770, %v766
        %v951 = vpack.c.b16 %v771, %v767
        %v952 = vpack.c.b16 %v776, %v772
        %v953 = vpack.c.b16 %v777, %v773
        %v954 = vpack.c.b16 %v778, %v774
        %v955 = vpack.c.b16 %v779, %v775
        %v956 = vpack.c.b16 %v784, %v780
        %v957 = vpack.c.b16 %v785, %v781
        %v958 = vpack.c.b16 %v786, %v782
        %v959 = vpack.c.b16 %v787, %v783
        %v960 = vpack.c.b16 %v792, %v788
        %v961 = vpack.c.b16 %v793, %v789
        %v962 = vpack.c.b16 %v794, %v790
        %v963 = vpack.c.b16 %v795, %v791
        %v964 = vpack.c.b16 %v800, %v796
        %v965 = vpack.c.b16 %v801, %v797
        %v966 = vpack.c.b16 %v802, %v798
        %v967 = vpack.c.b16 %v803, %v799
        %v968 = vpack.c.b16 %v808, %v804
        %v969 = vpack.c.b16 %v809, %v805
        %v970 = vpack.c.b16 %v810, %v806
        %v971 = vpack.c.b16 %v811, %v807
        %v972 = vpack.c.b16 %v816, %v812
        %v973 = vpack.c.b16 %v817, %v813
        %v974 = vpack.c.b16 %v818, %v814
        %v975 = vpack.c.b16 %v819, %v815
        %v976 = vpack.c.b16 %v824, %v820
        %v977 = vpack.c.b16 %v825, %v821
        %v978 = vpack.c.b16 %v826, %v822
        %v979 = vpack.c.b16 %v827, %v823
        %v980 = vpack.c.b16 %v832, %v828
        %v981 = vpack.c.b16 %v833, %v829
        %v982 = vpack.c.b16 %v834, %v830
        %v983 = vpack.c.b16 %v835, %v831
        %v984 = vpack.c.b16 %v840, %v836
        %v985 = vpack.c.b16 %v841, %v837
        %v986 = vpack.c.b16 %v842, %v838
        %v987 = vpack.c.b16 %v843, %v839
        %v988 = vpack.c.b16 %v848, %v844
        %v989 = vpack.c.b16 %v849, %v845
        %v990 = vpack.c.b16 %v850, %v846
        %v991 = vpack.c.b16 %v851, %v847
        %v992 = vpack.c.b16 %v856, %v852
        %v993 = vpack.c.b16 %v857, %v853
        %v994 = vpack.c.b16 %v858, %v854
        %v995 = vpack.c.b16 %v859, %v855
        %v996 = vpack.c.b16 %v864, %v860
        %v997 = vpack.c.b16 %v865, %v861
        %v998 = vpack.c.b16 %v866, %v862
        %v999 = vpack.c.b16 %v867, %v863
        %v1000 = vpack.c.b16 %v872, %v868
        %v1001 = vpack.c.b16 %v873, %v869
        %v1002 = vpack.c.b16 %v874, %v870
        %v1003 = vpack.c.b16 %v875, %v871
        %1132 = vmatprep.subr.bf16.mxu0 %v905
        %1133 = vmatpush1.bf16.msra.mxu0 %v904
        %1134 = vmatprep.subr.bf16.mxu0 %v901
        %1135 = vmatpush1.bf16.msra.mxu0 %v900
        %1136 = vmatprep.subr.bf16.mxu0 %v897
        %1137 = vmatpush1.bf16.msra.mxu0 %v896
        %1138 = vmatprep.subr.bf16.mxu0 %v893
        %1139 = vmatpush1.bf16.msra.mxu0 %v892
        %1140 = vmatprep.subr.bf16.mxu0 %v889
        %1141 = vmatpush1.bf16.msra.mxu0 %v888
        %1142 = vmatprep.subr.bf16.mxu0 %v885
        %1143 = vmatpush1.bf16.msra.mxu0 %v884
        %1144 = vmatprep.subr.bf16.mxu0 %v881
        %1145 = vmatpush1.bf16.msra.mxu0 %v880
        %1146 = vmatprep.subr.bf16.mxu0 %v877
        %1147 = vmatpush1.bf16.msra.mxu0 %v876
        %1148 = vmatprep.subr.bf16.mxu0 %v937
        %1149 = vmatpush2.bf16.msra.mxu0 %v936
        %1150 = vmatprep.subr.bf16.mxu0 %v933
        %1151 = vmatpush2.bf16.msra.mxu0 %v932
        %1152 = vmatprep.subr.bf16.mxu0 %v929
        %1153 = vmatpush2.bf16.msra.mxu0 %v928
        %1154 = vmatprep.subr.bf16.mxu0 %v925
        %1155 = vmatpush2.bf16.msra.mxu0 %v924
        %1156 = vmatprep.subr.bf16.mxu0 %v921
        %1157 = vmatpush2.bf16.msra.mxu0 %v920
        %1158 = vmatprep.subr.bf16.mxu0 %v917
        %1159 = vmatpush2.bf16.msra.mxu0 %v916
        %1160 = vmatprep.subr.bf16.mxu0 %v913
        %1161 = vmatpush2.bf16.msra.mxu0 %v912
        %1162 = vmatprep.subr.bf16.mxu0 %v909
        %1163 = vmatpush2.bf16.msra.mxu0 %v908
        %1164 = vmatprep.mubr.bf16.mxu0 %v477
        %1165 = vmatmul.mubr.bf16.gmra.mxu0 %v476
        %v1166 = vpop.f32.mrf.mxu0
        %v1167 = vadd.f32 0.0, %v1166
        %v1168 = vpop.f32.mrf.mxu0
        %v1169 = vadd.f32 0.0, %v1168
        %v1170 = vpop.f32.mrf.mxu0
        %v1171 = vadd.f32 0.0, %v1170
        %v1172 = vpop.f32.mrf.mxu0
        %v1173 = vadd.f32 0.0, %v1172
        %1174 = vmatprep.mubr.bf16.mxu0 %v481
        %1175 = vmatmul.mubr.bf16.gmra.mxu0 %v480
        %v1176 = vpop.f32.mrf.mxu0
        %v1177 = vadd.f32 0.0, %v1176
        %v1178 = vpop.f32.mrf.mxu0
        %v1179 = vadd.f32 0.0, %v1178
        %v1180 = vpop.f32.mrf.mxu0
        %v1181 = vpop.f32.mrf.mxu0
        %1182 = vdwg.mxu0
        %1183 = vmatprep.subr.bf16.mxu0 %v969
        %1184 = vmatpush1.bf16.msra.mxu0 %v968
        %1185 = vmatprep.subr.bf16.mxu0 %v965
        %1186 = vmatpush1.bf16.msra.mxu0 %v964
        %1187 = vmatprep.subr.bf16.mxu0 %v961
        %1188 = vmatpush1.bf16.msra.mxu0 %v960
        %1189 = vmatprep.subr.bf16.mxu0 %v957
        %1190 = vmatpush1.bf16.msra.mxu0 %v956
        %1191 = vmatprep.subr.bf16.mxu0 %v953
        %1192 = vmatpush1.bf16.msra.mxu0 %v952
        %1193 = vmatprep.subr.bf16.mxu0 %v949
        %1194 = vmatpush1.bf16.msra.mxu0 %v948
        %1195 = vmatprep.subr.bf16.mxu0 %v945
        %1196 = vmatpush1.bf16.msra.mxu0 %v944
        %1197 = vmatprep.subr.bf16.mxu0 %v941
        %1198 = vmatpush1.bf16.msra.mxu0 %v940
        %1199 = vmatprep.subr.bf16.mxu0 %v1001
        %1200 = vmatpush2.bf16.msra.mxu0 %v1000
        %1201 = vmatprep.subr.bf16.mxu0 %v997
        %1202 = vmatpush2.bf16.msra.mxu0 %v996
        %1203 = vmatprep.subr.bf16.mxu0 %v993
        %1204 = vmatpush2.bf16.msra.mxu0 %v992
        %1205 = vmatprep.subr.bf16.mxu0 %v989
        %1206 = vmatpush2.bf16.msra.mxu0 %v988
        %1207 = vmatprep.subr.bf16.mxu0 %v985
        %1208 = vmatpush2.bf16.msra.mxu0 %v984
        %1209 = vmatprep.subr.bf16.mxu0 %v981
        %1210 = vmatpush2.bf16.msra.mxu0 %v980
        %1211 = vmatprep.subr.bf16.mxu0 %v977
        %1212 = vmatpush2.bf16.msra.mxu0 %v976
        %1213 = vmatprep.subr.bf16.mxu0 %v973
        %1214 = vmatpush2.bf16.msra.mxu0 %v972
        %1215 = vmatprep.mubr.bf16.mxu0 %v479
        %1216 = vmatmul.mubr.bf16.gmra.mxu0 %v478
        %v1217 = vpop.f32.mrf.mxu0
        %v1218 = vadd.f32 %v1167, %v1217
        %v1219 = vpop.f32.mrf.mxu0
        %v1220 = vadd.f32 %v1169, %v1219
        %v1221 = vpop.f32.mrf.mxu0
        %v1222 = vadd.f32 %v1171, %v1221
        %v1223 = vpop.f32.mrf.mxu0
        %v1224 = vadd.f32 %v1173, %v1223
        %1225 = vmatprep.mubr.bf16.mxu0 %v483
        %1226 = vmatmul.mubr.bf16.gmra.mxu0 %v482
        %v1227 = vpop.f32.mrf.mxu0
        %v1228 = vadd.f32 %v1177, %v1227
        %v1229 = vpop.f32.mrf.mxu0
        %v1230 = vadd.f32 %v1179, %v1229
        %v1231 = vpop.f32.mrf.mxu0
        %v1232 = vpop.f32.mrf.mxu0
        %1233 = vdwg.mxu0
        %1234 = vmatprep.subr.bf16.mxu0 %v907
        %1235 = vmatpush1.bf16.msra.mxu0 %v906
        %1236 = vmatprep.subr.bf16.mxu0 %v903
        %1237 = vmatpush1.bf16.msra.mxu0 %v902
        %1238 = vmatprep.subr.bf16.mxu0 %v899
        %1239 = vmatpush1.bf16.msra.mxu0 %v898
        %1240 = vmatprep.subr.bf16.mxu0 %v895
        %1241 = vmatpush1.bf16.msra.mxu0 %v894
        %1242 = vmatprep.subr.bf16.mxu0 %v891
        %1243 = vmatpush1.bf16.msra.mxu0 %v890
        %1244 = vmatprep.subr.bf16.mxu0 %v887
        %1245 = vmatpush1.bf16.msra.mxu0 %v886
        %1246 = vmatprep.subr.bf16.mxu0 %v883
        %1247 = vmatpush1.bf16.msra.mxu0 %v882
        %1248 = vmatprep.subr.bf16.mxu0 %v879
        %1249 = vmatpush1.bf16.msra.mxu0 %v878
        %1250 = vmatprep.subr.bf16.mxu0 %v939
        %1251 = vmatpush2.bf16.msra.mxu0 %v938
        %1252 = vmatprep.subr.bf16.mxu0 %v935
        %1253 = vmatpush2.bf16.msra.mxu0 %v934
        %1254 = vmatprep.subr.bf16.mxu0 %v931
        %1255 = vmatpush2.bf16.msra.mxu0 %v930
        %1256 = vmatprep.subr.bf16.mxu0 %v927
        %1257 = vmatpush2.bf16.msra.mxu0 %v926
        %1258 = vmatprep.subr.bf16.mxu0 %v923
        %1259 = vmatpush2.bf16.msra.mxu0 %v922
        %1260 = vmatprep.subr.bf16.mxu0 %v919
        %1261 = vmatpush2.bf16.msra.mxu0 %v918
        %1262 = vmatprep.subr.bf16.mxu0 %v915
        %1263 = vmatpush2.bf16.msra.mxu0 %v914
        %1264 = vmatprep.subr.bf16.mxu0 %v911
        %1265 = vmatpush2.bf16.msra.mxu0 %v910
        %1266 = vmatprep.mubr.bf16.mxu0 %v477
        %1267 = vmatmul.mubr.bf16.gmra.mxu0 %v476
        %v1268 = vpop.f32.mrf.mxu0
        %v1269 = vadd.f32 0.0, %v1268
        %v1270 = vpop.f32.mrf.mxu0
        %v1271 = vadd.f32 0.0, %v1270
        %v1272 = vpop.f32.mrf.mxu0
        %v1273 = vadd.f32 0.0, %v1272
        %v1274 = vpop.f32.mrf.mxu0
        %v1275 = vadd.f32 0.0, %v1274
        %1276 = vmatprep.mubr.bf16.mxu0 %v481
        %1277 = vmatmul.mubr.bf16.gmra.mxu0 %v480
        %v1278 = vpop.f32.mrf.mxu0
        %v1279 = vadd.f32 0.0, %v1278
        %v1280 = vpop.f32.mrf.mxu0
        %v1281 = vadd.f32 0.0, %v1280
        %v1282 = vpop.f32.mrf.mxu0
        %v1283 = vpop.f32.mrf.mxu0
        %1284 = vdwg.mxu0
        %1285 = vmatprep.subr.bf16.mxu0 %v971
        %1286 = vmatpush1.bf16.msra.mxu0 %v970
        %1287 = vmatprep.subr.bf16.mxu0 %v967
        %1288 = vmatpush1.bf16.msra.mxu0 %v966
        %1289 = vmatprep.subr.bf16.mxu0 %v963
        %1290 = vmatpush1.bf16.msra.mxu0 %v962
        %1291 = vmatprep.subr.bf16.mxu0 %v959
        %1292 = vmatpush1.bf16.msra.mxu0 %v958
        %1293 = vmatprep.subr.bf16.mxu0 %v955
        %1294 = vmatpush1.bf16.msra.mxu0 %v954
        %1295 = vmatprep.subr.bf16.mxu0 %v951
        %1296 = vmatpush1.bf16.msra.mxu0 %v950
        %1297 = vmatprep.subr.bf16.mxu0 %v947
        %1298 = vmatpush1.bf16.msra.mxu0 %v946
        %1299 = vmatprep.subr.bf16.mxu0 %v943
        %1300 = vmatpush1.bf16.msra.mxu0 %v942
        %1301 = vmatprep.subr.bf16.mxu0 %v1003
        %1302 = vmatpush2.bf16.msra.mxu0 %v1002
        %1303 = vmatprep.subr.bf16.mxu0 %v999
        %1304 = vmatpush2.bf16.msra.mxu0 %v998
        %1305 = vmatprep.subr.bf16.mxu0 %v995
        %1306 = vmatpush2.bf16.msra.mxu0 %v994
        %1307 = vmatprep.subr.bf16.mxu0 %v991
        %1308 = vmatpush2.bf16.msra.mxu0 %v990
        %1309 = vmatprep.subr.bf16.mxu0 %v987
        %1310 = vmatpush2.bf16.msra.mxu0 %v986
        %1311 = vmatprep.subr.bf16.mxu0 %v983
        %1312 = vmatpush2.bf16.msra.mxu0 %v982
        %1313 = vmatprep.subr.bf16.mxu0 %v979
        %1314 = vmatpush2.bf16.msra.mxu0 %v978
        %1315 = vmatprep.subr.bf16.mxu0 %v975
        %1316 = vmatpush2.bf16.msra.mxu0 %v974
        %1317 = vmatprep.mubr.bf16.mxu0 %v479
        %1318 = vmatmul.mubr.bf16.gmra.mxu0 %v478
        %v1319 = vpop.f32.mrf.mxu0
        %v1320 = vadd.f32 %v1269, %v1319
        %v1321 = vpop.f32.mrf.mxu0
        %v1322 = vadd.f32 %v1271, %v1321
        %v1323 = vpop.f32.mrf.mxu0
        %v1324 = vadd.f32 %v1273, %v1323
        %v1325 = vpop.f32.mrf.mxu0
        %v1326 = vadd.f32 %v1275, %v1325
        %1327 = vmatprep.mubr.bf16.mxu0 %v483
        %1328 = vmatmul.mubr.bf16.gmra.mxu0 %v482
        %v1329 = vpop.f32.mrf.mxu0
        %v1330 = vadd.f32 %v1279, %v1329
        %v1331 = vpop.f32.mrf.mxu0
        %v1332 = vadd.f32 %v1281, %v1331
        %v1333 = vpop.f32.mrf.mxu0
        %v1334 = vpop.f32.mrf.mxu0
        %1335 = vdwg.mxu0
        %v1336 = vadd.f32 %v312, %v1218
        %v1337 = vadd.f32 %v313, %v1220
        %v1338 = vadd.f32 %v314, %v1320
        %v1339 = vadd.f32 %v315, %v1322
        %v1340 = vadd.f32 %v316, %v1222
        %v1341 = vadd.f32 %v317, %v1224
        %v1342 = vadd.f32 %v318, %v1324
        %v1343 = vadd.f32 %v319, %v1326
        %v1344 = vadd.f32 %v320, %v1228
        %v1345 = vadd.f32 %v321, %v1230
        %v1346 = vadd.f32 %v322, %v1330
        %v1347 = vadd.f32 %v323, %v1332
        %1348 = vst [vmem:[#allocation2] sm:$0xff] %v1336
        %1349 = vst [vmem:[#allocation2 + $0x8] sm:$0xff] %v1337
        %1350 = vst [vmem:[#allocation2 + $0x10] sm:$0xff] %v1338
        %1351 = vst [vmem:[#allocation2 + $0x18] sm:$0xff] %v1339
        %1352 = vst [vmem:[#allocation2 + $0x20] sm:$0xff] %v1340
        %1353 = vst [vmem:[#allocation2 + $0x28] sm:$0xff] %v1341
        %1354 = vst [vmem:[#allocation2 + $0x30] sm:$0xff] %v1342
        %1355 = vst [vmem:[#allocation2 + $0x38] sm:$0xff] %v1343
        %1356 = vst [vmem:[#allocation2 + $0x40] sm:$0x3] %v1344
        %1357 = vst [vmem:[#allocation2 + $0x48] sm:$0x3] %v1345
        %1358 = vst [vmem:[#allocation2 + $0x50] sm:$0x3] %v1346
        %1359 = vst [vmem:[#allocation2 + $0x58] sm:$0x3] %v1347
        %p1360 = scmp.eq.s32.totalorder %s21, 7
        // Predicated region
        $region56: #{_lambda_.15} parent=46 // pred_check
          %p1361 = pneg %p1360
        $region57: #{_lambda_.15} parent=46 // pred_check_branch
          %1363 = sbr.rel (%p1361) target = $region59
        $region58: #{_lambda_.15} parent=46 // pred_region
          %v1364 = vld [vmem:[#allocation2] sm:$0xff]
          %v1365 = vld [vmem:[#allocation2 + $0x8] sm:$0xff]
          %v1366 = vld [vmem:[#allocation2 + $0x10] sm:$0xff]
          %v1367 = vld [vmem:[#allocation2 + $0x18] sm:$0xff]
          %v1368 = vld [vmem:[#allocation2 + $0x20] sm:$0xff]
          %v1369 = vld [vmem:[#allocation2 + $0x28] sm:$0xff]
          %v1370 = vld [vmem:[#allocation2 + $0x30] sm:$0xff]
          %v1371 = vld [vmem:[#allocation2 + $0x38] sm:$0xff]
          %v1372 = vld [vmem:[#allocation2 + $0x40] sm:$0x3]
          %v1373 = vld [vmem:[#allocation2 + $0x48] sm:$0x3]
          %v1374 = vld [vmem:[#allocation2 + $0x50] sm:$0x3]
          %v1375 = vld [vmem:[#allocation2 + $0x58] sm:$0x3]
          %v1376 = vpack.c.bf16 %v1368, %v1364
          %v1377 = vpack.c.bf16 %v1369, %v1365
          %v1378 = vpack.c.bf16 %v1370, %v1366
          %v1379 = vpack.c.bf16 %v1371, %v1367
          %v1380 = vpack.c.bf16 %v1372, %v1372
          %v1381 = vpack.c.bf16 %v1373, %v1373
          %v1382 = vpack.c.bf16 %v1374, %v1374
          %v1383 = vpack.c.bf16 %v1375, %v1375
          %v1392 = vunpack.c.l.b16 %v1376
          %v1393 = vunpack.c.l.b16 %v1377
          %v1394 = vunpack.c.l.b16 %v1378
          %v1395 = vunpack.c.l.b16 %v1379
          %v1396 = vunpack.c.h.b16 %v1376
          %v1397 = vunpack.c.h.b16 %v1377
          %v1398 = vunpack.c.h.b16 %v1378
          %v1399 = vunpack.c.h.b16 %v1379
          %v1400 = vunpack.c.l.b16 %v1380
          %v1401 = vunpack.c.l.b16 %v1381
          %v1402 = vunpack.c.l.b16 %v1382
          %v1403 = vunpack.c.l.b16 %v1383
          %v1404 = vpack.c.b16 %v1393, %v1392
          %v1405 = vpack.c.b16 %v1395, %v1394
          %v1406 = vpack.c.b16 %v1397, %v1396
          %v1407 = vpack.c.b16 %v1399, %v1398
          %v1408 = vpack.c.b16 %v1401, %v1400
          %v1409 = vpack.c.b16 %v1403, %v1402
          %1416 = vst [vmem:[%s286] sm:$0xff] %v1404
          %1417 = vst [vmem:[%s286 + $0x8] sm:$0xff] %v1405
          %1418 = vst [vmem:[%s286 + $0x10] sm:$0xff] %v1406
          %1419 = vst [vmem:[%s286 + $0x18] sm:$0xff] %v1407
          %1420 = vst [vmem:[%s286 + $0x20] sm:$0x11] %v1408
          %1421 = vst [vmem:[%s286 + $0x28] sm:$0x11] %v1409
          %v1422 = vadd.f32 %v1364, %v1368
          %vm1423 = vcmask 1041408
          %v1424 = vsel %vm1423, %v1372, 0.0
          %v1425 = vadd.f32 %v1422, %v1424
          %v1426 = vrot.slane %v1425, 4
          %v1427 = vadd.f32 %v1425, %v1426
          %v1428 = vrot.slane %v1427, 2
          %v1429 = vadd.f32 %v1427, %v1428
          %v1430 = vrot.slane %v1429, 1
          %v1431 = vadd.f32 %v1429, %v1430
          %v1432 = vadd.f32 %v1365, %v1369
          %v1433 = vsel %vm1423, %v1373, 0.0
          %v1434 = vadd.f32 %v1432, %v1433
          %v1435 = vrot.slane %v1434, 4
          %v1436 = vadd.f32 %v1434, %v1435
          %v1437 = vrot.slane %v1436, 2
          %v1438 = vadd.f32 %v1436, %v1437
          %v1439 = vrot.slane %v1438, 1
          %v1440 = vadd.f32 %v1438, %v1439
          %v1441 = vadd.f32 %v1366, %v1370
          %v1442 = vsel %vm1423, %v1374, 0.0
          %v1443 = vadd.f32 %v1441, %v1442
          %v1444 = vrot.slane %v1443, 4
          %v1445 = vadd.f32 %v1443, %v1444
          %v1446 = vrot.slane %v1445, 2
          %v1447 = vadd.f32 %v1445, %v1446
          %v1448 = vrot.slane %v1447, 1
          %v1449 = vadd.f32 %v1447, %v1448
          %v1450 = vadd.f32 %v1367, %v1371
          %v1451 = vsel %vm1423, %v1375, 0.0
          %v1452 = vadd.f32 %v1450, %v1451
          %v1453 = vrot.slane %v1452, 4
          %v1454 = vadd.f32 %v1452, %v1453
          %v1455 = vrot.slane %v1454, 2
          %v1456 = vadd.f32 %v1454, %v1455
          %v1457 = vrot.slane %v1456, 1
          %v1458 = vadd.f32 %v1456, %v1457
          %v1463 = vcombine.low %v1431, %v1440
          %v1464 = vcombine.low %v1449, %v1458
          %v1466 = vunpack.c.l.s4 1966171168
          %v1467 = vunpack.c.0.s8 %v1466
          %v1468 = vlaneseq
          %v1469 = vshrl.u32 %v1468, 7
          %v1470 = vsub.s32 %v1467, %v1469
          %v1471 = vrot.slane %v1463, %v1470
          %v1473 = vunpack.c.l.s4 1966171168
          %v1474 = vunpack.c.0.s8 %v1473
          %v1475 = vlaneseq
          %v1476 = vshrl.u32 %v1475, 7
          %v1477 = vsub.s32 %v1474, %v1476
          %v1478 = vrot.slane %v1464, %v1477
          %v1479 = vcombine.low %v1471, %v1478
          %v1481 = vunpack.c.l.s4 1966171168
          %v1482 = vunpack.c.0.s8 %v1481
          %v1483 = vlaneseq
          %v1484 = vshrl.u32 %v1483, 7
          %v1485 = vsub.s32 %v1482, %v1484
          %v1486 = vrot.slane %v1479, %v1485
          %v1488 = vlaneseq
          %vm1489 = vcmp.ge.s32.totalorder %v1488, 0
          %vm1490 = vcmp.lt.s32.totalorder %v1488, 512
          %vm1491 = vmand %vm1489, %vm1490
          %1492 = vst.msk [vmem:[%s291] sm:$0xf] %vm1491, %v1486
          %v1493 = vmul.f32 %v1364, %v1364
          %v1494 = vmul.f32 %v1365, %v1365
          %v1495 = vmul.f32 %v1366, %v1366
          %v1496 = vmul.f32 %v1367, %v1367
          %v1497 = vmul.f32 %v1368, %v1368
          %v1498 = vmul.f32 %v1369, %v1369
          %v1499 = vmul.f32 %v1370, %v1370
          %v1500 = vmul.f32 %v1371, %v1371
          %v1501 = vmul.f32 %v1372, %v1372
          %v1502 = vmul.f32 %v1373, %v1373
          %v1503 = vmul.f32 %v1374, %v1374
          %v1504 = vmul.f32 %v1375, %v1375
          %v1505 = vadd.f32 %v1493, %v1497
          %v1506 = vsel %vm1423, %v1501, 0.0
          %v1507 = vadd.f32 %v1505, %v1506
          %v1508 = vrot.slane %v1507, 4
          %v1509 = vadd.f32 %v1507, %v1508
          %v1510 = vrot.slane %v1509, 2
          %v1511 = vadd.f32 %v1509, %v1510
          %v1512 = vrot.slane %v1511, 1
          %v1513 = vadd.f32 %v1511, %v1512
          %v1514 = vadd.f32 %v1494, %v1498
          %v1515 = vsel %vm1423, %v1502, 0.0
          %v1516 = vadd.f32 %v1514, %v1515
          %v1517 = vrot.slane %v1516, 4
          %v1518 = vadd.f32 %v1516, %v1517
          %v1519 = vrot.slane %v1518, 2
          %v1520 = vadd.f32 %v1518, %v1519
          %v1521 = vrot.slane %v1520, 1
          %v1522 = vadd.f32 %v1520, %v1521
          %v1523 = vadd.f32 %v1495, %v1499
          %v1524 = vsel %vm1423, %v1503, 0.0
          %v1525 = vadd.f32 %v1523, %v1524
          %v1526 = vrot.slane %v1525, 4
          %v1527 = vadd.f32 %v1525, %v1526
          %v1528 = vrot.slane %v1527, 2
          %v1529 = vadd.f32 %v1527, %v1528
          %v1530 = vrot.slane %v1529, 1
          %v1531 = vadd.f32 %v1529, %v1530
          %v1532 = vadd.f32 %v1496, %v1500
          %v1533 = vsel %vm1423, %v1504, 0.0
          %v1534 = vadd.f32 %v1532, %v1533
          %v1535 = vrot.slane %v1534, 4
          %v1536 = vadd.f32 %v1534, %v1535
          %v1537 = vrot.slane %v1536, 2
          %v1538 = vadd.f32 %v1536, %v1537
          %v1539 = vrot.slane %v1538, 1
          %v1540 = vadd.f32 %v1538, %v1539
          %v1545 = vcombine.low %v1513, %v1522
          %v1546 = vcombine.low %v1531, %v1540
          %v1548 = vunpack.c.l.s4 1966171168
          %v1549 = vunpack.c.0.s8 %v1548
          %v1550 = vlaneseq
          %v1551 = vshrl.u32 %v1550, 7
          %v1552 = vsub.s32 %v1549, %v1551
          %v1553 = vrot.slane %v1545, %v1552
          %v1555 = vunpack.c.l.s4 1966171168
          %v1556 = vunpack.c.0.s8 %v1555
          %v1557 = vlaneseq
          %v1558 = vshrl.u32 %v1557, 7
          %v1559 = vsub.s32 %v1556, %v1558
          %v1560 = vrot.slane %v1546, %v1559
          %v1561 = vcombine.low %v1553, %v1560
          %v1563 = vunpack.c.l.s4 1966171168
          %v1564 = vunpack.c.0.s8 %v1563
          %v1565 = vlaneseq
          %v1566 = vshrl.u32 %v1565, 7
          %v1567 = vsub.s32 %v1564, %v1566
          %v1568 = vrot.slane %v1561, %v1567
          %1570 = vst.msk [vmem:[%s295] sm:$0xf] %vm1491, %v1568
        $region59: #{_lambda_.15} parent=46 // pred_fallthru
          _
        %s1571 = smul.u32 3, %s20
        %p1572 = scmp.lt.s32.totalorder %s1571, 2
        %s1573 = scalar_select %p1572, %s1571, 2
        %s1574 = smul.addr %s1573, 4
        %s1575 = smul.addr %s1574, 4
        %s1576 = scalar_lea.vmem %s2, %s1575
        %p1577 = scmp.lt.s32.totalorder %s20, 0
        %s1578 = scalar_select %p1577, %s20, 0
        %s1579 = smul.addr %s1578, 4
        %s1580 = scalar_lea.vmem %s3, %s1579
        %p1581 = scmp.lt.s32.totalorder %s20, 0
        %s1582 = scalar_select %p1581, %s20, 0
        %s1583 = smul.addr %s1582, 4
        %s1584 = scalar_lea.vmem %s4, %s1583
        // Predicated region
        $region60: #{_lambda_.15} parent=46 // pred_check
          %p1585 = pneg %p100
        $region61: #{_lambda_.15} parent=46 // pred_check_branch
          %1587 = sbr.rel (%p1585) target = $region63
        $region62: #{_lambda_.15} parent=46 // pred_region
          %s1588 = smul.u32 3, %s20
        $region63: #{_lambda_.15} parent=46 // pred_fallthru
          _
        // Predicated region
        $region64: #{_lambda_.15} parent=46 // pred_check
          %p1589 = pneg %p126
        $region65: #{_lambda_.15} parent=46 // pred_check_branch
          %1591 = sbr.rel (%p1589) target = $region67
        $region66: #{_lambda_.15} parent=46 // pred_region
          _
        $region67: #{_lambda_.15} parent=46 // pred_fallthru
          _
        // Predicated region
        $region68: #{_lambda_.15} parent=46 // pred_check
          %p1592 = pneg %p152
        $region69: #{_lambda_.15} parent=46 // pred_check_branch
          %1594 = sbr.rel (%p1592) target = $region71
        $region70: #{_lambda_.15} parent=46 // pred_region
          _
        $region71: #{_lambda_.15} parent=46 // pred_fallthru
          _
        // Predicated region
        $region72: #{_lambda_.15} parent=46 // pred_check
          %p1595 = pneg %p100
        $region73: #{_lambda_.15} parent=46 // pred_check_branch
          %1597 = sbr.rel (%p1595) target = $region75
        $region74: #{_lambda_.15} parent=46 // pred_region
          %s1598 = smul.u32 3, %s20
          %p1599 = scmp.lt.s32.totalorder %s1598, 2
          %s1600 = scalar_select %p1599, %s1598, 2
          %s1601 = smul.addr %s1600, 4
          %s1602 = smul.addr %s1601, 4
          %s1603 = scalar_lea.vmem %s2, %s1602
        $region75: #{_lambda_.15} parent=46 // pred_fallthru
          _
        // Predicated region
        $region76: #{_lambda_.15} parent=46 // pred_check
          %p1604 = pneg %p126
        $region77: #{_lambda_.15} parent=46 // pred_check_branch
          %1606 = sbr.rel (%p1604) target = $region79
        $region78: #{_lambda_.15} parent=46 // pred_region
          %p1607 = scmp.lt.s32.totalorder %s20, 0
          %s1608 = scalar_select %p1607, %s20, 0
          %s1609 = smul.addr %s1608, 4
          %s1610 = scalar_lea.vmem %s3, %s1609
        $region79: #{_lambda_.15} parent=46 // pred_fallthru
          _
        // Predicated region
        $region80: #{_lambda_.15} parent=46 // pred_check
          %p1611 = pneg %p152
        $region81: #{_lambda_.15} parent=46 // pred_check_branch
          %1613 = sbr.rel (%p1611) target = $region83
        $region82: #{_lambda_.15} parent=46 // pred_region
          %p1614 = scmp.lt.s32.totalorder %s20, 0
          %s1615 = scalar_select %p1614, %s20, 0
          %s1616 = smul.addr %s1615, 4
          %s1617 = scalar_lea.vmem %s4, %s1616
        $region83: #{_lambda_.15} parent=46 // pred_fallthru
          _
      $region47: #{_lambda_.15} parent=5 // pred_fallthru
        _
      %p1618 = scmp.le.s32.totalorder 2, %s11
      // Predicated region
      $region84: #{_lambda_.15} parent=5 // pred_check
        %p1619 = pneg %p1618
      $region85: #{_lambda_.15} parent=5 // pred_check_branch
        %1621 = sbr.rel (%p1619) target = $region87
      $region86: #{_lambda_.15} parent=5 // pred_region
        %s1622 = ssub.s32 %s11, 2
      $region87: #{_lambda_.15} parent=5 // pred_fallthru
        _
    $region6: #{_lambda_.15} parent=1 // loop_footer
      %s15 = sadd.s32 1, %s11
    $region7: #{_lambda_.15} parent=1 // loop_footer_branch
      %10 = sbr.rel target = $region3
    $region8: #{_lambda_.15} parent=1 // loop_exit
      _

// kernel: _lambda_.17
$region0: #{_lambda_.17}
  #allocation0 [shape = 'u32[]', space=smem, size = 0x4, offset = 0x4, fixed_abs, tag = 'smem constant byte address 0x4 - core index']
  #allocation1 [shape = 'u32[144,128]{1,0:T(1,128)}', space=vmem, size = 0x12000, scoped, tag = 'internal scratch']
  #allocation2 [shape = 'f32[8,128]{1,0:T(8,128)}', space=vmem, size = 0x1000, scoped, tag = 'scratch operand']
  %s0 = inlined_call_operand.vmem [shape: bf16[8,8192], index: 0, kind: input, shape index: {}]
  %s1 = inlined_call_operand.vmem [shape: bf16[8192,128], index: 1, kind: input, shape index: {}]
  %s2 = inlined_call_operand.vmem [shape: f32[1,128], index: 2, kind: input, shape index: {}]
  %s3 = inlined_call_operand.vmem [shape: f32[8,128], index: 3, kind: output, shape index: {}]
  %s4 = sld [smem:[#allocation0]]
  $region53: #{_lambda_.17} parent=0
    _
  %s6 = ssub.s32 1, %s4
  %s7 = scalar_select 0, %s6, %s4
  loop: start=0, step=1, limit=18
  $region2: #{_lambda_.17} parent=0 // loop_pre_header
    _
  $region3: #{_lambda_.17} parent=0 // loop_header
    %s9 = sphi 0, %s13
    %p10 = scmp.ge.s32.totalorder %s9, 18
    %s16 = sphi 0, %s28
    %s17 = sphi 0, %s24
    %s18 = sphi 0, %s16
    %s19 = sphi 0, %s17
    %s20 = sphi 0, %s18
    %s21 = sphi 0, %s19
    %s33 = sphi 0, %s35
    %s36 = sphi 0, %s33
    %s37 = sphi 0, %s36
    %s53 = sphi 0, %s37
    %s59 = sphi 0, %s61
    %s62 = sphi 0, %s59
    %s63 = sphi 0, %s62
    %s79 = sphi 0, %s63
    %s83 = sphi 0, %s83
    %s85 = sphi 0, %s83
    %s86 = sphi 0, %s85
    %s100 = sphi 0, %s86
    %s106 = sphi 0, %s108
    %s109 = sphi 0, %s106
    %s110 = sphi 0, %s109
    %s126 = sphi 0, %s110
  $region4: #{_lambda_.17} parent=0 // loop_header_branch
    %12 = sbr.rel (%p10) target = $region8
  $region5: #{_lambda_.17} parent=0 // loop_body
    %s14 = ssub.s32 %s9, 1
    %s15 = ssub.s32 %s9, 2
    %s22 = sadd.s32 1, %s17
    %p23 = scmp.ge.s32.totalorder %s22, 16
    %s24 = scalar_select %p23, 0, %s22
    %s25 = sadd.s32 1, %s16
    %s26 = scalar_select %p23, %s25, %s16
    %p27 = scmp.ge.s32.totalorder %s26, 1
    %s28 = scalar_select %p27, 0, %s26
    %s29 = ssub.s32 %s16, %s28
    %s30 = ssub.s32 %s17, %s24
    %s31 = sor.u32 %s29, %s30
    %p32 = scmp.eq.s32.totalorder %s31, 0
    %s34 = sadd.s32 %s33, 1
    %s35 = scalar_select %p32, %s33, %s34
    %p38 = pneg %p32
    %p39 = scmp.eq.s32.totalorder %s9, 15
    %p40 = por %p38, %p39
    %p41 = scmp.ne.s32.totalorder %s33, %s36
    %p42 = scmp.eq.s32.totalorder %s9, 0
    %p43 = por %p41, %p42
    %p44 = scmp.ne.s32.totalorder %s33, %s36
    %p45 = scmp.eq.s32.totalorder %s14, 15
    %p46 = por %p44, %p45
    %p47 = scmp.ne.s32.totalorder %s36, %s37
    %p48 = scmp.eq.s32.totalorder %s14, 0
    %p49 = por %p47, %p48
    %p50 = scmp.ne.s32.totalorder %s36, %s37
    %p51 = scmp.eq.s32.totalorder %s15, 15
    %p52 = por %p50, %p51
    %p54 = scmp.ne.s32.totalorder %s37, %s53
    %p55 = scmp.eq.s32.totalorder %s15, 0
    %p56 = por %p54, %p55
    %s57 = ssub.s32 %s17, %s24
    %p58 = scmp.eq.s32.totalorder %s57, 0
    %s60 = sadd.s32 %s59, 1
    %s61 = scalar_select %p58, %s59, %s60
    %p64 = pneg %p58
    %p65 = scmp.eq.s32.totalorder %s9, 15
    %p66 = por %p64, %p65
    %p67 = scmp.ne.s32.totalorder %s59, %s62
    %p68 = scmp.eq.s32.totalorder %s9, 0
    %p69 = por %p67, %p68
    %p70 = scmp.ne.s32.totalorder %s59, %s62
    %p71 = scmp.eq.s32.totalorder %s14, 15
    %p72 = por %p70, %p71
    %p73 = scmp.ne.s32.totalorder %s62, %s63
    %p74 = scmp.eq.s32.totalorder %s14, 0
    %p75 = por %p73, %p74
    %p76 = scmp.ne.s32.totalorder %s62, %s63
    %p77 = scmp.eq.s32.totalorder %s15, 15
    %p78 = por %p76, %p77
    %p80 = scmp.ne.s32.totalorder %s63, %s79
    %p81 = scmp.eq.s32.totalorder %s15, 0
    %p82 = por %p80, %p81
    %s84 = sadd.s32 %s83, 1
    %p87 = scmp.eq.s32.totalorder %s9, 15
    %p88 = scmp.ne.s32.totalorder %s83, %s85
    %p89 = scmp.eq.s32.totalorder %s9, 0
    %p90 = por %p88, %p89
    %p91 = scmp.ne.s32.totalorder %s83, %s85
    %p92 = scmp.eq.s32.totalorder %s14, 15
    %p93 = por %p91, %p92
    %p94 = scmp.ne.s32.totalorder %s85, %s86
    %p95 = scmp.eq.s32.totalorder %s14, 0
    %p96 = por %p94, %p95
    %p97 = scmp.ne.s32.totalorder %s85, %s86
    %p98 = scmp.eq.s32.totalorder %s15, 15
    %p99 = por %p97, %p98
    %p101 = scmp.ne.s32.totalorder %s86, %s100
    %p102 = scmp.eq.s32.totalorder %s15, 0
    %p103 = por %p101, %p102
    %s104 = ssub.s32 %s16, %s28
    %p105 = scmp.eq.s32.totalorder %s104, 0
    %s107 = sadd.s32 %s106, 1
    %s108 = scalar_select %p105, %s106, %s107
    %p111 = pneg %p105
    %p112 = scmp.eq.s32.totalorder %s9, 15
    %p113 = por %p111, %p112
    %p114 = scmp.ne.s32.totalorder %s106, %s109
    %p115 = scmp.eq.s32.totalorder %s9, 0
    %p116 = por %p114, %p115
    %p117 = scmp.ne.s32.totalorder %s106, %s109
    %p118 = scmp.eq.s32.totalorder %s14, 15
    %p119 = por %p117, %p118
    %p120 = scmp.ne.s32.totalorder %s109, %s110
    %p121 = scmp.eq.s32.totalorder %s14, 0
    %p122 = por %p120, %p121
    %p123 = scmp.ne.s32.totalorder %s109, %s110
    %p124 = scmp.eq.s32.totalorder %s15, 15
    %p125 = por %p123, %p124
    %p127 = scmp.ne.s32.totalorder %s110, %s126
    %p128 = scmp.eq.s32.totalorder %s15, 0
    %p129 = por %p127, %p128
    %p130 = scmp.le.s32.totalorder 1, %s9
    %p131 = scmp.lt.s32.totalorder %s9, 17
    %p132 = pnand %p130, %p131
    %p133 = pneg %p132
    // Predicated region
    $region9: #{_lambda_.17} parent=5 // pred_check
      _
    $region10: #{_lambda_.17} parent=5 // pred_check_branch
      %135 = sbr.rel (%p132) target = $region12
    $region11: #{_lambda_.17} parent=5 // pred_region
      %s136 = ssub.s32 %s9, 1
      // Predicated region
      $region13: #{_lambda_.17} parent=11 // pred_check
        %p137 = pneg %p96
      $region14: #{_lambda_.17} parent=11 // pred_check_branch
        %139 = sbr.rel (%p137) target = $region16
      $region15: #{_lambda_.17} parent=11 // pred_region
        _
      $region16: #{_lambda_.17} parent=11 // pred_fallthru
        _
    $region12: #{_lambda_.17} parent=5 // pred_fallthru
      _
    %p140 = scmp.lt.s32.totalorder %s9, 16
    // Predicated region
    $region17: #{_lambda_.17} parent=5 // pred_check
      %p141 = pneg %p140
    $region18: #{_lambda_.17} parent=5 // pred_check_branch
      %143 = sbr.rel (%p141) target = $region20
    $region19: #{_lambda_.17} parent=5 // pred_region
      // Predicated region
      $region21: #{_lambda_.17} parent=19 // pred_check
        %p144 = pneg %p43
      $region22: #{_lambda_.17} parent=19 // pred_check_branch
        %146 = sbr.rel (%p144) target = $region24
      $region23: #{_lambda_.17} parent=19 // pred_region
        %s147 = smul.u32 4, %s17
        %p148 = scmp.lt.s32.totalorder %s16, 0
        %s149 = scalar_select %p148, %s16, 0
        %p150 = scmp.lt.s32.totalorder %s147, 63
        %s151 = scalar_select %p150, %s147, 63
        %s152 = smul.addr %s149, 64
        %s153 = sadd.s32 %s151, %s152
        %s154 = smul.addr %s153, 4
        %s155 = scalar_lea.vmem %s0, %s154
        %s156 = smul.u32 4, %s17
      $region24: #{_lambda_.17} parent=19 // pred_fallthru
        _
      // Predicated region
      $region25: #{_lambda_.17} parent=19 // pred_check
        %p157 = pneg %p69
      $region26: #{_lambda_.17} parent=19 // pred_check_branch
        %159 = sbr.rel (%p157) target = $region28
      $region27: #{_lambda_.17} parent=19 // pred_region
        %s160 = smul.u32 64, %s17
        %p161 = scmp.lt.s32.totalorder %s160, 1023
        %s162 = scalar_select %p161, %s160, 1023
        %s163 = smul.addr %s162, 4
        %s164 = scalar_lea.vmem %s1, %s163
        %s165 = smul.u32 64, %s17
      $region28: #{_lambda_.17} parent=19 // pred_fallthru
        _
    $region20: #{_lambda_.17} parent=5 // pred_fallthru
      _
    %p166 = scmp.le.s32.totalorder 1, %s9
    %p167 = scmp.lt.s32.totalorder %s9, 17
    %p168 = pnand %p166, %p167
    %p169 = pneg %p168
    // Predicated region
    $region29: #{_lambda_.17} parent=5 // pred_check
      _
    $region30: #{_lambda_.17} parent=5 // pred_check_branch
      %171 = sbr.rel (%p168) target = $region32
    $region31: #{_lambda_.17} parent=5 // pred_region
      %s172 = ssub.s32 %s9, 1
      %s173 = smul.u32 4, %s19
      %p174 = scmp.lt.s32.totalorder %s18, 0
      %s175 = scalar_select %p174, %s18, 0
      %p176 = scmp.lt.s32.totalorder %s173, 63
      %s177 = scalar_select %p176, %s173, 63
      %s178 = smul.addr %s175, 64
      %s179 = sadd.s32 %s177, %s178
      %s180 = smul.addr %s179, 4
      %s181 = scalar_lea.vmem %s0, %s180
      %p182 = pneg %p49
      %p183 = pneg %p46
      %s184 = smul.u32 64, %s19
      %p185 = scmp.lt.s32.totalorder %s184, 1023
      %s186 = scalar_select %p185, %s184, 1023
      %s187 = smul.addr %s186, 4
      %s188 = scalar_lea.vmem %s1, %s187
      %p189 = pneg %p75
      %p190 = pneg %p72
      %p191 = pneg %p96
      %p192 = pneg %p93
      %p193 = pneg %p122
      %p194 = pneg %p119
      %p195 = scmp.lt.s32.totalorder %s18, 0
      %s196 = scalar_select %p195, %s18, 0
      %s197 = smul.addr %s196, 8
      %s198 = scalar_lea.vmem %s3, %s197
      %s199 = smul.u32 4, %s19
      %p200 = scmp.lt.s32.totalorder %s18, 0
      %s201 = scalar_select %p200, %s18, 0
      %p202 = scmp.lt.s32.totalorder %s199, 63
      %s203 = scalar_select %p202, %s199, 63
      %s204 = smul.addr %s201, 64
      %s205 = sadd.s32 %s203, %s204
      %s206 = smul.addr %s205, 4
      %s207 = scalar_lea.vmem %s0, %s206
      %s208 = smul.u32 4, %s19
      %s209 = smul.u32 64, %s19
      %p210 = scmp.lt.s32.totalorder %s209, 1023
      %s211 = scalar_select %p210, %s209, 1023
      %s212 = smul.addr %s211, 4
      %s213 = scalar_lea.vmem %s1, %s212
      %s214 = smul.u32 64, %s19
      %p215 = scmp.lt.s32.totalorder %s18, 0
      %s216 = scalar_select %p215, %s18, 0
      %s217 = smul.addr %s216, 8
      %s218 = scalar_lea.vmem %s3, %s217
      %p220 = scmp.eq.s32.totalorder %s19, 0
      // Predicated region
      $region33: #{_lambda_.17} parent=31 // pred_check
        %p221 = pneg %p220
      $region34: #{_lambda_.17} parent=31 // pred_check_branch
        %223 = sbr.rel (%p221) target = $region36
      $region35: #{_lambda_.17} parent=31 // pred_region
        %224 = vst [vmem:[#allocation2] sm:$0xff] 0.0
      $region36: #{_lambda_.17} parent=31 // pred_fallthru
        _
      %v225 = vld [vmem:[#allocation2] sm:$0xff]
      %v226 = vld [vmem:[%s207] sm:$0xff]
      %v227 = vld [vmem:[%s207 + $0x8] sm:$0xff]
      %v228 = vld [vmem:[%s213] sm:$0xf]
      %v229 = vld [vmem:[%s213 + $0x4] sm:$0xf]
      %v230 = vld [vmem:[%s213 + $0x8] sm:$0xf]
      %v231 = vld [vmem:[%s213 + $0xc] sm:$0xf]
      %v232 = vld [vmem:[%s213 + $0x10] sm:$0xf]
      %v233 = vld [vmem:[%s213 + $0x14] sm:$0xf]
      %v234 = vld [vmem:[%s213 + $0x18] sm:$0xf]
      %v235 = vld [vmem:[%s213 + $0x1c] sm:$0xf]
      %v236 = vld [vmem:[%s213 + $0x20] sm:$0xf]
      %v237 = vld [vmem:[%s213 + $0x24] sm:$0xf]
      %v238 = vld [vmem:[%s213 + $0x28] sm:$0xf]
      %v239 = vld [vmem:[%s213 + $0x2c] sm:$0xf]
      %v240 = vld [vmem:[%s213 + $0x30] sm:$0xf]
      %v241 = vld [vmem:[%s213 + $0x34] sm:$0xf]
      %v242 = vld [vmem:[%s213 + $0x38] sm:$0xf]
      %v243 = vld [vmem:[%s213 + $0x3c] sm:$0xf]
      %v244 = vld [vmem:[%s213 + $0x40] sm:$0xf]
      %v245 = vld [vmem:[%s213 + $0x44] sm:$0xf]
      %v246 = vld [vmem:[%s213 + $0x48] sm:$0xf]
      %v247 = vld [vmem:[%s213 + $0x4c] sm:$0xf]
      %v248 = vld [vmem:[%s213 + $0x50] sm:$0xf]
      %v249 = vld [vmem:[%s213 + $0x54] sm:$0xf]
      %v250 = vld [vmem:[%s213 + $0x58] sm:$0xf]
      %v251 = vld [vmem:[%s213 + $0x5c] sm:$0xf]
      %v252 = vld [vmem:[%s213 + $0x60] sm:$0xf]
      %v253 = vld [vmem:[%s213 + $0x64] sm:$0xf]
      %v254 = vld [vmem:[%s213 + $0x68] sm:$0xf]
      %v255 = vld [vmem:[%s213 + $0x6c] sm:$0xf]
      %v256 = vld [vmem:[%s213 + $0x70] sm:$0xf]
      %v257 = vld [vmem:[%s213 + $0x74] sm:$0xf]
      %v258 = vld [vmem:[%s213 + $0x78] sm:$0xf]
      %v259 = vld [vmem:[%s213 + $0x7c] sm:$0xf]
      %v260 = vld [vmem:[%s213 + $0x80] sm:$0xf]
      %v261 = vld [vmem:[%s213 + $0x84] sm:$0xf]
      %v262 = vld [vmem:[%s213 + $0x88] sm:$0xf]
      %v263 = vld [vmem:[%s213 + $0x8c] sm:$0xf]
      %v264 = vld [vmem:[%s213 + $0x90] sm:$0xf]
      %v265 = vld [vmem:[%s213 + $0x94] sm:$0xf]
      %v266 = vld [vmem:[%s213 + $0x98] sm:$0xf]
      %v267 = vld [vmem:[%s213 + $0x9c] sm:$0xf]
      %v268 = vld [vmem:[%s213 + $0xa0] sm:$0xf]
      %v269 = vld [vmem:[%s213 + $0xa4] sm:$0xf]
      %v270 = vld [vmem:[%s213 + $0xa8] sm:$0xf]
      %v271 = vld [vmem:[%s213 + $0xac] sm:$0xf]
      %v272 = vld [vmem:[%s213 + $0xb0] sm:$0xf]
      %v273 = vld [vmem:[%s213 + $0xb4] sm:$0xf]
      %v274 = vld [vmem:[%s213 + $0xb8] sm:$0xf]
      %v275 = vld [vmem:[%s213 + $0xbc] sm:$0xf]
      %v276 = vld [vmem:[%s213 + $0xc0] sm:$0xf]
      %v277 = vld [vmem:[%s213 + $0xc4] sm:$0xf]
      %v278 = vld [vmem:[%s213 + $0xc8] sm:$0xf]
      %v279 = vld [vmem:[%s213 + $0xcc] sm:$0xf]
      %v280 = vld [vmem:[%s213 + $0xd0] sm:$0xf]
      %v281 = vld [vmem:[%s213 + $0xd4] sm:$0xf]
      %v282 = vld [vmem:[%s213 + $0xd8] sm:$0xf]
      %v283 = vld [vmem:[%s213 + $0xdc] sm:$0xf]
      %v284 = vld [vmem:[%s213 + $0xe0] sm:$0xf]
      %v285 = vld [vmem:[%s213 + $0xe4] sm:$0xf]
      %v286 = vld [vmem:[%s213 + $0xe8] sm:$0xf]
      %v287 = vld [vmem:[%s213 + $0xec] sm:$0xf]
      %v288 = vld [vmem:[%s213 + $0xf0] sm:$0xf]
      %v289 = vld [vmem:[%s213 + $0xf4] sm:$0xf]
      %v290 = vld [vmem:[%s213 + $0xf8] sm:$0xf]
      %v291 = vld [vmem:[%s213 + $0xfc] sm:$0xf]
      %v294 = vunpack.c.l.b16 %v226
      %v295 = vunpack.c.h.b16 %v226
      %v296 = vunpack.c.l.b16 %v227
      %v297 = vunpack.c.h.b16 %v227
      %v298 = vpack.c.b16 %v294, %v294
      %v299 = vpack.c.b16 %v295, %v295
      %v300 = vpack.c.b16 %v296, %v296
      %v301 = vpack.c.b16 %v297, %v297
      %v370 = vunpack.c.l.b16 %v228
      %v371 = vunpack.c.l.b16 %v229
      %v372 = vunpack.c.l.b16 %v230
      %v373 = vunpack.c.l.b16 %v231
      %v374 = vunpack.c.l.b16 %v232
      %v375 = vunpack.c.l.b16 %v233
      %v376 = vunpack.c.l.b16 %v234
      %v377 = vunpack.c.l.b16 %v235
      %v378 = vunpack.c.l.b16 %v236
      %v379 = vunpack.c.l.b16 %v237
      %v380 = vunpack.c.l.b16 %v238
      %v381 = vunpack.c.l.b16 %v239
      %v382 = vunpack.c.l.b16 %v240
      %v383 = vunpack.c.l.b16 %v241
      %v384 = vunpack.c.l.b16 %v242
      %v385 = vunpack.c.l.b16 %v243
      %v386 = vunpack.c.l.b16 %v244
      %v387 = vunpack.c.l.b16 %v245
      %v388 = vunpack.c.l.b16 %v246
      %v389 = vunpack.c.l.b16 %v247
      %v390 = vunpack.c.l.b16 %v248
      %v391 = vunpack.c.l.b16 %v249
      %v392 = vunpack.c.l.b16 %v250
      %v393 = vunpack.c.l.b16 %v251
      %v394 = vunpack.c.l.b16 %v252
      %v395 = vunpack.c.l.b16 %v253
      %v396 = vunpack.c.l.b16 %v254
      %v397 = vunpack.c.l.b16 %v255
      %v398 = vunpack.c.l.b16 %v256
      %v399 = vunpack.c.l.b16 %v257
      %v400 = vunpack.c.l.b16 %v258
      %v401 = vunpack.c.l.b16 %v259
      %v402 = vunpack.c.l.b16 %v260
      %v403 = vunpack.c.l.b16 %v261
      %v404 = vunpack.c.l.b16 %v262
      %v405 = vunpack.c.l.b16 %v263
      %v406 = vunpack.c.l.b16 %v264
      %v407 = vunpack.c.l.b16 %v265
      %v408 = vunpack.c.l.b16 %v266
      %v409 = vunpack.c.l.b16 %v267
      %v410 = vunpack.c.l.b16 %v268
      %v411 = vunpack.c.l.b16 %v269
      %v412 = vunpack.c.l.b16 %v270
      %v413 = vunpack.c.l.b16 %v271
      %v414 = vunpack.c.l.b16 %v272
      %v415 = vunpack.c.l.b16 %v273
      %v416 = vunpack.c.l.b16 %v274
      %v417 = vunpack.c.l.b16 %v275
      %v418 = vunpack.c.l.b16 %v276
      %v419 = vunpack.c.l.b16 %v277
      %v420 = vunpack.c.l.b16 %v278
      %v421 = vunpack.c.l.b16 %v279
      %v422 = vunpack.c.l.b16 %v280
      %v423 = vunpack.c.l.b16 %v281
      %v424 = vunpack.c.l.b16 %v282
      %v425 = vunpack.c.l.b16 %v283
      %v426 = vunpack.c.l.b16 %v284
      %v427 = vunpack.c.l.b16 %v285
      %v428 = vunpack.c.l.b16 %v286
      %v429 = vunpack.c.l.b16 %v287
      %v430 = vunpack.c.l.b16 %v288
      %v431 = vunpack.c.l.b16 %v289
      %v432 = vunpack.c.l.b16 %v290
      %v433 = vunpack.c.l.b16 %v291
      %v434 = vpack.c.b16 %v371, %v370
      %v435 = vpack.c.b16 %v373, %v372
      %v436 = vpack.c.b16 %v375, %v374
      %v437 = vpack.c.b16 %v377, %v376
      %v438 = vpack.c.b16 %v379, %v378
      %v439 = vpack.c.b16 %v381, %v380
      %v440 = vpack.c.b16 %v383, %v382
      %v441 = vpack.c.b16 %v385, %v384
      %v442 = vpack.c.b16 %v387, %v386
      %v443 = vpack.c.b16 %v389, %v388
      %v444 = vpack.c.b16 %v391, %v390
      %v445 = vpack.c.b16 %v393, %v392
      %v446 = vpack.c.b16 %v395, %v394
      %v447 = vpack.c.b16 %v397, %v396
      %v448 = vpack.c.b16 %v399, %v398
      %v449 = vpack.c.b16 %v401, %v400
      %v450 = vpack.c.b16 %v403, %v402
      %v451 = vpack.c.b16 %v405, %v404
      %v452 = vpack.c.b16 %v407, %v406
      %v453 = vpack.c.b16 %v409, %v408
      %v454 = vpack.c.b16 %v411, %v410
      %v455 = vpack.c.b16 %v413, %v412
      %v456 = vpack.c.b16 %v415, %v414
      %v457 = vpack.c.b16 %v417, %v416
      %v458 = vpack.c.b16 %v419, %v418
      %v459 = vpack.c.b16 %v421, %v420
      %v460 = vpack.c.b16 %v423, %v422
      %v461 = vpack.c.b16 %v425, %v424
      %v462 = vpack.c.b16 %v427, %v426
      %v463 = vpack.c.b16 %v429, %v428
      %v464 = vpack.c.b16 %v431, %v430
      %v465 = vpack.c.b16 %v433, %v432
      %498 = vmatprep.subr.bf16.mxu0 0
      %499 = vmatpush1.bf16.msra.mxu0 %v441
      %500 = vmatprep.subr.bf16.mxu0 0
      %501 = vmatpush1.bf16.msra.mxu0 %v440
      %502 = vmatprep.subr.bf16.mxu0 0
      %503 = vmatpush1.bf16.msra.mxu0 %v439
      %504 = vmatprep.subr.bf16.mxu0 0
      %505 = vmatpush1.bf16.msra.mxu0 %v438
      %506 = vmatprep.subr.bf16.mxu0 0
      %507 = vmatpush1.bf16.msra.mxu0 %v437
      %508 = vmatprep.subr.bf16.mxu0 0
      %509 = vmatpush1.bf16.msra.mxu0 %v436
      %510 = vmatprep.subr.bf16.mxu0 0
      %511 = vmatpush1.bf16.msra.mxu0 %v435
      %512 = vmatprep.subr.bf16.mxu0 0
      %513 = vmatpush1.bf16.msra.mxu0 %v434
      %514 = vmatprep.subr.bf16.mxu0 0
      %515 = vmatpush2.bf16.msra.mxu0 %v449
      %516 = vmatprep.subr.bf16.mxu0 0
      %517 = vmatpush2.bf16.msra.mxu0 %v448
      %518 = vmatprep.subr.bf16.mxu0 0
      %519 = vmatpush2.bf16.msra.mxu0 %v447
      %520 = vmatprep.subr.bf16.mxu0 0
      %521 = vmatpush2.bf16.msra.mxu0 %v446
      %522 = vmatprep.subr.bf16.mxu0 0
      %523 = vmatpush2.bf16.msra.mxu0 %v445
      %524 = vmatprep.subr.bf16.mxu0 0
      %525 = vmatpush2.bf16.msra.mxu0 %v444
      %526 = vmatprep.subr.bf16.mxu0 0
      %527 = vmatpush2.bf16.msra.mxu0 %v443
      %528 = vmatprep.subr.bf16.mxu0 0
      %529 = vmatpush2.bf16.msra.mxu0 %v442
      %530 = vmatprep.mubr.bf16.mxu0 %v299
      %531 = vmatmul.mubr.bf16.gmra.mxu0 %v298
      %v532 = vpop.f32.mrf.mxu0
      %v533 = vadd.f32 0.0, %v532
      %v534 = vpop.f32.mrf.mxu0
      %v535 = vpop.f32.mrf.mxu0
      %v536 = vpop.f32.mrf.mxu0
      %537 = vdwg.mxu0
      %538 = vmatprep.subr.bf16.mxu0 0
      %539 = vmatpush1.bf16.msra.mxu0 %v457
      %540 = vmatprep.subr.bf16.mxu0 0
      %541 = vmatpush1.bf16.msra.mxu0 %v456
      %542 = vmatprep.subr.bf16.mxu0 0
      %543 = vmatpush1.bf16.msra.mxu0 %v455
      %544 = vmatprep.subr.bf16.mxu0 0
      %545 = vmatpush1.bf16.msra.mxu0 %v454
      %546 = vmatprep.subr.bf16.mxu0 0
      %547 = vmatpush1.bf16.msra.mxu0 %v453
      %548 = vmatprep.subr.bf16.mxu0 0
      %549 = vmatpush1.bf16.msra.mxu0 %v452
      %550 = vmatprep.subr.bf16.mxu0 0
      %551 = vmatpush1.bf16.msra.mxu0 %v451
      %552 = vmatprep.subr.bf16.mxu0 0
      %553 = vmatpush1.bf16.msra.mxu0 %v450
      %554 = vmatprep.subr.bf16.mxu0 0
      %555 = vmatpush2.bf16.msra.mxu0 %v465
      %556 = vmatprep.subr.bf16.mxu0 0
      %557 = vmatpush2.bf16.msra.mxu0 %v464
      %558 = vmatprep.subr.bf16.mxu0 0
      %559 = vmatpush2.bf16.msra.mxu0 %v463
      %560 = vmatprep.subr.bf16.mxu0 0
      %561 = vmatpush2.bf16.msra.mxu0 %v462
      %562 = vmatprep.subr.bf16.mxu0 0
      %563 = vmatpush2.bf16.msra.mxu0 %v461
      %564 = vmatprep.subr.bf16.mxu0 0
      %565 = vmatpush2.bf16.msra.mxu0 %v460
      %566 = vmatprep.subr.bf16.mxu0 0
      %567 = vmatpush2.bf16.msra.mxu0 %v459
      %568 = vmatprep.subr.bf16.mxu0 0
      %569 = vmatpush2.bf16.msra.mxu0 %v458
      %570 = vmatprep.mubr.bf16.mxu0 %v301
      %571 = vmatmul.mubr.bf16.gmra.mxu0 %v300
      %v572 = vpop.f32.mrf.mxu0
      %v573 = vadd.f32 %v533, %v572
      %v574 = vpop.f32.mrf.mxu0
      %v575 = vpop.f32.mrf.mxu0
      %v576 = vpop.f32.mrf.mxu0
      %577 = vdwg.mxu0
      %v578 = vadd.f32 %v225, %v573
      %579 = vst [vmem:[#allocation2] sm:$0xff] %v578
      %p580 = scmp.eq.s32.totalorder %s19, 15
      // Predicated region
      $region37: #{_lambda_.17} parent=31 // pred_check
        %p581 = pneg %p580
      $region38: #{_lambda_.17} parent=31 // pred_check_branch
        %583 = sbr.rel (%p581) target = $region40
      $region39: #{_lambda_.17} parent=31 // pred_region
        %v584 = vld [vmem:[#allocation2] sm:$0xff]
        %v585 = vld [vmem:[%s2] sm:$0x1]
        %v587 = vlaneseq
        %v588 = vshrl.u32 %v587, 7
        %v589 = vsub.s32 0, %v588
        %v590 = vrot.slane %v585, %v589
        %v592 = vadd.f32 %v584, %v590
        %593 = vst [vmem:[%s218] sm:$0xff] %v592
      $region40: #{_lambda_.17} parent=31 // pred_fallthru
        _
      %p594 = scmp.lt.s32.totalorder %s18, 0
      %s595 = scalar_select %p594, %s18, 0
      %s596 = smul.addr %s595, 8
      %s597 = scalar_lea.vmem %s3, %s596
      // Predicated region
      $region41: #{_lambda_.17} parent=31 // pred_check
        %p598 = pneg %p119
      $region42: #{_lambda_.17} parent=31 // pred_check_branch
        %600 = sbr.rel (%p598) target = $region44
      $region43: #{_lambda_.17} parent=31 // pred_region
        _
      $region44: #{_lambda_.17} parent=31 // pred_fallthru
        _
      // Predicated region
      $region45: #{_lambda_.17} parent=31 // pred_check
        %p601 = pneg %p119
      $region46: #{_lambda_.17} parent=31 // pred_check_branch
        %603 = sbr.rel (%p601) target = $region48
      $region47: #{_lambda_.17} parent=31 // pred_region
        %p604 = scmp.lt.s32.totalorder %s18, 0
        %s605 = scalar_select %p604, %s18, 0
        %s606 = smul.addr %s605, 8
        %s607 = scalar_lea.vmem %s3, %s606
      $region48: #{_lambda_.17} parent=31 // pred_fallthru
        _
    $region32: #{_lambda_.17} parent=5 // pred_fallthru
      _
    %p608 = scmp.le.s32.totalorder 2, %s9
    // Predicated region
    $region49: #{_lambda_.17} parent=5 // pred_check
      %p609 = pneg %p608
    $region50: #{_lambda_.17} parent=5 // pred_check_branch
      %611 = sbr.rel (%p609) target = $region52
    $region51: #{_lambda_.17} parent=5 // pred_region
      %s612 = ssub.s32 %s9, 2
    $region52: #{_lambda_.17} parent=5 // pred_fallthru
      _
  $region6: #{_lambda_.17} parent=0 // loop_footer
    %s13 = sadd.s32 1, %s9
  $region7: #{_lambda_.17} parent=0 // loop_footer_branch
    %8 = sbr.rel target = $region3
  $region8: #{_lambda_.17} parent=0 // loop_exit
    _

</llo_original>
